<compile_context>
chip_gen: v7x
topology: tpu7x:2x2x1
jax: 0.10.0
libtpu: 0.0.40
codegen_flags: <defaults>
</compile_context>

<pallas_src>
import functools

import jax
import jax.numpy as jnp
from jax.experimental import pallas as pl
from jax.experimental.pallas import tpu as pltpu

EPS = 1e-6  # norm_layer = partial(nn.LayerNorm, eps=1e-6)


# ---------------------------------------------------------------------------
# Small helpers
# ---------------------------------------------------------------------------
def _tpu_vmem_capacity_bytes(default=64 * 1024 * 1024):
    """Physical per-core VMEM; conservative 64 MiB fallback if unqueryable."""
    try:
        info = pltpu.get_tpu_info()
        cap = getattr(info, "vmem_capacity_bytes", None)
        return int(cap) if cap else default
    except Exception:  # pragma: no cover - query not supported
        return default


def _largest_divisor(n, cap):
    for t in range(min(n, cap), 0, -1):
        if n % t == 0:
            return t
    return 1


def _pick_row_tile(m, cap=1024):
    """Largest multiple-of-8 divisor of m that is <= cap (or m if m <= cap)."""
    if m <= cap:
        return m
    for t in range(cap - cap % 8, 7, -8):
        if m % t == 0:
            return t
    return m


def _layernorm(v, w, b):
    mu = jnp.mean(v, axis=-1, keepdims=True)
    var = jnp.mean(jnp.square(v - mu), axis=-1, keepdims=True)
    return (v - mu) * jax.lax.rsqrt(var + EPS) * w + b


# ---------------------------------------------------------------------------
# Pallas kernels
# ---------------------------------------------------------------------------
def _embed_conv_kernel(x_ref, w_ref, b_ref, o_ref):
    # 1x1 Conv2d(728->768) == per-token linear: (TM, C_in) @ (C_in, D) + b
    o_ref[...] = (
        jnp.dot(x_ref[...], w_ref[...], preferred_element_type=jnp.float32)
        + b_ref[...]
    ).astype(o_ref.dtype)


def _vit_blocks_kernel(
    x_ref,
    ln1w_ref, ln1b_ref,
    qkvw_ref, qkvb_ref,
    projw_ref, projb_ref,
    ln2w_ref, ln2b_ref,
    fc1w_ref, fc1b_ref,
    fc2w_ref, fc2b_ref,
    normw_ref, normb_ref, headw_ref, headb_ref,
    o_ref,
    state_ref,
    *, num_heads, seq_valid,
):
    """Grid step (batch-block b, layer l): state <- Block_l(state).

    x = x + Attn(LN1(x)); x = x + MLP(LN2(x)); drop_path / dropout are 0.
    At l == depth-1 the final LayerNorm + classifier head run on the cls rows
    and only the logits are written back to HBM.
    """
    l = pl.program_id(1)

    @pl.when(l == 0)
    def _():
        state_ref[...] = x_ref[...]

    x = state_ref[...]                       # (Bt, S, D) f32 residual stream
    Bt, S, D = x.shape
    hd = D // num_heads
    M = Bt * S

    x2 = x.reshape(M, D)                     # token-major, D on lanes

    # ----------------- multi-head self attention -----------------
    xn = _layernorm(x2, ln1w_ref[0], ln1b_ref[0]).astype(jnp.bfloat16)
    # softmax scale is pre-folded into the q columns of W_qkv / b_qkv.
    qkv = (
        jnp.dot(xn, qkvw_ref[0], preferred_element_type=jnp.float32)
        + qkvb_ref[0]
    )                                        # (Bt*S, 3D)
    qkv = qkv.astype(jnp.bfloat16).reshape(Bt, S, 3 * D)

    ctxs = []
    for b in range(Bt):                      # static unroll; heads are the MXU batch dim
        qkv_b = jnp.swapaxes(qkv[b].reshape(S, 3 * num_heads, hd), 0, 1)
        q = qkv_b[:num_heads]                # (nh, S, hd)
        k = qkv_b[num_heads:2 * num_heads]
        v = qkv_b[2 * num_heads:]

        logits = jnp.einsum("hqd,hkd->hqk", q, k,
                            preferred_element_type=jnp.float32)   # (nh, S, S)
        if seq_valid < S:                    # mask padded key columns
            key_ok = (jax.lax.broadcasted_iota(jnp.int32, (1, 1, S), 2)
                      < seq_valid)
            logits = jnp.where(key_ok, logits, -1e30)
        m = jnp.max(logits, axis=-1, keepdims=True)
        e = jnp.exp(logits - m)
        p = e * pl.reciprocal(jnp.sum(e, axis=-1, keepdims=True), approx=True)

        ctx = jnp.einsum("hqk,hkd->hqd", p.astype(jnp.bfloat16), v,
                         preferred_element_type=jnp.float32)      # (nh, S, hd)
        ctxs.append(jnp.swapaxes(ctx.astype(jnp.bfloat16), 0, 1)
                    .reshape(1, S, D))

    attn = jnp.concatenate(ctxs, axis=0).reshape(M, D)            # (Bt*S, D) bf16
    attn = (
        jnp.dot(attn, projw_ref[0], preferred_element_type=jnp.float32)
        + projb_ref[0]
    )
    x2 = x2 + attn                           # residual (drop_path ratio == 0)

    # ----------------- MLP: fc1 -> GELU(exact) -> fc2 -----------------
    xn2 = _layernorm(x2, ln2w_ref[0], ln2b_ref[0]).astype(jnp.bfloat16)
    h1 = (
        jnp.dot(xn2, fc1w_ref[0], preferred_element_type=jnp.float32)
        + fc1b_ref[0]
    )
    # exact GELU (matches torch.nn.GELU default); cast to bf16 right away
    h1 = (0.5 * h1 * (1.0 + jax.lax.erf(h1 * 0.7071067811865476))
          ).astype(jnp.bfloat16)
    h2 = (
        jnp.dot(h1, fc2w_ref[0], preferred_element_type=jnp.float32)
        + fc2b_ref[0]
    )
    x2 = x2 + h2

    state_ref[...] = x2.reshape(Bt, S, D)

    @pl.when(l == pl.num_programs(1) - 1)
    def _():
        # fused final LayerNorm (eps=1e-6) + Linear head on the cls rows only
        cls = x2.reshape(Bt, S, D)[:, 0, :]                        # (Bt, D)
        cls_n = _layernorm(cls, normw_ref[...], normb_ref[...])
        o_ref[0] = (
            jnp.dot(cls_n, headw_ref[...], preferred_element_type=jnp.float32)
            + headb_ref[...]
        ).astype(o_ref.dtype)


# ---------------------------------------------------------------------------
# Wrappers (JAX glue + pallas_call)
# ---------------------------------------------------------------------------
def embed_conv_1x1(tokens, w, b, *, tile_cap=1024):
    """tokens: (B, N, C_in) f32; w: (C_in, D) bf16; b: (D,) f32 -> (B, N, D) f32."""
    B, N, Cin = tokens.shape
    D = w.shape[1]
    M = B * N
    x2 = tokens.reshape(M, Cin).astype(jnp.bfloat16)
    tm = _pick_row_tile(M, tile_cap)
    out = pl.pallas_call(
        _embed_conv_kernel,
        out_shape=jax.ShapeDtypeStruct((M, D), jnp.float32),
        grid=(M // tm,),
        in_specs=[
            pl.BlockSpec((tm, Cin), lambda i: (i, 0)),   # token-row tiles
            pl.BlockSpec((Cin, D), lambda i: (0, 0)),    # weight, resident
            pl.BlockSpec((1, D), lambda i: (0, 0)),      # bias, resident
        ],
        out_specs=pl.BlockSpec((tm, D), lambda i: (i, 0)),
        compiler_params=pltpu.CompilerParams(
            dimension_semantics=("parallel",)),
    )(x2, w, b.reshape(1, D))
    return out.reshape(B, N, D)


def vit_blocks_and_head(x, bp, head_params, *, num_heads, seq_valid,
                        bt=None, vmem_limit_bytes=None):
    """x: (B, S, D) f32 (S already padded to a multiple of 16).

    Runs all transformer blocks + final norm + classifier head in ONE fused
    pallas_call with grid (B // Bt, depth): the residual stream lives in a
    (Bt, S, D) VMEM scratch carried across the depth axis, layer l+1 weights
    are DMA-prefetched while layer l computes, and only (B, num_classes)
    logits go back to HBM.
    """
    B, S, D = x.shape
    depth = bp["qkv_w"].shape[0]
    C = head_params["head_w"].shape[1]

    cap = _tpu_vmem_capacity_bytes()
    if vmem_limit_bytes is None:
        # leave headroom below physical VMEM (64 MiB on v7x, 128 MiB v5e/v6e)
        vmem_limit_bytes = min(int(cap * 0.85), 110 * 1024 * 1024)
    if bt is None:
        bt_cap = 2 if cap <= 64 * 1024 * 1024 else 4
        bt = _largest_divisor(B, bt_cap)
    assert B % bt == 0

    names = ["ln1_w", "ln1_b", "qkv_w", "qkv_b", "proj_w", "proj_b",
             "ln2_w", "ln2_b", "fc1_w", "fc1_b", "fc2_w", "fc2_b"]
    weights = [bp[n] for n in names]

    def wspec(arr):  # depth-stacked per-layer weight: stream over the l axis
        nd = arr.ndim
        return pl.BlockSpec((1,) + arr.shape[1:],
                            lambda b, l, nd=nd: (l,) + (0,) * (nd - 1))

    def rspec(arr):  # small resident parameter (final norm / head)
        nd = arr.ndim
        return pl.BlockSpec(arr.shape, lambda b, l, nd=nd: (0,) * nd)

    head_args = [
        head_params["norm_w"].reshape(1, D),
        head_params["norm_b"].reshape(1, D),
        head_params["head_w"],
        head_params["head_b"].reshape(1, C),
    ]

    kernel = functools.partial(
        _vit_blocks_kernel, num_heads=num_heads, seq_valid=seq_valid)

    out = pl.pallas_call(
        kernel,
        out_shape=jax.ShapeDtypeStruct((B // bt, bt, C), jnp.float32),
        grid=(B // bt, depth),               # depth innermost: weights stream
        in_specs=([pl.BlockSpec((bt, S, D), lambda b, l: (b, 0, 0))]
                  + [wspec(w) for w in weights]
                  + [rspec(a) for a in head_args]),
        out_specs=pl.BlockSpec((1, bt, C), lambda b, l: (b, 0, 0)),
        scratch_shapes=[pltpu.VMEM((bt, S, D), jnp.float32)],  # residual carry
        compiler_params=pltpu.CompilerParams(
            dimension_semantics=("parallel", "arbitrary"),
            vmem_limit_bytes=vmem_limit_bytes),
    )(x, *weights, *head_args)
    return out.reshape(B, C)


def xvit_rgb_branch_forward(feat_nchw, params, num_heads):
    """Forward pass of XVit_Net_RGB_branch starting from the backbone features.

    feat_nchw: (B, C_in, H, W) float32 -- output of xception fea_part2.
    returns:   (B, num_classes) float32 logits.
    """
    B, Cin, H, W = feat_nchw.shape
    # embed_conv is 1x1 -> order-preserving per-pixel linear;
    # fea.flatten(2).permute(0,2,1) == NHWC tokens, row-major over (H, W).
    tokens = jnp.transpose(feat_nchw, (0, 2, 3, 1)).reshape(B, H * W, Cin)
    fea = embed_conv_1x1(tokens, params["embed_w"], params["embed_b"])  # (B,N,D)

    D = fea.shape[-1]
    cls = jnp.broadcast_to(params["cls_token"], (B, 1, D)).astype(fea.dtype)
    x = jnp.concatenate([cls, fea], axis=1) + params["pos_embed"]  # pos_drop p=0

    S0 = x.shape[1]
    s_pad = (-S0) % 16                   # bf16 packs 16 sublanes/vreg on tokens
    if s_pad:
        # padded keys are masked inside the kernel -> cls output is exact
        x = jnp.pad(x, ((0, 0), (0, s_pad), (0, 0)))

    head_params = {k: params[k] for k in ("norm_w", "norm_b", "head_w", "head_b")}
    return vit_blocks_and_head(x, params["blocks"], head_params,
                               num_heads=num_heads, seq_valid=S0)


# ---------------------------------------------------------------------------
# Deterministic synthetic parameters (shapes follow the module's __init__)
# ---------------------------------------------------------------------------
def init_params(key, *, c_in, embed_dim, depth, num_heads, mlp_hidden,
                num_classes, num_patches):
    kit = iter(jax.random.split(key, 16))

    def nrm(shape, std=0.02):
        return jax.random.normal(next(kit), shape, jnp.float32) * std

    bf16 = jnp.bfloat16
    D, Hm = embed_dim, mlp_hidden
    hd = D // num_heads

    # Fold the softmax scale (head_dim**-0.5) into the q columns of the qkv
    # weight / bias in f32 BEFORE the bf16 cast.  When loading real torch
    # weights, apply the same one-time fold at conversion time.
    qkv_w = nrm((depth, D, 3 * D), std=0.01)
    qkv_w = qkv_w.at[:, :, :D].multiply(hd ** -0.5)
    qkv_b = jnp.zeros((depth, 1, 3 * D), jnp.float32)     # qkv_bias=True
    qkv_b = qkv_b.at[:, :, :D].multiply(hd ** -0.5)

    params = {
        # Conv2d(728->768, k=1) weight stored transposed as (C_in, D), bf16
        "embed_w": nrm((c_in, D)).astype(bf16),
        "embed_b": jnp.zeros((D,), jnp.float32),
        "cls_token": nrm((1, 1, D)),
        "pos_embed": nrm((1, num_patches + 1, D)),
        "norm_w": jnp.ones((D,), jnp.float32),
        "norm_b": jnp.zeros((D,), jnp.float32),
        "head_w": nrm((D, num_classes), std=0.01),
        "head_b": jnp.zeros((num_classes,), jnp.float32),
        # per-block weights, stacked over depth so the fused kernel can stream
        # layer l+1's weights while layer l computes (matmul weights in bf16)
        "blocks": {
            "ln1_w": jnp.ones((depth, 1, D), jnp.float32),
            "ln1_b": jnp.zeros((depth, 1, D), jnp.float32),
            "qkv_w": qkv_w.astype(bf16),
            "qkv_b": qkv_b,
            "proj_w": nrm((depth, D, D), std=0.01).astype(bf16),
            "proj_b": jnp.zeros((depth, 1, D), jnp.float32),
            "ln2_w": jnp.ones((depth, 1, D), jnp.float32),
            "ln2_b": jnp.zeros((depth, 1, D), jnp.float32),
            "fc1_w": nrm((depth, D, Hm), std=0.01).astype(bf16),
            "fc1_b": jnp.zeros((depth, 1, Hm), jnp.float32),
            "fc2_w": nrm((depth, Hm, D), std=0.01).astype(bf16),
            "fc2_b": jnp.zeros((depth, 1, D), jnp.float32),
        },
    }
    return params


# ---------------------------------------------------------------------------
if __name__ == "__main__":
    # Small, shape-consistent configuration (real model: C_in=728, D=768,
    # depth=12, heads=12, H=W=14, classes=2).
    B, C_IN, H, W = 2, 32, 4, 4
    EMBED_DIM, DEPTH, NUM_HEADS, MLP_RATIO, NUM_CLASSES = 128, 2, 4, 4.0, 2
    N_PATCHES = H * W

    key = jax.random.PRNGKey(0)
    k_x, k_p = jax.random.split(key)
    x = jax.random.normal(k_x, (B, C_IN, H, W), jnp.float32)  # NCHW backbone feat

    params = init_params(
        k_p,
        c_in=C_IN,
        embed_dim=EMBED_DIM,
        depth=DEPTH,
        num_heads=NUM_HEADS,
        mlp_hidden=int(EMBED_DIM * MLP_RATIO),
        num_classes=NUM_CLASSES,
        num_patches=N_PATCHES,
    )

    fwd = jax.jit(functools.partial(xvit_rgb_branch_forward,
                                    num_heads=NUM_HEADS))
    out = fwd(x, params)
    out = jax.block_until_ready(out)
    assert out.shape == (B, NUM_CLASSES) and out.dtype == jnp.float32
    print("KERNEL_OK")
</pallas_src>

<mosaic_0001>
module attributes {stable_mosaic.version = 11 : i64} {
  func.func @_embed_conv_kernel(%arg0: i32, %arg1: memref<32x32xbf16, #tpu.memory_space<vmem>>, %arg2: memref<32x128xbf16, #tpu.memory_space<vmem>>, %arg3: memref<1x128xf32, #tpu.memory_space<vmem>>, %arg4: memref<32x128xf32, #tpu.memory_space<vmem>>) attributes {dimension_semantics = [#tpu.dimension_semantics<parallel>], iteration_bounds = array<i64: 1>, scalar_prefetch = 0 : i64, scratch_operands = 0 : i64, tpu.core_type = #tpu.core_type<tc>, window_params = [{transform_indices = @transform_0, window_bounds = array<i64: 32, 32>}, {pipeline_mode = #tpu.pipeline_mode<synchronous>, transform_indices = @transform_1, window_bounds = array<i64: 32, 128>}, {pipeline_mode = #tpu.pipeline_mode<synchronous>, transform_indices = @transform_2, window_bounds = array<i64: 1, 128>}, {transform_indices = @transform_3, window_bounds = array<i64: 32, 128>}]} {
    %c0 = arith.constant 0 : index
    %c0_0 = arith.constant 0 : index
    %0 = vector.load %arg1[%c0, %c0_0] : memref<32x32xbf16, #tpu.memory_space<vmem>>, vector<32x32xbf16>
    %c0_1 = arith.constant 0 : index
    %c0_2 = arith.constant 0 : index
    %1 = vector.load %arg2[%c0_1, %c0_2] : memref<32x128xbf16, #tpu.memory_space<vmem>>, vector<32x128xbf16>
    %cst = arith.constant dense<0.000000e+00> : vector<32x128xf32>
    %2 = tpu.matmul %0, %1, %cst {dimension_numbers = #tpu.dot_dimension_numbers<[1], [0], [0], [1], [0, 0, 1, 1], [], []>} : vector<32x32xbf16>, vector<32x128xbf16>, vector<32x128xf32> -> vector<32x128xf32>
    %c0_3 = arith.constant 0 : index
    %c0_4 = arith.constant 0 : index
    %3 = vector.load %arg3[%c0_3, %c0_4] : memref<1x128xf32, #tpu.memory_space<vmem>>, vector<1x128xf32>
    %4 = vector.broadcast %3 : vector<1x128xf32> to vector<32x128xf32>
    %5 = arith.addf %2, %4 : vector<32x128xf32>
    %c0_5 = arith.constant 0 : index
    %c0_6 = arith.constant 0 : index
    %6 = vector.load %arg4[%c0_5, %c0_6] : memref<32x128xf32, #tpu.memory_space<vmem>>, vector<32x128xf32>
    tpu.vector_store %arg4[%c0_5, %c0_6], %5 {strides = array<i32>} : memref<32x128xf32, #tpu.memory_space<vmem>>, vector<32x128xf32>,
    return
  }
  func.func @transform_0(%arg0: i32) -> (i32, i32) {
    %c0_i32 = arith.constant 0 : i32
    %c0_i32_0 = arith.constant 0 : i32
    return %arg0, %c0_i32 : i32, i32
  }
  func.func @transform_1(%arg0: i32) -> (i32, i32) {
    %c0_i32 = arith.constant 0 : i32
    %c0_i32_0 = arith.constant 0 : i32
    %c0_i32_1 = arith.constant 0 : i32
    return %c0_i32, %c0_i32_0 : i32, i32
  }
  func.func @transform_2(%arg0: i32) -> (i32, i32) {
    %c0_i32 = arith.constant 0 : i32
    %c0_i32_0 = arith.constant 0 : i32
    %c0_i32_1 = arith.constant 0 : i32
    return %c0_i32, %c0_i32_0 : i32, i32
  }
  func.func @transform_3(%arg0: i32) -> (i32, i32) {
    %c0_i32 = arith.constant 0 : i32
    %c0_i32_0 = arith.constant 0 : i32
    return %arg0, %c0_i32 : i32, i32
  }
}

module attributes {stable_mosaic.version = 11 : i64} {
  func.func @_vit_blocks_kernel(%arg0: i32, %arg1: i32, %arg2: memref<2x32x128xf32, #tpu.memory_space<vmem>>, %arg3: memref<1x1x128xf32, #tpu.memory_space<vmem>>, %arg4: memref<1x1x128xf32, #tpu.memory_space<vmem>>, %arg5: memref<1x128x384xbf16, #tpu.memory_space<vmem>>, %arg6: memref<1x1x384xf32, #tpu.memory_space<vmem>>, %arg7: memref<1x128x128xbf16, #tpu.memory_space<vmem>>, %arg8: memref<1x1x128xf32, #tpu.memory_space<vmem>>, %arg9: memref<1x1x128xf32, #tpu.memory_space<vmem>>, %arg10: memref<1x1x128xf32, #tpu.memory_space<vmem>>, %arg11: memref<1x128x512xbf16, #tpu.memory_space<vmem>>, %arg12: memref<1x1x512xf32, #tpu.memory_space<vmem>>, %arg13: memref<1x512x128xbf16, #tpu.memory_space<vmem>>, %arg14: memref<1x1x128xf32, #tpu.memory_space<vmem>>, %arg15: memref<1x128xf32, #tpu.memory_space<vmem>>, %arg16: memref<1x128xf32, #tpu.memory_space<vmem>>, %arg17: memref<128x2xf32, #tpu.memory_space<vmem>>, %arg18: memref<1x2xf32, #tpu.memory_space<vmem>>, %arg19: memref<1x2x2xf32, #tpu.memory_space<vmem>>, %arg20: memref<2x32x128xf32, #tpu.memory_space<vmem>>) attributes {dimension_semantics = [#tpu.dimension_semantics<parallel>, #tpu.dimension_semantics<arbitrary>], iteration_bounds = array<i64: 1, 2>, scalar_prefetch = 0 : i64, scratch_operands = 1 : i64, tpu.core_type = #tpu.core_type<tc>, window_params = [{transform_indices = @transform_0, window_bounds = array<i64: 2, 32, 128>}, {transform_indices = @transform_1, window_bounds = array<i64: 1, 1, 128>}, {transform_indices = @transform_2, window_bounds = array<i64: 1, 1, 128>}, {transform_indices = @transform_3, window_bounds = array<i64: 1, 128, 384>}, {transform_indices = @transform_4, window_bounds = array<i64: 1, 1, 384>}, {transform_indices = @transform_5, window_bounds = array<i64: 1, 128, 128>}, {transform_indices = @transform_6, window_bounds = array<i64: 1, 1, 128>}, {transform_indices = @transform_7, window_bounds = array<i64: 1, 1, 128>}, {transform_indices = @transform_8, window_bounds = array<i64: 1, 1, 128>}, {transform_indices = @transform_9, window_bounds = array<i64: 1, 128, 512>}, {transform_indices = @transform_10, window_bounds = array<i64: 1, 1, 512>}, {transform_indices = @transform_11, window_bounds = array<i64: 1, 512, 128>}, {transform_indices = @transform_12, window_bounds = array<i64: 1, 1, 128>}, {pipeline_mode = #tpu.pipeline_mode<synchronous>, transform_indices = @transform_13, window_bounds = array<i64: 1, 128>}, {pipeline_mode = #tpu.pipeline_mode<synchronous>, transform_indices = @transform_14, window_bounds = array<i64: 1, 128>}, {pipeline_mode = #tpu.pipeline_mode<synchronous>, transform_indices = @transform_15, window_bounds = array<i64: 128, 2>}, {pipeline_mode = #tpu.pipeline_mode<synchronous>, transform_indices = @transform_16, window_bounds = array<i64: 1, 2>}, {transform_indices = @transform_17, window_bounds = array<i64: 1, 2, 2>}]} {
    %c0_i32 = arith.constant 0 : i32
    %0 = arith.cmpi eq, %arg1, %c0_i32 : i32
    %1 = arith.extui %0 : i1 to i32
    %c0_i32_0 = arith.constant 0 : i32
    %2 = arith.cmpi ne, %1, %c0_i32_0 : i32
    scf.if %2 {
      %c0_70 = arith.constant 0 : index
      %c0_71 = arith.constant 0 : index
      %c0_72 = arith.constant 0 : index
      %167 = vector.load %arg2[%c0_70, %c0_71, %c0_72] : memref<2x32x128xf32, #tpu.memory_space<vmem>>, vector<2x32x128xf32>
      %c0_73 = arith.constant 0 : index
      %c0_74 = arith.constant 0 : index
      %c0_75 = arith.constant 0 : index
      %168 = vector.load %arg20[%c0_73, %c0_74, %c0_75] : memref<2x32x128xf32, #tpu.memory_space<vmem>>, vector<2x32x128xf32>
      tpu.vector_store %arg20[%c0_73, %c0_74, %c0_75], %167 {strides = array<i32>} : memref<2x32x128xf32, #tpu.memory_space<vmem>>, vector<2x32x128xf32>,
    } else {
    }
    %c0 = arith.constant 0 : index
    %c0_1 = arith.constant 0 : index
    %c0_2 = arith.constant 0 : index
    %3 = vector.load %arg20[%c0, %c0_1, %c0_2] : memref<2x32x128xf32, #tpu.memory_space<vmem>>, vector<2x32x128xf32>
    %4 = vector.shape_cast %3 : vector<2x32x128xf32> to vector<64x128xf32>
    %c0_3 = arith.constant 0 : index
    %c0_4 = arith.constant 0 : index
    %c0_5 = arith.constant 0 : index
    %5 = vector.load %arg3[%c0_3, %c0_4, %c0_5] : memref<1x1x128xf32, #tpu.memory_space<vmem>>, vector<1x1x128xf32>
    %6 = vector.shape_cast %5 : vector<1x1x128xf32> to vector<1x128xf32>
    %c0_6 = arith.constant 0 : index
    %c0_7 = arith.constant 0 : index
    %c0_8 = arith.constant 0 : index
    %7 = vector.load %arg4[%c0_6, %c0_7, %c0_8] : memref<1x1x128xf32, #tpu.memory_space<vmem>>, vector<1x1x128xf32>
    %8 = vector.shape_cast %7 : vector<1x1x128xf32> to vector<1x128xf32>
    %cst = arith.constant dense<0.000000e+00> : vector<64xf32>
    %9 = vector.multi_reduction <add>, %4, %cst [1] : vector<64x128xf32> to vector<64xf32>
    %10 = vector.shape_cast %9 : vector<64xf32> to vector<64x1xf32>
    %cst_9 = arith.constant 1.280000e+02 : f32
    %11 = vector.broadcast %cst_9 : f32 to vector<64x1xf32>
    %12 = arith.divf %10, %11 : vector<64x1xf32>
    %13 = vector.broadcast %12 : vector<64x1xf32> to vector<64x128xf32>
    %14 = arith.subf %4, %13 : vector<64x128xf32>
    %15 = arith.mulf %14, %14 : vector<64x128xf32>
    %cst_10 = arith.constant dense<0.000000e+00> : vector<64xf32>
    %16 = vector.multi_reduction <add>, %15, %cst_10 [1] : vector<64x128xf32> to vector<64xf32>
    %17 = vector.shape_cast %16 : vector<64xf32> to vector<64x1xf32>
    %cst_11 = arith.constant 1.280000e+02 : f32
    %18 = vector.broadcast %cst_11 : f32 to vector<64x1xf32>
    %19 = arith.divf %17, %18 : vector<64x1xf32>
    %20 = vector.broadcast %12 : vector<64x1xf32> to vector<64x128xf32>
    %21 = arith.subf %4, %20 : vector<64x128xf32>
    %cst_12 = arith.constant 9.99999997E-7 : f32
    %22 = vector.broadcast %cst_12 : f32 to vector<64x1xf32>
    %23 = arith.addf %19, %22 : vector<64x1xf32>
    %24 = math.rsqrt %23 : vector<64x1xf32>
    %25 = vector.broadcast %24 : vector<64x1xf32> to vector<64x128xf32>
    %26 = arith.mulf %21, %25 : vector<64x128xf32>
    %27 = vector.broadcast %6 : vector<1x128xf32> to vector<64x128xf32>
    %28 = arith.mulf %26, %27 : vector<64x128xf32>
    %29 = vector.broadcast %8 : vector<1x128xf32> to vector<64x128xf32>
    %30 = arith.addf %28, %29 : vector<64x128xf32>
    %31 = arith.truncf %30 : vector<64x128xf32> to vector<64x128xbf16>
    %c0_13 = arith.constant 0 : index
    %c0_14 = arith.constant 0 : index
    %c0_15 = arith.constant 0 : index
    %32 = vector.load %arg5[%c0_13, %c0_14, %c0_15] : memref<1x128x384xbf16, #tpu.memory_space<vmem>>, vector<1x128x384xbf16>
    %33 = vector.shape_cast %32 : vector<1x128x384xbf16> to vector<128x384xbf16>
    %cst_16 = arith.constant dense<0.000000e+00> : vector<64x384xf32>
    %34 = tpu.matmul %31, %33, %cst_16 {dimension_numbers = #tpu.dot_dimension_numbers<[1], [0], [0], [1], [0, 0, 1, 1], [], []>} : vector<64x128xbf16>, vector<128x384xbf16>, vector<64x384xf32> -> vector<64x384xf32>
    %c0_17 = arith.constant 0 : index
    %c0_18 = arith.constant 0 : index
    %c0_19 = arith.constant 0 : index
    %35 = vector.load %arg6[%c0_17, %c0_18, %c0_19] : memref<1x1x384xf32, #tpu.memory_space<vmem>>, vector<1x1x384xf32>
    %36 = vector.shape_cast %35 : vector<1x1x384xf32> to vector<1x384xf32>
    %37 = vector.broadcast %36 : vector<1x384xf32> to vector<64x384xf32>
    %38 = arith.addf %34, %37 : vector<64x384xf32>
    %39 = arith.truncf %38 : vector<64x384xf32> to vector<64x384xbf16>
    %40 = vector.shape_cast %39 : vector<64x384xbf16> to vector<2x32x384xbf16>
    %41 = vector.extract_strided_slice %40 {offsets = [0, 0, 0], sizes = [1, 32, 384], strides = [1, 1, 1]} : vector<2x32x384xbf16> to vector<1x32x384xbf16>
    %42 = vector.shape_cast %41 : vector<1x32x384xbf16> to vector<32x384xbf16>
    %43 = vector.shape_cast %42 : vector<32x384xbf16> to vector<32x12x32xbf16>
    %44 = tpu.transpose %43, [1, 0, 2] : vector<32x12x32xbf16> -> vector<12x32x32xbf16>
    %45 = vector.extract_strided_slice %44 {offsets = [0, 0, 0], sizes = [4, 32, 32], strides = [1, 1, 1]} : vector<12x32x32xbf16> to vector<4x32x32xbf16>
    %46 = vector.extract_strided_slice %44 {offsets = [4, 0, 0], sizes = [4, 32, 32], strides = [1, 1, 1]} : vector<12x32x32xbf16> to vector<4x32x32xbf16>
    %47 = vector.extract_strided_slice %44 {offsets = [8, 0, 0], sizes = [4, 32, 32], strides = [1, 1, 1]} : vector<12x32x32xbf16> to vector<4x32x32xbf16>
    "tpu.trace_start"() <{level = 10 : i32, message = "hqd,hkd->hqk"}> : () -> ()
    %cst_20 = arith.constant dense<0.000000e+00> : vector<4x32x32xf32>
    %48 = tpu.matmul %45, %46, %cst_20 {dimension_numbers = #tpu.dot_dimension_numbers<[2], [2], [1], [1], [0, 0, 0, 1, 1, 1], [0], [0]>} : vector<4x32x32xbf16>, vector<4x32x32xbf16>, vector<4x32x32xf32> -> vector<4x32x32xf32>
    "tpu.trace_stop"() : () -> ()
    %49 = tpu.iota {dimensions = array<i32: 2>} : vector<1x1x32xi32>
    %c17_i32 = arith.constant 17 : i32
    %50 = vector.broadcast %c17_i32 : i32 to vector<1x1x32xi32>
    %51 = arith.cmpi slt, %49, %50 : vector<1x1x32xi32>
    %cst_21 = arith.constant -1.000000e+30 : f32
    %52 = vector.shape_cast %51 : vector<1x1x32xi1> to vector<1x1x32xi1>
    %53 = vector.broadcast %52 : vector<1x1x32xi1> to vector<4x32x32xi1>
    %54 = vector.broadcast %cst_21 : f32 to vector<4x32x32xf32>
    %55 = arith.select %53, %48, %54 : vector<4x32x32xi1>, vector<4x32x32xf32>
    %cst_22 = arith.constant dense<0xFF800000> : vector<4x32xf32>
    %56 = vector.multi_reduction <maximumf>, %55, %cst_22 [2] : vector<4x32x32xf32> to vector<4x32xf32>
    %57 = vector.shape_cast %56 : vector<4x32xf32> to vector<4x32x1xf32>
    %58 = vector.broadcast %57 : vector<4x32x1xf32> to vector<4x32x32xf32>
    %59 = arith.subf %55, %58 : vector<4x32x32xf32>
    %60 = math.exp %59 : vector<4x32x32xf32>
    %cst_23 = arith.constant dense<0.000000e+00> : vector<4x32xf32>
    %61 = vector.multi_reduction <add>, %60, %cst_23 [2] : vector<4x32x32xf32> to vector<4x32xf32>
    %62 = vector.shape_cast %61 : vector<4x32xf32> to vector<4x32x1xf32>
    %63 = tpu.reciprocal %62 {approx = true} : vector<4x32x1xf32> -> vector<4x32x1xf32>
    %64 = vector.broadcast %63 : vector<4x32x1xf32> to vector<4x32x32xf32>
    %65 = arith.mulf %60, %64 : vector<4x32x32xf32>
    %66 = arith.truncf %65 : vector<4x32x32xf32> to vector<4x32x32xbf16>
    "tpu.trace_start"() <{level = 10 : i32, message = "hqk,hkd->hqd"}> : () -> ()
    %cst_24 = arith.constant dense<0.000000e+00> : vector<4x32x32xf32>
    %67 = tpu.matmul %66, %47, %cst_24 {dimension_numbers = #tpu.dot_dimension_numbers<[2], [1], [1], [2], [0, 0, 0, 1, 1, 2], [0], [0]>} : vector<4x32x32xbf16>, vector<4x32x32xbf16>, vector<4x32x32xf32> -> vector<4x32x32xf32>
    "tpu.trace_stop"() : () -> ()
    %68 = arith.truncf %67 : vector<4x32x32xf32> to vector<4x32x32xbf16>
    %69 = tpu.transpose %68, [1, 0, 2] : vector<4x32x32xbf16> -> vector<32x4x32xbf16>
    %70 = vector.shape_cast %69 : vector<32x4x32xbf16> to vector<1x32x128xbf16>
    %71 = vector.extract_strided_slice %40 {offsets = [1, 0, 0], sizes = [1, 32, 384], strides = [1, 1, 1]} : vector<2x32x384xbf16> to vector<1x32x384xbf16>
    %72 = vector.shape_cast %71 : vector<1x32x384xbf16> to vector<32x384xbf16>
    %73 = vector.shape_cast %72 : vector<32x384xbf16> to vector<32x12x32xbf16>
    %74 = tpu.transpose %73, [1, 0, 2] : vector<32x12x32xbf16> -> vector<12x32x32xbf16>
    %75 = vector.extract_strided_slice %74 {offsets = [0, 0, 0], sizes = [4, 32, 32], strides = [1, 1, 1]} : vector<12x32x32xbf16> to vector<4x32x32xbf16>
    %76 = vector.extract_strided_slice %74 {offsets = [4, 0, 0], sizes = [4, 32, 32], strides = [1, 1, 1]} : vector<12x32x32xbf16> to vector<4x32x32xbf16>
    %77 = vector.extract_strided_slice %74 {offsets = [8, 0, 0], sizes = [4, 32, 32], strides = [1, 1, 1]} : vector<12x32x32xbf16> to vector<4x32x32xbf16>
    "tpu.trace_start"() <{level = 10 : i32, message = "hqd,hkd->hqk"}> : () -> ()
    %cst_25 = arith.constant dense<0.000000e+00> : vector<4x32x32xf32>
    %78 = tpu.matmul %75, %76, %cst_25 {dimension_numbers = #tpu.dot_dimension_numbers<[2], [2], [1], [1], [0, 0, 0, 1, 1, 1], [0], [0]>} : vector<4x32x32xbf16>, vector<4x32x32xbf16>, vector<4x32x32xf32> -> vector<4x32x32xf32>
    "tpu.trace_stop"() : () -> ()
    %79 = tpu.iota {dimensions = array<i32: 2>} : vector<1x1x32xi32>
    %c17_i32_26 = arith.constant 17 : i32
    %80 = vector.broadcast %c17_i32_26 : i32 to vector<1x1x32xi32>
    %81 = arith.cmpi slt, %79, %80 : vector<1x1x32xi32>
    %cst_27 = arith.constant -1.000000e+30 : f32
    %82 = vector.shape_cast %81 : vector<1x1x32xi1> to vector<1x1x32xi1>
    %83 = vector.broadcast %82 : vector<1x1x32xi1> to vector<4x32x32xi1>
    %84 = vector.broadcast %cst_27 : f32 to vector<4x32x32xf32>
    %85 = arith.select %83, %78, %84 : vector<4x32x32xi1>, vector<4x32x32xf32>
    %cst_28 = arith.constant dense<0xFF800000> : vector<4x32xf32>
    %86 = vector.multi_reduction <maximumf>, %85, %cst_28 [2] : vector<4x32x32xf32> to vector<4x32xf32>
    %87 = vector.shape_cast %86 : vector<4x32xf32> to vector<4x32x1xf32>
    %88 = vector.broadcast %87 : vector<4x32x1xf32> to vector<4x32x32xf32>
    %89 = arith.subf %85, %88 : vector<4x32x32xf32>
    %90 = math.exp %89 : vector<4x32x32xf32>
    %cst_29 = arith.constant dense<0.000000e+00> : vector<4x32xf32>
    %91 = vector.multi_reduction <add>, %90, %cst_29 [2] : vector<4x32x32xf32> to vector<4x32xf32>
    %92 = vector.shape_cast %91 : vector<4x32xf32> to vector<4x32x1xf32>
    %93 = tpu.reciprocal %92 {approx = true} : vector<4x32x1xf32> -> vector<4x32x1xf32>
    %94 = vector.broadcast %93 : vector<4x32x1xf32> to vector<4x32x32xf32>
    %95 = arith.mulf %90, %94 : vector<4x32x32xf32>
    %96 = arith.truncf %95 : vector<4x32x32xf32> to vector<4x32x32xbf16>
    "tpu.trace_start"() <{level = 10 : i32, message = "hqk,hkd->hqd"}> : () -> ()
    %cst_30 = arith.constant dense<0.000000e+00> : vector<4x32x32xf32>
    %97 = tpu.matmul %96, %77, %cst_30 {dimension_numbers = #tpu.dot_dimension_numbers<[2], [1], [1], [2], [0, 0, 0, 1, 1, 2], [0], [0]>} : vector<4x32x32xbf16>, vector<4x32x32xbf16>, vector<4x32x32xf32> -> vector<4x32x32xf32>
    "tpu.trace_stop"() : () -> ()
    %98 = arith.truncf %97 : vector<4x32x32xf32> to vector<4x32x32xbf16>
    %99 = tpu.transpose %98, [1, 0, 2] : vector<4x32x32xbf16> -> vector<32x4x32xbf16>
    %100 = vector.shape_cast %99 : vector<32x4x32xbf16> to vector<1x32x128xbf16>
    %101 = tpu.concatenate %70, %100 in 0 : vector<1x32x128xbf16>, vector<1x32x128xbf16> -> vector<2x32x128xbf16>
    %102 = vector.shape_cast %101 : vector<2x32x128xbf16> to vector<64x128xbf16>
    %c0_31 = arith.constant 0 : index
    %c0_32 = arith.constant 0 : index
    %c0_33 = arith.constant 0 : index
    %103 = vector.load %arg7[%c0_31, %c0_32, %c0_33] : memref<1x128x128xbf16, #tpu.memory_space<vmem>>, vector<1x128x128xbf16>
    %104 = vector.shape_cast %103 : vector<1x128x128xbf16> to vector<128x128xbf16>
    %cst_34 = arith.constant dense<0.000000e+00> : vector<64x128xf32>
    %105 = tpu.matmul %102, %104, %cst_34 {dimension_numbers = #tpu.dot_dimension_numbers<[1], [0], [0], [1], [0, 0, 1, 1], [], []>} : vector<64x128xbf16>, vector<128x128xbf16>, vector<64x128xf32> -> vector<64x128xf32>
    %c0_35 = arith.constant 0 : index
    %c0_36 = arith.constant 0 : index
    %c0_37 = arith.constant 0 : index
    %106 = vector.load %arg8[%c0_35, %c0_36, %c0_37] : memref<1x1x128xf32, #tpu.memory_space<vmem>>, vector<1x1x128xf32>
    %107 = vector.shape_cast %106 : vector<1x1x128xf32> to vector<1x128xf32>
    %108 = vector.broadcast %107 : vector<1x128xf32> to vector<64x128xf32>
    %109 = arith.addf %105, %108 : vector<64x128xf32>
    %110 = arith.addf %4, %109 : vector<64x128xf32>
    %c0_38 = arith.constant 0 : index
    %c0_39 = arith.constant 0 : index
    %c0_40 = arith.constant 0 : index
    %111 = vector.load %arg9[%c0_38, %c0_39, %c0_40] : memref<1x1x128xf32, #tpu.memory_space<vmem>>, vector<1x1x128xf32>
    %112 = vector.shape_cast %111 : vector<1x1x128xf32> to vector<1x128xf32>
    %c0_41 = arith.constant 0 : index
    %c0_42 = arith.constant 0 : index
    %c0_43 = arith.constant 0 : index
    %113 = vector.load %arg10[%c0_41, %c0_42, %c0_43] : memref<1x1x128xf32, #tpu.memory_space<vmem>>, vector<1x1x128xf32>
    %114 = vector.shape_cast %113 : vector<1x1x128xf32> to vector<1x128xf32>
    %cst_44 = arith.constant dense<0.000000e+00> : vector<64xf32>
    %115 = vector.multi_reduction <add>, %110, %cst_44 [1] : vector<64x128xf32> to vector<64xf32>
    %116 = vector.shape_cast %115 : vector<64xf32> to vector<64x1xf32>
    %cst_45 = arith.constant 1.280000e+02 : f32
    %117 = vector.broadcast %cst_45 : f32 to vector<64x1xf32>
    %118 = arith.divf %116, %117 : vector<64x1xf32>
    %119 = vector.broadcast %118 : vector<64x1xf32> to vector<64x128xf32>
    %120 = arith.subf %110, %119 : vector<64x128xf32>
    %121 = arith.mulf %120, %120 : vector<64x128xf32>
    %cst_46 = arith.constant dense<0.000000e+00> : vector<64xf32>
    %122 = vector.multi_reduction <add>, %121, %cst_46 [1] : vector<64x128xf32> to vector<64xf32>
    %123 = vector.shape_cast %122 : vector<64xf32> to vector<64x1xf32>
    %cst_47 = arith.constant 1.280000e+02 : f32
    %124 = vector.broadcast %cst_47 : f32 to vector<64x1xf32>
    %125 = arith.divf %123, %124 : vector<64x1xf32>
    %126 = vector.broadcast %118 : vector<64x1xf32> to vector<64x128xf32>
    %127 = arith.subf %110, %126 : vector<64x128xf32>
    %cst_48 = arith.constant 9.99999997E-7 : f32
    %128 = vector.broadcast %cst_48 : f32 to vector<64x1xf32>
    %129 = arith.addf %125, %128 : vector<64x1xf32>
    %130 = math.rsqrt %129 : vector<64x1xf32>
    %131 = vector.broadcast %130 : vector<64x1xf32> to vector<64x128xf32>
    %132 = arith.mulf %127, %131 : vector<64x128xf32>
    %133 = vector.broadcast %112 : vector<1x128xf32> to vector<64x128xf32>
    %134 = arith.mulf %132, %133 : vector<64x128xf32>
    %135 = vector.broadcast %114 : vector<1x128xf32> to vector<64x128xf32>
    %136 = arith.addf %134, %135 : vector<64x128xf32>
    %137 = arith.truncf %136 : vector<64x128xf32> to vector<64x128xbf16>
    %c0_49 = arith.constant 0 : index
    %c0_50 = arith.constant 0 : index
    %c0_51 = arith.constant 0 : index
    %138 = vector.load %arg11[%c0_49, %c0_50, %c0_51] : memref<1x128x512xbf16, #tpu.memory_space<vmem>>, vector<1x128x512xbf16>
    %139 = vector.shape_cast %138 : vector<1x128x512xbf16> to vector<128x512xbf16>
    %cst_52 = arith.constant dense<0.000000e+00> : vector<64x512xf32>
    %140 = tpu.matmul %137, %139, %cst_52 {dimension_numbers = #tpu.dot_dimension_numbers<[1], [0], [0], [1], [0, 0, 1, 1], [], []>} : vector<64x128xbf16>, vector<128x512xbf16>, vector<64x512xf32> -> vector<64x512xf32>
    %c0_53 = arith.constant 0 : index
    %c0_54 = arith.constant 0 : index
    %c0_55 = arith.constant 0 : index
    %141 = vector.load %arg12[%c0_53, %c0_54, %c0_55] : memref<1x1x512xf32, #tpu.memory_space<vmem>>, vector<1x1x512xf32>
    %142 = vector.shape_cast %141 : vector<1x1x512xf32> to vector<1x512xf32>
    %143 = vector.broadcast %142 : vector<1x512xf32> to vector<64x512xf32>
    %144 = arith.addf %140, %143 : vector<64x512xf32>
    %cst_56 = arith.constant 5.000000e-01 : f32
    %145 = vector.broadcast %cst_56 : f32 to vector<64x512xf32>
    %146 = arith.mulf %145, %144 : vector<64x512xf32>
    %cst_57 = arith.constant 0.707106769 : f32
    %147 = vector.broadcast %cst_57 : f32 to vector<64x512xf32>
    %148 = arith.mulf %144, %147 : vector<64x512xf32>
    %149 = math.erf %148 : vector<64x512xf32>
    %cst_58 = arith.constant 1.000000e+00 : f32
    %150 = vector.broadcast %cst_58 : f32 to vector<64x512xf32>
    %151 = arith.addf %150, %149 : vector<64x512xf32>
    %152 = arith.mulf %146, %151 : vector<64x512xf32>
    %153 = arith.truncf %152 : vector<64x512xf32> to vector<64x512xbf16>
    %c0_59 = arith.constant 0 : index
    %c0_60 = arith.constant 0 : index
    %c0_61 = arith.constant 0 : index
    %154 = vector.load %arg13[%c0_59, %c0_60, %c0_61] : memref<1x512x128xbf16, #tpu.memory_space<vmem>>, vector<1x512x128xbf16>
    %155 = vector.shape_cast %154 : vector<1x512x128xbf16> to vector<512x128xbf16>
    %cst_62 = arith.constant dense<0.000000e+00> : vector<64x128xf32>
    %156 = tpu.matmul %153, %155, %cst_62 {dimension_numbers = #tpu.dot_dimension_numbers<[1], [0], [0], [1], [0, 0, 1, 1], [], []>} : vector<64x512xbf16>, vector<512x128xbf16>, vector<64x128xf32> -> vector<64x128xf32>
    %c0_63 = arith.constant 0 : index
    %c0_64 = arith.constant 0 : index
    %c0_65 = arith.constant 0 : index
    %157 = vector.load %arg14[%c0_63, %c0_64, %c0_65] : memref<1x1x128xf32, #tpu.memory_space<vmem>>, vector<1x1x128xf32>
    %158 = vector.shape_cast %157 : vector<1x1x128xf32> to vector<1x128xf32>
    %159 = vector.broadcast %158 : vector<1x128xf32> to vector<64x128xf32>
    %160 = arith.addf %156, %159 : vector<64x128xf32>
    %161 = arith.addf %110, %160 : vector<64x128xf32>
    %162 = vector.shape_cast %161 : vector<64x128xf32> to vector<2x32x128xf32>
    %c0_66 = arith.constant 0 : index
    %c0_67 = arith.constant 0 : index
    %c0_68 = arith.constant 0 : index
    %163 = vector.load %arg20[%c0_66, %c0_67, %c0_68] : memref<2x32x128xf32, #tpu.memory_space<vmem>>, vector<2x32x128xf32>
    tpu.vector_store %arg20[%c0_66, %c0_67, %c0_68], %162 {strides = array<i32>} : memref<2x32x128xf32, #tpu.memory_space<vmem>>, vector<2x32x128xf32>,
    %c1_i32 = arith.constant 1 : i32
    %164 = arith.cmpi eq, %arg1, %c1_i32 : i32
    %165 = arith.extui %164 : i1 to i32
    %c0_i32_69 = arith.constant 0 : i32
    %166 = arith.cmpi ne, %165, %c0_i32_69 : i32
    scf.if %166 {
      %167 = vector.shape_cast %161 : vector<64x128xf32> to vector<2x32x128xf32>
      %168 = vector.extract_strided_slice %167 {offsets = [0, 0, 0], sizes = [2, 1, 128], strides = [1, 1, 1]} : vector<2x32x128xf32> to vector<2x1x128xf32>
      %169 = vector.shape_cast %168 : vector<2x1x128xf32> to vector<2x128xf32>
      %c0_70 = arith.constant 0 : index
      %c0_71 = arith.constant 0 : index
      %170 = vector.load %arg15[%c0_70, %c0_71] : memref<1x128xf32, #tpu.memory_space<vmem>>, vector<1x128xf32>
      %c0_72 = arith.constant 0 : index
      %c0_73 = arith.constant 0 : index
      %171 = vector.load %arg16[%c0_72, %c0_73] : memref<1x128xf32, #tpu.memory_space<vmem>>, vector<1x128xf32>
      %cst_74 = arith.constant dense<0.000000e+00> : vector<2xf32>
      %172 = vector.multi_reduction <add>, %169, %cst_74 [1] : vector<2x128xf32> to vector<2xf32>
      %173 = vector.shape_cast %172 : vector<2xf32> to vector<2x1xf32>
      %cst_75 = arith.constant 1.280000e+02 : f32
      %174 = vector.broadcast %cst_75 : f32 to vector<2x1xf32>
      %175 = arith.divf %173, %174 : vector<2x1xf32>
      %176 = vector.broadcast %175 : vector<2x1xf32> to vector<2x128xf32>
      %177 = arith.subf %169, %176 : vector<2x128xf32>
      %178 = arith.mulf %177, %177 : vector<2x128xf32>
      %cst_76 = arith.constant dense<0.000000e+00> : vector<2xf32>
      %179 = vector.multi_reduction <add>, %178, %cst_76 [1] : vector<2x128xf32> to vector<2xf32>
      %180 = vector.shape_cast %179 : vector<2xf32> to vector<2x1xf32>
      %cst_77 = arith.constant 1.280000e+02 : f32
      %181 = vector.broadcast %cst_77 : f32 to vector<2x1xf32>
      %182 = arith.divf %180, %181 : vector<2x1xf32>
      %183 = vector.broadcast %175 : vector<2x1xf32> to vector<2x128xf32>
      %184 = arith.subf %169, %183 : vector<2x128xf32>
      %cst_78 = arith.constant 9.99999997E-7 : f32
      %185 = vector.broadcast %cst_78 : f32 to vector<2x1xf32>
      %186 = arith.addf %182, %185 : vector<2x1xf32>
      %187 = math.rsqrt %186 : vector<2x1xf32>
      %188 = vector.broadcast %187 : vector<2x1xf32> to vector<2x128xf32>
      %189 = arith.mulf %184, %188 : vector<2x128xf32>
      %190 = vector.broadcast %170 : vector<1x128xf32> to vector<2x128xf32>
      %191 = arith.mulf %189, %190 : vector<2x128xf32>
      %192 = vector.broadcast %171 : vector<1x128xf32> to vector<2x128xf32>
      %193 = arith.addf %191, %192 : vector<2x128xf32>
      %c0_79 = arith.constant 0 : index
      %c0_80 = arith.constant 0 : index
      %194 = vector.load %arg17[%c0_79, %c0_80] : memref<128x2xf32, #tpu.memory_space<vmem>>, vector<128x2xf32>
      %cst_81 = arith.constant dense<0.000000e+00> : vector<2x2xf32>
      %195 = tpu.matmul %193, %194, %cst_81 {dimension_numbers = #tpu.dot_dimension_numbers<[1], [0], [0], [1], [0, 0, 1, 1], [], []>} : vector<2x128xf32>, vector<128x2xf32>, vector<2x2xf32> -> vector<2x2xf32>
      %c0_82 = arith.constant 0 : index
      %c0_83 = arith.constant 0 : index
      %196 = vector.load %arg18[%c0_82, %c0_83] : memref<1x2xf32, #tpu.memory_space<vmem>>, vector<1x2xf32>
      %197 = vector.broadcast %196 : vector<1x2xf32> to vector<2x2xf32>
      %198 = arith.addf %195, %197 : vector<2x2xf32>
      %c0_84 = arith.constant 0 : index
      %c0_85 = arith.constant 0 : index
      %c0_86 = arith.constant 0 : index
      %199 = vector.load %arg19[%c0_84, %c0_85, %c0_86] : memref<1x2x2xf32, #tpu.memory_space<vmem>>, vector<1x2x2xf32>
      %200 = vector.shape_cast %199 : vector<1x2x2xf32> to vector<2x2xf32>
      %201 = vector.shape_cast %198 : vector<2x2xf32> to vector<1x2x2xf32>
      tpu.vector_store %arg19[%c0_84, %c0_85, %c0_86], %201 {strides = array<i32>} : memref<1x2x2xf32, #tpu.memory_space<vmem>>, vector<1x2x2xf32>,
    } else {
    }
    return
  }
  func.func @transform_0(%arg0: i32, %arg1: i32) -> (i32, i32, i32) {
    %c0_i32 = arith.constant 0 : i32
    %c0_i32_0 = arith.constant 0 : i32
    %c0_i32_1 = arith.constant 0 : i32
    return %arg0, %c0_i32, %c0_i32_0 : i32, i32, i32
  }
  func.func @transform_1(%arg0: i32, %arg1: i32) -> (i32, i32, i32) {
    %c0_i32 = arith.constant 0 : i32
    %c0_i32_0 = arith.constant 0 : i32
    %c0_i32_1 = arith.constant 0 : i32
    return %arg1, %c0_i32, %c0_i32_0 : i32, i32, i32
  }
  func.func @transform_2(%arg0: i32, %arg1: i32) -> (i32, i32, i32) {
    %c0_i32 = arith.constant 0 : i32
    %c0_i32_0 = arith.constant 0 : i32
    %c0_i32_1 = arith.constant 0 : i32
    return %arg1, %c0_i32, %c0_i32_0 : i32, i32, i32
  }
  func.func @transform_3(%arg0: i32, %arg1: i32) -> (i32, i32, i32) {
    %c0_i32 = arith.constant 0 : i32
    %c0_i32_0 = arith.constant 0 : i32
    %c0_i32_1 = arith.constant 0 : i32
    return %arg1, %c0_i32, %c0_i32_0 : i32, i32, i32
  }
  func.func @transform_4(%arg0: i32, %arg1: i32) -> (i32, i32, i32) {
    %c0_i32 = arith.constant 0 : i32
    %c0_i32_0 = arith.constant 0 : i32
    %c0_i32_1 = arith.constant 0 : i32
    return %arg1, %c0_i32, %c0_i32_0 : i32, i32, i32
  }
  func.func @transform_5(%arg0: i32, %arg1: i32) -> (i32, i32, i32) {
    %c0_i32 = arith.constant 0 : i32
    %c0_i32_0 = arith.constant 0 : i32
    %c0_i32_1 = arith.constant 0 : i32
    return %arg1, %c0_i32, %c0_i32_0 : i32, i32, i32
  }
  func.func @transform_6(%arg0: i32, %arg1: i32) -> (i32, i32, i32) {
    %c0_i32 = arith.constant 0 : i32
    %c0_i32_0 = arith.constant 0 : i32
    %c0_i32_1 = arith.constant 0 : i32
    return %arg1, %c0_i32, %c0_i32_0 : i32, i32, i32
  }
  func.func @transform_7(%arg0: i32, %arg1: i32) -> (i32, i32, i32) {
    %c0_i32 = arith.constant 0 : i32
    %c0_i32_0 = arith.constant 0 : i32
    %c0_i32_1 = arith.constant 0 : i32
    return %arg1, %c0_i32, %c0_i32_0 : i32, i32, i32
  }
  func.func @transform_8(%arg0: i32, %arg1: i32) -> (i32, i32, i32) {
    %c0_i32 = arith.constant 0 : i32
    %c0_i32_0 = arith.constant 0 : i32
    %c0_i32_1 = arith.constant 0 : i32
    return %arg1, %c0_i32, %c0_i32_0 : i32, i32, i32
  }
  func.func @transform_9(%arg0: i32, %arg1: i32) -> (i32, i32, i32) {
    %c0_i32 = arith.constant 0 : i32
    %c0_i32_0 = arith.constant 0 : i32
    %c0_i32_1 = arith.constant 0 : i32
    return %arg1, %c0_i32, %c0_i32_0 : i32, i32, i32
  }
  func.func @transform_10(%arg0: i32, %arg1: i32) -> (i32, i32, i32) {
    %c0_i32 = arith.constant 0 : i32
    %c0_i32_0 = arith.constant 0 : i32
    %c0_i32_1 = arith.constant 0 : i32
    return %arg1, %c0_i32, %c0_i32_0 : i32, i32, i32
  }
  func.func @transform_11(%arg0: i32, %arg1: i32) -> (i32, i32, i32) {
    %c0_i32 = arith.constant 0 : i32
    %c0_i32_0 = arith.constant 0 : i32
    %c0_i32_1 = arith.constant 0 : i32
    return %arg1, %c0_i32, %c0_i32_0 : i32, i32, i32
  }
  func.func @transform_12(%arg0: i32, %arg1: i32) -> (i32, i32, i32) {
    %c0_i32 = arith.constant 0 : i32
    %c0_i32_0 = arith.constant 0 : i32
    %c0_i32_1 = arith.constant 0 : i32
    return %arg1, %c0_i32, %c0_i32_0 : i32, i32, i32
  }
  func.func @transform_13(%arg0: i32, %arg1: i32) -> (i32, i32) {
    %c0_i32 = arith.constant 0 : i32
    %c0_i32_0 = arith.constant 0 : i32
    %c0_i32_1 = arith.constant 0 : i32
    return %c0_i32, %c0_i32_0 : i32, i32
  }
  func.func @transform_14(%arg0: i32, %arg1: i32) -> (i32, i32) {
    %c0_i32 = arith.constant 0 : i32
    %c0_i32_0 = arith.constant 0 : i32
    %c0_i32_1 = arith.constant 0 : i32
    return %c0_i32, %c0_i32_0 : i32, i32
  }
  func.func @transform_15(%arg0: i32, %arg1: i32) -> (i32, i32) {
    %c0_i32 = arith.constant 0 : i32
    %c0_i32_0 = arith.constant 0 : i32
    %c0_i32_1 = arith.constant 0 : i32
    return %c0_i32, %c0_i32_0 : i32, i32
  }
  func.func @transform_16(%arg0: i32, %arg1: i32) -> (i32, i32) {
    %c0_i32 = arith.constant 0 : i32
    %c0_i32_0 = arith.constant 0 : i32
    %c0_i32_1 = arith.constant 0 : i32
    return %c0_i32, %c0_i32_0 : i32, i32
  }
  func.func @transform_17(%arg0: i32, %arg1: i32) -> (i32, i32, i32) {
    %c0_i32 = arith.constant 0 : i32
    %c0_i32_0 = arith.constant 0 : i32
    %c0_i32_1 = arith.constant 0 : i32
    return %arg0, %c0_i32, %c0_i32_0 : i32, i32, i32
  }
}

</mosaic_0001>

<llo_original>
// kernel: xvit_rgb_branch_forward.2
$region0: #{xvit_rgb_branch_forward.2}
  #allocation0 [shape = 'u32[]', space=smem, size = 0x4, offset = 0x4, fixed_abs, tag = 'smem constant byte address 0x4 - core index']
  #allocation1 [shape = 'u32[144,128]{1,0:T(1,128)}', space=vmem, size = 0x12000, scoped, tag = 'internal scratch']
  %s0 = inlined_call_operand.vmem [shape: bf16[32,32], index: 0, kind: input, shape index: {}]
  %s1 = inlined_call_operand.vmem [shape: bf16[32,128], index: 1, kind: input, shape index: {}]
  %s2 = inlined_call_operand.vmem [shape: f32[1,128], index: 2, kind: input, shape index: {}]
  %s3 = inlined_call_operand.vmem [shape: f32[32,128], index: 3, kind: output, shape index: {}]
  %s4 = sld [smem:[#allocation0]]
  $region22: #{xvit_rgb_branch_forward.2} parent=0
    _
  %s6 = ssub.s32 1, %s4
  %s7 = scalar_select 0, %s6, %s4
  // Predicated region
  $region2: #{xvit_rgb_branch_forward.2} parent=0 // pred_check
    _
  $region3: #{xvit_rgb_branch_forward.2} parent=0 // pred_check_branch
    %9 = sbr.rel (0) target = $region5
  $region4: #{xvit_rgb_branch_forward.2} parent=0 // pred_region
    _
  $region5: #{xvit_rgb_branch_forward.2} parent=0 // pred_fallthru
    _
  // Predicated region
  $region6: #{xvit_rgb_branch_forward.2} parent=0 // pred_check
    _
  $region7: #{xvit_rgb_branch_forward.2} parent=0 // pred_check_branch
    %11 = sbr.rel (0) target = $region9
  $region8: #{xvit_rgb_branch_forward.2} parent=0 // pred_region
    _
  $region9: #{xvit_rgb_branch_forward.2} parent=0 // pred_fallthru
    _
  // Predicated region
  $region10: #{xvit_rgb_branch_forward.2} parent=0 // pred_check
    _
  $region11: #{xvit_rgb_branch_forward.2} parent=0 // pred_check_branch
    %13 = sbr.rel (0) target = $region13
  $region12: #{xvit_rgb_branch_forward.2} parent=0 // pred_region
    _
  $region13: #{xvit_rgb_branch_forward.2} parent=0 // pred_fallthru
    _
  %v15 = vld [vmem:[%s0] sm:$0xf]
  %v16 = vld [vmem:[%s0 + $0x4] sm:$0xf]
  %v17 = vld [vmem:[%s0 + $0x8] sm:$0xf]
  %v18 = vld [vmem:[%s0 + $0xc] sm:$0xf]
  %v19 = vld [vmem:[%s1] sm:$0xf]
  %v20 = vld [vmem:[%s1 + $0x4] sm:$0xf]
  %v21 = vld [vmem:[%s1 + $0x8] sm:$0xf]
  %v22 = vld [vmem:[%s1 + $0xc] sm:$0xf]
  %v23 = vld [vmem:[%s2] sm:$0x1]
  %v25 = vlaneseq
  %v26 = vshrl.u32 %v25, 7
  %v27 = vsub.s32 0, %v26
  %v28 = vrot.slane %v23, %v27
  %v34 = vunpack.c.l.b16 %v15
  %v35 = vunpack.c.l.b16 %v16
  %v36 = vunpack.c.l.b16 %v17
  %v37 = vunpack.c.l.b16 %v18
  %v38 = vpack.c.b16 %v35, %v34
  %v39 = vpack.c.b16 %v37, %v36
  %v44 = vunpack.c.l.b16 %v19
  %v45 = vunpack.c.l.b16 %v20
  %v46 = vunpack.c.l.b16 %v21
  %v47 = vunpack.c.l.b16 %v22
  %v48 = vpack.c.b16 %v45, %v44
  %v49 = vpack.c.b16 %v47, %v46
  %vm52 = vcmask 261120
  %v54 = vsel %vm52, %v38, 0
  %v57 = vsel %vm52, %v39, 0
  %59 = vmatprep.subr.bf16.mxu0 0
  %60 = vmatpush1.bf16.msra.mxu0 %v48
  %61 = vmatprep.subr.bf16.mxu0 0
  %62 = vmatpush1.bf16.msra.mxu0 %v49
  %63 = vmatprep.subr.bf16.mxu0 0
  %64 = vmatpush1.bf16.msra.mxu0 0
  %65 = vmatprep.subr.bf16.mxu0 0
  %66 = vmatpush1.bf16.msra.mxu0 0
  %67 = vmatprep.subr.bf16.mxu0 0
  %68 = vmatpush1.bf16.msra.mxu0 0
  %69 = vmatprep.subr.bf16.mxu0 0
  %70 = vmatpush1.bf16.msra.mxu0 0
  %71 = vmatprep.subr.bf16.mxu0 0
  %72 = vmatpush1.bf16.msra.mxu0 0
  %73 = vmatprep.subr.bf16.mxu0 0
  %74 = vmatpush1.bf16.msra.mxu0 0
  %75 = vmatprep.subr.bf16.mxu0 0
  %76 = vmatpush1.bf16.msra.mxu0 0
  %77 = vmatprep.subr.bf16.mxu0 0
  %78 = vmatpush1.bf16.msra.mxu0 0
  %79 = vmatprep.subr.bf16.mxu0 0
  %80 = vmatpush1.bf16.msra.mxu0 0
  %81 = vmatprep.subr.bf16.mxu0 0
  %82 = vmatpush1.bf16.msra.mxu0 0
  %83 = vmatprep.subr.bf16.mxu0 0
  %84 = vmatpush1.bf16.msra.mxu0 0
  %85 = vmatprep.subr.bf16.mxu0 0
  %86 = vmatpush1.bf16.msra.mxu0 0
  %87 = vmatprep.subr.bf16.mxu0 0
  %88 = vmatpush1.bf16.msra.mxu0 0
  %89 = vmatprep.subr.bf16.mxu0 0
  %90 = vmatpush1.bf16.msra.mxu0 0
  %91 = vmatprep.mubr.bf16.mxu0 0
  %92 = vmatmul.mubr.bf16.gmra.mrb[0].mxu0 %v54
  %v93 = vpop.f32.mrb[0].mxu0
  %v94 = vadd.f32 %v28, %v93
  %v95 = vpop.f32.mrb[0].mxu0
  %v96 = vpop.f32.mrb[0].mxu0
  %v97 = vadd.f32 %v28, %v96
  %v98 = vpop.f32.mrb[0].mxu0
  %99 = vmatprep.mubr.bf16.mxu0 0
  %100 = vmatmul.mubr.bf16.gmra.mrb[0].mxu0 %v57
  %v101 = vpop.f32.mrb[0].mxu0
  %v102 = vadd.f32 %v28, %v101
  %v103 = vpop.f32.mrb[0].mxu0
  %v104 = vpop.f32.mrb[0].mxu0
  %v105 = vadd.f32 %v28, %v104
  %v106 = vpop.f32.mrb[0].mxu0
  %107 = vdwg.mxu0
  %108 = vst [vmem:[%s3] sm:$0xff] %v94
  %109 = vst [vmem:[%s3 + $0x8] sm:$0xff] %v97
  %110 = vst [vmem:[%s3 + $0x10] sm:$0xff] %v102
  %111 = vst [vmem:[%s3 + $0x18] sm:$0xff] %v105
  // Predicated region
  $region14: #{xvit_rgb_branch_forward.2} parent=0 // pred_check
    _
  $region15: #{xvit_rgb_branch_forward.2} parent=0 // pred_check_branch
    %113 = sbr.rel (0) target = $region17
  $region16: #{xvit_rgb_branch_forward.2} parent=0 // pred_region
    _
  $region17: #{xvit_rgb_branch_forward.2} parent=0 // pred_fallthru
    _
  // Predicated region
  $region18: #{xvit_rgb_branch_forward.2} parent=0 // pred_check
    _
  $region19: #{xvit_rgb_branch_forward.2} parent=0 // pred_check_branch
    %115 = sbr.rel (0) target = $region21
  $region20: #{xvit_rgb_branch_forward.2} parent=0 // pred_region
    _
  $region21: #{xvit_rgb_branch_forward.2} parent=0 // pred_fallthru
    _

// kernel: xvit_rgb_branch_forward.3
$region0: #{xvit_rgb_branch_forward.3}
  #allocation0 [shape = 'u32[]', space=smem, size = 0x4, offset = 0x4, fixed_abs, tag = 'smem constant byte address 0x4 - core index']
  #allocation1 [shape = 'u32[144,128]{1,0:T(1,128)}', space=vmem, size = 0x12000, scoped, tag = 'internal scratch']
  #allocation2 [shape = 'f32[2,32,128]{2,1,0:T(8,128)}', space=vmem, size = 0x8000, scoped, tag = 'scratch operand']
  %s0 = inlined_call_operand.vmem [shape: f32[2,32,128], index: 0, kind: input, shape index: {}]
  %s1 = inlined_call_operand.vmem [shape: f32[2,1,128], index: 1, kind: input, shape index: {}]
  %s2 = inlined_call_operand.hbm [shape: f32[2,1,128], index: 2, kind: input, shape index: {}]
  %s3 = inlined_call_operand.hbm [shape: bf16[2,128,384], index: 3, kind: input, shape index: {}]
  %s4 = inlined_call_operand.vmem [shape: f32[2,1,384], index: 4, kind: input, shape index: {}]
  %s5 = inlined_call_operand.hbm [shape: bf16[2,128,128], index: 5, kind: input, shape index: {}]
  %s6 = inlined_call_operand.vmem [shape: f32[2,1,128], index: 6, kind: input, shape index: {}]
  %s7 = inlined_call_operand.vmem [shape: f32[2,1,128], index: 7, kind: input, shape index: {}]
  %s8 = inlined_call_operand.hbm [shape: f32[2,1,128], index: 8, kind: input, shape index: {}]
  %s9 = inlined_call_operand.vmem [shape: bf16[2,128,512], index: 9, kind: input, shape index: {}]
  %s10 = inlined_call_operand.hbm [shape: f32[2,1,512], index: 10, kind: input, shape index: {}]
  %s11 = inlined_call_operand.hbm [shape: bf16[2,512,128], index: 11, kind: input, shape index: {}]
  %s12 = inlined_call_operand.hbm [shape: f32[2,1,128], index: 12, kind: input, shape index: {}]
  %s13 = inlined_call_operand.vmem [shape: f32[1,128], index: 13, kind: input, shape index: {}]
  %s14 = inlined_call_operand.vmem [shape: f32[1,128], index: 14, kind: input, shape index: {}]
  %s15 = inlined_call_operand.vmem [shape: f32[128,2], index: 15, kind: input, shape index: {}]
  %s16 = inlined_call_operand.vmem [shape: f32[1,2], index: 16, kind: input, shape index: {}]
  %s17 = inlined_call_operand.hbm [shape: f32[1,2,2], index: 17, kind: output, shape index: {}]
  %s18 = sld [smem:[#allocation0]]
  $region137: #{xvit_rgb_branch_forward.3} parent=0
    _
  %s20 = ssub.s32 1, %s18
  %s21 = scalar_select 0, %s20, %s18
  $region1: #{xvit_rgb_branch_forward.3} parent=0
    #allocation3 [shape = 'u8[1024]{0}', space=vmem, size = 0x400, scoped, tag = 'input window, operand 2']
    #allocation4 [shape = 's32[2]{0}', space=sflag, size = 0x8, scoped, tag = 'scoped memory for xvit_rgb_branch_forward.3']
    #allocation5 [shape = 's32[2]{0}', space=sflag, size = 0x8, scoped, tag = 'scoped memory for xvit_rgb_branch_forward.3']
    #allocation6 [shape = 'u8[196608]{0}', space=vmem, size = 0x30000, scoped, tag = 'input window, operand 3']
    #allocation7 [shape = 's32[2]{0}', space=sflag, size = 0x8, scoped, tag = 'scoped memory for xvit_rgb_branch_forward.3']
    #allocation8 [shape = 'u8[65536]{0}', space=vmem, size = 0x10000, scoped, tag = 'input window, operand 5']
    #allocation9 [shape = 'u8[1024]{0}', space=vmem, size = 0x400, scoped, tag = 'input window, operand 8']
    #allocation10 [shape = 's32[2]{0}', space=sflag, size = 0x8, scoped, tag = 'scoped memory for xvit_rgb_branch_forward.3']
    #allocation11 [shape = 'u8[4096]{0}', space=vmem, size = 0x1000, scoped, tag = 'input window, operand 10']
    #allocation12 [shape = 'u8[262144]{0}', space=vmem, size = 0x40000, scoped, tag = 'input window, operand 11']
    #allocation13 [shape = 's32[2]{0}', space=sflag, size = 0x8, scoped, tag = 'scoped memory for xvit_rgb_branch_forward.3']
    #allocation14 [shape = 'u8[1024]{0}', space=vmem, size = 0x400, scoped, tag = 'input window, operand 12']
    #allocation15 [shape = 'u8[1024]{0}', space=vmem, size = 0x400, scoped, tag = 'output window, operand 0, single buffered']
    %22 = vsyncpa [#allocation4], 0
    %s23 = scalar_lea.sflag [#allocation4], 1
    %24 = vsyncpa %s23, 0
    %25 = vsyncpa [#allocation7], 0
    %s26 = scalar_lea.sflag [#allocation7], 1
    %27 = vsyncpa %s26, 0
    %28 = vsyncpa [#allocation10], 0
    %s29 = scalar_lea.sflag [#allocation10], 1
    %30 = vsyncpa %s29, 0
    %31 = vsyncpa [#allocation13], 0
    %s32 = scalar_lea.sflag [#allocation13], 1
    %33 = vsyncpa %s32, 0
    %34 = vsyncpa [#allocation5], 0
    loop: start=0, step=1, limit=4
    $region2: #{xvit_rgb_branch_forward.3} parent=1 // loop_pre_header
      _
    $region3: #{xvit_rgb_branch_forward.3} parent=1 // loop_header
      %s36 = sphi 0, %s40
      %p37 = scmp.ge.s32.totalorder %s36, 4
      %s43 = sphi 0, %s55
      %s44 = sphi 0, %s51
      %s45 = sphi 0, %s43
      %s46 = sphi 0, %s44
      %s47 = sphi 0, %s45
      %s48 = sphi 0, %s46
      %s58 = sphi 0, %s60
      %s61 = sphi 0, %s58
      %s62 = sphi 0, %s61
      %s78 = sphi 0, %s62
      %s84 = sphi 0, %s86
      %s87 = sphi 0, %s84
      %s88 = sphi 0, %s87
      %s104 = sphi 0, %s88
      %s110 = sphi 0, %s112
      %s113 = sphi 0, %s110
      %s114 = sphi 0, %s113
      %s130 = sphi 0, %s114
      %s136 = sphi 0, %s138
      %s139 = sphi 0, %s136
      %s140 = sphi 0, %s139
      %s156 = sphi 0, %s140
      %s162 = sphi 0, %s164
      %s165 = sphi 0, %s162
      %s166 = sphi 0, %s165
      %s182 = sphi 0, %s166
      %s188 = sphi 0, %s190
      %s191 = sphi 0, %s188
      %s192 = sphi 0, %s191
      %s208 = sphi 0, %s192
      %s214 = sphi 0, %s216
      %s217 = sphi 0, %s214
      %s218 = sphi 0, %s217
      %s234 = sphi 0, %s218
      %s240 = sphi 0, %s242
      %s243 = sphi 0, %s240
      %s244 = sphi 0, %s243
      %s260 = sphi 0, %s244
      %s266 = sphi 0, %s268
      %s269 = sphi 0, %s266
      %s270 = sphi 0, %s269
      %s286 = sphi 0, %s270
      %s292 = sphi 0, %s294
      %s295 = sphi 0, %s292
      %s296 = sphi 0, %s295
      %s312 = sphi 0, %s296
      %s318 = sphi 0, %s320
      %s321 = sphi 0, %s318
      %s322 = sphi 0, %s321
      %s338 = sphi 0, %s322
      %s344 = sphi 0, %s346
      %s347 = sphi 0, %s344
      %s348 = sphi 0, %s347
      %s364 = sphi 0, %s348
      %s370 = sphi 0, %s372
      %s373 = sphi 0, %s370
      %s374 = sphi 0, %s373
      %s390 = sphi 0, %s374
      %s394 = sphi 0, %s394
      %s396 = sphi 0, %s394
      %s397 = sphi 0, %s396
      %s411 = sphi 0, %s397
      %s415 = sphi 0, %s415
      %s417 = sphi 0, %s415
      %s418 = sphi 0, %s417
      %s432 = sphi 0, %s418
      %s436 = sphi 0, %s436
      %s438 = sphi 0, %s436
      %s439 = sphi 0, %s438
      %s453 = sphi 0, %s439
      %s457 = sphi 0, %s457
      %s459 = sphi 0, %s457
      %s460 = sphi 0, %s459
      %s474 = sphi 0, %s460
      %s480 = sphi 0, %s482
      %s483 = sphi 0, %s480
      %s484 = sphi 0, %s483
      %s500 = sphi 0, %s484
    $region4: #{xvit_rgb_branch_forward.3} parent=1 // loop_header_branch
      %39 = sbr.rel (%p37) target = $region8
    $region5: #{xvit_rgb_branch_forward.3} parent=1 // loop_body
      %s41 = ssub.s32 %s36, 1
      %s42 = ssub.s32 %s36, 2
      %s49 = sadd.s32 1, %s44
      %p50 = scmp.ge.s32.totalorder %s49, 2
      %s51 = scalar_select %p50, 0, %s49
      %s52 = sadd.s32 1, %s43
      %s53 = scalar_select %p50, %s52, %s43
      %p54 = scmp.ge.s32.totalorder %s53, 1
      %s55 = scalar_select %p54, 0, %s53
      %s56 = ssub.s32 %s43, %s55
      %p57 = scmp.eq.s32.totalorder %s56, 0
      %s59 = sadd.s32 %s58, 1
      %s60 = scalar_select %p57, %s58, %s59
      %p63 = pneg %p57
      %p64 = scmp.eq.s32.totalorder %s36, 1
      %p65 = por %p63, %p64
      %p66 = scmp.ne.s32.totalorder %s58, %s61
      %p67 = scmp.eq.s32.totalorder %s36, 0
      %p68 = por %p66, %p67
      %p69 = scmp.ne.s32.totalorder %s58, %s61
      %p70 = scmp.eq.s32.totalorder %s41, 1
      %p71 = por %p69, %p70
      %p72 = scmp.ne.s32.totalorder %s61, %s62
      %p73 = scmp.eq.s32.totalorder %s41, 0
      %p74 = por %p72, %p73
      %p75 = scmp.ne.s32.totalorder %s61, %s62
      %p76 = scmp.eq.s32.totalorder %s42, 1
      %p77 = por %p75, %p76
      %p79 = scmp.ne.s32.totalorder %s62, %s78
      %p80 = scmp.eq.s32.totalorder %s42, 0
      %p81 = por %p79, %p80
      %s82 = ssub.s32 %s44, %s51
      %p83 = scmp.eq.s32.totalorder %s82, 0
      %s85 = sadd.s32 %s84, 1
      %s86 = scalar_select %p83, %s84, %s85
      %p89 = pneg %p83
      %p90 = scmp.eq.s32.totalorder %s36, 1
      %p91 = por %p89, %p90
      %p92 = scmp.ne.s32.totalorder %s84, %s87
      %p93 = scmp.eq.s32.totalorder %s36, 0
      %p94 = por %p92, %p93
      %p95 = scmp.ne.s32.totalorder %s84, %s87
      %p96 = scmp.eq.s32.totalorder %s41, 1
      %p97 = por %p95, %p96
      %p98 = scmp.ne.s32.totalorder %s87, %s88
      %p99 = scmp.eq.s32.totalorder %s41, 0
      %p100 = por %p98, %p99
      %p101 = scmp.ne.s32.totalorder %s87, %s88
      %p102 = scmp.eq.s32.totalorder %s42, 1
      %p103 = por %p101, %p102
      %p105 = scmp.ne.s32.totalorder %s88, %s104
      %p106 = scmp.eq.s32.totalorder %s42, 0
      %p107 = por %p105, %p106
      %s108 = ssub.s32 %s44, %s51
      %p109 = scmp.eq.s32.totalorder %s108, 0
      %s111 = sadd.s32 %s110, 1
      %s112 = scalar_select %p109, %s110, %s111
      %p115 = pneg %p109
      %p116 = scmp.eq.s32.totalorder %s36, 1
      %p117 = por %p115, %p116
      %p118 = scmp.ne.s32.totalorder %s110, %s113
      %p119 = scmp.eq.s32.totalorder %s36, 0
      %p120 = por %p118, %p119
      %p121 = scmp.ne.s32.totalorder %s110, %s113
      %p122 = scmp.eq.s32.totalorder %s41, 1
      %p123 = por %p121, %p122
      %p124 = scmp.ne.s32.totalorder %s113, %s114
      %p125 = scmp.eq.s32.totalorder %s41, 0
      %p126 = por %p124, %p125
      %p127 = scmp.ne.s32.totalorder %s113, %s114
      %p128 = scmp.eq.s32.totalorder %s42, 1
      %p129 = por %p127, %p128
      %p131 = scmp.ne.s32.totalorder %s114, %s130
      %p132 = scmp.eq.s32.totalorder %s42, 0
      %p133 = por %p131, %p132
      %s134 = ssub.s32 %s44, %s51
      %p135 = scmp.eq.s32.totalorder %s134, 0
      %s137 = sadd.s32 %s136, 1
      %s138 = scalar_select %p135, %s136, %s137
      %p141 = pneg %p135
      %p142 = scmp.eq.s32.totalorder %s36, 1
      %p143 = por %p141, %p142
      %p144 = scmp.ne.s32.totalorder %s136, %s139
      %p145 = scmp.eq.s32.totalorder %s36, 0
      %p146 = por %p144, %p145
      %p147 = scmp.ne.s32.totalorder %s136, %s139
      %p148 = scmp.eq.s32.totalorder %s41, 1
      %p149 = por %p147, %p148
      %p150 = scmp.ne.s32.totalorder %s139, %s140
      %p151 = scmp.eq.s32.totalorder %s41, 0
      %p152 = por %p150, %p151
      %p153 = scmp.ne.s32.totalorder %s139, %s140
      %p154 = scmp.eq.s32.totalorder %s42, 1
      %p155 = por %p153, %p154
      %p157 = scmp.ne.s32.totalorder %s140, %s156
      %p158 = scmp.eq.s32.totalorder %s42, 0
      %p159 = por %p157, %p158
      %s160 = ssub.s32 %s44, %s51
      %p161 = scmp.eq.s32.totalorder %s160, 0
      %s163 = sadd.s32 %s162, 1
      %s164 = scalar_select %p161, %s162, %s163
      %p167 = pneg %p161
      %p168 = scmp.eq.s32.totalorder %s36, 1
      %p169 = por %p167, %p168
      %p170 = scmp.ne.s32.totalorder %s162, %s165
      %p171 = scmp.eq.s32.totalorder %s36, 0
      %p172 = por %p170, %p171
      %p173 = scmp.ne.s32.totalorder %s162, %s165
      %p174 = scmp.eq.s32.totalorder %s41, 1
      %p175 = por %p173, %p174
      %p176 = scmp.ne.s32.totalorder %s165, %s166
      %p177 = scmp.eq.s32.totalorder %s41, 0
      %p178 = por %p176, %p177
      %p179 = scmp.ne.s32.totalorder %s165, %s166
      %p180 = scmp.eq.s32.totalorder %s42, 1
      %p181 = por %p179, %p180
      %p183 = scmp.ne.s32.totalorder %s166, %s182
      %p184 = scmp.eq.s32.totalorder %s42, 0
      %p185 = por %p183, %p184
      %s186 = ssub.s32 %s44, %s51
      %p187 = scmp.eq.s32.totalorder %s186, 0
      %s189 = sadd.s32 %s188, 1
      %s190 = scalar_select %p187, %s188, %s189
      %p193 = pneg %p187
      %p194 = scmp.eq.s32.totalorder %s36, 1
      %p195 = por %p193, %p194
      %p196 = scmp.ne.s32.totalorder %s188, %s191
      %p197 = scmp.eq.s32.totalorder %s36, 0
      %p198 = por %p196, %p197
      %p199 = scmp.ne.s32.totalorder %s188, %s191
      %p200 = scmp.eq.s32.totalorder %s41, 1
      %p201 = por %p199, %p200
      %p202 = scmp.ne.s32.totalorder %s191, %s192
      %p203 = scmp.eq.s32.totalorder %s41, 0
      %p204 = por %p202, %p203
      %p205 = scmp.ne.s32.totalorder %s191, %s192
      %p206 = scmp.eq.s32.totalorder %s42, 1
      %p207 = por %p205, %p206
      %p209 = scmp.ne.s32.totalorder %s192, %s208
      %p210 = scmp.eq.s32.totalorder %s42, 0
      %p211 = por %p209, %p210
      %s212 = ssub.s32 %s44, %s51
      %p213 = scmp.eq.s32.totalorder %s212, 0
      %s215 = sadd.s32 %s214, 1
      %s216 = scalar_select %p213, %s214, %s215
      %p219 = pneg %p213
      %p220 = scmp.eq.s32.totalorder %s36, 1
      %p221 = por %p219, %p220
      %p222 = scmp.ne.s32.totalorder %s214, %s217
      %p223 = scmp.eq.s32.totalorder %s36, 0
      %p224 = por %p222, %p223
      %p225 = scmp.ne.s32.totalorder %s214, %s217
      %p226 = scmp.eq.s32.totalorder %s41, 1
      %p227 = por %p225, %p226
      %p228 = scmp.ne.s32.totalorder %s217, %s218
      %p229 = scmp.eq.s32.totalorder %s41, 0
      %p230 = por %p228, %p229
      %p231 = scmp.ne.s32.totalorder %s217, %s218
      %p232 = scmp.eq.s32.totalorder %s42, 1
      %p233 = por %p231, %p232
      %p235 = scmp.ne.s32.totalorder %s218, %s234
      %p236 = scmp.eq.s32.totalorder %s42, 0
      %p237 = por %p235, %p236
      %s238 = ssub.s32 %s44, %s51
      %p239 = scmp.eq.s32.totalorder %s238, 0
      %s241 = sadd.s32 %s240, 1
      %s242 = scalar_select %p239, %s240, %s241
      %p245 = pneg %p239
      %p246 = scmp.eq.s32.totalorder %s36, 1
      %p247 = por %p245, %p246
      %p248 = scmp.ne.s32.totalorder %s240, %s243
      %p249 = scmp.eq.s32.totalorder %s36, 0
      %p250 = por %p248, %p249
      %p251 = scmp.ne.s32.totalorder %s240, %s243
      %p252 = scmp.eq.s32.totalorder %s41, 1
      %p253 = por %p251, %p252
      %p254 = scmp.ne.s32.totalorder %s243, %s244
      %p255 = scmp.eq.s32.totalorder %s41, 0
      %p256 = por %p254, %p255
      %p257 = scmp.ne.s32.totalorder %s243, %s244
      %p258 = scmp.eq.s32.totalorder %s42, 1
      %p259 = por %p257, %p258
      %p261 = scmp.ne.s32.totalorder %s244, %s260
      %p262 = scmp.eq.s32.totalorder %s42, 0
      %p263 = por %p261, %p262
      %s264 = ssub.s32 %s44, %s51
      %p265 = scmp.eq.s32.totalorder %s264, 0
      %s267 = sadd.s32 %s266, 1
      %s268 = scalar_select %p265, %s266, %s267
      %p271 = pneg %p265
      %p272 = scmp.eq.s32.totalorder %s36, 1
      %p273 = por %p271, %p272
      %p274 = scmp.ne.s32.totalorder %s266, %s269
      %p275 = scmp.eq.s32.totalorder %s36, 0
      %p276 = por %p274, %p275
      %p277 = scmp.ne.s32.totalorder %s266, %s269
      %p278 = scmp.eq.s32.totalorder %s41, 1
      %p279 = por %p277, %p278
      %p280 = scmp.ne.s32.totalorder %s269, %s270
      %p281 = scmp.eq.s32.totalorder %s41, 0
      %p282 = por %p280, %p281
      %p283 = scmp.ne.s32.totalorder %s269, %s270
      %p284 = scmp.eq.s32.totalorder %s42, 1
      %p285 = por %p283, %p284
      %p287 = scmp.ne.s32.totalorder %s270, %s286
      %p288 = scmp.eq.s32.totalorder %s42, 0
      %p289 = por %p287, %p288
      %s290 = ssub.s32 %s44, %s51
      %p291 = scmp.eq.s32.totalorder %s290, 0
      %s293 = sadd.s32 %s292, 1
      %s294 = scalar_select %p291, %s292, %s293
      %p297 = pneg %p291
      %p298 = scmp.eq.s32.totalorder %s36, 1
      %p299 = por %p297, %p298
      %p300 = scmp.ne.s32.totalorder %s292, %s295
      %p301 = scmp.eq.s32.totalorder %s36, 0
      %p302 = por %p300, %p301
      %p303 = scmp.ne.s32.totalorder %s292, %s295
      %p304 = scmp.eq.s32.totalorder %s41, 1
      %p305 = por %p303, %p304
      %p306 = scmp.ne.s32.totalorder %s295, %s296
      %p307 = scmp.eq.s32.totalorder %s41, 0
      %p308 = por %p306, %p307
      %p309 = scmp.ne.s32.totalorder %s295, %s296
      %p310 = scmp.eq.s32.totalorder %s42, 1
      %p311 = por %p309, %p310
      %p313 = scmp.ne.s32.totalorder %s296, %s312
      %p314 = scmp.eq.s32.totalorder %s42, 0
      %p315 = por %p313, %p314
      %s316 = ssub.s32 %s44, %s51
      %p317 = scmp.eq.s32.totalorder %s316, 0
      %s319 = sadd.s32 %s318, 1
      %s320 = scalar_select %p317, %s318, %s319
      %p323 = pneg %p317
      %p324 = scmp.eq.s32.totalorder %s36, 1
      %p325 = por %p323, %p324
      %p326 = scmp.ne.s32.totalorder %s318, %s321
      %p327 = scmp.eq.s32.totalorder %s36, 0
      %p328 = por %p326, %p327
      %p329 = scmp.ne.s32.totalorder %s318, %s321
      %p330 = scmp.eq.s32.totalorder %s41, 1
      %p331 = por %p329, %p330
      %p332 = scmp.ne.s32.totalorder %s321, %s322
      %p333 = scmp.eq.s32.totalorder %s41, 0
      %p334 = por %p332, %p333
      %p335 = scmp.ne.s32.totalorder %s321, %s322
      %p336 = scmp.eq.s32.totalorder %s42, 1
      %p337 = por %p335, %p336
      %p339 = scmp.ne.s32.totalorder %s322, %s338
      %p340 = scmp.eq.s32.totalorder %s42, 0
      %p341 = por %p339, %p340
      %s342 = ssub.s32 %s44, %s51
      %p343 = scmp.eq.s32.totalorder %s342, 0
      %s345 = sadd.s32 %s344, 1
      %s346 = scalar_select %p343, %s344, %s345
      %p349 = pneg %p343
      %p350 = scmp.eq.s32.totalorder %s36, 1
      %p351 = por %p349, %p350
      %p352 = scmp.ne.s32.totalorder %s344, %s347
      %p353 = scmp.eq.s32.totalorder %s36, 0
      %p354 = por %p352, %p353
      %p355 = scmp.ne.s32.totalorder %s344, %s347
      %p356 = scmp.eq.s32.totalorder %s41, 1
      %p357 = por %p355, %p356
      %p358 = scmp.ne.s32.totalorder %s347, %s348
      %p359 = scmp.eq.s32.totalorder %s41, 0
      %p360 = por %p358, %p359
      %p361 = scmp.ne.s32.totalorder %s347, %s348
      %p362 = scmp.eq.s32.totalorder %s42, 1
      %p363 = por %p361, %p362
      %p365 = scmp.ne.s32.totalorder %s348, %s364
      %p366 = scmp.eq.s32.totalorder %s42, 0
      %p367 = por %p365, %p366
      %s368 = ssub.s32 %s44, %s51
      %p369 = scmp.eq.s32.totalorder %s368, 0
      %s371 = sadd.s32 %s370, 1
      %s372 = scalar_select %p369, %s370, %s371
      %p375 = pneg %p369
      %p376 = scmp.eq.s32.totalorder %s36, 1
      %p377 = por %p375, %p376
      %p378 = scmp.ne.s32.totalorder %s370, %s373
      %p379 = scmp.eq.s32.totalorder %s36, 0
      %p380 = por %p378, %p379
      %p381 = scmp.ne.s32.totalorder %s370, %s373
      %p382 = scmp.eq.s32.totalorder %s41, 1
      %p383 = por %p381, %p382
      %p384 = scmp.ne.s32.totalorder %s373, %s374
      %p385 = scmp.eq.s32.totalorder %s41, 0
      %p386 = por %p384, %p385
      %p387 = scmp.ne.s32.totalorder %s373, %s374
      %p388 = scmp.eq.s32.totalorder %s42, 1
      %p389 = por %p387, %p388
      %p391 = scmp.ne.s32.totalorder %s374, %s390
      %p392 = scmp.eq.s32.totalorder %s42, 0
      %p393 = por %p391, %p392
      %s395 = sadd.s32 %s394, 1
      %p398 = scmp.eq.s32.totalorder %s36, 1
      %p399 = scmp.ne.s32.totalorder %s394, %s396
      %p400 = scmp.eq.s32.totalorder %s36, 0
      %p401 = por %p399, %p400
      %p402 = scmp.ne.s32.totalorder %s394, %s396
      %p403 = scmp.eq.s32.totalorder %s41, 1
      %p404 = por %p402, %p403
      %p405 = scmp.ne.s32.totalorder %s396, %s397
      %p406 = scmp.eq.s32.totalorder %s41, 0
      %p407 = por %p405, %p406
      %p408 = scmp.ne.s32.totalorder %s396, %s397
      %p409 = scmp.eq.s32.totalorder %s42, 1
      %p410 = por %p408, %p409
      %p412 = scmp.ne.s32.totalorder %s397, %s411
      %p413 = scmp.eq.s32.totalorder %s42, 0
      %p414 = por %p412, %p413
      %s416 = sadd.s32 %s415, 1
      %p419 = scmp.eq.s32.totalorder %s36, 1
      %p420 = scmp.ne.s32.totalorder %s415, %s417
      %p421 = scmp.eq.s32.totalorder %s36, 0
      %p422 = por %p420, %p421
      %p423 = scmp.ne.s32.totalorder %s415, %s417
      %p424 = scmp.eq.s32.totalorder %s41, 1
      %p425 = por %p423, %p424
      %p426 = scmp.ne.s32.totalorder %s417, %s418
      %p427 = scmp.eq.s32.totalorder %s41, 0
      %p428 = por %p426, %p427
      %p429 = scmp.ne.s32.totalorder %s417, %s418
      %p430 = scmp.eq.s32.totalorder %s42, 1
      %p431 = por %p429, %p430
      %p433 = scmp.ne.s32.totalorder %s418, %s432
      %p434 = scmp.eq.s32.totalorder %s42, 0
      %p435 = por %p433, %p434
      %s437 = sadd.s32 %s436, 1
      %p440 = scmp.eq.s32.totalorder %s36, 1
      %p441 = scmp.ne.s32.totalorder %s436, %s438
      %p442 = scmp.eq.s32.totalorder %s36, 0
      %p443 = por %p441, %p442
      %p444 = scmp.ne.s32.totalorder %s436, %s438
      %p445 = scmp.eq.s32.totalorder %s41, 1
      %p446 = por %p444, %p445
      %p447 = scmp.ne.s32.totalorder %s438, %s439
      %p448 = scmp.eq.s32.totalorder %s41, 0
      %p449 = por %p447, %p448
      %p450 = scmp.ne.s32.totalorder %s438, %s439
      %p451 = scmp.eq.s32.totalorder %s42, 1
      %p452 = por %p450, %p451
      %p454 = scmp.ne.s32.totalorder %s439, %s453
      %p455 = scmp.eq.s32.totalorder %s42, 0
      %p456 = por %p454, %p455
      %s458 = sadd.s32 %s457, 1
      %p461 = scmp.eq.s32.totalorder %s36, 1
      %p462 = scmp.ne.s32.totalorder %s457, %s459
      %p463 = scmp.eq.s32.totalorder %s36, 0
      %p464 = por %p462, %p463
      %p465 = scmp.ne.s32.totalorder %s457, %s459
      %p466 = scmp.eq.s32.totalorder %s41, 1
      %p467 = por %p465, %p466
      %p468 = scmp.ne.s32.totalorder %s459, %s460
      %p469 = scmp.eq.s32.totalorder %s41, 0
      %p470 = por %p468, %p469
      %p471 = scmp.ne.s32.totalorder %s459, %s460
      %p472 = scmp.eq.s32.totalorder %s42, 1
      %p473 = por %p471, %p472
      %p475 = scmp.ne.s32.totalorder %s460, %s474
      %p476 = scmp.eq.s32.totalorder %s42, 0
      %p477 = por %p475, %p476
      %s478 = ssub.s32 %s43, %s55
      %p479 = scmp.eq.s32.totalorder %s478, 0
      %s481 = sadd.s32 %s480, 1
      %s482 = scalar_select %p479, %s480, %s481
      %p485 = pneg %p479
      %p486 = scmp.eq.s32.totalorder %s36, 1
      %p487 = por %p485, %p486
      %p488 = scmp.ne.s32.totalorder %s480, %s483
      %p489 = scmp.eq.s32.totalorder %s36, 0
      %p490 = por %p488, %p489
      %p491 = scmp.ne.s32.totalorder %s480, %s483
      %p492 = scmp.eq.s32.totalorder %s41, 1
      %p493 = por %p491, %p492
      %p494 = scmp.ne.s32.totalorder %s483, %s484
      %p495 = scmp.eq.s32.totalorder %s41, 0
      %p496 = por %p494, %p495
      %p497 = scmp.ne.s32.totalorder %s483, %s484
      %p498 = scmp.eq.s32.totalorder %s42, 1
      %p499 = por %p497, %p498
      %p501 = scmp.ne.s32.totalorder %s484, %s500
      %p502 = scmp.eq.s32.totalorder %s42, 0
      %p503 = por %p501, %p502
      %p504 = scmp.le.s32.totalorder 1, %s36
      %p505 = scmp.lt.s32.totalorder %s36, 3
      %p506 = pnand %p504, %p505
      %p507 = pneg %p506
      // Predicated region
      $region9: #{xvit_rgb_branch_forward.3} parent=5 // pred_check
        _
      $region10: #{xvit_rgb_branch_forward.3} parent=5 // pred_check_branch
        %509 = sbr.rel (%p506) target = $region12
      $region11: #{xvit_rgb_branch_forward.3} parent=5 // pred_region
        %s510 = ssub.s32 %s36, 1
        // Predicated region
        $region13: #{xvit_rgb_branch_forward.3} parent=11 // pred_check
          %p511 = pneg %p74
        $region14: #{xvit_rgb_branch_forward.3} parent=11 // pred_check_branch
          %513 = sbr.rel (%p511) target = $region16
        $region15: #{xvit_rgb_branch_forward.3} parent=11 // pred_region
          %s514 = smul.u32 2, %s45
          %p515 = scmp.lt.s32.totalorder %s514, 1
          %s516 = scalar_select %p515, %s514, 1
          %s517 = smul.addr %s516, 4
          %s518 = smul.addr %s517, 8
          %s519 = scalar_lea.vmem %s0, %s518
          %s520 = smul.u32 2, %s45
        $region16: #{xvit_rgb_branch_forward.3} parent=11 // pred_fallthru
          _
        // Predicated region
        $region17: #{xvit_rgb_branch_forward.3} parent=11 // pred_check
          %p521 = pneg %p407
        $region18: #{xvit_rgb_branch_forward.3} parent=11 // pred_check_branch
          %523 = sbr.rel (%p521) target = $region20
        $region19: #{xvit_rgb_branch_forward.3} parent=11 // pred_region
          _
        $region20: #{xvit_rgb_branch_forward.3} parent=11 // pred_fallthru
          _
        // Predicated region
        $region21: #{xvit_rgb_branch_forward.3} parent=11 // pred_check
          %p524 = pneg %p428
        $region22: #{xvit_rgb_branch_forward.3} parent=11 // pred_check_branch
          %526 = sbr.rel (%p524) target = $region24
        $region23: #{xvit_rgb_branch_forward.3} parent=11 // pred_region
          _
        $region24: #{xvit_rgb_branch_forward.3} parent=11 // pred_fallthru
          _
        // Predicated region
        $region25: #{xvit_rgb_branch_forward.3} parent=11 // pred_check
          %p527 = pneg %p449
        $region26: #{xvit_rgb_branch_forward.3} parent=11 // pred_check_branch
          %529 = sbr.rel (%p527) target = $region28
        $region27: #{xvit_rgb_branch_forward.3} parent=11 // pred_region
          _
        $region28: #{xvit_rgb_branch_forward.3} parent=11 // pred_fallthru
          _
        // Predicated region
        $region29: #{xvit_rgb_branch_forward.3} parent=11 // pred_check
          %p530 = pneg %p470
        $region30: #{xvit_rgb_branch_forward.3} parent=11 // pred_check_branch
          %532 = sbr.rel (%p530) target = $region32
        $region31: #{xvit_rgb_branch_forward.3} parent=11 // pred_region
          _
        $region32: #{xvit_rgb_branch_forward.3} parent=11 // pred_fallthru
          _
      $region12: #{xvit_rgb_branch_forward.3} parent=5 // pred_fallthru
        _
      %p533 = scmp.lt.s32.totalorder %s36, 2
      // Predicated region
      $region33: #{xvit_rgb_branch_forward.3} parent=5 // pred_check
        %p534 = pneg %p533
      $region34: #{xvit_rgb_branch_forward.3} parent=5 // pred_check_branch
        %536 = sbr.rel (%p534) target = $region36
      $region35: #{xvit_rgb_branch_forward.3} parent=5 // pred_region
        // Predicated region
        $region37: #{xvit_rgb_branch_forward.3} parent=35 // pred_check
          %p537 = pneg %p94
        $region38: #{xvit_rgb_branch_forward.3} parent=35 // pred_check_branch
          %539 = sbr.rel (%p537) target = $region40
        $region39: #{xvit_rgb_branch_forward.3} parent=35 // pred_region
          %p540 = scmp.lt.s32.totalorder %s44, 1
          %s541 = scalar_select %p540, %s44, 1
          %s542 = scalar_lea.vmem %s1, %s541
        $region40: #{xvit_rgb_branch_forward.3} parent=35 // pred_fallthru
          _
        // Predicated region
        $region41: #{xvit_rgb_branch_forward.3} parent=35 // pred_check
          %p543 = pneg %p120
        $region42: #{xvit_rgb_branch_forward.3} parent=35 // pred_check_branch
          %545 = sbr.rel (%p543) target = $region44
        $region43: #{xvit_rgb_branch_forward.3} parent=35 // pred_region
          %s546 = sand.u32 %s110, 1
          %s547 = scalar_lea.sflag [#allocation4], %s546
          %s548 = sand.u32 %s110, 1
          %s549 = scalar_lea.vmem [#allocation3], %s548
          %s551 = ssub.s32 16, 16
          %552 = vsyncadd %s547, %s551
          %s553 = smul.addr %s44, 16
          %s554 = scalar_lea.hbm %s2, %s553
          %s556 = sshll.u32 %s549, 4
          %s557 = int_to_ptr.vmem [resolvable:$true] %s556
          %559 = dma.hbm_to_vmem [thread:$0]  %s554, 16, %s557, %s547
        $region44: #{xvit_rgb_branch_forward.3} parent=35 // pred_fallthru
          _
        // Predicated region
        $region45: #{xvit_rgb_branch_forward.3} parent=35 // pred_check
          %p560 = pneg %p146
        $region46: #{xvit_rgb_branch_forward.3} parent=35 // pred_check_branch
          %562 = sbr.rel (%p560) target = $region48
        $region47: #{xvit_rgb_branch_forward.3} parent=35 // pred_region
          %s563 = sand.u32 %s36, 1
          %s564 = scalar_lea.sflag [#allocation7], %s563
          %s565 = sand.u32 %s136, 1
          %s566 = smul.addr %s565, 192
          %s567 = scalar_lea.vmem [#allocation6], %s566
          %s569 = ssub.s32 3072, 3072
          %570 = vsyncadd %s564, %s569
          %s571 = smul.addr %s44, 48
          %s572 = smul.addr %s571, 64
          %s573 = scalar_lea.hbm %s3, %s572
          %s574 = sshll.u32 %s567, 4
          %s575 = int_to_ptr.vmem [resolvable:$true] %s574
          %580 = dma.hbm_to_vmem [thread:$0]  %s573, 3072, %s575, %s564, 192, 192, 12
        $region48: #{xvit_rgb_branch_forward.3} parent=35 // pred_fallthru
          _
        // Predicated region
        $region49: #{xvit_rgb_branch_forward.3} parent=35 // pred_check
          %p581 = pneg %p172
        $region50: #{xvit_rgb_branch_forward.3} parent=35 // pred_check_branch
          %583 = sbr.rel (%p581) target = $region52
        $region51: #{xvit_rgb_branch_forward.3} parent=35 // pred_region
          %p584 = scmp.lt.s32.totalorder %s44, 1
          %s585 = scalar_select %p584, %s44, 1
          %s586 = smul.addr %s585, 3
          %s587 = scalar_lea.vmem %s4, %s586
        $region52: #{xvit_rgb_branch_forward.3} parent=35 // pred_fallthru
          _
        // Predicated region
        $region53: #{xvit_rgb_branch_forward.3} parent=35 // pred_check
          %p588 = pneg %p198
        $region54: #{xvit_rgb_branch_forward.3} parent=35 // pred_check_branch
          %590 = sbr.rel (%p588) target = $region56
        $region55: #{xvit_rgb_branch_forward.3} parent=35 // pred_region
          %s591 = sand.u32 %s36, 1
          %s592 = scalar_lea.sflag [#allocation7], %s591
          %s593 = sand.u32 %s188, 1
          %s594 = smul.addr %s593, 64
          %s595 = scalar_lea.vmem [#allocation8], %s594
          %s597 = ssub.s32 1024, 1024
          %598 = vsyncadd %s592, %s597
          %s599 = smul.addr %s44, 16
          %s600 = smul.addr %s599, 64
          %s601 = scalar_lea.hbm %s5, %s600
          %s602 = sshll.u32 %s595, 4
          %s603 = int_to_ptr.vmem [resolvable:$true] %s602
          %608 = dma.hbm_to_vmem [thread:$0]  %s601, 1024, %s603, %s592, 64, 64, 4
        $region56: #{xvit_rgb_branch_forward.3} parent=35 // pred_fallthru
          _
        // Predicated region
        $region57: #{xvit_rgb_branch_forward.3} parent=35 // pred_check
          %p609 = pneg %p224
        $region58: #{xvit_rgb_branch_forward.3} parent=35 // pred_check_branch
          %611 = sbr.rel (%p609) target = $region60
        $region59: #{xvit_rgb_branch_forward.3} parent=35 // pred_region
          %p612 = scmp.lt.s32.totalorder %s44, 1
          %s613 = scalar_select %p612, %s44, 1
          %s614 = scalar_lea.vmem %s6, %s613
        $region60: #{xvit_rgb_branch_forward.3} parent=35 // pred_fallthru
          _
        // Predicated region
        $region61: #{xvit_rgb_branch_forward.3} parent=35 // pred_check
          %p615 = pneg %p250
        $region62: #{xvit_rgb_branch_forward.3} parent=35 // pred_check_branch
          %617 = sbr.rel (%p615) target = $region64
        $region63: #{xvit_rgb_branch_forward.3} parent=35 // pred_region
          %p618 = scmp.lt.s32.totalorder %s44, 1
          %s619 = scalar_select %p618, %s44, 1
          %s620 = scalar_lea.vmem %s7, %s619
        $region64: #{xvit_rgb_branch_forward.3} parent=35 // pred_fallthru
          _
        // Predicated region
        $region65: #{xvit_rgb_branch_forward.3} parent=35 // pred_check
          %p621 = pneg %p276
        $region66: #{xvit_rgb_branch_forward.3} parent=35 // pred_check_branch
          %623 = sbr.rel (%p621) target = $region68
        $region67: #{xvit_rgb_branch_forward.3} parent=35 // pred_region
          %s624 = sand.u32 %s36, 1
          %s625 = scalar_lea.sflag [#allocation10], %s624
          %s626 = sand.u32 %s266, 1
          %s627 = scalar_lea.vmem [#allocation9], %s626
          %s629 = ssub.s32 16, 16
          %630 = vsyncadd %s625, %s629
          %s631 = smul.addr %s44, 16
          %s632 = scalar_lea.hbm %s8, %s631
          %s634 = sshll.u32 %s627, 4
          %s635 = int_to_ptr.vmem [resolvable:$true] %s634
          %637 = dma.hbm_to_vmem [thread:$0]  %s632, 16, %s635, %s625
        $region68: #{xvit_rgb_branch_forward.3} parent=35 // pred_fallthru
          _
        // Predicated region
        $region69: #{xvit_rgb_branch_forward.3} parent=35 // pred_check
          %p638 = pneg %p302
        $region70: #{xvit_rgb_branch_forward.3} parent=35 // pred_check_branch
          %640 = sbr.rel (%p638) target = $region72
        $region71: #{xvit_rgb_branch_forward.3} parent=35 // pred_region
          %p641 = scmp.lt.s32.totalorder %s44, 1
          %s642 = scalar_select %p641, %s44, 1
          %s643 = smul.addr %s642, 64
          %s644 = smul.addr %s643, 4
          %s645 = scalar_lea.vmem %s9, %s644
        $region72: #{xvit_rgb_branch_forward.3} parent=35 // pred_fallthru
          _
        // Predicated region
        $region73: #{xvit_rgb_branch_forward.3} parent=35 // pred_check
          %p646 = pneg %p328
        $region74: #{xvit_rgb_branch_forward.3} parent=35 // pred_check_branch
          %648 = sbr.rel (%p646) target = $region76
        $region75: #{xvit_rgb_branch_forward.3} parent=35 // pred_region
          %s649 = sand.u32 %s36, 1
          %s650 = scalar_lea.sflag [#allocation10], %s649
          %s651 = sand.u32 %s318, 1
          %s652 = smul.addr %s651, 4
          %s653 = scalar_lea.vmem [#allocation11], %s652
          %s655 = ssub.s32 64, 64
          %656 = vsyncadd %s650, %s655
          %s657 = smul.addr %s44, 4
          %s658 = smul.addr %s657, 16
          %s659 = scalar_lea.hbm %s10, %s658
          %s661 = sshll.u32 %s653, 4
          %s662 = int_to_ptr.vmem [resolvable:$true] %s661
          %664 = dma.hbm_to_vmem [thread:$0]  %s659, 64, %s662, %s650
        $region76: #{xvit_rgb_branch_forward.3} parent=35 // pred_fallthru
          _
        // Predicated region
        $region77: #{xvit_rgb_branch_forward.3} parent=35 // pred_check
          %p665 = pneg %p354
        $region78: #{xvit_rgb_branch_forward.3} parent=35 // pred_check_branch
          %667 = sbr.rel (%p665) target = $region80
        $region79: #{xvit_rgb_branch_forward.3} parent=35 // pred_region
          %s668 = sand.u32 %s36, 1
          %s669 = scalar_lea.sflag [#allocation13], %s668
          %s670 = sand.u32 %s344, 1
          %s671 = smul.addr %s670, 256
          %s672 = scalar_lea.vmem [#allocation12], %s671
          %s674 = ssub.s32 4096, 4096
          %675 = vsyncadd %s669, %s674
          %s676 = smul.addr %s44, 64
          %s677 = smul.addr %s676, 64
          %s678 = scalar_lea.hbm %s11, %s677
          %s679 = sshll.u32 %s672, 4
          %s680 = int_to_ptr.vmem [resolvable:$true] %s679
          %685 = dma.hbm_to_vmem [thread:$0]  %s678, 4096, %s680, %s669, 64, 64, 4
        $region80: #{xvit_rgb_branch_forward.3} parent=35 // pred_fallthru
          _
        // Predicated region
        $region81: #{xvit_rgb_branch_forward.3} parent=35 // pred_check
          %p686 = pneg %p380
        $region82: #{xvit_rgb_branch_forward.3} parent=35 // pred_check_branch
          %688 = sbr.rel (%p686) target = $region84
        $region83: #{xvit_rgb_branch_forward.3} parent=35 // pred_region
          %s689 = sand.u32 %s36, 1
          %s690 = scalar_lea.sflag [#allocation13], %s689
          %s691 = sand.u32 %s370, 1
          %s692 = scalar_lea.vmem [#allocation14], %s691
          %s694 = ssub.s32 16, 16
          %695 = vsyncadd %s690, %s694
          %s696 = smul.addr %s44, 16
          %s697 = scalar_lea.hbm %s12, %s696
          %s699 = sshll.u32 %s692, 4
          %s700 = int_to_ptr.vmem [resolvable:$true] %s699
          %702 = dma.hbm_to_vmem [thread:$0]  %s697, 16, %s700, %s690
        $region84: #{xvit_rgb_branch_forward.3} parent=35 // pred_fallthru
          _
      $region36: #{xvit_rgb_branch_forward.3} parent=5 // pred_fallthru
        _
      %p703 = scmp.le.s32.totalorder 1, %s36
      %p704 = scmp.lt.s32.totalorder %s36, 3
      %p705 = pnand %p703, %p704
      %p706 = pneg %p705
      // Predicated region
      $region85: #{xvit_rgb_branch_forward.3} parent=5 // pred_check
        _
      $region86: #{xvit_rgb_branch_forward.3} parent=5 // pred_check_branch
        %708 = sbr.rel (%p705) target = $region88
      $region87: #{xvit_rgb_branch_forward.3} parent=5 // pred_region
        %s709 = ssub.s32 %s36, 1
        %s710 = sand.u32 %s113, 1
        %s711 = scalar_lea.sflag [#allocation4], %s710
        %s712 = sand.u32 %s113, 1
        %s713 = scalar_lea.vmem [#allocation3], %s712
        // Predicated region
        $region89: #{xvit_rgb_branch_forward.3} parent=87 // pred_check
          %p714 = pneg %p126
        $region90: #{xvit_rgb_branch_forward.3} parent=87 // pred_check_branch
          %716 = sbr.rel (%p714) target = $region92
        $region91: #{xvit_rgb_branch_forward.3} parent=87 // pred_region
          %717 = dma.done %s711, 16
        $region92: #{xvit_rgb_branch_forward.3} parent=87 // pred_fallthru
          _
        %s718 = sand.u32 %s41, 1
        %s719 = scalar_lea.sflag [#allocation7], %s718
        %s720 = sand.u32 %s139, 1
        %s721 = smul.addr %s720, 192
        %s722 = scalar_lea.vmem [#allocation6], %s721
        // Predicated region
        $region93: #{xvit_rgb_branch_forward.3} parent=87 // pred_check
          %p723 = pneg %p152
        $region94: #{xvit_rgb_branch_forward.3} parent=87 // pred_check_branch
          %725 = sbr.rel (%p723) target = $region96
        $region95: #{xvit_rgb_branch_forward.3} parent=87 // pred_region
          %726 = dma.done %s719, 3072
        $region96: #{xvit_rgb_branch_forward.3} parent=87 // pred_fallthru
          _
        %s727 = sand.u32 %s41, 1
        %s728 = scalar_lea.sflag [#allocation7], %s727
        %s729 = sand.u32 %s191, 1
        %s730 = smul.addr %s729, 64
        %s731 = scalar_lea.vmem [#allocation8], %s730
        // Predicated region
        $region97: #{xvit_rgb_branch_forward.3} parent=87 // pred_check
          %p732 = pneg %p204
        $region98: #{xvit_rgb_branch_forward.3} parent=87 // pred_check_branch
          %734 = sbr.rel (%p732) target = $region100
        $region99: #{xvit_rgb_branch_forward.3} parent=87 // pred_region
          %735 = dma.done %s728, 1024
        $region100: #{xvit_rgb_branch_forward.3} parent=87 // pred_fallthru
          _
        %s736 = sand.u32 %s41, 1
        %s737 = scalar_lea.sflag [#allocation10], %s736
        %s738 = sand.u32 %s269, 1
        %s739 = scalar_lea.vmem [#allocation9], %s738
        // Predicated region
        $region101: #{xvit_rgb_branch_forward.3} parent=87 // pred_check
          %p740 = pneg %p282
        $region102: #{xvit_rgb_branch_forward.3} parent=87 // pred_check_branch
          %742 = sbr.rel (%p740) target = $region104
        $region103: #{xvit_rgb_branch_forward.3} parent=87 // pred_region
          %743 = dma.done %s737, 16
        $region104: #{xvit_rgb_branch_forward.3} parent=87 // pred_fallthru
          _
        %s744 = sand.u32 %s41, 1
        %s745 = scalar_lea.sflag [#allocation10], %s744
        %s746 = sand.u32 %s321, 1
        %s747 = smul.addr %s746, 4
        %s748 = scalar_lea.vmem [#allocation11], %s747
        // Predicated region
        $region105: #{xvit_rgb_branch_forward.3} parent=87 // pred_check
          %p749 = pneg %p334
        $region106: #{xvit_rgb_branch_forward.3} parent=87 // pred_check_branch
          %751 = sbr.rel (%p749) target = $region108
        $region107: #{xvit_rgb_branch_forward.3} parent=87 // pred_region
          %752 = dma.done %s745, 64
        $region108: #{xvit_rgb_branch_forward.3} parent=87 // pred_fallthru
          _
        %s753 = sand.u32 %s41, 1
        %s754 = scalar_lea.sflag [#allocation13], %s753
        %s755 = sand.u32 %s347, 1
        %s756 = smul.addr %s755, 256
        %s757 = scalar_lea.vmem [#allocation12], %s756
        // Predicated region
        $region109: #{xvit_rgb_branch_forward.3} parent=87 // pred_check
          %p758 = pneg %p360
        $region110: #{xvit_rgb_branch_forward.3} parent=87 // pred_check_branch
          %760 = sbr.rel (%p758) target = $region112
        $region111: #{xvit_rgb_branch_forward.3} parent=87 // pred_region
          %761 = dma.done %s754, 4096
        $region112: #{xvit_rgb_branch_forward.3} parent=87 // pred_fallthru
          _
        %s762 = sand.u32 %s41, 1
        %s763 = scalar_lea.sflag [#allocation13], %s762
        %s764 = sand.u32 %s373, 1
        %s765 = scalar_lea.vmem [#allocation14], %s764
        // Predicated region
        $region113: #{xvit_rgb_branch_forward.3} parent=87 // pred_check
          %p766 = pneg %p386
        $region114: #{xvit_rgb_branch_forward.3} parent=87 // pred_check_branch
          %768 = sbr.rel (%p766) target = $region116
        $region115: #{xvit_rgb_branch_forward.3} parent=87 // pred_region
          %769 = dma.done %s763, 16
        $region116: #{xvit_rgb_branch_forward.3} parent=87 // pred_fallthru
          _
        %s770 = smul.u32 2, %s45
        %p771 = scmp.lt.s32.totalorder %s770, 1
        %s772 = scalar_select %p771, %s770, 1
        %s773 = smul.addr %s772, 4
        %s774 = smul.addr %s773, 8
        %s775 = scalar_lea.vmem %s0, %s774
        %p776 = pneg %p74
        %p777 = pneg %p71
        %p778 = scmp.lt.s32.totalorder %s46, 1
        %s779 = scalar_select %p778, %s46, 1
        %s780 = scalar_lea.vmem %s1, %s779
        %p781 = pneg %p100
        %p782 = pneg %p97
        %s783 = sand.u32 %s113, 1
        %s784 = scalar_lea.sflag [#allocation4], %s783
        %s785 = sand.u32 %s113, 1
        %s786 = scalar_lea.vmem [#allocation3], %s785
        %p787 = pneg %p126
        %p788 = pneg %p123
        %s789 = sand.u32 %s41, 1
        %s790 = scalar_lea.sflag [#allocation7], %s789
        %s791 = sand.u32 %s139, 1
        %s792 = smul.addr %s791, 192
        %s793 = scalar_lea.vmem [#allocation6], %s792
        %p794 = pneg %p152
        %p795 = pneg %p149
        %p796 = scmp.lt.s32.totalorder %s46, 1
        %s797 = scalar_select %p796, %s46, 1
        %s798 = smul.addr %s797, 3
        %s799 = scalar_lea.vmem %s4, %s798
        %p800 = pneg %p178
        %p801 = pneg %p175
        %s802 = sand.u32 %s41, 1
        %s803 = scalar_lea.sflag [#allocation7], %s802
        %s804 = sand.u32 %s191, 1
        %s805 = smul.addr %s804, 64
        %s806 = scalar_lea.vmem [#allocation8], %s805
        %p807 = pneg %p204
        %p808 = pneg %p201
        %p809 = scmp.lt.s32.totalorder %s46, 1
        %s810 = scalar_select %p809, %s46, 1
        %s811 = scalar_lea.vmem %s6, %s810
        %p812 = pneg %p230
        %p813 = pneg %p227
        %p814 = scmp.lt.s32.totalorder %s46, 1
        %s815 = scalar_select %p814, %s46, 1
        %s816 = scalar_lea.vmem %s7, %s815
        %p817 = pneg %p256
        %p818 = pneg %p253
        %s819 = sand.u32 %s41, 1
        %s820 = scalar_lea.sflag [#allocation10], %s819
        %s821 = sand.u32 %s269, 1
        %s822 = scalar_lea.vmem [#allocation9], %s821
        %p823 = pneg %p282
        %p824 = pneg %p279
        %p825 = scmp.lt.s32.totalorder %s46, 1
        %s826 = scalar_select %p825, %s46, 1
        %s827 = smul.addr %s826, 64
        %s828 = smul.addr %s827, 4
        %s829 = scalar_lea.vmem %s9, %s828
        %p830 = pneg %p308
        %p831 = pneg %p305
        %s832 = sand.u32 %s41, 1
        %s833 = scalar_lea.sflag [#allocation10], %s832
        %s834 = sand.u32 %s321, 1
        %s835 = smul.addr %s834, 4
        %s836 = scalar_lea.vmem [#allocation11], %s835
        %p837 = pneg %p334
        %p838 = pneg %p331
        %s839 = sand.u32 %s41, 1
        %s840 = scalar_lea.sflag [#allocation13], %s839
        %s841 = sand.u32 %s347, 1
        %s842 = smul.addr %s841, 256
        %s843 = scalar_lea.vmem [#allocation12], %s842
        %p844 = pneg %p360
        %p845 = pneg %p357
        %s846 = sand.u32 %s41, 1
        %s847 = scalar_lea.sflag [#allocation13], %s846
        %s848 = sand.u32 %s373, 1
        %s849 = scalar_lea.vmem [#allocation14], %s848
        %p850 = pneg %p386
        %p851 = pneg %p383
        %p852 = pneg %p407
        %p853 = pneg %p404
        %p854 = pneg %p428
        %p855 = pneg %p425
        %p856 = pneg %p449
        %p857 = pneg %p446
        %p858 = pneg %p470
        %p859 = pneg %p467
        %p860 = pneg %p496
        %p861 = pneg %p493
        %s862 = smul.u32 2, %s45
        %p863 = scmp.lt.s32.totalorder %s862, 1
        %s864 = scalar_select %p863, %s862, 1
        %s865 = smul.addr %s864, 4
        %s866 = smul.addr %s865, 8
        %s867 = scalar_lea.vmem %s0, %s866
        %s868 = smul.u32 2, %s45
        %p869 = scmp.lt.s32.totalorder %s46, 1
        %s870 = scalar_select %p869, %s46, 1
        %s871 = scalar_lea.vmem %s1, %s870
        %p872 = scmp.lt.s32.totalorder %s46, 1
        %s873 = scalar_select %p872, %s46, 1
        %s874 = smul.addr %s873, 3
        %s875 = scalar_lea.vmem %s4, %s874
        %p876 = scmp.lt.s32.totalorder %s46, 1
        %s877 = scalar_select %p876, %s46, 1
        %s878 = scalar_lea.vmem %s6, %s877
        %p879 = scmp.lt.s32.totalorder %s46, 1
        %s880 = scalar_select %p879, %s46, 1
        %s881 = scalar_lea.vmem %s7, %s880
        %p882 = scmp.lt.s32.totalorder %s46, 1
        %s883 = scalar_select %p882, %s46, 1
        %s884 = smul.addr %s883, 64
        %s885 = smul.addr %s884, 4
        %s886 = scalar_lea.vmem %s9, %s885
        %p888 = scmp.eq.s32.totalorder %s46, 0
        // Predicated region
        $region117: #{xvit_rgb_branch_forward.3} parent=87 // pred_check
          %p889 = pneg %p888
        $region118: #{xvit_rgb_branch_forward.3} parent=87 // pred_check_branch
          %891 = sbr.rel (%p889) target = $region120
        $region119: #{xvit_rgb_branch_forward.3} parent=87 // pred_region
          %v892 = vld [vmem:[%s867] sm:$0xff]
          %v893 = vld [vmem:[%s867 + $0x8] sm:$0xff]
          %v894 = vld [vmem:[%s867 + $0x10] sm:$0xff]
          %v895 = vld [vmem:[%s867 + $0x18] sm:$0xff]
          %v896 = vld [vmem:[%s867 + $0x20] sm:$0xff]
          %v897 = vld [vmem:[%s867 + $0x28] sm:$0xff]
          %v898 = vld [vmem:[%s867 + $0x30] sm:$0xff]
          %v899 = vld [vmem:[%s867 + $0x38] sm:$0xff]
          %900 = vst [vmem:[#allocation2] sm:$0xff] %v892
          %901 = vst [vmem:[#allocation2 + $0x8] sm:$0xff] %v893
          %902 = vst [vmem:[#allocation2 + $0x10] sm:$0xff] %v894
          %903 = vst [vmem:[#allocation2 + $0x18] sm:$0xff] %v895
          %904 = vst [vmem:[#allocation2 + $0x20] sm:$0xff] %v896
          %905 = vst [vmem:[#allocation2 + $0x28] sm:$0xff] %v897
          %906 = vst [vmem:[#allocation2 + $0x30] sm:$0xff] %v898
          %907 = vst [vmem:[#allocation2 + $0x38] sm:$0xff] %v899
        $region120: #{xvit_rgb_branch_forward.3} parent=87 // pred_fallthru
          _
        %v908 = vld [vmem:[#allocation2] sm:$0xff]
        %v909 = vld [vmem:[#allocation2 + $0x8] sm:$0xff]
        %v910 = vld [vmem:[#allocation2 + $0x10] sm:$0xff]
        %v911 = vld [vmem:[#allocation2 + $0x18] sm:$0xff]
        %v912 = vld [vmem:[#allocation2 + $0x20] sm:$0xff]
        %v913 = vld [vmem:[#allocation2 + $0x28] sm:$0xff]
        %v914 = vld [vmem:[#allocation2 + $0x30] sm:$0xff]
        %v915 = vld [vmem:[#allocation2 + $0x38] sm:$0xff]
        %v916 = vld [vmem:[%s871] sm:$0x1]
        %v917 = vld [vmem:[%s713] sm:$0x1]
        %918 = vadd.xlane.f32.xlu0 %v908
        %v919 = vpop.xlane.xlu0 %918
        %920 = vadd.xlane.f32.xlu0 %v909
        %v921 = vpop.xlane.xlu0 %920
        %922 = vadd.xlane.f32.xlu0 %v910
        %v923 = vpop.xlane.xlu0 %922
        %924 = vadd.xlane.f32.xlu0 %v911
        %v925 = vpop.xlane.xlu0 %924
        %926 = vadd.xlane.f32.xlu0 %v912
        %v927 = vpop.xlane.xlu0 %926
        %928 = vadd.xlane.f32.xlu0 %v913
        %v929 = vpop.xlane.xlu0 %928
        %930 = vadd.xlane.f32.xlu0 %v914
        %v931 = vpop.xlane.xlu0 %930
        %932 = vadd.xlane.f32.xlu0 %v915
        %v933 = vpop.xlane.xlu0 %932
        %v934 = vrcp.pop 128.0
        %v935 = vmul.f32 %v919, %v934
        %v936 = vmul.f32 %v921, %v934
        %v937 = vmul.f32 %v923, %v934
        %v938 = vmul.f32 %v925, %v934
        %v939 = vmul.f32 %v927, %v934
        %v940 = vmul.f32 %v929, %v934
        %v941 = vmul.f32 %v931, %v934
        %v942 = vmul.f32 %v933, %v934
        %v943 = vsub.f32 %v908, %v935
        %v944 = vsub.f32 %v909, %v936
        %v945 = vsub.f32 %v910, %v937
        %v946 = vsub.f32 %v911, %v938
        %v947 = vsub.f32 %v912, %v939
        %v948 = vsub.f32 %v913, %v940
        %v949 = vsub.f32 %v914, %v941
        %v950 = vsub.f32 %v915, %v942
        %v951 = vmul.f32 %v943, %v943
        %v952 = vmul.f32 %v944, %v944
        %v953 = vmul.f32 %v945, %v945
        %v954 = vmul.f32 %v946, %v946
        %v955 = vmul.f32 %v947, %v947
        %v956 = vmul.f32 %v948, %v948
        %v957 = vmul.f32 %v949, %v949
        %v958 = vmul.f32 %v950, %v950
        %959 = vadd.xlane.f32.xlu0 %v951
        %v960 = vpop.xlane.xlu0 %959
        %961 = vadd.xlane.f32.xlu0 %v952
        %v962 = vpop.xlane.xlu0 %961
        %963 = vadd.xlane.f32.xlu0 %v953
        %v964 = vpop.xlane.xlu0 %963
        %965 = vadd.xlane.f32.xlu0 %v954
        %v966 = vpop.xlane.xlu0 %965
        %967 = vadd.xlane.f32.xlu0 %v955
        %v968 = vpop.xlane.xlu0 %967
        %969 = vadd.xlane.f32.xlu0 %v956
        %v970 = vpop.xlane.xlu0 %969
        %971 = vadd.xlane.f32.xlu0 %v957
        %v972 = vpop.xlane.xlu0 %971
        %973 = vadd.xlane.f32.xlu0 %v958
        %v974 = vpop.xlane.xlu0 %973
        %v975 = vmul.f32 %v960, %v934
        %v976 = vmul.f32 %v962, %v934
        %v977 = vmul.f32 %v964, %v934
        %v978 = vmul.f32 %v966, %v934
        %v979 = vmul.f32 %v968, %v934
        %v980 = vmul.f32 %v970, %v934
        %v981 = vmul.f32 %v972, %v934
        %v982 = vmul.f32 %v974, %v934
        %v983 = vadd.f32 %v975, 1e-06
        %v984 = vadd.f32 %v976, 1e-06
        %v985 = vadd.f32 %v977, 1e-06
        %v986 = vadd.f32 %v978, 1e-06
        %v987 = vadd.f32 %v979, 1e-06
        %v988 = vadd.f32 %v980, 1e-06
        %v989 = vadd.f32 %v981, 1e-06
        %v990 = vadd.f32 %v982, 1e-06
        %v991 = vrsqrt.pop %v983
        %v992 = vrsqrt.pop %v984
        %v993 = vrsqrt.pop %v985
        %v994 = vrsqrt.pop %v986
        %v995 = vrsqrt.pop %v987
        %v996 = vrsqrt.pop %v988
        %v997 = vrsqrt.pop %v989
        %v998 = vrsqrt.pop %v990
        %v999 = vmul.f32 %v943, %v991
        %v1000 = vmul.f32 %v944, %v992
        %v1001 = vmul.f32 %v945, %v993
        %v1002 = vmul.f32 %v946, %v994
        %v1003 = vmul.f32 %v947, %v995
        %v1004 = vmul.f32 %v948, %v996
        %v1005 = vmul.f32 %v949, %v997
        %v1006 = vmul.f32 %v950, %v998
        %v1008 = vlaneseq
        %v1009 = vshrl.u32 %v1008, 7
        %v1010 = vsub.s32 0, %v1009
        %v1011 = vrot.slane %v916, %v1010
        %v1013 = vmul.f32 %v999, %v1011
        %v1014 = vmul.f32 %v1000, %v1011
        %v1015 = vmul.f32 %v1001, %v1011
        %v1016 = vmul.f32 %v1002, %v1011
        %v1017 = vmul.f32 %v1003, %v1011
        %v1018 = vmul.f32 %v1004, %v1011
        %v1019 = vmul.f32 %v1005, %v1011
        %v1020 = vmul.f32 %v1006, %v1011
        %v1022 = vlaneseq
        %v1023 = vshrl.u32 %v1022, 7
        %v1024 = vsub.s32 0, %v1023
        %v1025 = vrot.slane %v917, %v1024
        %v1027 = vadd.f32 %v1013, %v1025
        %v1028 = vadd.f32 %v1014, %v1025
        %v1029 = vadd.f32 %v1015, %v1025
        %v1030 = vadd.f32 %v1016, %v1025
        %v1031 = vadd.f32 %v1017, %v1025
        %v1032 = vadd.f32 %v1018, %v1025
        %v1033 = vadd.f32 %v1019, %v1025
        %v1034 = vadd.f32 %v1020, %v1025
        %v1035 = vpack.c.bf16 %v1028, %v1027
        %v1036 = vpack.c.bf16 %v1030, %v1029
        %v1037 = vpack.c.bf16 %v1032, %v1031
        %v1038 = vpack.c.bf16 %v1034, %v1033
        %v1039 = vld [vmem:[%s722] sm:$0xff]
        %v1040 = vld [vmem:[%s722 + $0x8] sm:$0xf]
        %v1041 = vld [vmem:[%s722 + $0xc] sm:$0xff]
        %v1042 = vld [vmem:[%s722 + $0x14] sm:$0xf]
        %v1043 = vld [vmem:[%s722 + $0x18] sm:$0xff]
        %v1044 = vld [vmem:[%s722 + $0x20] sm:$0xf]
        %v1045 = vld [vmem:[%s722 + $0x24] sm:$0xff]
        %v1046 = vld [vmem:[%s722 + $0x2c] sm:$0xf]
        %v1047 = vld [vmem:[%s722 + $0x30] sm:$0xff]
        %v1048 = vld [vmem:[%s722 + $0x38] sm:$0xf]
        %v1049 = vld [vmem:[%s722 + $0x3c] sm:$0xff]
        %v1050 = vld [vmem:[%s722 + $0x44] sm:$0xf]
        %v1051 = vld [vmem:[%s722 + $0x48] sm:$0xff]
        %v1052 = vld [vmem:[%s722 + $0x50] sm:$0xf]
        %v1053 = vld [vmem:[%s722 + $0x54] sm:$0xff]
        %v1054 = vld [vmem:[%s722 + $0x5c] sm:$0xf]
        %v1055 = vld [vmem:[%s722 + $0x60] sm:$0xff]
        %v1056 = vld [vmem:[%s722 + $0x68] sm:$0xf]
        %v1057 = vld [vmem:[%s722 + $0x6c] sm:$0xff]
        %v1058 = vld [vmem:[%s722 + $0x74] sm:$0xf]
        %v1059 = vld [vmem:[%s722 + $0x78] sm:$0xff]
        %v1060 = vld [vmem:[%s722 + $0x80] sm:$0xf]
        %v1061 = vld [vmem:[%s722 + $0x84] sm:$0xff]
        %v1062 = vld [vmem:[%s722 + $0x8c] sm:$0xf]
        %v1063 = vld [vmem:[%s722 + $0x90] sm:$0xff]
        %v1064 = vld [vmem:[%s722 + $0x98] sm:$0xf]
        %v1065 = vld [vmem:[%s722 + $0x9c] sm:$0xff]
        %v1066 = vld [vmem:[%s722 + $0xa4] sm:$0xf]
        %v1067 = vld [vmem:[%s722 + $0xa8] sm:$0xff]
        %v1068 = vld [vmem:[%s722 + $0xb0] sm:$0xf]
        %v1069 = vld [vmem:[%s722 + $0xb4] sm:$0xff]
        %v1070 = vld [vmem:[%s722 + $0xbc] sm:$0xf]
        %v1071 = vld [vmem:[%s875] sm:$0x7]
        %v1073 = vlaneseq
        %v1074 = vshrl.u32 %v1073, 7
        %v1075 = vsub.s32 0, %v1074
        %v1076 = vrot.slane %v1071, %v1075
        %v1077 = vlaneseq
        %v1078 = vshrl.u32 %v1077, 7
        %v1079 = vsub.s32 1, %v1078
        %v1080 = vrot.slane %v1071, %v1079
        %v1081 = vlaneseq
        %v1082 = vshrl.u32 %v1081, 7
        %v1083 = vsub.s32 2, %v1082
        %v1084 = vrot.slane %v1071, %v1083
        %v1120 = vunpack.c.l.b16 %v1039
        %v1121 = vunpack.c.h.b16 %v1039
        %v1122 = vunpack.c.l.b16 %v1040
        %v1123 = vunpack.c.l.b16 %v1041
        %v1124 = vunpack.c.h.b16 %v1041
        %v1125 = vunpack.c.l.b16 %v1042
        %v1126 = vunpack.c.l.b16 %v1043
        %v1127 = vunpack.c.h.b16 %v1043
        %v1128 = vunpack.c.l.b16 %v1044
        %v1129 = vunpack.c.l.b16 %v1045
        %v1130 = vunpack.c.h.b16 %v1045
        %v1131 = vunpack.c.l.b16 %v1046
        %v1132 = vunpack.c.l.b16 %v1047
        %v1133 = vunpack.c.h.b16 %v1047
        %v1134 = vunpack.c.l.b16 %v1048
        %v1135 = vunpack.c.l.b16 %v1049
        %v1136 = vunpack.c.h.b16 %v1049
        %v1137 = vunpack.c.l.b16 %v1050
        %v1138 = vunpack.c.l.b16 %v1051
        %v1139 = vunpack.c.h.b16 %v1051
        %v1140 = vunpack.c.l.b16 %v1052
        %v1141 = vunpack.c.l.b16 %v1053
        %v1142 = vunpack.c.h.b16 %v1053
        %v1143 = vunpack.c.l.b16 %v1054
        %v1144 = vunpack.c.l.b16 %v1055
        %v1145 = vunpack.c.h.b16 %v1055
        %v1146 = vunpack.c.l.b16 %v1056
        %v1147 = vunpack.c.l.b16 %v1057
        %v1148 = vunpack.c.h.b16 %v1057
        %v1149 = vunpack.c.l.b16 %v1058
        %v1150 = vunpack.c.l.b16 %v1059
        %v1151 = vunpack.c.h.b16 %v1059
        %v1152 = vunpack.c.l.b16 %v1060
        %v1153 = vunpack.c.l.b16 %v1061
        %v1154 = vunpack.c.h.b16 %v1061
        %v1155 = vunpack.c.l.b16 %v1062
        %v1156 = vunpack.c.l.b16 %v1063
        %v1157 = vunpack.c.h.b16 %v1063
        %v1158 = vunpack.c.l.b16 %v1064
        %v1159 = vunpack.c.l.b16 %v1065
        %v1160 = vunpack.c.h.b16 %v1065
        %v1161 = vunpack.c.l.b16 %v1066
        %v1162 = vunpack.c.l.b16 %v1067
        %v1163 = vunpack.c.h.b16 %v1067
        %v1164 = vunpack.c.l.b16 %v1068
        %v1165 = vunpack.c.l.b16 %v1069
        %v1166 = vunpack.c.h.b16 %v1069
        %v1167 = vunpack.c.l.b16 %v1070
        %v1168 = vpack.c.b16 %v1123, %v1120
        %v1169 = vpack.c.b16 %v1124, %v1121
        %v1170 = vpack.c.b16 %v1125, %v1122
        %v1171 = vpack.c.b16 %v1129, %v1126
        %v1172 = vpack.c.b16 %v1130, %v1127
        %v1173 = vpack.c.b16 %v1131, %v1128
        %v1174 = vpack.c.b16 %v1135, %v1132
        %v1175 = vpack.c.b16 %v1136, %v1133
        %v1176 = vpack.c.b16 %v1137, %v1134
        %v1177 = vpack.c.b16 %v1141, %v1138
        %v1178 = vpack.c.b16 %v1142, %v1139
        %v1179 = vpack.c.b16 %v1143, %v1140
        %v1180 = vpack.c.b16 %v1147, %v1144
        %v1181 = vpack.c.b16 %v1148, %v1145
        %v1182 = vpack.c.b16 %v1149, %v1146
        %v1183 = vpack.c.b16 %v1153, %v1150
        %v1184 = vpack.c.b16 %v1154, %v1151
        %v1185 = vpack.c.b16 %v1155, %v1152
        %v1186 = vpack.c.b16 %v1159, %v1156
        %v1187 = vpack.c.b16 %v1160, %v1157
        %v1188 = vpack.c.b16 %v1161, %v1158
        %v1189 = vpack.c.b16 %v1165, %v1162
        %v1190 = vpack.c.b16 %v1166, %v1163
        %v1191 = vpack.c.b16 %v1167, %v1164
        %1216 = vmatprep.subr.bf16.mxu0 %v1169
        %1217 = vmatpush1.bf16.msra.mxu0 %v1168
        %1218 = vmatprep.subr.bf16.mxu0 %v1172
        %1219 = vmatpush1.bf16.msra.mxu0 %v1171
        %1220 = vmatprep.subr.bf16.mxu0 %v1175
        %1221 = vmatpush1.bf16.msra.mxu0 %v1174
        %1222 = vmatprep.subr.bf16.mxu0 %v1178
        %1223 = vmatpush1.bf16.msra.mxu0 %v1177
        %1224 = vmatprep.subr.bf16.mxu0 %v1181
        %1225 = vmatpush1.bf16.msra.mxu0 %v1180
        %1226 = vmatprep.subr.bf16.mxu0 %v1184
        %1227 = vmatpush1.bf16.msra.mxu0 %v1183
        %1228 = vmatprep.subr.bf16.mxu0 %v1187
        %1229 = vmatpush1.bf16.msra.mxu0 %v1186
        %1230 = vmatprep.subr.bf16.mxu0 %v1190
        %1231 = vmatpush1.bf16.msra.mxu0 %v1189
        %1232 = vmatprep.subr.bf16.mxu0 0
        %1233 = vmatpush1.bf16.msra.mxu0 0
        %1234 = vmatprep.subr.bf16.mxu0 0
        %1235 = vmatpush1.bf16.msra.mxu0 0
        %1236 = vmatprep.subr.bf16.mxu0 0
        %1237 = vmatpush1.bf16.msra.mxu0 0
        %1238 = vmatprep.subr.bf16.mxu0 0
        %1239 = vmatpush1.bf16.msra.mxu0 0
        %1240 = vmatprep.subr.bf16.mxu0 0
        %1241 = vmatpush1.bf16.msra.mxu0 0
        %1242 = vmatprep.subr.bf16.mxu0 0
        %1243 = vmatpush1.bf16.msra.mxu0 0
        %1244 = vmatprep.subr.bf16.mxu0 0
        %1245 = vmatpush1.bf16.msra.mxu0 0
        %1246 = vmatprep.subr.bf16.mxu0 0
        %1247 = vmatpush1.bf16.msra.mxu0 0
        %1248 = vmatprep.mubr.bf16.mxu0 0
        %1249 = vmatmul.mubr.bf16.gmra.mrb[0].mxu0 %v1035
        %v1250 = vpop.f32.mrb[0].mxu0
        %v1251 = vadd.f32 %v1076, %v1250
        %v1252 = vpop.f32.mrb[0].mxu0
        %v1253 = vadd.f32 %v1080, %v1252
        %v1254 = vpop.f32.mrb[0].mxu0
        %v1255 = vadd.f32 %v1076, %v1254
        %v1256 = vpop.f32.mrb[0].mxu0
        %v1257 = vadd.f32 %v1080, %v1256
        %1258 = vmatprep.mubr.bf16.mxu0 0
        %1259 = vmatmul.mubr.bf16.gmra.mrb[0].mxu0 %v1036
        %v1260 = vpop.f32.mrb[0].mxu0
        %v1261 = vadd.f32 %v1076, %v1260
        %v1262 = vpop.f32.mrb[0].mxu0
        %v1263 = vadd.f32 %v1080, %v1262
        %v1264 = vpop.f32.mrb[0].mxu0
        %v1265 = vadd.f32 %v1076, %v1264
        %v1266 = vpop.f32.mrb[0].mxu0
        %v1267 = vadd.f32 %v1080, %v1266
        %1268 = vmatprep.mubr.bf16.mxu0 0
        %1269 = vmatmul.mubr.bf16.gmra.mrb[0].mxu0 %v1037
        %v1270 = vpop.f32.mrb[0].mxu0
        %v1271 = vadd.f32 %v1076, %v1270
        %v1272 = vpop.f32.mrb[0].mxu0
        %v1273 = vadd.f32 %v1080, %v1272
        %v1274 = vpop.f32.mrb[0].mxu0
        %v1275 = vadd.f32 %v1076, %v1274
        %v1276 = vpop.f32.mrb[0].mxu0
        %v1277 = vadd.f32 %v1080, %v1276
        %1278 = vmatprep.mubr.bf16.mxu0 0
        %1279 = vmatmul.mubr.bf16.gmra.mrb[0].mxu0 %v1038
        %v1280 = vpop.f32.mrb[0].mxu0
        %v1281 = vadd.f32 %v1076, %v1280
        %v1282 = vpop.f32.mrb[0].mxu0
        %v1283 = vadd.f32 %v1080, %v1282
        %v1284 = vpop.f32.mrb[0].mxu0
        %v1285 = vadd.f32 %v1076, %v1284
        %v1286 = vpop.f32.mrb[0].mxu0
        %v1287 = vadd.f32 %v1080, %v1286
        %1288 = vdwg.mxu0
        %1289 = vmatprep.subr.bf16.mxu0 0
        %1290 = vmatpush1.bf16.msra.mxu0 %v1170
        %1291 = vmatprep.subr.bf16.mxu0 0
        %1292 = vmatpush1.bf16.msra.mxu0 %v1173
        %1293 = vmatprep.subr.bf16.mxu0 0
        %1294 = vmatpush1.bf16.msra.mxu0 %v1176
        %1295 = vmatprep.subr.bf16.mxu0 0
        %1296 = vmatpush1.bf16.msra.mxu0 %v1179
        %1297 = vmatprep.subr.bf16.mxu0 0
        %1298 = vmatpush1.bf16.msra.mxu0 %v1182
        %1299 = vmatprep.subr.bf16.mxu0 0
        %1300 = vmatpush1.bf16.msra.mxu0 %v1185
        %1301 = vmatprep.subr.bf16.mxu0 0
        %1302 = vmatpush1.bf16.msra.mxu0 %v1188
        %1303 = vmatprep.subr.bf16.mxu0 0
        %1304 = vmatpush1.bf16.msra.mxu0 %v1191
        %1305 = vmatprep.subr.bf16.mxu0 0
        %1306 = vmatpush1.bf16.msra.mxu0 0
        %1307 = vmatprep.subr.bf16.mxu0 0
        %1308 = vmatpush1.bf16.msra.mxu0 0
        %1309 = vmatprep.subr.bf16.mxu0 0
        %1310 = vmatpush1.bf16.msra.mxu0 0
        %1311 = vmatprep.subr.bf16.mxu0 0
        %1312 = vmatpush1.bf16.msra.mxu0 0
        %1313 = vmatprep.subr.bf16.mxu0 0
        %1314 = vmatpush1.bf16.msra.mxu0 0
        %1315 = vmatprep.subr.bf16.mxu0 0
        %1316 = vmatpush1.bf16.msra.mxu0 0
        %1317 = vmatprep.subr.bf16.mxu0 0
        %1318 = vmatpush1.bf16.msra.mxu0 0
        %1319 = vmatprep.subr.bf16.mxu0 0
        %1320 = vmatpush1.bf16.msra.mxu0 0
        %1321 = vmatprep.mubr.bf16.mxu0 0
        %1322 = vmatmul.mubr.bf16.gmra.mrb[0].mxu0 %v1035
        %v1323 = vpop.f32.mrb[0].mxu0
        %v1324 = vadd.f32 %v1084, %v1323
        %v1325 = vpop.f32.mrb[0].mxu0
        %v1326 = vpop.f32.mrb[0].mxu0
        %v1327 = vadd.f32 %v1084, %v1326
        %v1328 = vpop.f32.mrb[0].mxu0
        %1329 = vmatprep.mubr.bf16.mxu0 0
        %1330 = vmatmul.mubr.bf16.gmra.mrb[0].mxu0 %v1036
        %v1331 = vpop.f32.mrb[0].mxu0
        %v1332 = vadd.f32 %v1084, %v1331
        %v1333 = vpop.f32.mrb[0].mxu0
        %v1334 = vpop.f32.mrb[0].mxu0
        %v1335 = vadd.f32 %v1084, %v1334
        %v1336 = vpop.f32.mrb[0].mxu0
        %1337 = vmatprep.mubr.bf16.mxu0 0
        %1338 = vmatmul.mubr.bf16.gmra.mrb[0].mxu0 %v1037
        %v1339 = vpop.f32.mrb[0].mxu0
        %v1340 = vadd.f32 %v1084, %v1339
        %v1341 = vpop.f32.mrb[0].mxu0
        %v1342 = vpop.f32.mrb[0].mxu0
        %v1343 = vadd.f32 %v1084, %v1342
        %v1344 = vpop.f32.mrb[0].mxu0
        %1345 = vmatprep.mubr.bf16.mxu0 0
        %1346 = vmatmul.mubr.bf16.gmra.mrb[0].mxu0 %v1038
        %v1347 = vpop.f32.mrb[0].mxu0
        %v1348 = vadd.f32 %v1084, %v1347
        %v1349 = vpop.f32.mrb[0].mxu0
        %v1350 = vpop.f32.mrb[0].mxu0
        %v1351 = vadd.f32 %v1084, %v1350
        %v1352 = vpop.f32.mrb[0].mxu0
        %1353 = vdwg.mxu0
        %v1354 = vpack.c.bf16 %v1255, %v1251
        %v1355 = vpack.c.bf16 %v1257, %v1253
        %v1356 = vpack.c.bf16 %v1327, %v1324
        %v1357 = vpack.c.bf16 %v1265, %v1261
        %v1358 = vpack.c.bf16 %v1267, %v1263
        %v1359 = vpack.c.bf16 %v1335, %v1332
        %v1360 = vpack.c.bf16 %v1275, %v1271
        %v1361 = vpack.c.bf16 %v1277, %v1273
        %v1362 = vpack.c.bf16 %v1343, %v1340
        %v1363 = vpack.c.bf16 %v1285, %v1281
        %v1364 = vpack.c.bf16 %v1287, %v1283
        %v1365 = vpack.c.bf16 %v1351, %v1348
        %1368 = vrot.lane.b32.xlu0 %v1354, 96
        %v1369 = vpop.permute.xlu0 %1368
        %1370 = vrot.lane.b32.xlu0 %v1357, 96
        %v1371 = vpop.permute.xlu0 %1370
        %1372 = vrot.lane.b32.xlu0 %v1354, 64
        %v1373 = vpop.permute.xlu0 %1372
        %1374 = vrot.lane.b32.xlu0 %v1357, 64
        %v1375 = vpop.permute.xlu0 %1374
        %1376 = vrot.lane.b32.xlu0 %v1354, 32
        %v1377 = vpop.permute.xlu0 %1376
        %1378 = vrot.lane.b32.xlu0 %v1357, 32
        %v1379 = vpop.permute.xlu0 %1378
        %1382 = vrot.lane.b32.xlu0 %v1355, 96
        %v1383 = vpop.permute.xlu0 %1382
        %1384 = vrot.lane.b32.xlu0 %v1358, 96
        %v1385 = vpop.permute.xlu0 %1384
        %1386 = vrot.lane.b32.xlu0 %v1355, 64
        %v1387 = vpop.permute.xlu0 %1386
        %1388 = vrot.lane.b32.xlu0 %v1358, 64
        %v1389 = vpop.permute.xlu0 %1388
        %1390 = vrot.lane.b32.xlu0 %v1355, 32
        %v1391 = vpop.permute.xlu0 %1390
        %1392 = vrot.lane.b32.xlu0 %v1358, 32
        %v1393 = vpop.permute.xlu0 %1392
        %1396 = vrot.lane.b32.xlu0 %v1356, 96
        %v1397 = vpop.permute.xlu0 %1396
        %1398 = vrot.lane.b32.xlu0 %v1359, 96
        %v1399 = vpop.permute.xlu0 %1398
        %1400 = vrot.lane.b32.xlu0 %v1356, 64
        %v1401 = vpop.permute.xlu0 %1400
        %1402 = vrot.lane.b32.xlu0 %v1359, 64
        %v1403 = vpop.permute.xlu0 %1402
        %1404 = vrot.lane.b32.xlu0 %v1356, 32
        %v1405 = vpop.permute.xlu0 %1404
        %1406 = vrot.lane.b32.xlu0 %v1359, 32
        %v1407 = vpop.permute.xlu0 %1406
        %v1410 = vpack.i.b16 %v1369, %v1354
        %v1412 = vshrl.u32 %v1354, 16
        %v1413 = vshrl.u32 %v1369, 16
        %v1414 = vpack.i.b16 %v1413, %v1412
        %v1418 = vpack.i.b16 %v1377, %v1373
        %v1420 = vshrl.u32 %v1373, 16
        %v1421 = vshrl.u32 %v1377, 16
        %v1422 = vpack.i.b16 %v1421, %v1420
        %v1426 = vpack.i.b16 %v1383, %v1355
        %v1428 = vshrl.u32 %v1355, 16
        %v1429 = vshrl.u32 %v1383, 16
        %v1430 = vpack.i.b16 %v1429, %v1428
        %v1434 = vpack.i.b16 %v1391, %v1387
        %v1436 = vshrl.u32 %v1387, 16
        %v1437 = vshrl.u32 %v1391, 16
        %v1438 = vpack.i.b16 %v1437, %v1436
        %v1442 = vpack.i.b16 %v1397, %v1356
        %v1444 = vshrl.u32 %v1356, 16
        %v1445 = vshrl.u32 %v1397, 16
        %v1446 = vpack.i.b16 %v1445, %v1444
        %v1450 = vpack.i.b16 %v1405, %v1401
        %v1452 = vshrl.u32 %v1401, 16
        %v1453 = vshrl.u32 %v1405, 16
        %v1454 = vpack.i.b16 %v1453, %v1452
        %v1457 = vpack.i.b16 0, 0
        %v1459 = vshrl.u32 0, 16
        %v1460 = vpack.i.b16 %v1459, %v1459
        %v1464 = vpack.i.b16 %v1371, %v1357
        %v1466 = vshrl.u32 %v1357, 16
        %v1467 = vshrl.u32 %v1371, 16
        %v1468 = vpack.i.b16 %v1467, %v1466
        %v1472 = vpack.i.b16 %v1379, %v1375
        %v1474 = vshrl.u32 %v1375, 16
        %v1475 = vshrl.u32 %v1379, 16
        %v1476 = vpack.i.b16 %v1475, %v1474
        %v1480 = vpack.i.b16 %v1385, %v1358
        %v1482 = vshrl.u32 %v1358, 16
        %v1483 = vshrl.u32 %v1385, 16
        %v1484 = vpack.i.b16 %v1483, %v1482
        %v1488 = vpack.i.b16 %v1393, %v1389
        %v1490 = vshrl.u32 %v1389, 16
        %v1491 = vshrl.u32 %v1393, 16
        %v1492 = vpack.i.b16 %v1491, %v1490
        %v1496 = vpack.i.b16 %v1399, %v1359
        %v1498 = vshrl.u32 %v1359, 16
        %v1499 = vshrl.u32 %v1399, 16
        %v1500 = vpack.i.b16 %v1499, %v1498
        %v1504 = vpack.i.b16 %v1407, %v1403
        %v1506 = vshrl.u32 %v1403, 16
        %v1507 = vshrl.u32 %v1407, 16
        %v1508 = vpack.i.b16 %v1507, %v1506
        %v1510 = vcombine.low %v1410, %v1426
        %v1511 = vcombine.high %v1410, %v1426
        %v1513 = vunpack.c.l.s4 1983009808
        %v1514 = vunpack.c.0.s8 %v1513
        %v1515 = vlaneseq
        %v1516 = vshrl.u32 %v1515, 7
        %v1517 = vsub.s32 %v1514, %v1516
        %v1518 = vrot.slane %v1510, %v1517
        %v1520 = vunpack.c.l.s4 1983009808
        %v1521 = vunpack.c.0.s8 %v1520
        %v1522 = vlaneseq
        %v1523 = vshrl.u32 %v1522, 7
        %v1524 = vsub.s32 %v1521, %v1523
        %v1525 = vrot.slane %v1511, %v1524
        %v1526 = vcombine.low %v1418, %v1434
        %v1527 = vcombine.high %v1418, %v1434
        %v1529 = vunpack.c.l.s4 1983009808
        %v1530 = vunpack.c.0.s8 %v1529
        %v1531 = vlaneseq
        %v1532 = vshrl.u32 %v1531, 7
        %v1533 = vsub.s32 %v1530, %v1532
        %v1534 = vrot.slane %v1526, %v1533
        %v1536 = vunpack.c.l.s4 1983009808
        %v1537 = vunpack.c.0.s8 %v1536
        %v1538 = vlaneseq
        %v1539 = vshrl.u32 %v1538, 7
        %v1540 = vsub.s32 %v1537, %v1539
        %v1541 = vrot.slane %v1527, %v1540
        %v1542 = vcombine.high %v1442, %v1457
        %v1544 = vunpack.c.l.s4 1983009808
        %v1545 = vunpack.c.0.s8 %v1544
        %v1546 = vlaneseq
        %v1547 = vshrl.u32 %v1546, 7
        %v1548 = vsub.s32 %v1545, %v1547
        %v1549 = vrot.slane %v1442, %v1548
        %v1551 = vunpack.c.l.s4 1983009808
        %v1552 = vunpack.c.0.s8 %v1551
        %v1553 = vlaneseq
        %v1554 = vshrl.u32 %v1553, 7
        %v1555 = vsub.s32 %v1552, %v1554
        %v1556 = vrot.slane %v1542, %v1555
        %v1557 = vcombine.high %v1450, %v1457
        %v1559 = vunpack.c.l.s4 1983009808
        %v1560 = vunpack.c.0.s8 %v1559
        %v1561 = vlaneseq
        %v1562 = vshrl.u32 %v1561, 7
        %v1563 = vsub.s32 %v1560, %v1562
        %v1564 = vrot.slane %v1450, %v1563
        %v1566 = vunpack.c.l.s4 1983009808
        %v1567 = vunpack.c.0.s8 %v1566
        %v1568 = vlaneseq
        %v1569 = vshrl.u32 %v1568, 7
        %v1570 = vsub.s32 %v1567, %v1569
        %v1571 = vrot.slane %v1557, %v1570
        %v1572 = vcombine.low %v1518, %v1534
        %v1573 = vcombine.high %v1518, %v1534
        %v1575 = vunpack.c.l.s4 1934713408
        %v1576 = vunpack.c.0.s8 %v1575
        %v1577 = vlaneseq
        %v1578 = vshrl.u32 %v1577, 7
        %v1579 = vsub.s32 %v1576, %v1578
        %v1580 = vrot.slane %v1572, %v1579
        %v1582 = vunpack.c.l.s4 1934713408
        %v1583 = vunpack.c.0.s8 %v1582
        %v1584 = vlaneseq
        %v1585 = vshrl.u32 %v1584, 7
        %v1586 = vsub.s32 %v1583, %v1585
        %v1587 = vrot.slane %v1573, %v1586
        %v1588 = vcombine.low %v1525, %v1541
        %v1589 = vcombine.high %v1525, %v1541
        %v1591 = vunpack.c.l.s4 1934713408
        %v1592 = vunpack.c.0.s8 %v1591
        %v1593 = vlaneseq
        %v1594 = vshrl.u32 %v1593, 7
        %v1595 = vsub.s32 %v1592, %v1594
        %v1596 = vrot.slane %v1588, %v1595
        %v1598 = vunpack.c.l.s4 1934713408
        %v1599 = vunpack.c.0.s8 %v1598
        %v1600 = vlaneseq
        %v1601 = vshrl.u32 %v1600, 7
        %v1602 = vsub.s32 %v1599, %v1601
        %v1603 = vrot.slane %v1589, %v1602
        %v1604 = vcombine.low %v1549, %v1564
        %v1605 = vcombine.high %v1549, %v1564
        %v1607 = vunpack.c.l.s4 1934713408
        %v1608 = vunpack.c.0.s8 %v1607
        %v1609 = vlaneseq
        %v1610 = vshrl.u32 %v1609, 7
        %v1611 = vsub.s32 %v1608, %v1610
        %v1612 = vrot.slane %v1604, %v1611
        %v1614 = vunpack.c.l.s4 1934713408
        %v1615 = vunpack.c.0.s8 %v1614
        %v1616 = vlaneseq
        %v1617 = vshrl.u32 %v1616, 7
        %v1618 = vsub.s32 %v1615, %v1617
        %v1619 = vrot.slane %v1605, %v1618
        %v1620 = vcombine.low %v1556, %v1571
        %v1621 = vcombine.high %v1556, %v1571
        %v1623 = vunpack.c.l.s4 1934713408
        %v1624 = vunpack.c.0.s8 %v1623
        %v1625 = vlaneseq
        %v1626 = vshrl.u32 %v1625, 7
        %v1627 = vsub.s32 %v1624, %v1626
        %v1628 = vrot.slane %v1620, %v1627
        %v1630 = vunpack.c.l.s4 1934713408
        %v1631 = vunpack.c.0.s8 %v1630
        %v1632 = vlaneseq
        %v1633 = vshrl.u32 %v1632, 7
        %v1634 = vsub.s32 %v1631, %v1633
        %v1635 = vrot.slane %v1621, %v1634
        %v1636 = vcombine.low %v1580, %v1612
        %v1637 = vcombine.high %v1580, %v1612
        %v1638 = vcombine.low %v1587, %v1619
        %v1639 = vcombine.high %v1587, %v1619
        %v1640 = vcombine.low %v1596, %v1628
        %v1641 = vcombine.high %v1596, %v1628
        %v1642 = vcombine.low %v1603, %v1635
        %v1643 = vcombine.high %v1603, %v1635
        %v1644 = vcombine.low %v1414, %v1430
        %v1645 = vcombine.high %v1414, %v1430
        %v1647 = vunpack.c.l.s4 1983009808
        %v1648 = vunpack.c.0.s8 %v1647
        %v1649 = vlaneseq
        %v1650 = vshrl.u32 %v1649, 7
        %v1651 = vsub.s32 %v1648, %v1650
        %v1652 = vrot.slane %v1644, %v1651
        %v1654 = vunpack.c.l.s4 1983009808
        %v1655 = vunpack.c.0.s8 %v1654
        %v1656 = vlaneseq
        %v1657 = vshrl.u32 %v1656, 7
        %v1658 = vsub.s32 %v1655, %v1657
        %v1659 = vrot.slane %v1645, %v1658
        %v1660 = vcombine.low %v1422, %v1438
        %v1661 = vcombine.high %v1422, %v1438
        %v1663 = vunpack.c.l.s4 1983009808
        %v1664 = vunpack.c.0.s8 %v1663
        %v1665 = vlaneseq
        %v1666 = vshrl.u32 %v1665, 7
        %v1667 = vsub.s32 %v1664, %v1666
        %v1668 = vrot.slane %v1660, %v1667
        %v1670 = vunpack.c.l.s4 1983009808
        %v1671 = vunpack.c.0.s8 %v1670
        %v1672 = vlaneseq
        %v1673 = vshrl.u32 %v1672, 7
        %v1674 = vsub.s32 %v1671, %v1673
        %v1675 = vrot.slane %v1661, %v1674
        %v1676 = vcombine.high %v1446, %v1460
        %v1678 = vunpack.c.l.s4 1983009808
        %v1679 = vunpack.c.0.s8 %v1678
        %v1680 = vlaneseq
        %v1681 = vshrl.u32 %v1680, 7
        %v1682 = vsub.s32 %v1679, %v1681
        %v1683 = vrot.slane %v1446, %v1682
        %v1685 = vunpack.c.l.s4 1983009808
        %v1686 = vunpack.c.0.s8 %v1685
        %v1687 = vlaneseq
        %v1688 = vshrl.u32 %v1687, 7
        %v1689 = vsub.s32 %v1686, %v1688
        %v1690 = vrot.slane %v1676, %v1689
        %v1691 = vcombine.high %v1454, %v1460
        %v1693 = vunpack.c.l.s4 1983009808
        %v1694 = vunpack.c.0.s8 %v1693
        %v1695 = vlaneseq
        %v1696 = vshrl.u32 %v1695, 7
        %v1697 = vsub.s32 %v1694, %v1696
        %v1698 = vrot.slane %v1454, %v1697
        %v1700 = vunpack.c.l.s4 1983009808
        %v1701 = vunpack.c.0.s8 %v1700
        %v1702 = vlaneseq
        %v1703 = vshrl.u32 %v1702, 7
        %v1704 = vsub.s32 %v1701, %v1703
        %v1705 = vrot.slane %v1691, %v1704
        %v1706 = vcombine.low %v1652, %v1668
        %v1707 = vcombine.high %v1652, %v1668
        %v1709 = vunpack.c.l.s4 1934713408
        %v1710 = vunpack.c.0.s8 %v1709
        %v1711 = vlaneseq
        %v1712 = vshrl.u32 %v1711, 7
        %v1713 = vsub.s32 %v1710, %v1712
        %v1714 = vrot.slane %v1706, %v1713
        %v1716 = vunpack.c.l.s4 1934713408
        %v1717 = vunpack.c.0.s8 %v1716
        %v1718 = vlaneseq
        %v1719 = vshrl.u32 %v1718, 7
        %v1720 = vsub.s32 %v1717, %v1719
        %v1721 = vrot.slane %v1707, %v1720
        %v1722 = vcombine.low %v1659, %v1675
        %v1723 = vcombine.high %v1659, %v1675
        %v1725 = vunpack.c.l.s4 1934713408
        %v1726 = vunpack.c.0.s8 %v1725
        %v1727 = vlaneseq
        %v1728 = vshrl.u32 %v1727, 7
        %v1729 = vsub.s32 %v1726, %v1728
        %v1730 = vrot.slane %v1722, %v1729
        %v1732 = vunpack.c.l.s4 1934713408
        %v1733 = vunpack.c.0.s8 %v1732
        %v1734 = vlaneseq
        %v1735 = vshrl.u32 %v1734, 7
        %v1736 = vsub.s32 %v1733, %v1735
        %v1737 = vrot.slane %v1723, %v1736
        %v1738 = vcombine.low %v1683, %v1698
        %v1739 = vcombine.high %v1683, %v1698
        %v1741 = vunpack.c.l.s4 1934713408
        %v1742 = vunpack.c.0.s8 %v1741
        %v1743 = vlaneseq
        %v1744 = vshrl.u32 %v1743, 7
        %v1745 = vsub.s32 %v1742, %v1744
        %v1746 = vrot.slane %v1738, %v1745
        %v1748 = vunpack.c.l.s4 1934713408
        %v1749 = vunpack.c.0.s8 %v1748
        %v1750 = vlaneseq
        %v1751 = vshrl.u32 %v1750, 7
        %v1752 = vsub.s32 %v1749, %v1751
        %v1753 = vrot.slane %v1739, %v1752
        %v1754 = vcombine.low %v1690, %v1705
        %v1755 = vcombine.high %v1690, %v1705
        %v1757 = vunpack.c.l.s4 1934713408
        %v1758 = vunpack.c.0.s8 %v1757
        %v1759 = vlaneseq
        %v1760 = vshrl.u32 %v1759, 7
        %v1761 = vsub.s32 %v1758, %v1760
        %v1762 = vrot.slane %v1754, %v1761
        %v1764 = vunpack.c.l.s4 1934713408
        %v1765 = vunpack.c.0.s8 %v1764
        %v1766 = vlaneseq
        %v1767 = vshrl.u32 %v1766, 7
        %v1768 = vsub.s32 %v1765, %v1767
        %v1769 = vrot.slane %v1755, %v1768
        %v1770 = vcombine.low %v1714, %v1746
        %v1771 = vcombine.high %v1714, %v1746
        %v1772 = vcombine.low %v1721, %v1753
        %v1773 = vcombine.high %v1721, %v1753
        %v1774 = vcombine.low %v1730, %v1762
        %v1775 = vcombine.high %v1730, %v1762
        %v1776 = vcombine.low %v1737, %v1769
        %v1777 = vcombine.high %v1737, %v1769
        %v1778 = vcombine.low %v1464, %v1480
        %v1779 = vcombine.high %v1464, %v1480
        %v1781 = vunpack.c.l.s4 1983009808
        %v1782 = vunpack.c.0.s8 %v1781
        %v1783 = vlaneseq
        %v1784 = vshrl.u32 %v1783, 7
        %v1785 = vsub.s32 %v1782, %v1784
        %v1786 = vrot.slane %v1778, %v1785
        %v1788 = vunpack.c.l.s4 1983009808
        %v1789 = vunpack.c.0.s8 %v1788
        %v1790 = vlaneseq
        %v1791 = vshrl.u32 %v1790, 7
        %v1792 = vsub.s32 %v1789, %v1791
        %v1793 = vrot.slane %v1779, %v1792
        %v1794 = vcombine.low %v1472, %v1488
        %v1795 = vcombine.high %v1472, %v1488
        %v1797 = vunpack.c.l.s4 1983009808
        %v1798 = vunpack.c.0.s8 %v1797
        %v1799 = vlaneseq
        %v1800 = vshrl.u32 %v1799, 7
        %v1801 = vsub.s32 %v1798, %v1800
        %v1802 = vrot.slane %v1794, %v1801
        %v1804 = vunpack.c.l.s4 1983009808
        %v1805 = vunpack.c.0.s8 %v1804
        %v1806 = vlaneseq
        %v1807 = vshrl.u32 %v1806, 7
        %v1808 = vsub.s32 %v1805, %v1807
        %v1809 = vrot.slane %v1795, %v1808
        %v1810 = vcombine.high %v1496, %v1457
        %v1812 = vunpack.c.l.s4 1983009808
        %v1813 = vunpack.c.0.s8 %v1812
        %v1814 = vlaneseq
        %v1815 = vshrl.u32 %v1814, 7
        %v1816 = vsub.s32 %v1813, %v1815
        %v1817 = vrot.slane %v1496, %v1816
        %v1819 = vunpack.c.l.s4 1983009808
        %v1820 = vunpack.c.0.s8 %v1819
        %v1821 = vlaneseq
        %v1822 = vshrl.u32 %v1821, 7
        %v1823 = vsub.s32 %v1820, %v1822
        %v1824 = vrot.slane %v1810, %v1823
        %v1825 = vcombine.high %v1504, %v1457
        %v1827 = vunpack.c.l.s4 1983009808
        %v1828 = vunpack.c.0.s8 %v1827
        %v1829 = vlaneseq
        %v1830 = vshrl.u32 %v1829, 7
        %v1831 = vsub.s32 %v1828, %v1830
        %v1832 = vrot.slane %v1504, %v1831
        %v1834 = vunpack.c.l.s4 1983009808
        %v1835 = vunpack.c.0.s8 %v1834
        %v1836 = vlaneseq
        %v1837 = vshrl.u32 %v1836, 7
        %v1838 = vsub.s32 %v1835, %v1837
        %v1839 = vrot.slane %v1825, %v1838
        %v1840 = vcombine.low %v1786, %v1802
        %v1841 = vcombine.high %v1786, %v1802
        %v1843 = vunpack.c.l.s4 1934713408
        %v1844 = vunpack.c.0.s8 %v1843
        %v1845 = vlaneseq
        %v1846 = vshrl.u32 %v1845, 7
        %v1847 = vsub.s32 %v1844, %v1846
        %v1848 = vrot.slane %v1840, %v1847
        %v1850 = vunpack.c.l.s4 1934713408
        %v1851 = vunpack.c.0.s8 %v1850
        %v1852 = vlaneseq
        %v1853 = vshrl.u32 %v1852, 7
        %v1854 = vsub.s32 %v1851, %v1853
        %v1855 = vrot.slane %v1841, %v1854
        %v1856 = vcombine.low %v1793, %v1809
        %v1857 = vcombine.high %v1793, %v1809
        %v1859 = vunpack.c.l.s4 1934713408
        %v1860 = vunpack.c.0.s8 %v1859
        %v1861 = vlaneseq
        %v1862 = vshrl.u32 %v1861, 7
        %v1863 = vsub.s32 %v1860, %v1862
        %v1864 = vrot.slane %v1856, %v1863
        %v1866 = vunpack.c.l.s4 1934713408
        %v1867 = vunpack.c.0.s8 %v1866
        %v1868 = vlaneseq
        %v1869 = vshrl.u32 %v1868, 7
        %v1870 = vsub.s32 %v1867, %v1869
        %v1871 = vrot.slane %v1857, %v1870
        %v1872 = vcombine.low %v1817, %v1832
        %v1873 = vcombine.high %v1817, %v1832
        %v1875 = vunpack.c.l.s4 1934713408
        %v1876 = vunpack.c.0.s8 %v1875
        %v1877 = vlaneseq
        %v1878 = vshrl.u32 %v1877, 7
        %v1879 = vsub.s32 %v1876, %v1878
        %v1880 = vrot.slane %v1872, %v1879
        %v1882 = vunpack.c.l.s4 1934713408
        %v1883 = vunpack.c.0.s8 %v1882
        %v1884 = vlaneseq
        %v1885 = vshrl.u32 %v1884, 7
        %v1886 = vsub.s32 %v1883, %v1885
        %v1887 = vrot.slane %v1873, %v1886
        %v1888 = vcombine.low %v1824, %v1839
        %v1889 = vcombine.high %v1824, %v1839
        %v1891 = vunpack.c.l.s4 1934713408
        %v1892 = vunpack.c.0.s8 %v1891
        %v1893 = vlaneseq
        %v1894 = vshrl.u32 %v1893, 7
        %v1895 = vsub.s32 %v1892, %v1894
        %v1896 = vrot.slane %v1888, %v1895
        %v1898 = vunpack.c.l.s4 1934713408
        %v1899 = vunpack.c.0.s8 %v1898
        %v1900 = vlaneseq
        %v1901 = vshrl.u32 %v1900, 7
        %v1902 = vsub.s32 %v1899, %v1901
        %v1903 = vrot.slane %v1889, %v1902
        %v1904 = vcombine.low %v1848, %v1880
        %v1905 = vcombine.high %v1848, %v1880
        %v1906 = vcombine.low %v1855, %v1887
        %v1907 = vcombine.high %v1855, %v1887
        %v1908 = vcombine.low %v1864, %v1896
        %v1909 = vcombine.high %v1864, %v1896
        %v1910 = vcombine.low %v1871, %v1903
        %v1911 = vcombine.high %v1871, %v1903
        %v1912 = vcombine.low %v1468, %v1484
        %v1913 = vcombine.high %v1468, %v1484
        %v1915 = vunpack.c.l.s4 1983009808
        %v1916 = vunpack.c.0.s8 %v1915
        %v1917 = vlaneseq
        %v1918 = vshrl.u32 %v1917, 7
        %v1919 = vsub.s32 %v1916, %v1918
        %v1920 = vrot.slane %v1912, %v1919
        %v1922 = vunpack.c.l.s4 1983009808
        %v1923 = vunpack.c.0.s8 %v1922
        %v1924 = vlaneseq
        %v1925 = vshrl.u32 %v1924, 7
        %v1926 = vsub.s32 %v1923, %v1925
        %v1927 = vrot.slane %v1913, %v1926
        %v1928 = vcombine.low %v1476, %v1492
        %v1929 = vcombine.high %v1476, %v1492
        %v1931 = vunpack.c.l.s4 1983009808
        %v1932 = vunpack.c.0.s8 %v1931
        %v1933 = vlaneseq
        %v1934 = vshrl.u32 %v1933, 7
        %v1935 = vsub.s32 %v1932, %v1934
        %v1936 = vrot.slane %v1928, %v1935
        %v1938 = vunpack.c.l.s4 1983009808
        %v1939 = vunpack.c.0.s8 %v1938
        %v1940 = vlaneseq
        %v1941 = vshrl.u32 %v1940, 7
        %v1942 = vsub.s32 %v1939, %v1941
        %v1943 = vrot.slane %v1929, %v1942
        %v1944 = vcombine.high %v1500, %v1460
        %v1946 = vunpack.c.l.s4 1983009808
        %v1947 = vunpack.c.0.s8 %v1946
        %v1948 = vlaneseq
        %v1949 = vshrl.u32 %v1948, 7
        %v1950 = vsub.s32 %v1947, %v1949
        %v1951 = vrot.slane %v1500, %v1950
        %v1953 = vunpack.c.l.s4 1983009808
        %v1954 = vunpack.c.0.s8 %v1953
        %v1955 = vlaneseq
        %v1956 = vshrl.u32 %v1955, 7
        %v1957 = vsub.s32 %v1954, %v1956
        %v1958 = vrot.slane %v1944, %v1957
        %v1959 = vcombine.high %v1508, %v1460
        %v1961 = vunpack.c.l.s4 1983009808
        %v1962 = vunpack.c.0.s8 %v1961
        %v1963 = vlaneseq
        %v1964 = vshrl.u32 %v1963, 7
        %v1965 = vsub.s32 %v1962, %v1964
        %v1966 = vrot.slane %v1508, %v1965
        %v1968 = vunpack.c.l.s4 1983009808
        %v1969 = vunpack.c.0.s8 %v1968
        %v1970 = vlaneseq
        %v1971 = vshrl.u32 %v1970, 7
        %v1972 = vsub.s32 %v1969, %v1971
        %v1973 = vrot.slane %v1959, %v1972
        %v1974 = vcombine.low %v1920, %v1936
        %v1975 = vcombine.high %v1920, %v1936
        %v1977 = vunpack.c.l.s4 1934713408
        %v1978 = vunpack.c.0.s8 %v1977
        %v1979 = vlaneseq
        %v1980 = vshrl.u32 %v1979, 7
        %v1981 = vsub.s32 %v1978, %v1980
        %v1982 = vrot.slane %v1974, %v1981
        %v1984 = vunpack.c.l.s4 1934713408
        %v1985 = vunpack.c.0.s8 %v1984
        %v1986 = vlaneseq
        %v1987 = vshrl.u32 %v1986, 7
        %v1988 = vsub.s32 %v1985, %v1987
        %v1989 = vrot.slane %v1975, %v1988
        %v1990 = vcombine.low %v1927, %v1943
        %v1991 = vcombine.high %v1927, %v1943
        %v1993 = vunpack.c.l.s4 1934713408
        %v1994 = vunpack.c.0.s8 %v1993
        %v1995 = vlaneseq
        %v1996 = vshrl.u32 %v1995, 7
        %v1997 = vsub.s32 %v1994, %v1996
        %v1998 = vrot.slane %v1990, %v1997
        %v2000 = vunpack.c.l.s4 1934713408
        %v2001 = vunpack.c.0.s8 %v2000
        %v2002 = vlaneseq
        %v2003 = vshrl.u32 %v2002, 7
        %v2004 = vsub.s32 %v2001, %v2003
        %v2005 = vrot.slane %v1991, %v2004
        %v2006 = vcombine.low %v1951, %v1966
        %v2007 = vcombine.high %v1951, %v1966
        %v2009 = vunpack.c.l.s4 1934713408
        %v2010 = vunpack.c.0.s8 %v2009
        %v2011 = vlaneseq
        %v2012 = vshrl.u32 %v2011, 7
        %v2013 = vsub.s32 %v2010, %v2012
        %v2014 = vrot.slane %v2006, %v2013
        %v2016 = vunpack.c.l.s4 1934713408
        %v2017 = vunpack.c.0.s8 %v2016
        %v2018 = vlaneseq
        %v2019 = vshrl.u32 %v2018, 7
        %v2020 = vsub.s32 %v2017, %v2019
        %v2021 = vrot.slane %v2007, %v2020
        %v2022 = vcombine.low %v1958, %v1973
        %v2023 = vcombine.high %v1958, %v1973
        %v2025 = vunpack.c.l.s4 1934713408
        %v2026 = vunpack.c.0.s8 %v2025
        %v2027 = vlaneseq
        %v2028 = vshrl.u32 %v2027, 7
        %v2029 = vsub.s32 %v2026, %v2028
        %v2030 = vrot.slane %v2022, %v2029
        %v2032 = vunpack.c.l.s4 1934713408
        %v2033 = vunpack.c.0.s8 %v2032
        %v2034 = vlaneseq
        %v2035 = vshrl.u32 %v2034, 7
        %v2036 = vsub.s32 %v2033, %v2035
        %v2037 = vrot.slane %v2023, %v2036
        %v2038 = vcombine.low %v1982, %v2014
        %v2039 = vcombine.high %v1982, %v2014
        %v2040 = vcombine.low %v1989, %v2021
        %v2041 = vcombine.high %v1989, %v2021
        %v2042 = vcombine.low %v1998, %v2030
        %v2043 = vcombine.high %v1998, %v2030
        %v2044 = vcombine.low %v2005, %v2037
        %v2045 = vcombine.high %v2005, %v2037
        %v2046 = vcombine.low %v1636, %v1638
        %v2047 = vcombine.high %v1636, %v1638
        %v2049 = vunpack.c.l.s4 1983009808
        %v2050 = vunpack.c.0.s8 %v2049
        %v2051 = vlaneseq
        %v2052 = vshrl.u32 %v2051, 7
        %v2053 = vsub.s32 %v2050, %v2052
        %v2054 = vrot.slane %v2046, %v2053
        %v2056 = vunpack.c.l.s4 1983009808
        %v2057 = vunpack.c.0.s8 %v2056
        %v2058 = vlaneseq
        %v2059 = vshrl.u32 %v2058, 7
        %v2060 = vsub.s32 %v2057, %v2059
        %v2061 = vrot.slane %v2047, %v2060
        %v2062 = vcombine.low %v1637, %v1639
        %v2063 = vcombine.high %v1637, %v1639
        %v2065 = vunpack.c.l.s4 1983009808
        %v2066 = vunpack.c.0.s8 %v2065
        %v2067 = vlaneseq
        %v2068 = vshrl.u32 %v2067, 7
        %v2069 = vsub.s32 %v2066, %v2068
        %v2070 = vrot.slane %v2062, %v2069
        %v2072 = vunpack.c.l.s4 1983009808
        %v2073 = vunpack.c.0.s8 %v2072
        %v2074 = vlaneseq
        %v2075 = vshrl.u32 %v2074, 7
        %v2076 = vsub.s32 %v2073, %v2075
        %v2077 = vrot.slane %v2063, %v2076
        %v2078 = vcombine.low %v1640, %v1642
        %v2079 = vcombine.high %v1640, %v1642
        %v2081 = vunpack.c.l.s4 1983009808
        %v2082 = vunpack.c.0.s8 %v2081
        %v2083 = vlaneseq
        %v2084 = vshrl.u32 %v2083, 7
        %v2085 = vsub.s32 %v2082, %v2084
        %v2086 = vrot.slane %v2078, %v2085
        %v2088 = vunpack.c.l.s4 1983009808
        %v2089 = vunpack.c.0.s8 %v2088
        %v2090 = vlaneseq
        %v2091 = vshrl.u32 %v2090, 7
        %v2092 = vsub.s32 %v2089, %v2091
        %v2093 = vrot.slane %v2079, %v2092
        %v2094 = vcombine.low %v1641, %v1643
        %v2095 = vcombine.high %v1641, %v1643
        %v2097 = vunpack.c.l.s4 1983009808
        %v2098 = vunpack.c.0.s8 %v2097
        %v2099 = vlaneseq
        %v2100 = vshrl.u32 %v2099, 7
        %v2101 = vsub.s32 %v2098, %v2100
        %v2102 = vrot.slane %v2094, %v2101
        %v2104 = vunpack.c.l.s4 1983009808
        %v2105 = vunpack.c.0.s8 %v2104
        %v2106 = vlaneseq
        %v2107 = vshrl.u32 %v2106, 7
        %v2108 = vsub.s32 %v2105, %v2107
        %v2109 = vrot.slane %v2095, %v2108
        %v2110 = vcombine.low %v2054, %v2070
        %v2111 = vcombine.high %v2054, %v2070
        %v2113 = vunpack.c.l.s4 1934713408
        %v2114 = vunpack.c.0.s8 %v2113
        %v2115 = vlaneseq
        %v2116 = vshrl.u32 %v2115, 7
        %v2117 = vsub.s32 %v2114, %v2116
        %v2118 = vrot.slane %v2110, %v2117
        %v2120 = vunpack.c.l.s4 1934713408
        %v2121 = vunpack.c.0.s8 %v2120
        %v2122 = vlaneseq
        %v2123 = vshrl.u32 %v2122, 7
        %v2124 = vsub.s32 %v2121, %v2123
        %v2125 = vrot.slane %v2111, %v2124
        %v2126 = vcombine.low %v2061, %v2077
        %v2128 = vunpack.c.l.s4 1934713408
        %v2129 = vunpack.c.0.s8 %v2128
        %v2130 = vlaneseq
        %v2131 = vshrl.u32 %v2130, 7
        %v2132 = vsub.s32 %v2129, %v2131
        %v2133 = vrot.slane %v2126, %v2132
        %v2134 = vcombine.low %v2086, %v2102
        %v2135 = vcombine.high %v2086, %v2102
        %v2137 = vunpack.c.l.s4 1934713408
        %v2138 = vunpack.c.0.s8 %v2137
        %v2139 = vlaneseq
        %v2140 = vshrl.u32 %v2139, 7
        %v2141 = vsub.s32 %v2138, %v2140
        %v2142 = vrot.slane %v2134, %v2141
        %v2144 = vunpack.c.l.s4 1934713408
        %v2145 = vunpack.c.0.s8 %v2144
        %v2146 = vlaneseq
        %v2147 = vshrl.u32 %v2146, 7
        %v2148 = vsub.s32 %v2145, %v2147
        %v2149 = vrot.slane %v2135, %v2148
        %v2150 = vcombine.low %v2093, %v2109
        %v2152 = vunpack.c.l.s4 1934713408
        %v2153 = vunpack.c.0.s8 %v2152
        %v2154 = vlaneseq
        %v2155 = vshrl.u32 %v2154, 7
        %v2156 = vsub.s32 %v2153, %v2155
        %v2157 = vrot.slane %v2150, %v2156
        %v2158 = vcombine.low %v2118, %v2142
        %v2159 = vcombine.high %v2118, %v2142
        %v2160 = vcombine.low %v2125, %v2149
        %v2161 = vcombine.high %v2125, %v2149
        %v2162 = vcombine.low %v2133, %v2157
        %v2163 = vcombine.high %v2133, %v2157
        %v2164 = vcombine.low %v1770, %v1772
        %v2165 = vcombine.high %v1770, %v1772
        %v2167 = vunpack.c.l.s4 1983009808
        %v2168 = vunpack.c.0.s8 %v2167
        %v2169 = vlaneseq
        %v2170 = vshrl.u32 %v2169, 7
        %v2171 = vsub.s32 %v2168, %v2170
        %v2172 = vrot.slane %v2164, %v2171
        %v2174 = vunpack.c.l.s4 1983009808
        %v2175 = vunpack.c.0.s8 %v2174
        %v2176 = vlaneseq
        %v2177 = vshrl.u32 %v2176, 7
        %v2178 = vsub.s32 %v2175, %v2177
        %v2179 = vrot.slane %v2165, %v2178
        %v2180 = vcombine.low %v1771, %v1773
        %v2181 = vcombine.high %v1771, %v1773
        %v2183 = vunpack.c.l.s4 1983009808
        %v2184 = vunpack.c.0.s8 %v2183
        %v2185 = vlaneseq
        %v2186 = vshrl.u32 %v2185, 7
        %v2187 = vsub.s32 %v2184, %v2186
        %v2188 = vrot.slane %v2180, %v2187
        %v2190 = vunpack.c.l.s4 1983009808
        %v2191 = vunpack.c.0.s8 %v2190
        %v2192 = vlaneseq
        %v2193 = vshrl.u32 %v2192, 7
        %v2194 = vsub.s32 %v2191, %v2193
        %v2195 = vrot.slane %v2181, %v2194
        %v2196 = vcombine.low %v1774, %v1776
        %v2197 = vcombine.high %v1774, %v1776
        %v2199 = vunpack.c.l.s4 1983009808
        %v2200 = vunpack.c.0.s8 %v2199
        %v2201 = vlaneseq
        %v2202 = vshrl.u32 %v2201, 7
        %v2203 = vsub.s32 %v2200, %v2202
        %v2204 = vrot.slane %v2196, %v2203
        %v2206 = vunpack.c.l.s4 1983009808
        %v2207 = vunpack.c.0.s8 %v2206
        %v2208 = vlaneseq
        %v2209 = vshrl.u32 %v2208, 7
        %v2210 = vsub.s32 %v2207, %v2209
        %v2211 = vrot.slane %v2197, %v2210
        %v2212 = vcombine.low %v1775, %v1777
        %v2213 = vcombine.high %v1775, %v1777
        %v2215 = vunpack.c.l.s4 1983009808
        %v2216 = vunpack.c.0.s8 %v2215
        %v2217 = vlaneseq
        %v2218 = vshrl.u32 %v2217, 7
        %v2219 = vsub.s32 %v2216, %v2218
        %v2220 = vrot.slane %v2212, %v2219
        %v2222 = vunpack.c.l.s4 1983009808
        %v2223 = vunpack.c.0.s8 %v2222
        %v2224 = vlaneseq
        %v2225 = vshrl.u32 %v2224, 7
        %v2226 = vsub.s32 %v2223, %v2225
        %v2227 = vrot.slane %v2213, %v2226
        %v2228 = vcombine.low %v2172, %v2188
        %v2229 = vcombine.high %v2172, %v2188
        %v2231 = vunpack.c.l.s4 1934713408
        %v2232 = vunpack.c.0.s8 %v2231
        %v2233 = vlaneseq
        %v2234 = vshrl.u32 %v2233, 7
        %v2235 = vsub.s32 %v2232, %v2234
        %v2236 = vrot.slane %v2228, %v2235
        %v2238 = vunpack.c.l.s4 1934713408
        %v2239 = vunpack.c.0.s8 %v2238
        %v2240 = vlaneseq
        %v2241 = vshrl.u32 %v2240, 7
        %v2242 = vsub.s32 %v2239, %v2241
        %v2243 = vrot.slane %v2229, %v2242
        %v2244 = vcombine.low %v2179, %v2195
        %v2246 = vunpack.c.l.s4 1934713408
        %v2247 = vunpack.c.0.s8 %v2246
        %v2248 = vlaneseq
        %v2249 = vshrl.u32 %v2248, 7
        %v2250 = vsub.s32 %v2247, %v2249
        %v2251 = vrot.slane %v2244, %v2250
        %v2252 = vcombine.low %v2204, %v2220
        %v2253 = vcombine.high %v2204, %v2220
        %v2255 = vunpack.c.l.s4 1934713408
        %v2256 = vunpack.c.0.s8 %v2255
        %v2257 = vlaneseq
        %v2258 = vshrl.u32 %v2257, 7
        %v2259 = vsub.s32 %v2256, %v2258
        %v2260 = vrot.slane %v2252, %v2259
        %v2262 = vunpack.c.l.s4 1934713408
        %v2263 = vunpack.c.0.s8 %v2262
        %v2264 = vlaneseq
        %v2265 = vshrl.u32 %v2264, 7
        %v2266 = vsub.s32 %v2263, %v2265
        %v2267 = vrot.slane %v2253, %v2266
        %v2268 = vcombine.low %v2211, %v2227
        %v2270 = vunpack.c.l.s4 1934713408
        %v2271 = vunpack.c.0.s8 %v2270
        %v2272 = vlaneseq
        %v2273 = vshrl.u32 %v2272, 7
        %v2274 = vsub.s32 %v2271, %v2273
        %v2275 = vrot.slane %v2268, %v2274
        %v2276 = vcombine.low %v2236, %v2260
        %v2277 = vcombine.high %v2236, %v2260
        %v2278 = vcombine.low %v2243, %v2267
        %v2279 = vcombine.high %v2243, %v2267
        %v2280 = vcombine.low %v2251, %v2275
        %v2281 = vcombine.high %v2251, %v2275
        %v2282 = vcombine.low %v1904, %v1906
        %v2283 = vcombine.high %v1904, %v1906
        %v2285 = vunpack.c.l.s4 1983009808
        %v2286 = vunpack.c.0.s8 %v2285
        %v2287 = vlaneseq
        %v2288 = vshrl.u32 %v2287, 7
        %v2289 = vsub.s32 %v2286, %v2288
        %v2290 = vrot.slane %v2282, %v2289
        %v2292 = vunpack.c.l.s4 1983009808
        %v2293 = vunpack.c.0.s8 %v2292
        %v2294 = vlaneseq
        %v2295 = vshrl.u32 %v2294, 7
        %v2296 = vsub.s32 %v2293, %v2295
        %v2297 = vrot.slane %v2283, %v2296
        %v2298 = vcombine.low %v1905, %v1907
        %v2299 = vcombine.high %v1905, %v1907
        %v2301 = vunpack.c.l.s4 1983009808
        %v2302 = vunpack.c.0.s8 %v2301
        %v2303 = vlaneseq
        %v2304 = vshrl.u32 %v2303, 7
        %v2305 = vsub.s32 %v2302, %v2304
        %v2306 = vrot.slane %v2298, %v2305
        %v2308 = vunpack.c.l.s4 1983009808
        %v2309 = vunpack.c.0.s8 %v2308
        %v2310 = vlaneseq
        %v2311 = vshrl.u32 %v2310, 7
        %v2312 = vsub.s32 %v2309, %v2311
        %v2313 = vrot.slane %v2299, %v2312
        %v2314 = vcombine.low %v1908, %v1910
        %v2315 = vcombine.high %v1908, %v1910
        %v2317 = vunpack.c.l.s4 1983009808
        %v2318 = vunpack.c.0.s8 %v2317
        %v2319 = vlaneseq
        %v2320 = vshrl.u32 %v2319, 7
        %v2321 = vsub.s32 %v2318, %v2320
        %v2322 = vrot.slane %v2314, %v2321
        %v2324 = vunpack.c.l.s4 1983009808
        %v2325 = vunpack.c.0.s8 %v2324
        %v2326 = vlaneseq
        %v2327 = vshrl.u32 %v2326, 7
        %v2328 = vsub.s32 %v2325, %v2327
        %v2329 = vrot.slane %v2315, %v2328
        %v2330 = vcombine.low %v1909, %v1911
        %v2331 = vcombine.high %v1909, %v1911
        %v2333 = vunpack.c.l.s4 1983009808
        %v2334 = vunpack.c.0.s8 %v2333
        %v2335 = vlaneseq
        %v2336 = vshrl.u32 %v2335, 7
        %v2337 = vsub.s32 %v2334, %v2336
        %v2338 = vrot.slane %v2330, %v2337
        %v2340 = vunpack.c.l.s4 1983009808
        %v2341 = vunpack.c.0.s8 %v2340
        %v2342 = vlaneseq
        %v2343 = vshrl.u32 %v2342, 7
        %v2344 = vsub.s32 %v2341, %v2343
        %v2345 = vrot.slane %v2331, %v2344
        %v2346 = vcombine.low %v2290, %v2306
        %v2347 = vcombine.high %v2290, %v2306
        %v2349 = vunpack.c.l.s4 1934713408
        %v2350 = vunpack.c.0.s8 %v2349
        %v2351 = vlaneseq
        %v2352 = vshrl.u32 %v2351, 7
        %v2353 = vsub.s32 %v2350, %v2352
        %v2354 = vrot.slane %v2346, %v2353
        %v2356 = vunpack.c.l.s4 1934713408
        %v2357 = vunpack.c.0.s8 %v2356
        %v2358 = vlaneseq
        %v2359 = vshrl.u32 %v2358, 7
        %v2360 = vsub.s32 %v2357, %v2359
        %v2361 = vrot.slane %v2347, %v2360
        %v2362 = vcombine.low %v2297, %v2313
        %v2364 = vunpack.c.l.s4 1934713408
        %v2365 = vunpack.c.0.s8 %v2364
        %v2366 = vlaneseq
        %v2367 = vshrl.u32 %v2366, 7
        %v2368 = vsub.s32 %v2365, %v2367
        %v2369 = vrot.slane %v2362, %v2368
        %v2370 = vcombine.low %v2322, %v2338
        %v2371 = vcombine.high %v2322, %v2338
        %v2373 = vunpack.c.l.s4 1934713408
        %v2374 = vunpack.c.0.s8 %v2373
        %v2375 = vlaneseq
        %v2376 = vshrl.u32 %v2375, 7
        %v2377 = vsub.s32 %v2374, %v2376
        %v2378 = vrot.slane %v2370, %v2377
        %v2380 = vunpack.c.l.s4 1934713408
        %v2381 = vunpack.c.0.s8 %v2380
        %v2382 = vlaneseq
        %v2383 = vshrl.u32 %v2382, 7
        %v2384 = vsub.s32 %v2381, %v2383
        %v2385 = vrot.slane %v2371, %v2384
        %v2386 = vcombine.low %v2329, %v2345
        %v2388 = vunpack.c.l.s4 1934713408
        %v2389 = vunpack.c.0.s8 %v2388
        %v2390 = vlaneseq
        %v2391 = vshrl.u32 %v2390, 7
        %v2392 = vsub.s32 %v2389, %v2391
        %v2393 = vrot.slane %v2386, %v2392
        %v2394 = vcombine.low %v2354, %v2378
        %v2395 = vcombine.high %v2354, %v2378
        %v2396 = vcombine.low %v2361, %v2385
        %v2397 = vcombine.high %v2361, %v2385
        %v2398 = vcombine.low %v2369, %v2393
        %v2399 = vcombine.high %v2369, %v2393
        %v2400 = vcombine.low %v2038, %v2040
        %v2401 = vcombine.high %v2038, %v2040
        %v2403 = vunpack.c.l.s4 1983009808
        %v2404 = vunpack.c.0.s8 %v2403
        %v2405 = vlaneseq
        %v2406 = vshrl.u32 %v2405, 7
        %v2407 = vsub.s32 %v2404, %v2406
        %v2408 = vrot.slane %v2400, %v2407
        %v2410 = vunpack.c.l.s4 1983009808
        %v2411 = vunpack.c.0.s8 %v2410
        %v2412 = vlaneseq
        %v2413 = vshrl.u32 %v2412, 7
        %v2414 = vsub.s32 %v2411, %v2413
        %v2415 = vrot.slane %v2401, %v2414
        %v2416 = vcombine.low %v2039, %v2041
        %v2417 = vcombine.high %v2039, %v2041
        %v2419 = vunpack.c.l.s4 1983009808
        %v2420 = vunpack.c.0.s8 %v2419
        %v2421 = vlaneseq
        %v2422 = vshrl.u32 %v2421, 7
        %v2423 = vsub.s32 %v2420, %v2422
        %v2424 = vrot.slane %v2416, %v2423
        %v2426 = vunpack.c.l.s4 1983009808
        %v2427 = vunpack.c.0.s8 %v2426
        %v2428 = vlaneseq
        %v2429 = vshrl.u32 %v2428, 7
        %v2430 = vsub.s32 %v2427, %v2429
        %v2431 = vrot.slane %v2417, %v2430
        %v2432 = vcombine.low %v2042, %v2044
        %v2433 = vcombine.high %v2042, %v2044
        %v2435 = vunpack.c.l.s4 1983009808
        %v2436 = vunpack.c.0.s8 %v2435
        %v2437 = vlaneseq
        %v2438 = vshrl.u32 %v2437, 7
        %v2439 = vsub.s32 %v2436, %v2438
        %v2440 = vrot.slane %v2432, %v2439
        %v2442 = vunpack.c.l.s4 1983009808
        %v2443 = vunpack.c.0.s8 %v2442
        %v2444 = vlaneseq
        %v2445 = vshrl.u32 %v2444, 7
        %v2446 = vsub.s32 %v2443, %v2445
        %v2447 = vrot.slane %v2433, %v2446
        %v2448 = vcombine.low %v2043, %v2045
        %v2449 = vcombine.high %v2043, %v2045
        %v2451 = vunpack.c.l.s4 1983009808
        %v2452 = vunpack.c.0.s8 %v2451
        %v2453 = vlaneseq
        %v2454 = vshrl.u32 %v2453, 7
        %v2455 = vsub.s32 %v2452, %v2454
        %v2456 = vrot.slane %v2448, %v2455
        %v2458 = vunpack.c.l.s4 1983009808
        %v2459 = vunpack.c.0.s8 %v2458
        %v2460 = vlaneseq
        %v2461 = vshrl.u32 %v2460, 7
        %v2462 = vsub.s32 %v2459, %v2461
        %v2463 = vrot.slane %v2449, %v2462
        %v2464 = vcombine.low %v2408, %v2424
        %v2465 = vcombine.high %v2408, %v2424
        %v2467 = vunpack.c.l.s4 1934713408
        %v2468 = vunpack.c.0.s8 %v2467
        %v2469 = vlaneseq
        %v2470 = vshrl.u32 %v2469, 7
        %v2471 = vsub.s32 %v2468, %v2470
        %v2472 = vrot.slane %v2464, %v2471
        %v2474 = vunpack.c.l.s4 1934713408
        %v2475 = vunpack.c.0.s8 %v2474
        %v2476 = vlaneseq
        %v2477 = vshrl.u32 %v2476, 7
        %v2478 = vsub.s32 %v2475, %v2477
        %v2479 = vrot.slane %v2465, %v2478
        %v2480 = vcombine.low %v2415, %v2431
        %v2482 = vunpack.c.l.s4 1934713408
        %v2483 = vunpack.c.0.s8 %v2482
        %v2484 = vlaneseq
        %v2485 = vshrl.u32 %v2484, 7
        %v2486 = vsub.s32 %v2483, %v2485
        %v2487 = vrot.slane %v2480, %v2486
        %v2488 = vcombine.low %v2440, %v2456
        %v2489 = vcombine.high %v2440, %v2456
        %v2491 = vunpack.c.l.s4 1934713408
        %v2492 = vunpack.c.0.s8 %v2491
        %v2493 = vlaneseq
        %v2494 = vshrl.u32 %v2493, 7
        %v2495 = vsub.s32 %v2492, %v2494
        %v2496 = vrot.slane %v2488, %v2495
        %v2498 = vunpack.c.l.s4 1934713408
        %v2499 = vunpack.c.0.s8 %v2498
        %v2500 = vlaneseq
        %v2501 = vshrl.u32 %v2500, 7
        %v2502 = vsub.s32 %v2499, %v2501
        %v2503 = vrot.slane %v2489, %v2502
        %v2504 = vcombine.low %v2447, %v2463
        %v2506 = vunpack.c.l.s4 1934713408
        %v2507 = vunpack.c.0.s8 %v2506
        %v2508 = vlaneseq
        %v2509 = vshrl.u32 %v2508, 7
        %v2510 = vsub.s32 %v2507, %v2509
        %v2511 = vrot.slane %v2504, %v2510
        %v2512 = vcombine.low %v2472, %v2496
        %v2513 = vcombine.high %v2472, %v2496
        %v2514 = vcombine.low %v2479, %v2503
        %v2515 = vcombine.high %v2479, %v2503
        %v2516 = vcombine.low %v2487, %v2511
        %v2517 = vcombine.high %v2487, %v2511
        %v2520 = vpack.i.b16 %v2276, %v2158
        %v2521 = vshrl.u32 %v2158, 16
        %v2522 = vshrl.u32 %v2276, 16
        %v2523 = vpack.i.b16 %v2522, %v2521
        %v2526 = vpack.i.b16 %v2277, %v2159
        %v2527 = vshrl.u32 %v2159, 16
        %v2528 = vshrl.u32 %v2277, 16
        %v2529 = vpack.i.b16 %v2528, %v2527
        %v2532 = vpack.i.b16 %v2278, %v2160
        %v2533 = vshrl.u32 %v2160, 16
        %v2534 = vshrl.u32 %v2278, 16
        %v2535 = vpack.i.b16 %v2534, %v2533
        %v2538 = vpack.i.b16 %v2279, %v2161
        %v2539 = vshrl.u32 %v2161, 16
        %v2540 = vshrl.u32 %v2279, 16
        %v2541 = vpack.i.b16 %v2540, %v2539
        %v2544 = vpack.i.b16 %v2280, %v2162
        %v2546 = vshrl.u32 %v2162, 16
        %v2547 = vshrl.u32 %v2280, 16
        %v2548 = vpack.i.b16 %v2547, %v2546
        %v2552 = vpack.i.b16 %v2281, %v2163
        %v2554 = vshrl.u32 %v2163, 16
        %v2555 = vshrl.u32 %v2281, 16
        %v2556 = vpack.i.b16 %v2555, %v2554
        %v2560 = vpack.i.b16 %v2512, %v2394
        %v2561 = vshrl.u32 %v2394, 16
        %v2562 = vshrl.u32 %v2512, 16
        %v2563 = vpack.i.b16 %v2562, %v2561
        %v2566 = vpack.i.b16 %v2513, %v2395
        %v2567 = vshrl.u32 %v2395, 16
        %v2568 = vshrl.u32 %v2513, 16
        %v2569 = vpack.i.b16 %v2568, %v2567
        %v2572 = vpack.i.b16 %v2514, %v2396
        %v2573 = vshrl.u32 %v2396, 16
        %v2574 = vshrl.u32 %v2514, 16
        %v2575 = vpack.i.b16 %v2574, %v2573
        %v2578 = vpack.i.b16 %v2515, %v2397
        %v2579 = vshrl.u32 %v2397, 16
        %v2580 = vshrl.u32 %v2515, 16
        %v2581 = vpack.i.b16 %v2580, %v2579
        %v2584 = vpack.i.b16 %v2516, %v2398
        %v2586 = vshrl.u32 %v2398, 16
        %v2587 = vshrl.u32 %v2516, 16
        %v2588 = vpack.i.b16 %v2587, %v2586
        %v2592 = vpack.i.b16 %v2517, %v2399
        %v2594 = vshrl.u32 %v2399, 16
        %v2595 = vshrl.u32 %v2517, 16
        %v2596 = vpack.i.b16 %v2595, %v2594
        %vm2598 = vcmask 261120
        %v2600 = vsel %vm2598, %v2520, 0
        %v2603 = vsel %vm2598, %v2560, 0
        %v2606 = vsel %vm2598, %v2532, 0
        %v2609 = vsel %vm2598, %v2572, 0
        %2611 = vmatprep.subr.bf16.mxu0 0
        %2612 = vmatpush1.bf16.xpose.msra.mxu0 %v2606
        %2613 = vmatprep.subr.bf16.mxu0 0
        %2614 = vmatpush1.bf16.xpose.msra.mxu0 %v2609
        %2615 = vmatprep.subr.bf16.mxu0 0
        %2616 = vmatpush1.bf16.xpose.msra.mxu0 0
        %2617 = vmatprep.subr.bf16.mxu0 0
        %2618 = vmatpush1.bf16.xpose.msra.mxu0 0
        %2619 = vmatprep.subr.bf16.mxu0 0
        %2620 = vmatpush1.bf16.xpose.msra.mxu0 0
        %2621 = vmatprep.subr.bf16.mxu0 0
        %2622 = vmatpush1.bf16.xpose.msra.mxu0 0
        %2623 = vmatprep.subr.bf16.mxu0 0
        %2624 = vmatpush1.bf16.xpose.msra.mxu0 0
        %2625 = vmatprep.subr.bf16.mxu0 0
        %2626 = vmatpush1.bf16.xpose.msra.mxu0 0
        %2627 = vmatprep.subr.bf16.mxu0 0
        %2628 = vmatpush1.bf16.xpose.msra.mxu0 0
        %2629 = vmatprep.subr.bf16.mxu0 0
        %2630 = vmatpush1.bf16.xpose.msra.mxu0 0
        %2631 = vmatprep.subr.bf16.mxu0 0
        %2632 = vmatpush1.bf16.xpose.msra.mxu0 0
        %2633 = vmatprep.subr.bf16.mxu0 0
        %2634 = vmatpush1.bf16.xpose.msra.mxu0 0
        %2635 = vmatprep.subr.bf16.mxu0 0
        %2636 = vmatpush1.bf16.xpose.msra.mxu0 0
        %2637 = vmatprep.subr.bf16.mxu0 0
        %2638 = vmatpush1.bf16.xpose.msra.mxu0 0
        %2639 = vmatprep.subr.bf16.mxu0 0
        %2640 = vmatpush1.bf16.xpose.msra.mxu0 0
        %2641 = vmatprep.subr.bf16.mxu0 0
        %2642 = vmatpush1.bf16.xpose.msra.mxu0 0
        %2643 = vmatprep.mubr.bf16.mxu0 0
        %2644 = vmatmul.mubr.bf16.gmra.mrb[0].mxu0 %v2600
        %v2645 = vpop.f32.mrb[0].mxu0
        %v2646 = vadd.f32 0.0, %v2645
        %v2647 = vpop.f32.mrb[0].mxu0
        %v2648 = vpop.f32.mrb[0].mxu0
        %v2649 = vadd.f32 0.0, %v2648
        %v2650 = vpop.f32.mrb[0].mxu0
        %2651 = vmatprep.mubr.bf16.mxu0 0
        %2652 = vmatmul.mubr.bf16.gmra.mrb[0].mxu0 %v2603
        %v2653 = vpop.f32.mrb[0].mxu0
        %v2654 = vadd.f32 0.0, %v2653
        %v2655 = vpop.f32.mrb[0].mxu0
        %v2656 = vpop.f32.mrb[0].mxu0
        %v2657 = vadd.f32 0.0, %v2656
        %v2658 = vpop.f32.mrb[0].mxu0
        %2659 = vdwg.mxu0
        %v2661 = vsel %vm2598, %v2523, 0
        %v2664 = vsel %vm2598, %v2563, 0
        %v2667 = vsel %vm2598, %v2535, 0
        %v2670 = vsel %vm2598, %v2575, 0
        %2672 = vmatprep.subr.bf16.mxu0 0
        %2673 = vmatpush1.bf16.xpose.msra.mxu0 %v2667
        %2674 = vmatprep.subr.bf16.mxu0 0
        %2675 = vmatpush1.bf16.xpose.msra.mxu0 %v2670
        %2676 = vmatprep.subr.bf16.mxu0 0
        %2677 = vmatpush1.bf16.xpose.msra.mxu0 0
        %2678 = vmatprep.subr.bf16.mxu0 0
        %2679 = vmatpush1.bf16.xpose.msra.mxu0 0
        %2680 = vmatprep.subr.bf16.mxu0 0
        %2681 = vmatpush1.bf16.xpose.msra.mxu0 0
        %2682 = vmatprep.subr.bf16.mxu0 0
        %2683 = vmatpush1.bf16.xpose.msra.mxu0 0
        %2684 = vmatprep.subr.bf16.mxu0 0
        %2685 = vmatpush1.bf16.xpose.msra.mxu0 0
        %2686 = vmatprep.subr.bf16.mxu0 0
        %2687 = vmatpush1.bf16.xpose.msra.mxu0 0
        %2688 = vmatprep.subr.bf16.mxu0 0
        %2689 = vmatpush1.bf16.xpose.msra.mxu0 0
        %2690 = vmatprep.subr.bf16.mxu0 0
        %2691 = vmatpush1.bf16.xpose.msra.mxu0 0
        %2692 = vmatprep.subr.bf16.mxu0 0
        %2693 = vmatpush1.bf16.xpose.msra.mxu0 0
        %2694 = vmatprep.subr.bf16.mxu0 0
        %2695 = vmatpush1.bf16.xpose.msra.mxu0 0
        %2696 = vmatprep.subr.bf16.mxu0 0
        %2697 = vmatpush1.bf16.xpose.msra.mxu0 0
        %2698 = vmatprep.subr.bf16.mxu0 0
        %2699 = vmatpush1.bf16.xpose.msra.mxu0 0
        %2700 = vmatprep.subr.bf16.mxu0 0
        %2701 = vmatpush1.bf16.xpose.msra.mxu0 0
        %2702 = vmatprep.subr.bf16.mxu0 0
        %2703 = vmatpush1.bf16.xpose.msra.mxu0 0
        %2704 = vmatprep.mubr.bf16.mxu0 0
        %2705 = vmatmul.mubr.bf16.gmra.mrb[0].mxu0 %v2661
        %v2706 = vpop.f32.mrb[0].mxu0
        %v2707 = vadd.f32 0.0, %v2706
        %v2708 = vpop.f32.mrb[0].mxu0
        %v2709 = vpop.f32.mrb[0].mxu0
        %v2710 = vadd.f32 0.0, %v2709
        %v2711 = vpop.f32.mrb[0].mxu0
        %2712 = vmatprep.mubr.bf16.mxu0 0
        %2713 = vmatmul.mubr.bf16.gmra.mrb[0].mxu0 %v2664
        %v2714 = vpop.f32.mrb[0].mxu0
        %v2715 = vadd.f32 0.0, %v2714
        %v2716 = vpop.f32.mrb[0].mxu0
        %v2717 = vpop.f32.mrb[0].mxu0
        %v2718 = vadd.f32 0.0, %v2717
        %v2719 = vpop.f32.mrb[0].mxu0
        %2720 = vdwg.mxu0
        %v2722 = vsel %vm2598, %v2526, 0
        %v2725 = vsel %vm2598, %v2566, 0
        %v2728 = vsel %vm2598, %v2538, 0
        %v2731 = vsel %vm2598, %v2578, 0
        %2733 = vmatprep.subr.bf16.mxu0 0
        %2734 = vmatpush1.bf16.xpose.msra.mxu0 %v2728
        %2735 = vmatprep.subr.bf16.mxu0 0
        %2736 = vmatpush1.bf16.xpose.msra.mxu0 %v2731
        %2737 = vmatprep.subr.bf16.mxu0 0
        %2738 = vmatpush1.bf16.xpose.msra.mxu0 0
        %2739 = vmatprep.subr.bf16.mxu0 0
        %2740 = vmatpush1.bf16.xpose.msra.mxu0 0
        %2741 = vmatprep.subr.bf16.mxu0 0
        %2742 = vmatpush1.bf16.xpose.msra.mxu0 0
        %2743 = vmatprep.subr.bf16.mxu0 0
        %2744 = vmatpush1.bf16.xpose.msra.mxu0 0
        %2745 = vmatprep.subr.bf16.mxu0 0
        %2746 = vmatpush1.bf16.xpose.msra.mxu0 0
        %2747 = vmatprep.subr.bf16.mxu0 0
        %2748 = vmatpush1.bf16.xpose.msra.mxu0 0
        %2749 = vmatprep.subr.bf16.mxu0 0
        %2750 = vmatpush1.bf16.xpose.msra.mxu0 0
        %2751 = vmatprep.subr.bf16.mxu0 0
        %2752 = vmatpush1.bf16.xpose.msra.mxu0 0
        %2753 = vmatprep.subr.bf16.mxu0 0
        %2754 = vmatpush1.bf16.xpose.msra.mxu0 0
        %2755 = vmatprep.subr.bf16.mxu0 0
        %2756 = vmatpush1.bf16.xpose.msra.mxu0 0
        %2757 = vmatprep.subr.bf16.mxu0 0
        %2758 = vmatpush1.bf16.xpose.msra.mxu0 0
        %2759 = vmatprep.subr.bf16.mxu0 0
        %2760 = vmatpush1.bf16.xpose.msra.mxu0 0
        %2761 = vmatprep.subr.bf16.mxu0 0
        %2762 = vmatpush1.bf16.xpose.msra.mxu0 0
        %2763 = vmatprep.subr.bf16.mxu0 0
        %2764 = vmatpush1.bf16.xpose.msra.mxu0 0
        %2765 = vmatprep.mubr.bf16.mxu0 0
        %2766 = vmatmul.mubr.bf16.gmra.mrb[0].mxu0 %v2722
        %v2767 = vpop.f32.mrb[0].mxu0
        %v2768 = vadd.f32 0.0, %v2767
        %v2769 = vpop.f32.mrb[0].mxu0
        %v2770 = vpop.f32.mrb[0].mxu0
        %v2771 = vadd.f32 0.0, %v2770
        %v2772 = vpop.f32.mrb[0].mxu0
        %2773 = vmatprep.mubr.bf16.mxu0 0
        %2774 = vmatmul.mubr.bf16.gmra.mrb[0].mxu0 %v2725
        %v2775 = vpop.f32.mrb[0].mxu0
        %v2776 = vadd.f32 0.0, %v2775
        %v2777 = vpop.f32.mrb[0].mxu0
        %v2778 = vpop.f32.mrb[0].mxu0
        %v2779 = vadd.f32 0.0, %v2778
        %v2780 = vpop.f32.mrb[0].mxu0
        %2781 = vdwg.mxu0
        %v2783 = vsel %vm2598, %v2529, 0
        %v2786 = vsel %vm2598, %v2569, 0
        %v2789 = vsel %vm2598, %v2541, 0
        %v2792 = vsel %vm2598, %v2581, 0
        %2794 = vmatprep.subr.bf16.mxu0 0
        %2795 = vmatpush1.bf16.xpose.msra.mxu0 %v2789
        %2796 = vmatprep.subr.bf16.mxu0 0
        %2797 = vmatpush1.bf16.xpose.msra.mxu0 %v2792
        %2798 = vmatprep.subr.bf16.mxu0 0
        %2799 = vmatpush1.bf16.xpose.msra.mxu0 0
        %2800 = vmatprep.subr.bf16.mxu0 0
        %2801 = vmatpush1.bf16.xpose.msra.mxu0 0
        %2802 = vmatprep.subr.bf16.mxu0 0
        %2803 = vmatpush1.bf16.xpose.msra.mxu0 0
        %2804 = vmatprep.subr.bf16.mxu0 0
        %2805 = vmatpush1.bf16.xpose.msra.mxu0 0
        %2806 = vmatprep.subr.bf16.mxu0 0
        %2807 = vmatpush1.bf16.xpose.msra.mxu0 0
        %2808 = vmatprep.subr.bf16.mxu0 0
        %2809 = vmatpush1.bf16.xpose.msra.mxu0 0
        %2810 = vmatprep.subr.bf16.mxu0 0
        %2811 = vmatpush1.bf16.xpose.msra.mxu0 0
        %2812 = vmatprep.subr.bf16.mxu0 0
        %2813 = vmatpush1.bf16.xpose.msra.mxu0 0
        %2814 = vmatprep.subr.bf16.mxu0 0
        %2815 = vmatpush1.bf16.xpose.msra.mxu0 0
        %2816 = vmatprep.subr.bf16.mxu0 0
        %2817 = vmatpush1.bf16.xpose.msra.mxu0 0
        %2818 = vmatprep.subr.bf16.mxu0 0
        %2819 = vmatpush1.bf16.xpose.msra.mxu0 0
        %2820 = vmatprep.subr.bf16.mxu0 0
        %2821 = vmatpush1.bf16.xpose.msra.mxu0 0
        %2822 = vmatprep.subr.bf16.mxu0 0
        %2823 = vmatpush1.bf16.xpose.msra.mxu0 0
        %2824 = vmatprep.subr.bf16.mxu0 0
        %2825 = vmatpush1.bf16.xpose.msra.mxu0 0
        %2826 = vmatprep.mubr.bf16.mxu0 0
        %2827 = vmatmul.mubr.bf16.gmra.mrb[0].mxu0 %v2783
        %v2828 = vpop.f32.mrb[0].mxu0
        %v2829 = vadd.f32 0.0, %v2828
        %v2830 = vpop.f32.mrb[0].mxu0
        %v2831 = vpop.f32.mrb[0].mxu0
        %v2832 = vadd.f32 0.0, %v2831
        %v2833 = vpop.f32.mrb[0].mxu0
        %2834 = vmatprep.mubr.bf16.mxu0 0
        %2835 = vmatmul.mubr.bf16.gmra.mrb[0].mxu0 %v2786
        %v2836 = vpop.f32.mrb[0].mxu0
        %v2837 = vadd.f32 0.0, %v2836
        %v2838 = vpop.f32.mrb[0].mxu0
        %v2839 = vpop.f32.mrb[0].mxu0
        %v2840 = vadd.f32 0.0, %v2839
        %v2841 = vpop.f32.mrb[0].mxu0
        %2842 = vdwg.mxu0
        %v2843 = vlaneseq
        %v2844 = vand.u32 %v2843, 127
        %vm2845 = vcmp.lt.s32.totalorder %v2844, 17
        %v2846 = vsel %vm2845, 1, 0
        %vm2847 = vcmp.eq.s32.totalorder %v2846, 1
        %v2848 = vsel %vm2847, %v2646, -1e+30
        %v2849 = vsel %vm2847, %v2649, -1e+30
        %v2850 = vsel %vm2847, %v2654, -1e+30
        %v2851 = vsel %vm2847, %v2657, -1e+30
        %v2852 = vsel %vm2847, %v2707, -1e+30
        %v2853 = vsel %vm2847, %v2710, -1e+30
        %v2854 = vsel %vm2847, %v2715, -1e+30
        %v2855 = vsel %vm2847, %v2718, -1e+30
        %v2856 = vsel %vm2847, %v2768, -1e+30
        %v2857 = vsel %vm2847, %v2771, -1e+30
        %v2858 = vsel %vm2847, %v2776, -1e+30
        %v2859 = vsel %vm2847, %v2779, -1e+30
        %v2860 = vsel %vm2847, %v2829, -1e+30
        %v2861 = vsel %vm2847, %v2832, -1e+30
        %v2862 = vsel %vm2847, %v2837, -1e+30
        %v2863 = vsel %vm2847, %v2840, -1e+30
        %v2864 = vsel %vm2598, %v2848, -inf
        %2865 = vmax.xlane.f32.xlu0 %v2864
        %v2866 = vpop.xlane.xlu0 %2865
        %v2867 = vsel %vm2598, %v2849, -inf
        %2868 = vmax.xlane.f32.xlu0 %v2867
        %v2869 = vpop.xlane.xlu0 %2868
        %v2870 = vsel %vm2598, %v2850, -inf
        %2871 = vmax.xlane.f32.xlu0 %v2870
        %v2872 = vpop.xlane.xlu0 %2871
        %v2873 = vsel %vm2598, %v2851, -inf
        %2874 = vmax.xlane.f32.xlu0 %v2873
        %v2875 = vpop.xlane.xlu0 %2874
        %v2876 = vsel %vm2598, %v2852, -inf
        %2877 = vmax.xlane.f32.xlu0 %v2876
        %v2878 = vpop.xlane.xlu0 %2877
        %v2879 = vsel %vm2598, %v2853, -inf
        %2880 = vmax.xlane.f32.xlu0 %v2879
        %v2881 = vpop.xlane.xlu0 %2880
        %v2882 = vsel %vm2598, %v2854, -inf
        %2883 = vmax.xlane.f32.xlu0 %v2882
        %v2884 = vpop.xlane.xlu0 %2883
        %v2885 = vsel %vm2598, %v2855, -inf
        %2886 = vmax.xlane.f32.xlu0 %v2885
        %v2887 = vpop.xlane.xlu0 %2886
        %v2888 = vsel %vm2598, %v2856, -inf
        %2889 = vmax.xlane.f32.xlu0 %v2888
        %v2890 = vpop.xlane.xlu0 %2889
        %v2891 = vsel %vm2598, %v2857, -inf
        %2892 = vmax.xlane.f32.xlu0 %v2891
        %v2893 = vpop.xlane.xlu0 %2892
        %v2894 = vsel %vm2598, %v2858, -inf
        %2895 = vmax.xlane.f32.xlu0 %v2894
        %v2896 = vpop.xlane.xlu0 %2895
        %v2897 = vsel %vm2598, %v2859, -inf
        %2898 = vmax.xlane.f32.xlu0 %v2897
        %v2899 = vpop.xlane.xlu0 %2898
        %v2900 = vsel %vm2598, %v2860, -inf
        %2901 = vmax.xlane.f32.xlu0 %v2900
        %v2902 = vpop.xlane.xlu0 %2901
        %v2903 = vsel %vm2598, %v2861, -inf
        %2904 = vmax.xlane.f32.xlu0 %v2903
        %v2905 = vpop.xlane.xlu0 %2904
        %v2906 = vsel %vm2598, %v2862, -inf
        %2907 = vmax.xlane.f32.xlu0 %v2906
        %v2908 = vpop.xlane.xlu0 %2907
        %v2909 = vsel %vm2598, %v2863, -inf
        %2910 = vmax.xlane.f32.xlu0 %v2909
        %v2911 = vpop.xlane.xlu0 %2910
        %v2912 = vsub.f32 %v2848, %v2866
        %v2913 = vsub.f32 %v2849, %v2869
        %v2914 = vsub.f32 %v2850, %v2872
        %v2915 = vsub.f32 %v2851, %v2875
        %v2916 = vsub.f32 %v2852, %v2878
        %v2917 = vsub.f32 %v2853, %v2881
        %v2918 = vsub.f32 %v2854, %v2884
        %v2919 = vsub.f32 %v2855, %v2887
        %v2920 = vsub.f32 %v2856, %v2890
        %v2921 = vsub.f32 %v2857, %v2893
        %v2922 = vsub.f32 %v2858, %v2896
        %v2923 = vsub.f32 %v2859, %v2899
        %v2924 = vsub.f32 %v2860, %v2902
        %v2925 = vsub.f32 %v2861, %v2905
        %v2926 = vsub.f32 %v2862, %v2908
        %v2927 = vsub.f32 %v2863, %v2911
        %v2928 = vmul.f32 %v2912, 1.442695
        %v2929 = vpow.pop %v2928
        %v2930 = vmul.f32 %v2913, 1.442695
        %v2931 = vpow.pop %v2930
        %v2932 = vmul.f32 %v2914, 1.442695
        %v2933 = vpow.pop %v2932
        %v2934 = vmul.f32 %v2915, 1.442695
        %v2935 = vpow.pop %v2934
        %v2936 = vmul.f32 %v2916, 1.442695
        %v2937 = vpow.pop %v2936
        %v2938 = vmul.f32 %v2917, 1.442695
        %v2939 = vpow.pop %v2938
        %v2940 = vmul.f32 %v2918, 1.442695
        %v2941 = vpow.pop %v2940
        %v2942 = vmul.f32 %v2919, 1.442695
        %v2943 = vpow.pop %v2942
        %v2944 = vmul.f32 %v2920, 1.442695
        %v2945 = vpow.pop %v2944
        %v2946 = vmul.f32 %v2921, 1.442695
        %v2947 = vpow.pop %v2946
        %v2948 = vmul.f32 %v2922, 1.442695
        %v2949 = vpow.pop %v2948
        %v2950 = vmul.f32 %v2923, 1.442695
        %v2951 = vpow.pop %v2950
        %v2952 = vmul.f32 %v2924, 1.442695
        %v2953 = vpow.pop %v2952
        %v2954 = vmul.f32 %v2925, 1.442695
        %v2955 = vpow.pop %v2954
        %v2956 = vmul.f32 %v2926, 1.442695
        %v2957 = vpow.pop %v2956
        %v2958 = vmul.f32 %v2927, 1.442695
        %v2959 = vpow.pop %v2958
        %v2960 = vsel %vm2598, %v2929, 0.0
        %2961 = vadd.xlane.f32.xlu0 %v2960
        %v2962 = vpop.xlane.xlu0 %2961
        %v2963 = vsel %vm2598, %v2931, 0.0
        %2964 = vadd.xlane.f32.xlu0 %v2963
        %v2965 = vpop.xlane.xlu0 %2964
        %v2966 = vsel %vm2598, %v2933, 0.0
        %2967 = vadd.xlane.f32.xlu0 %v2966
        %v2968 = vpop.xlane.xlu0 %2967
        %v2969 = vsel %vm2598, %v2935, 0.0
        %2970 = vadd.xlane.f32.xlu0 %v2969
        %v2971 = vpop.xlane.xlu0 %2970
        %v2972 = vsel %vm2598, %v2937, 0.0
        %2973 = vadd.xlane.f32.xlu0 %v2972
        %v2974 = vpop.xlane.xlu0 %2973
        %v2975 = vsel %vm2598, %v2939, 0.0
        %2976 = vadd.xlane.f32.xlu0 %v2975
        %v2977 = vpop.xlane.xlu0 %2976
        %v2978 = vsel %vm2598, %v2941, 0.0
        %2979 = vadd.xlane.f32.xlu0 %v2978
        %v2980 = vpop.xlane.xlu0 %2979
        %v2981 = vsel %vm2598, %v2943, 0.0
        %2982 = vadd.xlane.f32.xlu0 %v2981
        %v2983 = vpop.xlane.xlu0 %2982
        %v2984 = vsel %vm2598, %v2945, 0.0
        %2985 = vadd.xlane.f32.xlu0 %v2984
        %v2986 = vpop.xlane.xlu0 %2985
        %v2987 = vsel %vm2598, %v2947, 0.0
        %2988 = vadd.xlane.f32.xlu0 %v2987
        %v2989 = vpop.xlane.xlu0 %2988
        %v2990 = vsel %vm2598, %v2949, 0.0
        %2991 = vadd.xlane.f32.xlu0 %v2990
        %v2992 = vpop.xlane.xlu0 %2991
        %v2993 = vsel %vm2598, %v2951, 0.0
        %2994 = vadd.xlane.f32.xlu0 %v2993
        %v2995 = vpop.xlane.xlu0 %2994
        %v2996 = vsel %vm2598, %v2953, 0.0
        %2997 = vadd.xlane.f32.xlu0 %v2996
        %v2998 = vpop.xlane.xlu0 %2997
        %v2999 = vsel %vm2598, %v2955, 0.0
        %3000 = vadd.xlane.f32.xlu0 %v2999
        %v3001 = vpop.xlane.xlu0 %3000
        %v3002 = vsel %vm2598, %v2957, 0.0
        %3003 = vadd.xlane.f32.xlu0 %v3002
        %v3004 = vpop.xlane.xlu0 %3003
        %v3005 = vsel %vm2598, %v2959, 0.0
        %3006 = vadd.xlane.f32.xlu0 %v3005
        %v3007 = vpop.xlane.xlu0 %3006
        %v3008 = vrcp.pop %v2962
        %v3009 = vrcp.pop %v2965
        %v3010 = vrcp.pop %v2968
        %v3011 = vrcp.pop %v2971
        %v3012 = vrcp.pop %v2974
        %v3013 = vrcp.pop %v2977
        %v3014 = vrcp.pop %v2980
        %v3015 = vrcp.pop %v2983
        %v3016 = vrcp.pop %v2986
        %v3017 = vrcp.pop %v2989
        %v3018 = vrcp.pop %v2992
        %v3019 = vrcp.pop %v2995
        %v3020 = vrcp.pop %v2998
        %v3021 = vrcp.pop %v3001
        %v3022 = vrcp.pop %v3004
        %v3023 = vrcp.pop %v3007
        %v3024 = vmul.f32 %v2929, %v3008
        %v3025 = vmul.f32 %v2931, %v3009
        %v3026 = vmul.f32 %v2933, %v3010
        %v3027 = vmul.f32 %v2935, %v3011
        %v3028 = vmul.f32 %v2937, %v3012
        %v3029 = vmul.f32 %v2939, %v3013
        %v3030 = vmul.f32 %v2941, %v3014
        %v3031 = vmul.f32 %v2943, %v3015
        %v3032 = vmul.f32 %v2945, %v3016
        %v3033 = vmul.f32 %v2947, %v3017
        %v3034 = vmul.f32 %v2949, %v3018
        %v3035 = vmul.f32 %v2951, %v3019
        %v3036 = vmul.f32 %v2953, %v3020
        %v3037 = vmul.f32 %v2955, %v3021
        %v3038 = vmul.f32 %v2957, %v3022
        %v3039 = vmul.f32 %v2959, %v3023
        %v3040 = vpack.c.bf16 %v3025, %v3024
        %v3041 = vpack.c.bf16 %v3027, %v3026
        %v3042 = vpack.c.bf16 %v3029, %v3028
        %v3043 = vpack.c.bf16 %v3031, %v3030
        %v3044 = vpack.c.bf16 %v3033, %v3032
        %v3045 = vpack.c.bf16 %v3035, %v3034
        %v3046 = vpack.c.bf16 %v3037, %v3036
        %v3047 = vpack.c.bf16 %v3039, %v3038
        %v3049 = vsel %vm2598, %v3040, 0
        %v3052 = vsel %vm2598, %v3041, 0
        %3054 = vmatprep.subr.bf16.mxu0 0
        %3055 = vmatpush1.bf16.msra.mxu0 %v2544
        %3056 = vmatprep.subr.bf16.mxu0 0
        %3057 = vmatpush1.bf16.msra.mxu0 %v2584
        %3058 = vmatprep.subr.bf16.mxu0 0
        %3059 = vmatpush1.bf16.msra.mxu0 0
        %3060 = vmatprep.subr.bf16.mxu0 0
        %3061 = vmatpush1.bf16.msra.mxu0 0
        %3062 = vmatprep.subr.bf16.mxu0 0
        %3063 = vmatpush1.bf16.msra.mxu0 0
        %3064 = vmatprep.subr.bf16.mxu0 0
        %3065 = vmatpush1.bf16.msra.mxu0 0
        %3066 = vmatprep.subr.bf16.mxu0 0
        %3067 = vmatpush1.bf16.msra.mxu0 0
        %3068 = vmatprep.subr.bf16.mxu0 0
        %3069 = vmatpush1.bf16.msra.mxu0 0
        %3070 = vmatprep.subr.bf16.mxu0 0
        %3071 = vmatpush1.bf16.msra.mxu0 0
        %3072 = vmatprep.subr.bf16.mxu0 0
        %3073 = vmatpush1.bf16.msra.mxu0 0
        %3074 = vmatprep.subr.bf16.mxu0 0
        %3075 = vmatpush1.bf16.msra.mxu0 0
        %3076 = vmatprep.subr.bf16.mxu0 0
        %3077 = vmatpush1.bf16.msra.mxu0 0
        %3078 = vmatprep.subr.bf16.mxu0 0
        %3079 = vmatpush1.bf16.msra.mxu0 0
        %3080 = vmatprep.subr.bf16.mxu0 0
        %3081 = vmatpush1.bf16.msra.mxu0 0
        %3082 = vmatprep.subr.bf16.mxu0 0
        %3083 = vmatpush1.bf16.msra.mxu0 0
        %3084 = vmatprep.subr.bf16.mxu0 0
        %3085 = vmatpush1.bf16.msra.mxu0 0
        %3086 = vmatprep.mubr.bf16.mxu0 0
        %3087 = vmatmul.mubr.bf16.gmra.mrb[0].mxu0 %v3049
        %v3088 = vpop.f32.mrb[0].mxu0
        %v3089 = vadd.f32 0.0, %v3088
        %v3090 = vpop.f32.mrb[0].mxu0
        %v3091 = vpop.f32.mrb[0].mxu0
        %v3092 = vadd.f32 0.0, %v3091
        %v3093 = vpop.f32.mrb[0].mxu0
        %3094 = vmatprep.mubr.bf16.mxu0 0
        %3095 = vmatmul.mubr.bf16.gmra.mrb[0].mxu0 %v3052
        %v3096 = vpop.f32.mrb[0].mxu0
        %v3097 = vadd.f32 0.0, %v3096
        %v3098 = vpop.f32.mrb[0].mxu0
        %v3099 = vpop.f32.mrb[0].mxu0
        %v3100 = vadd.f32 0.0, %v3099
        %v3101 = vpop.f32.mrb[0].mxu0
        %3102 = vdwg.mxu0
        %v3104 = vsel %vm2598, %v3042, 0
        %v3107 = vsel %vm2598, %v3043, 0
        %3109 = vmatprep.subr.bf16.mxu0 0
        %3110 = vmatpush1.bf16.msra.mxu0 %v2548
        %3111 = vmatprep.subr.bf16.mxu0 0
        %3112 = vmatpush1.bf16.msra.mxu0 %v2588
        %3113 = vmatprep.subr.bf16.mxu0 0
        %3114 = vmatpush1.bf16.msra.mxu0 0
        %3115 = vmatprep.subr.bf16.mxu0 0
        %3116 = vmatpush1.bf16.msra.mxu0 0
        %3117 = vmatprep.subr.bf16.mxu0 0
        %3118 = vmatpush1.bf16.msra.mxu0 0
        %3119 = vmatprep.subr.bf16.mxu0 0
        %3120 = vmatpush1.bf16.msra.mxu0 0
        %3121 = vmatprep.subr.bf16.mxu0 0
        %3122 = vmatpush1.bf16.msra.mxu0 0
        %3123 = vmatprep.subr.bf16.mxu0 0
        %3124 = vmatpush1.bf16.msra.mxu0 0
        %3125 = vmatprep.subr.bf16.mxu0 0
        %3126 = vmatpush1.bf16.msra.mxu0 0
        %3127 = vmatprep.subr.bf16.mxu0 0
        %3128 = vmatpush1.bf16.msra.mxu0 0
        %3129 = vmatprep.subr.bf16.mxu0 0
        %3130 = vmatpush1.bf16.msra.mxu0 0
        %3131 = vmatprep.subr.bf16.mxu0 0
        %3132 = vmatpush1.bf16.msra.mxu0 0
        %3133 = vmatprep.subr.bf16.mxu0 0
        %3134 = vmatpush1.bf16.msra.mxu0 0
        %3135 = vmatprep.subr.bf16.mxu0 0
        %3136 = vmatpush1.bf16.msra.mxu0 0
        %3137 = vmatprep.subr.bf16.mxu0 0
        %3138 = vmatpush1.bf16.msra.mxu0 0
        %3139 = vmatprep.subr.bf16.mxu0 0
        %3140 = vmatpush1.bf16.msra.mxu0 0
        %3141 = vmatprep.mubr.bf16.mxu0 0
        %3142 = vmatmul.mubr.bf16.gmra.mrb[0].mxu0 %v3104
        %v3143 = vpop.f32.mrb[0].mxu0
        %v3144 = vadd.f32 0.0, %v3143
        %v3145 = vpop.f32.mrb[0].mxu0
        %v3146 = vpop.f32.mrb[0].mxu0
        %v3147 = vadd.f32 0.0, %v3146
        %v3148 = vpop.f32.mrb[0].mxu0
        %3149 = vmatprep.mubr.bf16.mxu0 0
        %3150 = vmatmul.mubr.bf16.gmra.mrb[0].mxu0 %v3107
        %v3151 = vpop.f32.mrb[0].mxu0
        %v3152 = vadd.f32 0.0, %v3151
        %v3153 = vpop.f32.mrb[0].mxu0
        %v3154 = vpop.f32.mrb[0].mxu0
        %v3155 = vadd.f32 0.0, %v3154
        %v3156 = vpop.f32.mrb[0].mxu0
        %3157 = vdwg.mxu0
        %v3159 = vsel %vm2598, %v3044, 0
        %v3162 = vsel %vm2598, %v3045, 0
        %3164 = vmatprep.subr.bf16.mxu0 0
        %3165 = vmatpush1.bf16.msra.mxu0 %v2552
        %3166 = vmatprep.subr.bf16.mxu0 0
        %3167 = vmatpush1.bf16.msra.mxu0 %v2592
        %3168 = vmatprep.subr.bf16.mxu0 0
        %3169 = vmatpush1.bf16.msra.mxu0 0
        %3170 = vmatprep.subr.bf16.mxu0 0
        %3171 = vmatpush1.bf16.msra.mxu0 0
        %3172 = vmatprep.subr.bf16.mxu0 0
        %3173 = vmatpush1.bf16.msra.mxu0 0
        %3174 = vmatprep.subr.bf16.mxu0 0
        %3175 = vmatpush1.bf16.msra.mxu0 0
        %3176 = vmatprep.subr.bf16.mxu0 0
        %3177 = vmatpush1.bf16.msra.mxu0 0
        %3178 = vmatprep.subr.bf16.mxu0 0
        %3179 = vmatpush1.bf16.msra.mxu0 0
        %3180 = vmatprep.subr.bf16.mxu0 0
        %3181 = vmatpush1.bf16.msra.mxu0 0
        %3182 = vmatprep.subr.bf16.mxu0 0
        %3183 = vmatpush1.bf16.msra.mxu0 0
        %3184 = vmatprep.subr.bf16.mxu0 0
        %3185 = vmatpush1.bf16.msra.mxu0 0
        %3186 = vmatprep.subr.bf16.mxu0 0
        %3187 = vmatpush1.bf16.msra.mxu0 0
        %3188 = vmatprep.subr.bf16.mxu0 0
        %3189 = vmatpush1.bf16.msra.mxu0 0
        %3190 = vmatprep.subr.bf16.mxu0 0
        %3191 = vmatpush1.bf16.msra.mxu0 0
        %3192 = vmatprep.subr.bf16.mxu0 0
        %3193 = vmatpush1.bf16.msra.mxu0 0
        %3194 = vmatprep.subr.bf16.mxu0 0
        %3195 = vmatpush1.bf16.msra.mxu0 0
        %3196 = vmatprep.mubr.bf16.mxu0 0
        %3197 = vmatmul.mubr.bf16.gmra.mrb[0].mxu0 %v3159
        %v3198 = vpop.f32.mrb[0].mxu0
        %v3199 = vadd.f32 0.0, %v3198
        %v3200 = vpop.f32.mrb[0].mxu0
        %v3201 = vpop.f32.mrb[0].mxu0
        %v3202 = vadd.f32 0.0, %v3201
        %v3203 = vpop.f32.mrb[0].mxu0
        %3204 = vmatprep.mubr.bf16.mxu0 0
        %3205 = vmatmul.mubr.bf16.gmra.mrb[0].mxu0 %v3162
        %v3206 = vpop.f32.mrb[0].mxu0
        %v3207 = vadd.f32 0.0, %v3206
        %v3208 = vpop.f32.mrb[0].mxu0
        %v3209 = vpop.f32.mrb[0].mxu0
        %v3210 = vadd.f32 0.0, %v3209
        %v3211 = vpop.f32.mrb[0].mxu0
        %3212 = vdwg.mxu0
        %v3214 = vsel %vm2598, %v3046, 0
        %v3217 = vsel %vm2598, %v3047, 0
        %3219 = vmatprep.subr.bf16.mxu0 0
        %3220 = vmatpush1.bf16.msra.mxu0 %v2556
        %3221 = vmatprep.subr.bf16.mxu0 0
        %3222 = vmatpush1.bf16.msra.mxu0 %v2596
        %3223 = vmatprep.subr.bf16.mxu0 0
        %3224 = vmatpush1.bf16.msra.mxu0 0
        %3225 = vmatprep.subr.bf16.mxu0 0
        %3226 = vmatpush1.bf16.msra.mxu0 0
        %3227 = vmatprep.subr.bf16.mxu0 0
        %3228 = vmatpush1.bf16.msra.mxu0 0
        %3229 = vmatprep.subr.bf16.mxu0 0
        %3230 = vmatpush1.bf16.msra.mxu0 0
        %3231 = vmatprep.subr.bf16.mxu0 0
        %3232 = vmatpush1.bf16.msra.mxu0 0
        %3233 = vmatprep.subr.bf16.mxu0 0
        %3234 = vmatpush1.bf16.msra.mxu0 0
        %3235 = vmatprep.subr.bf16.mxu0 0
        %3236 = vmatpush1.bf16.msra.mxu0 0
        %3237 = vmatprep.subr.bf16.mxu0 0
        %3238 = vmatpush1.bf16.msra.mxu0 0
        %3239 = vmatprep.subr.bf16.mxu0 0
        %3240 = vmatpush1.bf16.msra.mxu0 0
        %3241 = vmatprep.subr.bf16.mxu0 0
        %3242 = vmatpush1.bf16.msra.mxu0 0
        %3243 = vmatprep.subr.bf16.mxu0 0
        %3244 = vmatpush1.bf16.msra.mxu0 0
        %3245 = vmatprep.subr.bf16.mxu0 0
        %3246 = vmatpush1.bf16.msra.mxu0 0
        %3247 = vmatprep.subr.bf16.mxu0 0
        %3248 = vmatpush1.bf16.msra.mxu0 0
        %3249 = vmatprep.subr.bf16.mxu0 0
        %3250 = vmatpush1.bf16.msra.mxu0 0
        %3251 = vmatprep.mubr.bf16.mxu0 0
        %3252 = vmatmul.mubr.bf16.gmra.mrb[0].mxu0 %v3214
        %v3253 = vpop.f32.mrb[0].mxu0
        %v3254 = vadd.f32 0.0, %v3253
        %v3255 = vpop.f32.mrb[0].mxu0
        %v3256 = vpop.f32.mrb[0].mxu0
        %v3257 = vadd.f32 0.0, %v3256
        %v3258 = vpop.f32.mrb[0].mxu0
        %3259 = vmatprep.mubr.bf16.mxu0 0
        %3260 = vmatmul.mubr.bf16.gmra.mrb[0].mxu0 %v3217
        %v3261 = vpop.f32.mrb[0].mxu0
        %v3262 = vadd.f32 0.0, %v3261
        %v3263 = vpop.f32.mrb[0].mxu0
        %v3264 = vpop.f32.mrb[0].mxu0
        %v3265 = vadd.f32 0.0, %v3264
        %v3266 = vpop.f32.mrb[0].mxu0
        %3267 = vdwg.mxu0
        %v3268 = vpack.c.bf16 %v3092, %v3089
        %v3269 = vpack.c.bf16 %v3100, %v3097
        %v3270 = vpack.c.bf16 %v3147, %v3144
        %v3271 = vpack.c.bf16 %v3155, %v3152
        %v3272 = vpack.c.bf16 %v3202, %v3199
        %v3273 = vpack.c.bf16 %v3210, %v3207
        %v3274 = vpack.c.bf16 %v3257, %v3254
        %v3275 = vpack.c.bf16 %v3265, %v3262
        %v3278 = vpack.i.b16 %v3270, %v3268
        %v3280 = vshrl.u32 %v3268, 16
        %v3281 = vshrl.u32 %v3270, 16
        %v3282 = vpack.i.b16 %v3281, %v3280
        %v3286 = vpack.i.b16 %v3274, %v3272
        %v3288 = vshrl.u32 %v3272, 16
        %v3289 = vshrl.u32 %v3274, 16
        %v3290 = vpack.i.b16 %v3289, %v3288
        %v3294 = vpack.i.b16 %v3271, %v3269
        %v3296 = vshrl.u32 %v3269, 16
        %v3297 = vshrl.u32 %v3271, 16
        %v3298 = vpack.i.b16 %v3297, %v3296
        %v3302 = vpack.i.b16 %v3275, %v3273
        %v3304 = vshrl.u32 %v3273, 16
        %v3305 = vshrl.u32 %v3275, 16
        %v3306 = vpack.i.b16 %v3305, %v3304
        %v3308 = vcombine.high %v3278, %v1457
        %v3310 = vunpack.c.l.s4 1983009808
        %v3311 = vunpack.c.0.s8 %v3310
        %v3312 = vlaneseq
        %v3313 = vshrl.u32 %v3312, 7
        %v3314 = vsub.s32 %v3311, %v3313
        %v3315 = vrot.slane %v3278, %v3314
        %v3317 = vunpack.c.l.s4 1983009808
        %v3318 = vunpack.c.0.s8 %v3317
        %v3319 = vlaneseq
        %v3320 = vshrl.u32 %v3319, 7
        %v3321 = vsub.s32 %v3318, %v3320
        %v3322 = vrot.slane %v3308, %v3321
        %v3323 = vcombine.high %v3286, %v1457
        %v3325 = vunpack.c.l.s4 1983009808
        %v3326 = vunpack.c.0.s8 %v3325
        %v3327 = vlaneseq
        %v3328 = vshrl.u32 %v3327, 7
        %v3329 = vsub.s32 %v3326, %v3328
        %v3330 = vrot.slane %v3286, %v3329
        %v3332 = vunpack.c.l.s4 1983009808
        %v3333 = vunpack.c.0.s8 %v3332
        %v3334 = vlaneseq
        %v3335 = vshrl.u32 %v3334, 7
        %v3336 = vsub.s32 %v3333, %v3335
        %v3337 = vrot.slane %v3323, %v3336
        %v3338 = vcombine.low %v3315, %v3330
        %v3339 = vcombine.high %v3315, %v3330
        %v3341 = vunpack.c.l.s4 1934713408
        %v3342 = vunpack.c.0.s8 %v3341
        %v3343 = vlaneseq
        %v3344 = vshrl.u32 %v3343, 7
        %v3345 = vsub.s32 %v3342, %v3344
        %v3346 = vrot.slane %v3338, %v3345
        %v3348 = vunpack.c.l.s4 1934713408
        %v3349 = vunpack.c.0.s8 %v3348
        %v3350 = vlaneseq
        %v3351 = vshrl.u32 %v3350, 7
        %v3352 = vsub.s32 %v3349, %v3351
        %v3353 = vrot.slane %v3339, %v3352
        %v3354 = vcombine.low %v3322, %v3337
        %v3355 = vcombine.high %v3322, %v3337
        %v3357 = vunpack.c.l.s4 1934713408
        %v3358 = vunpack.c.0.s8 %v3357
        %v3359 = vlaneseq
        %v3360 = vshrl.u32 %v3359, 7
        %v3361 = vsub.s32 %v3358, %v3360
        %v3362 = vrot.slane %v3354, %v3361
        %v3364 = vunpack.c.l.s4 1934713408
        %v3365 = vunpack.c.0.s8 %v3364
        %v3366 = vlaneseq
        %v3367 = vshrl.u32 %v3366, 7
        %v3368 = vsub.s32 %v3365, %v3367
        %v3369 = vrot.slane %v3355, %v3368
        %v3370 = vcombine.high %v3346, 0
        %v3371 = vcombine.high %v3353, 0
        %v3372 = vcombine.high %v3362, 0
        %v3373 = vcombine.high %v3369, 0
        %v3374 = vcombine.high %v3282, %v1460
        %v3376 = vunpack.c.l.s4 1983009808
        %v3377 = vunpack.c.0.s8 %v3376
        %v3378 = vlaneseq
        %v3379 = vshrl.u32 %v3378, 7
        %v3380 = vsub.s32 %v3377, %v3379
        %v3381 = vrot.slane %v3282, %v3380
        %v3383 = vunpack.c.l.s4 1983009808
        %v3384 = vunpack.c.0.s8 %v3383
        %v3385 = vlaneseq
        %v3386 = vshrl.u32 %v3385, 7
        %v3387 = vsub.s32 %v3384, %v3386
        %v3388 = vrot.slane %v3374, %v3387
        %v3389 = vcombine.high %v3290, %v1460
        %v3391 = vunpack.c.l.s4 1983009808
        %v3392 = vunpack.c.0.s8 %v3391
        %v3393 = vlaneseq
        %v3394 = vshrl.u32 %v3393, 7
        %v3395 = vsub.s32 %v3392, %v3394
        %v3396 = vrot.slane %v3290, %v3395
        %v3398 = vunpack.c.l.s4 1983009808
        %v3399 = vunpack.c.0.s8 %v3398
        %v3400 = vlaneseq
        %v3401 = vshrl.u32 %v3400, 7
        %v3402 = vsub.s32 %v3399, %v3401
        %v3403 = vrot.slane %v3389, %v3402
        %v3404 = vcombine.low %v3381, %v3396
        %v3405 = vcombine.high %v3381, %v3396
        %v3407 = vunpack.c.l.s4 1934713408
        %v3408 = vunpack.c.0.s8 %v3407
        %v3409 = vlaneseq
        %v3410 = vshrl.u32 %v3409, 7
        %v3411 = vsub.s32 %v3408, %v3410
        %v3412 = vrot.slane %v3404, %v3411
        %v3414 = vunpack.c.l.s4 1934713408
        %v3415 = vunpack.c.0.s8 %v3414
        %v3416 = vlaneseq
        %v3417 = vshrl.u32 %v3416, 7
        %v3418 = vsub.s32 %v3415, %v3417
        %v3419 = vrot.slane %v3405, %v3418
        %v3420 = vcombine.low %v3388, %v3403
        %v3421 = vcombine.high %v3388, %v3403
        %v3423 = vunpack.c.l.s4 1934713408
        %v3424 = vunpack.c.0.s8 %v3423
        %v3425 = vlaneseq
        %v3426 = vshrl.u32 %v3425, 7
        %v3427 = vsub.s32 %v3424, %v3426
        %v3428 = vrot.slane %v3420, %v3427
        %v3430 = vunpack.c.l.s4 1934713408
        %v3431 = vunpack.c.0.s8 %v3430
        %v3432 = vlaneseq
        %v3433 = vshrl.u32 %v3432, 7
        %v3434 = vsub.s32 %v3431, %v3433
        %v3435 = vrot.slane %v3421, %v3434
        %v3436 = vcombine.high %v3412, 0
        %v3437 = vcombine.high %v3419, 0
        %v3438 = vcombine.high %v3428, 0
        %v3439 = vcombine.high %v3435, 0
        %v3440 = vcombine.high %v3294, %v1457
        %v3442 = vunpack.c.l.s4 1983009808
        %v3443 = vunpack.c.0.s8 %v3442
        %v3444 = vlaneseq
        %v3445 = vshrl.u32 %v3444, 7
        %v3446 = vsub.s32 %v3443, %v3445
        %v3447 = vrot.slane %v3294, %v3446
        %v3449 = vunpack.c.l.s4 1983009808
        %v3450 = vunpack.c.0.s8 %v3449
        %v3451 = vlaneseq
        %v3452 = vshrl.u32 %v3451, 7
        %v3453 = vsub.s32 %v3450, %v3452
        %v3454 = vrot.slane %v3440, %v3453
        %v3455 = vcombine.high %v3302, %v1457
        %v3457 = vunpack.c.l.s4 1983009808
        %v3458 = vunpack.c.0.s8 %v3457
        %v3459 = vlaneseq
        %v3460 = vshrl.u32 %v3459, 7
        %v3461 = vsub.s32 %v3458, %v3460
        %v3462 = vrot.slane %v3302, %v3461
        %v3464 = vunpack.c.l.s4 1983009808
        %v3465 = vunpack.c.0.s8 %v3464
        %v3466 = vlaneseq
        %v3467 = vshrl.u32 %v3466, 7
        %v3468 = vsub.s32 %v3465, %v3467
        %v3469 = vrot.slane %v3455, %v3468
        %v3470 = vcombine.low %v3447, %v3462
        %v3471 = vcombine.high %v3447, %v3462
        %v3473 = vunpack.c.l.s4 1934713408
        %v3474 = vunpack.c.0.s8 %v3473
        %v3475 = vlaneseq
        %v3476 = vshrl.u32 %v3475, 7
        %v3477 = vsub.s32 %v3474, %v3476
        %v3478 = vrot.slane %v3470, %v3477
        %v3480 = vunpack.c.l.s4 1934713408
        %v3481 = vunpack.c.0.s8 %v3480
        %v3482 = vlaneseq
        %v3483 = vshrl.u32 %v3482, 7
        %v3484 = vsub.s32 %v3481, %v3483
        %v3485 = vrot.slane %v3471, %v3484
        %v3486 = vcombine.low %v3454, %v3469
        %v3487 = vcombine.high %v3454, %v3469
        %v3489 = vunpack.c.l.s4 1934713408
        %v3490 = vunpack.c.0.s8 %v3489
        %v3491 = vlaneseq
        %v3492 = vshrl.u32 %v3491, 7
        %v3493 = vsub.s32 %v3490, %v3492
        %v3494 = vrot.slane %v3486, %v3493
        %v3496 = vunpack.c.l.s4 1934713408
        %v3497 = vunpack.c.0.s8 %v3496
        %v3498 = vlaneseq
        %v3499 = vshrl.u32 %v3498, 7
        %v3500 = vsub.s32 %v3497, %v3499
        %v3501 = vrot.slane %v3487, %v3500
        %v3502 = vcombine.high %v3478, 0
        %v3503 = vcombine.high %v3485, 0
        %v3504 = vcombine.high %v3494, 0
        %v3505 = vcombine.high %v3501, 0
        %v3506 = vcombine.high %v3298, %v1460
        %v3508 = vunpack.c.l.s4 1983009808
        %v3509 = vunpack.c.0.s8 %v3508
        %v3510 = vlaneseq
        %v3511 = vshrl.u32 %v3510, 7
        %v3512 = vsub.s32 %v3509, %v3511
        %v3513 = vrot.slane %v3298, %v3512
        %v3515 = vunpack.c.l.s4 1983009808
        %v3516 = vunpack.c.0.s8 %v3515
        %v3517 = vlaneseq
        %v3518 = vshrl.u32 %v3517, 7
        %v3519 = vsub.s32 %v3516, %v3518
        %v3520 = vrot.slane %v3506, %v3519
        %v3521 = vcombine.high %v3306, %v1460
        %v3523 = vunpack.c.l.s4 1983009808
        %v3524 = vunpack.c.0.s8 %v3523
        %v3525 = vlaneseq
        %v3526 = vshrl.u32 %v3525, 7
        %v3527 = vsub.s32 %v3524, %v3526
        %v3528 = vrot.slane %v3306, %v3527
        %v3530 = vunpack.c.l.s4 1983009808
        %v3531 = vunpack.c.0.s8 %v3530
        %v3532 = vlaneseq
        %v3533 = vshrl.u32 %v3532, 7
        %v3534 = vsub.s32 %v3531, %v3533
        %v3535 = vrot.slane %v3521, %v3534
        %v3536 = vcombine.low %v3513, %v3528
        %v3537 = vcombine.high %v3513, %v3528
        %v3539 = vunpack.c.l.s4 1934713408
        %v3540 = vunpack.c.0.s8 %v3539
        %v3541 = vlaneseq
        %v3542 = vshrl.u32 %v3541, 7
        %v3543 = vsub.s32 %v3540, %v3542
        %v3544 = vrot.slane %v3536, %v3543
        %v3546 = vunpack.c.l.s4 1934713408
        %v3547 = vunpack.c.0.s8 %v3546
        %v3548 = vlaneseq
        %v3549 = vshrl.u32 %v3548, 7
        %v3550 = vsub.s32 %v3547, %v3549
        %v3551 = vrot.slane %v3537, %v3550
        %v3552 = vcombine.low %v3520, %v3535
        %v3553 = vcombine.high %v3520, %v3535
        %v3555 = vunpack.c.l.s4 1934713408
        %v3556 = vunpack.c.0.s8 %v3555
        %v3557 = vlaneseq
        %v3558 = vshrl.u32 %v3557, 7
        %v3559 = vsub.s32 %v3556, %v3558
        %v3560 = vrot.slane %v3552, %v3559
        %v3562 = vunpack.c.l.s4 1934713408
        %v3563 = vunpack.c.0.s8 %v3562
        %v3564 = vlaneseq
        %v3565 = vshrl.u32 %v3564, 7
        %v3566 = vsub.s32 %v3563, %v3565
        %v3567 = vrot.slane %v3553, %v3566
        %v3568 = vcombine.high %v3544, 0
        %v3569 = vcombine.high %v3551, 0
        %v3570 = vcombine.high %v3560, 0
        %v3571 = vcombine.high %v3567, 0
        %v3572 = vcombine.low %v3346, %v3353
        %v3574 = vunpack.c.l.s4 1983009808
        %v3575 = vunpack.c.0.s8 %v3574
        %v3576 = vlaneseq
        %v3577 = vshrl.u32 %v3576, 7
        %v3578 = vsub.s32 %v3575, %v3577
        %v3579 = vrot.slane %v3572, %v3578
        %v3580 = vcombine.low %v3370, %v3371
        %v3582 = vunpack.c.l.s4 1983009808
        %v3583 = vunpack.c.0.s8 %v3582
        %v3584 = vlaneseq
        %v3585 = vshrl.u32 %v3584, 7
        %v3586 = vsub.s32 %v3583, %v3585
        %v3587 = vrot.slane %v3580, %v3586
        %v3588 = vcombine.low %v3362, %v3369
        %v3590 = vunpack.c.l.s4 1983009808
        %v3591 = vunpack.c.0.s8 %v3590
        %v3592 = vlaneseq
        %v3593 = vshrl.u32 %v3592, 7
        %v3594 = vsub.s32 %v3591, %v3593
        %v3595 = vrot.slane %v3588, %v3594
        %v3596 = vcombine.low %v3372, %v3373
        %v3598 = vunpack.c.l.s4 1983009808
        %v3599 = vunpack.c.0.s8 %v3598
        %v3600 = vlaneseq
        %v3601 = vshrl.u32 %v3600, 7
        %v3602 = vsub.s32 %v3599, %v3601
        %v3603 = vrot.slane %v3596, %v3602
        %v3604 = vcombine.low %v3579, %v3587
        %v3606 = vunpack.c.l.s4 1934713408
        %v3607 = vunpack.c.0.s8 %v3606
        %v3608 = vlaneseq
        %v3609 = vshrl.u32 %v3608, 7
        %v3610 = vsub.s32 %v3607, %v3609
        %v3611 = vrot.slane %v3604, %v3610
        %v3612 = vcombine.low %v3595, %v3603
        %v3614 = vunpack.c.l.s4 1934713408
        %v3615 = vunpack.c.0.s8 %v3614
        %v3616 = vlaneseq
        %v3617 = vshrl.u32 %v3616, 7
        %v3618 = vsub.s32 %v3615, %v3617
        %v3619 = vrot.slane %v3612, %v3618
        %v3620 = vcombine.low %v3611, %v3619
        %v3621 = vcombine.high %v3611, %v3619
        %v3622 = vcombine.low %v3412, %v3419
        %v3624 = vunpack.c.l.s4 1983009808
        %v3625 = vunpack.c.0.s8 %v3624
        %v3626 = vlaneseq
        %v3627 = vshrl.u32 %v3626, 7
        %v3628 = vsub.s32 %v3625, %v3627
        %v3629 = vrot.slane %v3622, %v3628
        %v3630 = vcombine.low %v3436, %v3437
        %v3632 = vunpack.c.l.s4 1983009808
        %v3633 = vunpack.c.0.s8 %v3632
        %v3634 = vlaneseq
        %v3635 = vshrl.u32 %v3634, 7
        %v3636 = vsub.s32 %v3633, %v3635
        %v3637 = vrot.slane %v3630, %v3636
        %v3638 = vcombine.low %v3428, %v3435
        %v3640 = vunpack.c.l.s4 1983009808
        %v3641 = vunpack.c.0.s8 %v3640
        %v3642 = vlaneseq
        %v3643 = vshrl.u32 %v3642, 7
        %v3644 = vsub.s32 %v3641, %v3643
        %v3645 = vrot.slane %v3638, %v3644
        %v3646 = vcombine.low %v3438, %v3439
        %v3648 = vunpack.c.l.s4 1983009808
        %v3649 = vunpack.c.0.s8 %v3648
        %v3650 = vlaneseq
        %v3651 = vshrl.u32 %v3650, 7
        %v3652 = vsub.s32 %v3649, %v3651
        %v3653 = vrot.slane %v3646, %v3652
        %v3654 = vcombine.low %v3629, %v3637
        %v3656 = vunpack.c.l.s4 1934713408
        %v3657 = vunpack.c.0.s8 %v3656
        %v3658 = vlaneseq
        %v3659 = vshrl.u32 %v3658, 7
        %v3660 = vsub.s32 %v3657, %v3659
        %v3661 = vrot.slane %v3654, %v3660
        %v3662 = vcombine.low %v3645, %v3653
        %v3664 = vunpack.c.l.s4 1934713408
        %v3665 = vunpack.c.0.s8 %v3664
        %v3666 = vlaneseq
        %v3667 = vshrl.u32 %v3666, 7
        %v3668 = vsub.s32 %v3665, %v3667
        %v3669 = vrot.slane %v3662, %v3668
        %v3670 = vcombine.low %v3661, %v3669
        %v3671 = vcombine.high %v3661, %v3669
        %v3672 = vcombine.low %v3478, %v3485
        %v3674 = vunpack.c.l.s4 1983009808
        %v3675 = vunpack.c.0.s8 %v3674
        %v3676 = vlaneseq
        %v3677 = vshrl.u32 %v3676, 7
        %v3678 = vsub.s32 %v3675, %v3677
        %v3679 = vrot.slane %v3672, %v3678
        %v3680 = vcombine.low %v3502, %v3503
        %v3682 = vunpack.c.l.s4 1983009808
        %v3683 = vunpack.c.0.s8 %v3682
        %v3684 = vlaneseq
        %v3685 = vshrl.u32 %v3684, 7
        %v3686 = vsub.s32 %v3683, %v3685
        %v3687 = vrot.slane %v3680, %v3686
        %v3688 = vcombine.low %v3494, %v3501
        %v3690 = vunpack.c.l.s4 1983009808
        %v3691 = vunpack.c.0.s8 %v3690
        %v3692 = vlaneseq
        %v3693 = vshrl.u32 %v3692, 7
        %v3694 = vsub.s32 %v3691, %v3693
        %v3695 = vrot.slane %v3688, %v3694
        %v3696 = vcombine.low %v3504, %v3505
        %v3698 = vunpack.c.l.s4 1983009808
        %v3699 = vunpack.c.0.s8 %v3698
        %v3700 = vlaneseq
        %v3701 = vshrl.u32 %v3700, 7
        %v3702 = vsub.s32 %v3699, %v3701
        %v3703 = vrot.slane %v3696, %v3702
        %v3704 = vcombine.low %v3679, %v3687
        %v3706 = vunpack.c.l.s4 1934713408
        %v3707 = vunpack.c.0.s8 %v3706
        %v3708 = vlaneseq
        %v3709 = vshrl.u32 %v3708, 7
        %v3710 = vsub.s32 %v3707, %v3709
        %v3711 = vrot.slane %v3704, %v3710
        %v3712 = vcombine.low %v3695, %v3703
        %v3714 = vunpack.c.l.s4 1934713408
        %v3715 = vunpack.c.0.s8 %v3714
        %v3716 = vlaneseq
        %v3717 = vshrl.u32 %v3716, 7
        %v3718 = vsub.s32 %v3715, %v3717
        %v3719 = vrot.slane %v3712, %v3718
        %v3720 = vcombine.low %v3711, %v3719
        %v3721 = vcombine.high %v3711, %v3719
        %v3722 = vcombine.low %v3544, %v3551
        %v3724 = vunpack.c.l.s4 1983009808
        %v3725 = vunpack.c.0.s8 %v3724
        %v3726 = vlaneseq
        %v3727 = vshrl.u32 %v3726, 7
        %v3728 = vsub.s32 %v3725, %v3727
        %v3729 = vrot.slane %v3722, %v3728
        %v3730 = vcombine.low %v3568, %v3569
        %v3732 = vunpack.c.l.s4 1983009808
        %v3733 = vunpack.c.0.s8 %v3732
        %v3734 = vlaneseq
        %v3735 = vshrl.u32 %v3734, 7
        %v3736 = vsub.s32 %v3733, %v3735
        %v3737 = vrot.slane %v3730, %v3736
        %v3738 = vcombine.low %v3560, %v3567
        %v3740 = vunpack.c.l.s4 1983009808
        %v3741 = vunpack.c.0.s8 %v3740
        %v3742 = vlaneseq
        %v3743 = vshrl.u32 %v3742, 7
        %v3744 = vsub.s32 %v3741, %v3743
        %v3745 = vrot.slane %v3738, %v3744
        %v3746 = vcombine.low %v3570, %v3571
        %v3748 = vunpack.c.l.s4 1983009808
        %v3749 = vunpack.c.0.s8 %v3748
        %v3750 = vlaneseq
        %v3751 = vshrl.u32 %v3750, 7
        %v3752 = vsub.s32 %v3749, %v3751
        %v3753 = vrot.slane %v3746, %v3752
        %v3754 = vcombine.low %v3729, %v3737
        %v3756 = vunpack.c.l.s4 1934713408
        %v3757 = vunpack.c.0.s8 %v3756
        %v3758 = vlaneseq
        %v3759 = vshrl.u32 %v3758, 7
        %v3760 = vsub.s32 %v3757, %v3759
        %v3761 = vrot.slane %v3754, %v3760
        %v3762 = vcombine.low %v3745, %v3753
        %v3764 = vunpack.c.l.s4 1934713408
        %v3765 = vunpack.c.0.s8 %v3764
        %v3766 = vlaneseq
        %v3767 = vshrl.u32 %v3766, 7
        %v3768 = vsub.s32 %v3765, %v3767
        %v3769 = vrot.slane %v3762, %v3768
        %v3770 = vcombine.low %v3761, %v3769
        %v3771 = vcombine.high %v3761, %v3769
        %v3774 = vpack.i.b16 %v3670, %v3620
        %v3775 = vshrl.u32 %v3620, 16
        %v3776 = vshrl.u32 %v3670, 16
        %v3777 = vpack.i.b16 %v3776, %v3775
        %v3780 = vpack.i.b16 %v3671, %v3621
        %v3781 = vshrl.u32 %v3621, 16
        %v3782 = vshrl.u32 %v3671, 16
        %v3783 = vpack.i.b16 %v3782, %v3781
        %v3786 = vpack.i.b16 %v3770, %v3720
        %v3787 = vshrl.u32 %v3720, 16
        %v3788 = vshrl.u32 %v3770, 16
        %v3789 = vpack.i.b16 %v3788, %v3787
        %v3792 = vpack.i.b16 %v3771, %v3721
        %v3793 = vshrl.u32 %v3721, 16
        %v3794 = vshrl.u32 %v3771, 16
        %v3795 = vpack.i.b16 %v3794, %v3793
        %3796 = vrot.lane.b32.xlu0 %v3777, 32
        %v3797 = vpop.permute.xlu0 %3796
        %3798 = vrot.lane.b32.xlu0 %v3789, 32
        %v3799 = vpop.permute.xlu0 %3798
        %3800 = vrot.lane.b32.xlu0 %v3780, 64
        %v3801 = vpop.permute.xlu0 %3800
        %3802 = vrot.lane.b32.xlu0 %v3792, 64
        %v3803 = vpop.permute.xlu0 %3802
        %3804 = vrot.lane.b32.xlu0 %v3783, 96
        %v3805 = vpop.permute.xlu0 %3804
        %3806 = vrot.lane.b32.xlu0 %v3795, 96
        %v3807 = vpop.permute.xlu0 %3806
        %v3810 = vsel %vm2598, %v3774, %v3797
        %v3813 = vsel %vm2598, %v3786, %v3799
        %vm3814 = vcmask 523264
        %v3816 = vsel %vm3814, %v3810, %v3801
        %v3818 = vsel %vm3814, %v3813, %v3803
        %vm3819 = vcmask 785408
        %v3821 = vsel %vm3819, %v3816, %v3805
        %v3824 = vsel %vm3819, %v3818, %v3807
        %3828 = vrot.lane.b32.xlu0 %v1360, 96
        %v3829 = vpop.permute.xlu0 %3828
        %3830 = vrot.lane.b32.xlu0 %v1363, 96
        %v3831 = vpop.permute.xlu0 %3830
        %3832 = vrot.lane.b32.xlu0 %v1360, 64
        %v3833 = vpop.permute.xlu0 %3832
        %3834 = vrot.lane.b32.xlu0 %v1363, 64
        %v3835 = vpop.permute.xlu0 %3834
        %3836 = vrot.lane.b32.xlu0 %v1360, 32
        %v3837 = vpop.permute.xlu0 %3836
        %3838 = vrot.lane.b32.xlu0 %v1363, 32
        %v3839 = vpop.permute.xlu0 %3838
        %3842 = vrot.lane.b32.xlu0 %v1361, 96
        %v3843 = vpop.permute.xlu0 %3842
        %3844 = vrot.lane.b32.xlu0 %v1364, 96
        %v3845 = vpop.permute.xlu0 %3844
        %3846 = vrot.lane.b32.xlu0 %v1361, 64
        %v3847 = vpop.permute.xlu0 %3846
        %3848 = vrot.lane.b32.xlu0 %v1364, 64
        %v3849 = vpop.permute.xlu0 %3848
        %3850 = vrot.lane.b32.xlu0 %v1361, 32
        %v3851 = vpop.permute.xlu0 %3850
        %3852 = vrot.lane.b32.xlu0 %v1364, 32
        %v3853 = vpop.permute.xlu0 %3852
        %3856 = vrot.lane.b32.xlu0 %v1362, 96
        %v3857 = vpop.permute.xlu0 %3856
        %3858 = vrot.lane.b32.xlu0 %v1365, 96
        %v3859 = vpop.permute.xlu0 %3858
        %3860 = vrot.lane.b32.xlu0 %v1362, 64
        %v3861 = vpop.permute.xlu0 %3860
        %3862 = vrot.lane.b32.xlu0 %v1365, 64
        %v3863 = vpop.permute.xlu0 %3862
        %3864 = vrot.lane.b32.xlu0 %v1362, 32
        %v3865 = vpop.permute.xlu0 %3864
        %3866 = vrot.lane.b32.xlu0 %v1365, 32
        %v3867 = vpop.permute.xlu0 %3866
        %v3870 = vpack.i.b16 %v3829, %v1360
        %v3872 = vshrl.u32 %v1360, 16
        %v3873 = vshrl.u32 %v3829, 16
        %v3874 = vpack.i.b16 %v3873, %v3872
        %v3878 = vpack.i.b16 %v3837, %v3833
        %v3880 = vshrl.u32 %v3833, 16
        %v3881 = vshrl.u32 %v3837, 16
        %v3882 = vpack.i.b16 %v3881, %v3880
        %v3886 = vpack.i.b16 %v3843, %v1361
        %v3888 = vshrl.u32 %v1361, 16
        %v3889 = vshrl.u32 %v3843, 16
        %v3890 = vpack.i.b16 %v3889, %v3888
        %v3894 = vpack.i.b16 %v3851, %v3847
        %v3896 = vshrl.u32 %v3847, 16
        %v3897 = vshrl.u32 %v3851, 16
        %v3898 = vpack.i.b16 %v3897, %v3896
        %v3902 = vpack.i.b16 %v3857, %v1362
        %v3904 = vshrl.u32 %v1362, 16
        %v3905 = vshrl.u32 %v3857, 16
        %v3906 = vpack.i.b16 %v3905, %v3904
        %v3910 = vpack.i.b16 %v3865, %v3861
        %v3912 = vshrl.u32 %v3861, 16
        %v3913 = vshrl.u32 %v3865, 16
        %v3914 = vpack.i.b16 %v3913, %v3912
        %v3918 = vpack.i.b16 %v3831, %v1363
        %v3920 = vshrl.u32 %v1363, 16
        %v3921 = vshrl.u32 %v3831, 16
        %v3922 = vpack.i.b16 %v3921, %v3920
        %v3926 = vpack.i.b16 %v3839, %v3835
        %v3928 = vshrl.u32 %v3835, 16
        %v3929 = vshrl.u32 %v3839, 16
        %v3930 = vpack.i.b16 %v3929, %v3928
        %v3934 = vpack.i.b16 %v3845, %v1364
        %v3936 = vshrl.u32 %v1364, 16
        %v3937 = vshrl.u32 %v3845, 16
        %v3938 = vpack.i.b16 %v3937, %v3936
        %v3942 = vpack.i.b16 %v3853, %v3849
        %v3944 = vshrl.u32 %v3849, 16
        %v3945 = vshrl.u32 %v3853, 16
        %v3946 = vpack.i.b16 %v3945, %v3944
        %v3950 = vpack.i.b16 %v3859, %v1365
        %v3952 = vshrl.u32 %v1365, 16
        %v3953 = vshrl.u32 %v3859, 16
        %v3954 = vpack.i.b16 %v3953, %v3952
        %v3958 = vpack.i.b16 %v3867, %v3863
        %v3960 = vshrl.u32 %v3863, 16
        %v3961 = vshrl.u32 %v3867, 16
        %v3962 = vpack.i.b16 %v3961, %v3960
        %v3964 = vcombine.low %v3870, %v3886
        %v3965 = vcombine.high %v3870, %v3886
        %v3967 = vunpack.c.l.s4 1983009808
        %v3968 = vunpack.c.0.s8 %v3967
        %v3969 = vlaneseq
        %v3970 = vshrl.u32 %v3969, 7
        %v3971 = vsub.s32 %v3968, %v3970
        %v3972 = vrot.slane %v3964, %v3971
        %v3974 = vunpack.c.l.s4 1983009808
        %v3975 = vunpack.c.0.s8 %v3974
        %v3976 = vlaneseq
        %v3977 = vshrl.u32 %v3976, 7
        %v3978 = vsub.s32 %v3975, %v3977
        %v3979 = vrot.slane %v3965, %v3978
        %v3980 = vcombine.low %v3878, %v3894
        %v3981 = vcombine.high %v3878, %v3894
        %v3983 = vunpack.c.l.s4 1983009808
        %v3984 = vunpack.c.0.s8 %v3983
        %v3985 = vlaneseq
        %v3986 = vshrl.u32 %v3985, 7
        %v3987 = vsub.s32 %v3984, %v3986
        %v3988 = vrot.slane %v3980, %v3987
        %v3990 = vunpack.c.l.s4 1983009808
        %v3991 = vunpack.c.0.s8 %v3990
        %v3992 = vlaneseq
        %v3993 = vshrl.u32 %v3992, 7
        %v3994 = vsub.s32 %v3991, %v3993
        %v3995 = vrot.slane %v3981, %v3994
        %v3996 = vcombine.high %v3902, %v1457
        %v3998 = vunpack.c.l.s4 1983009808
        %v3999 = vunpack.c.0.s8 %v3998
        %v4000 = vlaneseq
        %v4001 = vshrl.u32 %v4000, 7
        %v4002 = vsub.s32 %v3999, %v4001
        %v4003 = vrot.slane %v3902, %v4002
        %v4005 = vunpack.c.l.s4 1983009808
        %v4006 = vunpack.c.0.s8 %v4005
        %v4007 = vlaneseq
        %v4008 = vshrl.u32 %v4007, 7
        %v4009 = vsub.s32 %v4006, %v4008
        %v4010 = vrot.slane %v3996, %v4009
        %v4011 = vcombine.high %v3910, %v1457
        %v4013 = vunpack.c.l.s4 1983009808
        %v4014 = vunpack.c.0.s8 %v4013
        %v4015 = vlaneseq
        %v4016 = vshrl.u32 %v4015, 7
        %v4017 = vsub.s32 %v4014, %v4016
        %v4018 = vrot.slane %v3910, %v4017
        %v4020 = vunpack.c.l.s4 1983009808
        %v4021 = vunpack.c.0.s8 %v4020
        %v4022 = vlaneseq
        %v4023 = vshrl.u32 %v4022, 7
        %v4024 = vsub.s32 %v4021, %v4023
        %v4025 = vrot.slane %v4011, %v4024
        %v4026 = vcombine.low %v3972, %v3988
        %v4027 = vcombine.high %v3972, %v3988
        %v4029 = vunpack.c.l.s4 1934713408
        %v4030 = vunpack.c.0.s8 %v4029
        %v4031 = vlaneseq
        %v4032 = vshrl.u32 %v4031, 7
        %v4033 = vsub.s32 %v4030, %v4032
        %v4034 = vrot.slane %v4026, %v4033
        %v4036 = vunpack.c.l.s4 1934713408
        %v4037 = vunpack.c.0.s8 %v4036
        %v4038 = vlaneseq
        %v4039 = vshrl.u32 %v4038, 7
        %v4040 = vsub.s32 %v4037, %v4039
        %v4041 = vrot.slane %v4027, %v4040
        %v4042 = vcombine.low %v3979, %v3995
        %v4043 = vcombine.high %v3979, %v3995
        %v4045 = vunpack.c.l.s4 1934713408
        %v4046 = vunpack.c.0.s8 %v4045
        %v4047 = vlaneseq
        %v4048 = vshrl.u32 %v4047, 7
        %v4049 = vsub.s32 %v4046, %v4048
        %v4050 = vrot.slane %v4042, %v4049
        %v4052 = vunpack.c.l.s4 1934713408
        %v4053 = vunpack.c.0.s8 %v4052
        %v4054 = vlaneseq
        %v4055 = vshrl.u32 %v4054, 7
        %v4056 = vsub.s32 %v4053, %v4055
        %v4057 = vrot.slane %v4043, %v4056
        %v4058 = vcombine.low %v4003, %v4018
        %v4059 = vcombine.high %v4003, %v4018
        %v4061 = vunpack.c.l.s4 1934713408
        %v4062 = vunpack.c.0.s8 %v4061
        %v4063 = vlaneseq
        %v4064 = vshrl.u32 %v4063, 7
        %v4065 = vsub.s32 %v4062, %v4064
        %v4066 = vrot.slane %v4058, %v4065
        %v4068 = vunpack.c.l.s4 1934713408
        %v4069 = vunpack.c.0.s8 %v4068
        %v4070 = vlaneseq
        %v4071 = vshrl.u32 %v4070, 7
        %v4072 = vsub.s32 %v4069, %v4071
        %v4073 = vrot.slane %v4059, %v4072
        %v4074 = vcombine.low %v4010, %v4025
        %v4075 = vcombine.high %v4010, %v4025
        %v4077 = vunpack.c.l.s4 1934713408
        %v4078 = vunpack.c.0.s8 %v4077
        %v4079 = vlaneseq
        %v4080 = vshrl.u32 %v4079, 7
        %v4081 = vsub.s32 %v4078, %v4080
        %v4082 = vrot.slane %v4074, %v4081
        %v4084 = vunpack.c.l.s4 1934713408
        %v4085 = vunpack.c.0.s8 %v4084
        %v4086 = vlaneseq
        %v4087 = vshrl.u32 %v4086, 7
        %v4088 = vsub.s32 %v4085, %v4087
        %v4089 = vrot.slane %v4075, %v4088
        %v4090 = vcombine.low %v4034, %v4066
        %v4091 = vcombine.high %v4034, %v4066
        %v4092 = vcombine.low %v4041, %v4073
        %v4093 = vcombine.high %v4041, %v4073
        %v4094 = vcombine.low %v4050, %v4082
        %v4095 = vcombine.high %v4050, %v4082
        %v4096 = vcombine.low %v4057, %v4089
        %v4097 = vcombine.high %v4057, %v4089
        %v4098 = vcombine.low %v3874, %v3890
        %v4099 = vcombine.high %v3874, %v3890
        %v4101 = vunpack.c.l.s4 1983009808
        %v4102 = vunpack.c.0.s8 %v4101
        %v4103 = vlaneseq
        %v4104 = vshrl.u32 %v4103, 7
        %v4105 = vsub.s32 %v4102, %v4104
        %v4106 = vrot.slane %v4098, %v4105
        %v4108 = vunpack.c.l.s4 1983009808
        %v4109 = vunpack.c.0.s8 %v4108
        %v4110 = vlaneseq
        %v4111 = vshrl.u32 %v4110, 7
        %v4112 = vsub.s32 %v4109, %v4111
        %v4113 = vrot.slane %v4099, %v4112
        %v4114 = vcombine.low %v3882, %v3898
        %v4115 = vcombine.high %v3882, %v3898
        %v4117 = vunpack.c.l.s4 1983009808
        %v4118 = vunpack.c.0.s8 %v4117
        %v4119 = vlaneseq
        %v4120 = vshrl.u32 %v4119, 7
        %v4121 = vsub.s32 %v4118, %v4120
        %v4122 = vrot.slane %v4114, %v4121
        %v4124 = vunpack.c.l.s4 1983009808
        %v4125 = vunpack.c.0.s8 %v4124
        %v4126 = vlaneseq
        %v4127 = vshrl.u32 %v4126, 7
        %v4128 = vsub.s32 %v4125, %v4127
        %v4129 = vrot.slane %v4115, %v4128
        %v4130 = vcombine.high %v3906, %v1460
        %v4132 = vunpack.c.l.s4 1983009808
        %v4133 = vunpack.c.0.s8 %v4132
        %v4134 = vlaneseq
        %v4135 = vshrl.u32 %v4134, 7
        %v4136 = vsub.s32 %v4133, %v4135
        %v4137 = vrot.slane %v3906, %v4136
        %v4139 = vunpack.c.l.s4 1983009808
        %v4140 = vunpack.c.0.s8 %v4139
        %v4141 = vlaneseq
        %v4142 = vshrl.u32 %v4141, 7
        %v4143 = vsub.s32 %v4140, %v4142
        %v4144 = vrot.slane %v4130, %v4143
        %v4145 = vcombine.high %v3914, %v1460
        %v4147 = vunpack.c.l.s4 1983009808
        %v4148 = vunpack.c.0.s8 %v4147
        %v4149 = vlaneseq
        %v4150 = vshrl.u32 %v4149, 7
        %v4151 = vsub.s32 %v4148, %v4150
        %v4152 = vrot.slane %v3914, %v4151
        %v4154 = vunpack.c.l.s4 1983009808
        %v4155 = vunpack.c.0.s8 %v4154
        %v4156 = vlaneseq
        %v4157 = vshrl.u32 %v4156, 7
        %v4158 = vsub.s32 %v4155, %v4157
        %v4159 = vrot.slane %v4145, %v4158
        %v4160 = vcombine.low %v4106, %v4122
        %v4161 = vcombine.high %v4106, %v4122
        %v4163 = vunpack.c.l.s4 1934713408
        %v4164 = vunpack.c.0.s8 %v4163
        %v4165 = vlaneseq
        %v4166 = vshrl.u32 %v4165, 7
        %v4167 = vsub.s32 %v4164, %v4166
        %v4168 = vrot.slane %v4160, %v4167
        %v4170 = vunpack.c.l.s4 1934713408
        %v4171 = vunpack.c.0.s8 %v4170
        %v4172 = vlaneseq
        %v4173 = vshrl.u32 %v4172, 7
        %v4174 = vsub.s32 %v4171, %v4173
        %v4175 = vrot.slane %v4161, %v4174
        %v4176 = vcombine.low %v4113, %v4129
        %v4177 = vcombine.high %v4113, %v4129
        %v4179 = vunpack.c.l.s4 1934713408
        %v4180 = vunpack.c.0.s8 %v4179
        %v4181 = vlaneseq
        %v4182 = vshrl.u32 %v4181, 7
        %v4183 = vsub.s32 %v4180, %v4182
        %v4184 = vrot.slane %v4176, %v4183
        %v4186 = vunpack.c.l.s4 1934713408
        %v4187 = vunpack.c.0.s8 %v4186
        %v4188 = vlaneseq
        %v4189 = vshrl.u32 %v4188, 7
        %v4190 = vsub.s32 %v4187, %v4189
        %v4191 = vrot.slane %v4177, %v4190
        %v4192 = vcombine.low %v4137, %v4152
        %v4193 = vcombine.high %v4137, %v4152
        %v4195 = vunpack.c.l.s4 1934713408
        %v4196 = vunpack.c.0.s8 %v4195
        %v4197 = vlaneseq
        %v4198 = vshrl.u32 %v4197, 7
        %v4199 = vsub.s32 %v4196, %v4198
        %v4200 = vrot.slane %v4192, %v4199
        %v4202 = vunpack.c.l.s4 1934713408
        %v4203 = vunpack.c.0.s8 %v4202
        %v4204 = vlaneseq
        %v4205 = vshrl.u32 %v4204, 7
        %v4206 = vsub.s32 %v4203, %v4205
        %v4207 = vrot.slane %v4193, %v4206
        %v4208 = vcombine.low %v4144, %v4159
        %v4209 = vcombine.high %v4144, %v4159
        %v4211 = vunpack.c.l.s4 1934713408
        %v4212 = vunpack.c.0.s8 %v4211
        %v4213 = vlaneseq
        %v4214 = vshrl.u32 %v4213, 7
        %v4215 = vsub.s32 %v4212, %v4214
        %v4216 = vrot.slane %v4208, %v4215
        %v4218 = vunpack.c.l.s4 1934713408
        %v4219 = vunpack.c.0.s8 %v4218
        %v4220 = vlaneseq
        %v4221 = vshrl.u32 %v4220, 7
        %v4222 = vsub.s32 %v4219, %v4221
        %v4223 = vrot.slane %v4209, %v4222
        %v4224 = vcombine.low %v4168, %v4200
        %v4225 = vcombine.high %v4168, %v4200
        %v4226 = vcombine.low %v4175, %v4207
        %v4227 = vcombine.high %v4175, %v4207
        %v4228 = vcombine.low %v4184, %v4216
        %v4229 = vcombine.high %v4184, %v4216
        %v4230 = vcombine.low %v4191, %v4223
        %v4231 = vcombine.high %v4191, %v4223
        %v4232 = vcombine.low %v3918, %v3934
        %v4233 = vcombine.high %v3918, %v3934
        %v4235 = vunpack.c.l.s4 1983009808
        %v4236 = vunpack.c.0.s8 %v4235
        %v4237 = vlaneseq
        %v4238 = vshrl.u32 %v4237, 7
        %v4239 = vsub.s32 %v4236, %v4238
        %v4240 = vrot.slane %v4232, %v4239
        %v4242 = vunpack.c.l.s4 1983009808
        %v4243 = vunpack.c.0.s8 %v4242
        %v4244 = vlaneseq
        %v4245 = vshrl.u32 %v4244, 7
        %v4246 = vsub.s32 %v4243, %v4245
        %v4247 = vrot.slane %v4233, %v4246
        %v4248 = vcombine.low %v3926, %v3942
        %v4249 = vcombine.high %v3926, %v3942
        %v4251 = vunpack.c.l.s4 1983009808
        %v4252 = vunpack.c.0.s8 %v4251
        %v4253 = vlaneseq
        %v4254 = vshrl.u32 %v4253, 7
        %v4255 = vsub.s32 %v4252, %v4254
        %v4256 = vrot.slane %v4248, %v4255
        %v4258 = vunpack.c.l.s4 1983009808
        %v4259 = vunpack.c.0.s8 %v4258
        %v4260 = vlaneseq
        %v4261 = vshrl.u32 %v4260, 7
        %v4262 = vsub.s32 %v4259, %v4261
        %v4263 = vrot.slane %v4249, %v4262
        %v4264 = vcombine.high %v3950, %v1457
        %v4266 = vunpack.c.l.s4 1983009808
        %v4267 = vunpack.c.0.s8 %v4266
        %v4268 = vlaneseq
        %v4269 = vshrl.u32 %v4268, 7
        %v4270 = vsub.s32 %v4267, %v4269
        %v4271 = vrot.slane %v3950, %v4270
        %v4273 = vunpack.c.l.s4 1983009808
        %v4274 = vunpack.c.0.s8 %v4273
        %v4275 = vlaneseq
        %v4276 = vshrl.u32 %v4275, 7
        %v4277 = vsub.s32 %v4274, %v4276
        %v4278 = vrot.slane %v4264, %v4277
        %v4279 = vcombine.high %v3958, %v1457
        %v4281 = vunpack.c.l.s4 1983009808
        %v4282 = vunpack.c.0.s8 %v4281
        %v4283 = vlaneseq
        %v4284 = vshrl.u32 %v4283, 7
        %v4285 = vsub.s32 %v4282, %v4284
        %v4286 = vrot.slane %v3958, %v4285
        %v4288 = vunpack.c.l.s4 1983009808
        %v4289 = vunpack.c.0.s8 %v4288
        %v4290 = vlaneseq
        %v4291 = vshrl.u32 %v4290, 7
        %v4292 = vsub.s32 %v4289, %v4291
        %v4293 = vrot.slane %v4279, %v4292
        %v4294 = vcombine.low %v4240, %v4256
        %v4295 = vcombine.high %v4240, %v4256
        %v4297 = vunpack.c.l.s4 1934713408
        %v4298 = vunpack.c.0.s8 %v4297
        %v4299 = vlaneseq
        %v4300 = vshrl.u32 %v4299, 7
        %v4301 = vsub.s32 %v4298, %v4300
        %v4302 = vrot.slane %v4294, %v4301
        %v4304 = vunpack.c.l.s4 1934713408
        %v4305 = vunpack.c.0.s8 %v4304
        %v4306 = vlaneseq
        %v4307 = vshrl.u32 %v4306, 7
        %v4308 = vsub.s32 %v4305, %v4307
        %v4309 = vrot.slane %v4295, %v4308
        %v4310 = vcombine.low %v4247, %v4263
        %v4311 = vcombine.high %v4247, %v4263
        %v4313 = vunpack.c.l.s4 1934713408
        %v4314 = vunpack.c.0.s8 %v4313
        %v4315 = vlaneseq
        %v4316 = vshrl.u32 %v4315, 7
        %v4317 = vsub.s32 %v4314, %v4316
        %v4318 = vrot.slane %v4310, %v4317
        %v4320 = vunpack.c.l.s4 1934713408
        %v4321 = vunpack.c.0.s8 %v4320
        %v4322 = vlaneseq
        %v4323 = vshrl.u32 %v4322, 7
        %v4324 = vsub.s32 %v4321, %v4323
        %v4325 = vrot.slane %v4311, %v4324
        %v4326 = vcombine.low %v4271, %v4286
        %v4327 = vcombine.high %v4271, %v4286
        %v4329 = vunpack.c.l.s4 1934713408
        %v4330 = vunpack.c.0.s8 %v4329
        %v4331 = vlaneseq
        %v4332 = vshrl.u32 %v4331, 7
        %v4333 = vsub.s32 %v4330, %v4332
        %v4334 = vrot.slane %v4326, %v4333
        %v4336 = vunpack.c.l.s4 1934713408
        %v4337 = vunpack.c.0.s8 %v4336
        %v4338 = vlaneseq
        %v4339 = vshrl.u32 %v4338, 7
        %v4340 = vsub.s32 %v4337, %v4339
        %v4341 = vrot.slane %v4327, %v4340
        %v4342 = vcombine.low %v4278, %v4293
        %v4343 = vcombine.high %v4278, %v4293
        %v4345 = vunpack.c.l.s4 1934713408
        %v4346 = vunpack.c.0.s8 %v4345
        %v4347 = vlaneseq
        %v4348 = vshrl.u32 %v4347, 7
        %v4349 = vsub.s32 %v4346, %v4348
        %v4350 = vrot.slane %v4342, %v4349
        %v4352 = vunpack.c.l.s4 1934713408
        %v4353 = vunpack.c.0.s8 %v4352
        %v4354 = vlaneseq
        %v4355 = vshrl.u32 %v4354, 7
        %v4356 = vsub.s32 %v4353, %v4355
        %v4357 = vrot.slane %v4343, %v4356
        %v4358 = vcombine.low %v4302, %v4334
        %v4359 = vcombine.high %v4302, %v4334
        %v4360 = vcombine.low %v4309, %v4341
        %v4361 = vcombine.high %v4309, %v4341
        %v4362 = vcombine.low %v4318, %v4350
        %v4363 = vcombine.high %v4318, %v4350
        %v4364 = vcombine.low %v4325, %v4357
        %v4365 = vcombine.high %v4325, %v4357
        %v4366 = vcombine.low %v3922, %v3938
        %v4367 = vcombine.high %v3922, %v3938
        %v4369 = vunpack.c.l.s4 1983009808
        %v4370 = vunpack.c.0.s8 %v4369
        %v4371 = vlaneseq
        %v4372 = vshrl.u32 %v4371, 7
        %v4373 = vsub.s32 %v4370, %v4372
        %v4374 = vrot.slane %v4366, %v4373
        %v4376 = vunpack.c.l.s4 1983009808
        %v4377 = vunpack.c.0.s8 %v4376
        %v4378 = vlaneseq
        %v4379 = vshrl.u32 %v4378, 7
        %v4380 = vsub.s32 %v4377, %v4379
        %v4381 = vrot.slane %v4367, %v4380
        %v4382 = vcombine.low %v3930, %v3946
        %v4383 = vcombine.high %v3930, %v3946
        %v4385 = vunpack.c.l.s4 1983009808
        %v4386 = vunpack.c.0.s8 %v4385
        %v4387 = vlaneseq
        %v4388 = vshrl.u32 %v4387, 7
        %v4389 = vsub.s32 %v4386, %v4388
        %v4390 = vrot.slane %v4382, %v4389
        %v4392 = vunpack.c.l.s4 1983009808
        %v4393 = vunpack.c.0.s8 %v4392
        %v4394 = vlaneseq
        %v4395 = vshrl.u32 %v4394, 7
        %v4396 = vsub.s32 %v4393, %v4395
        %v4397 = vrot.slane %v4383, %v4396
        %v4398 = vcombine.high %v3954, %v1460
        %v4400 = vunpack.c.l.s4 1983009808
        %v4401 = vunpack.c.0.s8 %v4400
        %v4402 = vlaneseq
        %v4403 = vshrl.u32 %v4402, 7
        %v4404 = vsub.s32 %v4401, %v4403
        %v4405 = vrot.slane %v3954, %v4404
        %v4407 = vunpack.c.l.s4 1983009808
        %v4408 = vunpack.c.0.s8 %v4407
        %v4409 = vlaneseq
        %v4410 = vshrl.u32 %v4409, 7
        %v4411 = vsub.s32 %v4408, %v4410
        %v4412 = vrot.slane %v4398, %v4411
        %v4413 = vcombine.high %v3962, %v1460
        %v4415 = vunpack.c.l.s4 1983009808
        %v4416 = vunpack.c.0.s8 %v4415
        %v4417 = vlaneseq
        %v4418 = vshrl.u32 %v4417, 7
        %v4419 = vsub.s32 %v4416, %v4418
        %v4420 = vrot.slane %v3962, %v4419
        %v4422 = vunpack.c.l.s4 1983009808
        %v4423 = vunpack.c.0.s8 %v4422
        %v4424 = vlaneseq
        %v4425 = vshrl.u32 %v4424, 7
        %v4426 = vsub.s32 %v4423, %v4425
        %v4427 = vrot.slane %v4413, %v4426
        %v4428 = vcombine.low %v4374, %v4390
        %v4429 = vcombine.high %v4374, %v4390
        %v4431 = vunpack.c.l.s4 1934713408
        %v4432 = vunpack.c.0.s8 %v4431
        %v4433 = vlaneseq
        %v4434 = vshrl.u32 %v4433, 7
        %v4435 = vsub.s32 %v4432, %v4434
        %v4436 = vrot.slane %v4428, %v4435
        %v4438 = vunpack.c.l.s4 1934713408
        %v4439 = vunpack.c.0.s8 %v4438
        %v4440 = vlaneseq
        %v4441 = vshrl.u32 %v4440, 7
        %v4442 = vsub.s32 %v4439, %v4441
        %v4443 = vrot.slane %v4429, %v4442
        %v4444 = vcombine.low %v4381, %v4397
        %v4445 = vcombine.high %v4381, %v4397
        %v4447 = vunpack.c.l.s4 1934713408
        %v4448 = vunpack.c.0.s8 %v4447
        %v4449 = vlaneseq
        %v4450 = vshrl.u32 %v4449, 7
        %v4451 = vsub.s32 %v4448, %v4450
        %v4452 = vrot.slane %v4444, %v4451
        %v4454 = vunpack.c.l.s4 1934713408
        %v4455 = vunpack.c.0.s8 %v4454
        %v4456 = vlaneseq
        %v4457 = vshrl.u32 %v4456, 7
        %v4458 = vsub.s32 %v4455, %v4457
        %v4459 = vrot.slane %v4445, %v4458
        %v4460 = vcombine.low %v4405, %v4420
        %v4461 = vcombine.high %v4405, %v4420
        %v4463 = vunpack.c.l.s4 1934713408
        %v4464 = vunpack.c.0.s8 %v4463
        %v4465 = vlaneseq
        %v4466 = vshrl.u32 %v4465, 7
        %v4467 = vsub.s32 %v4464, %v4466
        %v4468 = vrot.slane %v4460, %v4467
        %v4470 = vunpack.c.l.s4 1934713408
        %v4471 = vunpack.c.0.s8 %v4470
        %v4472 = vlaneseq
        %v4473 = vshrl.u32 %v4472, 7
        %v4474 = vsub.s32 %v4471, %v4473
        %v4475 = vrot.slane %v4461, %v4474
        %v4476 = vcombine.low %v4412, %v4427
        %v4477 = vcombine.high %v4412, %v4427
        %v4479 = vunpack.c.l.s4 1934713408
        %v4480 = vunpack.c.0.s8 %v4479
        %v4481 = vlaneseq
        %v4482 = vshrl.u32 %v4481, 7
        %v4483 = vsub.s32 %v4480, %v4482
        %v4484 = vrot.slane %v4476, %v4483
        %v4486 = vunpack.c.l.s4 1934713408
        %v4487 = vunpack.c.0.s8 %v4486
        %v4488 = vlaneseq
        %v4489 = vshrl.u32 %v4488, 7
        %v4490 = vsub.s32 %v4487, %v4489
        %v4491 = vrot.slane %v4477, %v4490
        %v4492 = vcombine.low %v4436, %v4468
        %v4493 = vcombine.high %v4436, %v4468
        %v4494 = vcombine.low %v4443, %v4475
        %v4495 = vcombine.high %v4443, %v4475
        %v4496 = vcombine.low %v4452, %v4484
        %v4497 = vcombine.high %v4452, %v4484
        %v4498 = vcombine.low %v4459, %v4491
        %v4499 = vcombine.high %v4459, %v4491
        %v4500 = vcombine.low %v4090, %v4092
        %v4501 = vcombine.high %v4090, %v4092
        %v4503 = vunpack.c.l.s4 1983009808
        %v4504 = vunpack.c.0.s8 %v4503
        %v4505 = vlaneseq
        %v4506 = vshrl.u32 %v4505, 7
        %v4507 = vsub.s32 %v4504, %v4506
        %v4508 = vrot.slane %v4500, %v4507
        %v4510 = vunpack.c.l.s4 1983009808
        %v4511 = vunpack.c.0.s8 %v4510
        %v4512 = vlaneseq
        %v4513 = vshrl.u32 %v4512, 7
        %v4514 = vsub.s32 %v4511, %v4513
        %v4515 = vrot.slane %v4501, %v4514
        %v4516 = vcombine.low %v4091, %v4093
        %v4517 = vcombine.high %v4091, %v4093
        %v4519 = vunpack.c.l.s4 1983009808
        %v4520 = vunpack.c.0.s8 %v4519
        %v4521 = vlaneseq
        %v4522 = vshrl.u32 %v4521, 7
        %v4523 = vsub.s32 %v4520, %v4522
        %v4524 = vrot.slane %v4516, %v4523
        %v4526 = vunpack.c.l.s4 1983009808
        %v4527 = vunpack.c.0.s8 %v4526
        %v4528 = vlaneseq
        %v4529 = vshrl.u32 %v4528, 7
        %v4530 = vsub.s32 %v4527, %v4529
        %v4531 = vrot.slane %v4517, %v4530
        %v4532 = vcombine.low %v4094, %v4096
        %v4533 = vcombine.high %v4094, %v4096
        %v4535 = vunpack.c.l.s4 1983009808
        %v4536 = vunpack.c.0.s8 %v4535
        %v4537 = vlaneseq
        %v4538 = vshrl.u32 %v4537, 7
        %v4539 = vsub.s32 %v4536, %v4538
        %v4540 = vrot.slane %v4532, %v4539
        %v4542 = vunpack.c.l.s4 1983009808
        %v4543 = vunpack.c.0.s8 %v4542
        %v4544 = vlaneseq
        %v4545 = vshrl.u32 %v4544, 7
        %v4546 = vsub.s32 %v4543, %v4545
        %v4547 = vrot.slane %v4533, %v4546
        %v4548 = vcombine.low %v4095, %v4097
        %v4549 = vcombine.high %v4095, %v4097
        %v4551 = vunpack.c.l.s4 1983009808
        %v4552 = vunpack.c.0.s8 %v4551
        %v4553 = vlaneseq
        %v4554 = vshrl.u32 %v4553, 7
        %v4555 = vsub.s32 %v4552, %v4554
        %v4556 = vrot.slane %v4548, %v4555
        %v4558 = vunpack.c.l.s4 1983009808
        %v4559 = vunpack.c.0.s8 %v4558
        %v4560 = vlaneseq
        %v4561 = vshrl.u32 %v4560, 7
        %v4562 = vsub.s32 %v4559, %v4561
        %v4563 = vrot.slane %v4549, %v4562
        %v4564 = vcombine.low %v4508, %v4524
        %v4565 = vcombine.high %v4508, %v4524
        %v4567 = vunpack.c.l.s4 1934713408
        %v4568 = vunpack.c.0.s8 %v4567
        %v4569 = vlaneseq
        %v4570 = vshrl.u32 %v4569, 7
        %v4571 = vsub.s32 %v4568, %v4570
        %v4572 = vrot.slane %v4564, %v4571
        %v4574 = vunpack.c.l.s4 1934713408
        %v4575 = vunpack.c.0.s8 %v4574
        %v4576 = vlaneseq
        %v4577 = vshrl.u32 %v4576, 7
        %v4578 = vsub.s32 %v4575, %v4577
        %v4579 = vrot.slane %v4565, %v4578
        %v4580 = vcombine.low %v4515, %v4531
        %v4582 = vunpack.c.l.s4 1934713408
        %v4583 = vunpack.c.0.s8 %v4582
        %v4584 = vlaneseq
        %v4585 = vshrl.u32 %v4584, 7
        %v4586 = vsub.s32 %v4583, %v4585
        %v4587 = vrot.slane %v4580, %v4586
        %v4588 = vcombine.low %v4540, %v4556
        %v4589 = vcombine.high %v4540, %v4556
        %v4591 = vunpack.c.l.s4 1934713408
        %v4592 = vunpack.c.0.s8 %v4591
        %v4593 = vlaneseq
        %v4594 = vshrl.u32 %v4593, 7
        %v4595 = vsub.s32 %v4592, %v4594
        %v4596 = vrot.slane %v4588, %v4595
        %v4598 = vunpack.c.l.s4 1934713408
        %v4599 = vunpack.c.0.s8 %v4598
        %v4600 = vlaneseq
        %v4601 = vshrl.u32 %v4600, 7
        %v4602 = vsub.s32 %v4599, %v4601
        %v4603 = vrot.slane %v4589, %v4602
        %v4604 = vcombine.low %v4547, %v4563
        %v4606 = vunpack.c.l.s4 1934713408
        %v4607 = vunpack.c.0.s8 %v4606
        %v4608 = vlaneseq
        %v4609 = vshrl.u32 %v4608, 7
        %v4610 = vsub.s32 %v4607, %v4609
        %v4611 = vrot.slane %v4604, %v4610
        %v4612 = vcombine.low %v4572, %v4596
        %v4613 = vcombine.high %v4572, %v4596
        %v4614 = vcombine.low %v4579, %v4603
        %v4615 = vcombine.high %v4579, %v4603
        %v4616 = vcombine.low %v4587, %v4611
        %v4617 = vcombine.high %v4587, %v4611
        %v4618 = vcombine.low %v4224, %v4226
        %v4619 = vcombine.high %v4224, %v4226
        %v4621 = vunpack.c.l.s4 1983009808
        %v4622 = vunpack.c.0.s8 %v4621
        %v4623 = vlaneseq
        %v4624 = vshrl.u32 %v4623, 7
        %v4625 = vsub.s32 %v4622, %v4624
        %v4626 = vrot.slane %v4618, %v4625
        %v4628 = vunpack.c.l.s4 1983009808
        %v4629 = vunpack.c.0.s8 %v4628
        %v4630 = vlaneseq
        %v4631 = vshrl.u32 %v4630, 7
        %v4632 = vsub.s32 %v4629, %v4631
        %v4633 = vrot.slane %v4619, %v4632
        %v4634 = vcombine.low %v4225, %v4227
        %v4635 = vcombine.high %v4225, %v4227
        %v4637 = vunpack.c.l.s4 1983009808
        %v4638 = vunpack.c.0.s8 %v4637
        %v4639 = vlaneseq
        %v4640 = vshrl.u32 %v4639, 7
        %v4641 = vsub.s32 %v4638, %v4640
        %v4642 = vrot.slane %v4634, %v4641
        %v4644 = vunpack.c.l.s4 1983009808
        %v4645 = vunpack.c.0.s8 %v4644
        %v4646 = vlaneseq
        %v4647 = vshrl.u32 %v4646, 7
        %v4648 = vsub.s32 %v4645, %v4647
        %v4649 = vrot.slane %v4635, %v4648
        %v4650 = vcombine.low %v4228, %v4230
        %v4651 = vcombine.high %v4228, %v4230
        %v4653 = vunpack.c.l.s4 1983009808
        %v4654 = vunpack.c.0.s8 %v4653
        %v4655 = vlaneseq
        %v4656 = vshrl.u32 %v4655, 7
        %v4657 = vsub.s32 %v4654, %v4656
        %v4658 = vrot.slane %v4650, %v4657
        %v4660 = vunpack.c.l.s4 1983009808
        %v4661 = vunpack.c.0.s8 %v4660
        %v4662 = vlaneseq
        %v4663 = vshrl.u32 %v4662, 7
        %v4664 = vsub.s32 %v4661, %v4663
        %v4665 = vrot.slane %v4651, %v4664
        %v4666 = vcombine.low %v4229, %v4231
        %v4667 = vcombine.high %v4229, %v4231
        %v4669 = vunpack.c.l.s4 1983009808
        %v4670 = vunpack.c.0.s8 %v4669
        %v4671 = vlaneseq
        %v4672 = vshrl.u32 %v4671, 7
        %v4673 = vsub.s32 %v4670, %v4672
        %v4674 = vrot.slane %v4666, %v4673
        %v4676 = vunpack.c.l.s4 1983009808
        %v4677 = vunpack.c.0.s8 %v4676
        %v4678 = vlaneseq
        %v4679 = vshrl.u32 %v4678, 7
        %v4680 = vsub.s32 %v4677, %v4679
        %v4681 = vrot.slane %v4667, %v4680
        %v4682 = vcombine.low %v4626, %v4642
        %v4683 = vcombine.high %v4626, %v4642
        %v4685 = vunpack.c.l.s4 1934713408
        %v4686 = vunpack.c.0.s8 %v4685
        %v4687 = vlaneseq
        %v4688 = vshrl.u32 %v4687, 7
        %v4689 = vsub.s32 %v4686, %v4688
        %v4690 = vrot.slane %v4682, %v4689
        %v4692 = vunpack.c.l.s4 1934713408
        %v4693 = vunpack.c.0.s8 %v4692
        %v4694 = vlaneseq
        %v4695 = vshrl.u32 %v4694, 7
        %v4696 = vsub.s32 %v4693, %v4695
        %v4697 = vrot.slane %v4683, %v4696
        %v4698 = vcombine.low %v4633, %v4649
        %v4700 = vunpack.c.l.s4 1934713408
        %v4701 = vunpack.c.0.s8 %v4700
        %v4702 = vlaneseq
        %v4703 = vshrl.u32 %v4702, 7
        %v4704 = vsub.s32 %v4701, %v4703
        %v4705 = vrot.slane %v4698, %v4704
        %v4706 = vcombine.low %v4658, %v4674
        %v4707 = vcombine.high %v4658, %v4674
        %v4709 = vunpack.c.l.s4 1934713408
        %v4710 = vunpack.c.0.s8 %v4709
        %v4711 = vlaneseq
        %v4712 = vshrl.u32 %v4711, 7
        %v4713 = vsub.s32 %v4710, %v4712
        %v4714 = vrot.slane %v4706, %v4713
        %v4716 = vunpack.c.l.s4 1934713408
        %v4717 = vunpack.c.0.s8 %v4716
        %v4718 = vlaneseq
        %v4719 = vshrl.u32 %v4718, 7
        %v4720 = vsub.s32 %v4717, %v4719
        %v4721 = vrot.slane %v4707, %v4720
        %v4722 = vcombine.low %v4665, %v4681
        %v4724 = vunpack.c.l.s4 1934713408
        %v4725 = vunpack.c.0.s8 %v4724
        %v4726 = vlaneseq
        %v4727 = vshrl.u32 %v4726, 7
        %v4728 = vsub.s32 %v4725, %v4727
        %v4729 = vrot.slane %v4722, %v4728
        %v4730 = vcombine.low %v4690, %v4714
        %v4731 = vcombine.high %v4690, %v4714
        %v4732 = vcombine.low %v4697, %v4721
        %v4733 = vcombine.high %v4697, %v4721
        %v4734 = vcombine.low %v4705, %v4729
        %v4735 = vcombine.high %v4705, %v4729
        %v4736 = vcombine.low %v4358, %v4360
        %v4737 = vcombine.high %v4358, %v4360
        %v4739 = vunpack.c.l.s4 1983009808
        %v4740 = vunpack.c.0.s8 %v4739
        %v4741 = vlaneseq
        %v4742 = vshrl.u32 %v4741, 7
        %v4743 = vsub.s32 %v4740, %v4742
        %v4744 = vrot.slane %v4736, %v4743
        %v4746 = vunpack.c.l.s4 1983009808
        %v4747 = vunpack.c.0.s8 %v4746
        %v4748 = vlaneseq
        %v4749 = vshrl.u32 %v4748, 7
        %v4750 = vsub.s32 %v4747, %v4749
        %v4751 = vrot.slane %v4737, %v4750
        %v4752 = vcombine.low %v4359, %v4361
        %v4753 = vcombine.high %v4359, %v4361
        %v4755 = vunpack.c.l.s4 1983009808
        %v4756 = vunpack.c.0.s8 %v4755
        %v4757 = vlaneseq
        %v4758 = vshrl.u32 %v4757, 7
        %v4759 = vsub.s32 %v4756, %v4758
        %v4760 = vrot.slane %v4752, %v4759
        %v4762 = vunpack.c.l.s4 1983009808
        %v4763 = vunpack.c.0.s8 %v4762
        %v4764 = vlaneseq
        %v4765 = vshrl.u32 %v4764, 7
        %v4766 = vsub.s32 %v4763, %v4765
        %v4767 = vrot.slane %v4753, %v4766
        %v4768 = vcombine.low %v4362, %v4364
        %v4769 = vcombine.high %v4362, %v4364
        %v4771 = vunpack.c.l.s4 1983009808
        %v4772 = vunpack.c.0.s8 %v4771
        %v4773 = vlaneseq
        %v4774 = vshrl.u32 %v4773, 7
        %v4775 = vsub.s32 %v4772, %v4774
        %v4776 = vrot.slane %v4768, %v4775
        %v4778 = vunpack.c.l.s4 1983009808
        %v4779 = vunpack.c.0.s8 %v4778
        %v4780 = vlaneseq
        %v4781 = vshrl.u32 %v4780, 7
        %v4782 = vsub.s32 %v4779, %v4781
        %v4783 = vrot.slane %v4769, %v4782
        %v4784 = vcombine.low %v4363, %v4365
        %v4785 = vcombine.high %v4363, %v4365
        %v4787 = vunpack.c.l.s4 1983009808
        %v4788 = vunpack.c.0.s8 %v4787
        %v4789 = vlaneseq
        %v4790 = vshrl.u32 %v4789, 7
        %v4791 = vsub.s32 %v4788, %v4790
        %v4792 = vrot.slane %v4784, %v4791
        %v4794 = vunpack.c.l.s4 1983009808
        %v4795 = vunpack.c.0.s8 %v4794
        %v4796 = vlaneseq
        %v4797 = vshrl.u32 %v4796, 7
        %v4798 = vsub.s32 %v4795, %v4797
        %v4799 = vrot.slane %v4785, %v4798
        %v4800 = vcombine.low %v4744, %v4760
        %v4801 = vcombine.high %v4744, %v4760
        %v4803 = vunpack.c.l.s4 1934713408
        %v4804 = vunpack.c.0.s8 %v4803
        %v4805 = vlaneseq
        %v4806 = vshrl.u32 %v4805, 7
        %v4807 = vsub.s32 %v4804, %v4806
        %v4808 = vrot.slane %v4800, %v4807
        %v4810 = vunpack.c.l.s4 1934713408
        %v4811 = vunpack.c.0.s8 %v4810
        %v4812 = vlaneseq
        %v4813 = vshrl.u32 %v4812, 7
        %v4814 = vsub.s32 %v4811, %v4813
        %v4815 = vrot.slane %v4801, %v4814
        %v4816 = vcombine.low %v4751, %v4767
        %v4818 = vunpack.c.l.s4 1934713408
        %v4819 = vunpack.c.0.s8 %v4818
        %v4820 = vlaneseq
        %v4821 = vshrl.u32 %v4820, 7
        %v4822 = vsub.s32 %v4819, %v4821
        %v4823 = vrot.slane %v4816, %v4822
        %v4824 = vcombine.low %v4776, %v4792
        %v4825 = vcombine.high %v4776, %v4792
        %v4827 = vunpack.c.l.s4 1934713408
        %v4828 = vunpack.c.0.s8 %v4827
        %v4829 = vlaneseq
        %v4830 = vshrl.u32 %v4829, 7
        %v4831 = vsub.s32 %v4828, %v4830
        %v4832 = vrot.slane %v4824, %v4831
        %v4834 = vunpack.c.l.s4 1934713408
        %v4835 = vunpack.c.0.s8 %v4834
        %v4836 = vlaneseq
        %v4837 = vshrl.u32 %v4836, 7
        %v4838 = vsub.s32 %v4835, %v4837
        %v4839 = vrot.slane %v4825, %v4838
        %v4840 = vcombine.low %v4783, %v4799
        %v4842 = vunpack.c.l.s4 1934713408
        %v4843 = vunpack.c.0.s8 %v4842
        %v4844 = vlaneseq
        %v4845 = vshrl.u32 %v4844, 7
        %v4846 = vsub.s32 %v4843, %v4845
        %v4847 = vrot.slane %v4840, %v4846
        %v4848 = vcombine.low %v4808, %v4832
        %v4849 = vcombine.high %v4808, %v4832
        %v4850 = vcombine.low %v4815, %v4839
        %v4851 = vcombine.high %v4815, %v4839
        %v4852 = vcombine.low %v4823, %v4847
        %v4853 = vcombine.high %v4823, %v4847
        %v4854 = vcombine.low %v4492, %v4494
        %v4855 = vcombine.high %v4492, %v4494
        %v4857 = vunpack.c.l.s4 1983009808
        %v4858 = vunpack.c.0.s8 %v4857
        %v4859 = vlaneseq
        %v4860 = vshrl.u32 %v4859, 7
        %v4861 = vsub.s32 %v4858, %v4860
        %v4862 = vrot.slane %v4854, %v4861
        %v4864 = vunpack.c.l.s4 1983009808
        %v4865 = vunpack.c.0.s8 %v4864
        %v4866 = vlaneseq
        %v4867 = vshrl.u32 %v4866, 7
        %v4868 = vsub.s32 %v4865, %v4867
        %v4869 = vrot.slane %v4855, %v4868
        %v4870 = vcombine.low %v4493, %v4495
        %v4871 = vcombine.high %v4493, %v4495
        %v4873 = vunpack.c.l.s4 1983009808
        %v4874 = vunpack.c.0.s8 %v4873
        %v4875 = vlaneseq
        %v4876 = vshrl.u32 %v4875, 7
        %v4877 = vsub.s32 %v4874, %v4876
        %v4878 = vrot.slane %v4870, %v4877
        %v4880 = vunpack.c.l.s4 1983009808
        %v4881 = vunpack.c.0.s8 %v4880
        %v4882 = vlaneseq
        %v4883 = vshrl.u32 %v4882, 7
        %v4884 = vsub.s32 %v4881, %v4883
        %v4885 = vrot.slane %v4871, %v4884
        %v4886 = vcombine.low %v4496, %v4498
        %v4887 = vcombine.high %v4496, %v4498
        %v4889 = vunpack.c.l.s4 1983009808
        %v4890 = vunpack.c.0.s8 %v4889
        %v4891 = vlaneseq
        %v4892 = vshrl.u32 %v4891, 7
        %v4893 = vsub.s32 %v4890, %v4892
        %v4894 = vrot.slane %v4886, %v4893
        %v4896 = vunpack.c.l.s4 1983009808
        %v4897 = vunpack.c.0.s8 %v4896
        %v4898 = vlaneseq
        %v4899 = vshrl.u32 %v4898, 7
        %v4900 = vsub.s32 %v4897, %v4899
        %v4901 = vrot.slane %v4887, %v4900
        %v4902 = vcombine.low %v4497, %v4499
        %v4903 = vcombine.high %v4497, %v4499
        %v4905 = vunpack.c.l.s4 1983009808
        %v4906 = vunpack.c.0.s8 %v4905
        %v4907 = vlaneseq
        %v4908 = vshrl.u32 %v4907, 7
        %v4909 = vsub.s32 %v4906, %v4908
        %v4910 = vrot.slane %v4902, %v4909
        %v4912 = vunpack.c.l.s4 1983009808
        %v4913 = vunpack.c.0.s8 %v4912
        %v4914 = vlaneseq
        %v4915 = vshrl.u32 %v4914, 7
        %v4916 = vsub.s32 %v4913, %v4915
        %v4917 = vrot.slane %v4903, %v4916
        %v4918 = vcombine.low %v4862, %v4878
        %v4919 = vcombine.high %v4862, %v4878
        %v4921 = vunpack.c.l.s4 1934713408
        %v4922 = vunpack.c.0.s8 %v4921
        %v4923 = vlaneseq
        %v4924 = vshrl.u32 %v4923, 7
        %v4925 = vsub.s32 %v4922, %v4924
        %v4926 = vrot.slane %v4918, %v4925
        %v4928 = vunpack.c.l.s4 1934713408
        %v4929 = vunpack.c.0.s8 %v4928
        %v4930 = vlaneseq
        %v4931 = vshrl.u32 %v4930, 7
        %v4932 = vsub.s32 %v4929, %v4931
        %v4933 = vrot.slane %v4919, %v4932
        %v4934 = vcombine.low %v4869, %v4885
        %v4936 = vunpack.c.l.s4 1934713408
        %v4937 = vunpack.c.0.s8 %v4936
        %v4938 = vlaneseq
        %v4939 = vshrl.u32 %v4938, 7
        %v4940 = vsub.s32 %v4937, %v4939
        %v4941 = vrot.slane %v4934, %v4940
        %v4942 = vcombine.low %v4894, %v4910
        %v4943 = vcombine.high %v4894, %v4910
        %v4945 = vunpack.c.l.s4 1934713408
        %v4946 = vunpack.c.0.s8 %v4945
        %v4947 = vlaneseq
        %v4948 = vshrl.u32 %v4947, 7
        %v4949 = vsub.s32 %v4946, %v4948
        %v4950 = vrot.slane %v4942, %v4949
        %v4952 = vunpack.c.l.s4 1934713408
        %v4953 = vunpack.c.0.s8 %v4952
        %v4954 = vlaneseq
        %v4955 = vshrl.u32 %v4954, 7
        %v4956 = vsub.s32 %v4953, %v4955
        %v4957 = vrot.slane %v4943, %v4956
        %v4958 = vcombine.low %v4901, %v4917
        %v4960 = vunpack.c.l.s4 1934713408
        %v4961 = vunpack.c.0.s8 %v4960
        %v4962 = vlaneseq
        %v4963 = vshrl.u32 %v4962, 7
        %v4964 = vsub.s32 %v4961, %v4963
        %v4965 = vrot.slane %v4958, %v4964
        %v4966 = vcombine.low %v4926, %v4950
        %v4967 = vcombine.high %v4926, %v4950
        %v4968 = vcombine.low %v4933, %v4957
        %v4969 = vcombine.high %v4933, %v4957
        %v4970 = vcombine.low %v4941, %v4965
        %v4971 = vcombine.high %v4941, %v4965
        %v4974 = vpack.i.b16 %v4730, %v4612
        %v4975 = vshrl.u32 %v4612, 16
        %v4976 = vshrl.u32 %v4730, 16
        %v4977 = vpack.i.b16 %v4976, %v4975
        %v4980 = vpack.i.b16 %v4731, %v4613
        %v4981 = vshrl.u32 %v4613, 16
        %v4982 = vshrl.u32 %v4731, 16
        %v4983 = vpack.i.b16 %v4982, %v4981
        %v4986 = vpack.i.b16 %v4732, %v4614
        %v4987 = vshrl.u32 %v4614, 16
        %v4988 = vshrl.u32 %v4732, 16
        %v4989 = vpack.i.b16 %v4988, %v4987
        %v4992 = vpack.i.b16 %v4733, %v4615
        %v4993 = vshrl.u32 %v4615, 16
        %v4994 = vshrl.u32 %v4733, 16
        %v4995 = vpack.i.b16 %v4994, %v4993
        %v4998 = vpack.i.b16 %v4734, %v4616
        %v5000 = vshrl.u32 %v4616, 16
        %v5001 = vshrl.u32 %v4734, 16
        %v5002 = vpack.i.b16 %v5001, %v5000
        %v5006 = vpack.i.b16 %v4735, %v4617
        %v5008 = vshrl.u32 %v4617, 16
        %v5009 = vshrl.u32 %v4735, 16
        %v5010 = vpack.i.b16 %v5009, %v5008
        %v5014 = vpack.i.b16 %v4966, %v4848
        %v5015 = vshrl.u32 %v4848, 16
        %v5016 = vshrl.u32 %v4966, 16
        %v5017 = vpack.i.b16 %v5016, %v5015
        %v5020 = vpack.i.b16 %v4967, %v4849
        %v5021 = vshrl.u32 %v4849, 16
        %v5022 = vshrl.u32 %v4967, 16
        %v5023 = vpack.i.b16 %v5022, %v5021
        %v5026 = vpack.i.b16 %v4968, %v4850
        %v5027 = vshrl.u32 %v4850, 16
        %v5028 = vshrl.u32 %v4968, 16
        %v5029 = vpack.i.b16 %v5028, %v5027
        %v5032 = vpack.i.b16 %v4969, %v4851
        %v5033 = vshrl.u32 %v4851, 16
        %v5034 = vshrl.u32 %v4969, 16
        %v5035 = vpack.i.b16 %v5034, %v5033
        %v5038 = vpack.i.b16 %v4970, %v4852
        %v5040 = vshrl.u32 %v4852, 16
        %v5041 = vshrl.u32 %v4970, 16
        %v5042 = vpack.i.b16 %v5041, %v5040
        %v5046 = vpack.i.b16 %v4971, %v4853
        %v5048 = vshrl.u32 %v4853, 16
        %v5049 = vshrl.u32 %v4971, 16
        %v5050 = vpack.i.b16 %v5049, %v5048
        %v5053 = vsel %vm2598, %v4974, 0
        %v5056 = vsel %vm2598, %v5014, 0
        %v5059 = vsel %vm2598, %v4986, 0
        %v5062 = vsel %vm2598, %v5026, 0
        %5064 = vmatprep.subr.bf16.mxu0 0
        %5065 = vmatpush1.bf16.xpose.msra.mxu0 %v5059
        %5066 = vmatprep.subr.bf16.mxu0 0
        %5067 = vmatpush1.bf16.xpose.msra.mxu0 %v5062
        %5068 = vmatprep.subr.bf16.mxu0 0
        %5069 = vmatpush1.bf16.xpose.msra.mxu0 0
        %5070 = vmatprep.subr.bf16.mxu0 0
        %5071 = vmatpush1.bf16.xpose.msra.mxu0 0
        %5072 = vmatprep.subr.bf16.mxu0 0
        %5073 = vmatpush1.bf16.xpose.msra.mxu0 0
        %5074 = vmatprep.subr.bf16.mxu0 0
        %5075 = vmatpush1.bf16.xpose.msra.mxu0 0
        %5076 = vmatprep.subr.bf16.mxu0 0
        %5077 = vmatpush1.bf16.xpose.msra.mxu0 0
        %5078 = vmatprep.subr.bf16.mxu0 0
        %5079 = vmatpush1.bf16.xpose.msra.mxu0 0
        %5080 = vmatprep.subr.bf16.mxu0 0
        %5081 = vmatpush1.bf16.xpose.msra.mxu0 0
        %5082 = vmatprep.subr.bf16.mxu0 0
        %5083 = vmatpush1.bf16.xpose.msra.mxu0 0
        %5084 = vmatprep.subr.bf16.mxu0 0
        %5085 = vmatpush1.bf16.xpose.msra.mxu0 0
        %5086 = vmatprep.subr.bf16.mxu0 0
        %5087 = vmatpush1.bf16.xpose.msra.mxu0 0
        %5088 = vmatprep.subr.bf16.mxu0 0
        %5089 = vmatpush1.bf16.xpose.msra.mxu0 0
        %5090 = vmatprep.subr.bf16.mxu0 0
        %5091 = vmatpush1.bf16.xpose.msra.mxu0 0
        %5092 = vmatprep.subr.bf16.mxu0 0
        %5093 = vmatpush1.bf16.xpose.msra.mxu0 0
        %5094 = vmatprep.subr.bf16.mxu0 0
        %5095 = vmatpush1.bf16.xpose.msra.mxu0 0
        %5096 = vmatprep.mubr.bf16.mxu0 0
        %5097 = vmatmul.mubr.bf16.gmra.mrb[0].mxu0 %v5053
        %v5098 = vpop.f32.mrb[0].mxu0
        %v5099 = vadd.f32 0.0, %v5098
        %v5100 = vpop.f32.mrb[0].mxu0
        %v5101 = vpop.f32.mrb[0].mxu0
        %v5102 = vadd.f32 0.0, %v5101
        %v5103 = vpop.f32.mrb[0].mxu0
        %5104 = vmatprep.mubr.bf16.mxu0 0
        %5105 = vmatmul.mubr.bf16.gmra.mrb[0].mxu0 %v5056
        %v5106 = vpop.f32.mrb[0].mxu0
        %v5107 = vadd.f32 0.0, %v5106
        %v5108 = vpop.f32.mrb[0].mxu0
        %v5109 = vpop.f32.mrb[0].mxu0
        %v5110 = vadd.f32 0.0, %v5109
        %v5111 = vpop.f32.mrb[0].mxu0
        %5112 = vdwg.mxu0
        %v5114 = vsel %vm2598, %v4977, 0
        %v5117 = vsel %vm2598, %v5017, 0
        %v5120 = vsel %vm2598, %v4989, 0
        %v5123 = vsel %vm2598, %v5029, 0
        %5125 = vmatprep.subr.bf16.mxu0 0
        %5126 = vmatpush1.bf16.xpose.msra.mxu0 %v5120
        %5127 = vmatprep.subr.bf16.mxu0 0
        %5128 = vmatpush1.bf16.xpose.msra.mxu0 %v5123
        %5129 = vmatprep.subr.bf16.mxu0 0
        %5130 = vmatpush1.bf16.xpose.msra.mxu0 0
        %5131 = vmatprep.subr.bf16.mxu0 0
        %5132 = vmatpush1.bf16.xpose.msra.mxu0 0
        %5133 = vmatprep.subr.bf16.mxu0 0
        %5134 = vmatpush1.bf16.xpose.msra.mxu0 0
        %5135 = vmatprep.subr.bf16.mxu0 0
        %5136 = vmatpush1.bf16.xpose.msra.mxu0 0
        %5137 = vmatprep.subr.bf16.mxu0 0
        %5138 = vmatpush1.bf16.xpose.msra.mxu0 0
        %5139 = vmatprep.subr.bf16.mxu0 0
        %5140 = vmatpush1.bf16.xpose.msra.mxu0 0
        %5141 = vmatprep.subr.bf16.mxu0 0
        %5142 = vmatpush1.bf16.xpose.msra.mxu0 0
        %5143 = vmatprep.subr.bf16.mxu0 0
        %5144 = vmatpush1.bf16.xpose.msra.mxu0 0
        %5145 = vmatprep.subr.bf16.mxu0 0
        %5146 = vmatpush1.bf16.xpose.msra.mxu0 0
        %5147 = vmatprep.subr.bf16.mxu0 0
        %5148 = vmatpush1.bf16.xpose.msra.mxu0 0
        %5149 = vmatprep.subr.bf16.mxu0 0
        %5150 = vmatpush1.bf16.xpose.msra.mxu0 0
        %5151 = vmatprep.subr.bf16.mxu0 0
        %5152 = vmatpush1.bf16.xpose.msra.mxu0 0
        %5153 = vmatprep.subr.bf16.mxu0 0
        %5154 = vmatpush1.bf16.xpose.msra.mxu0 0
        %5155 = vmatprep.subr.bf16.mxu0 0
        %5156 = vmatpush1.bf16.xpose.msra.mxu0 0
        %5157 = vmatprep.mubr.bf16.mxu0 0
        %5158 = vmatmul.mubr.bf16.gmra.mrb[0].mxu0 %v5114
        %v5159 = vpop.f32.mrb[0].mxu0
        %v5160 = vadd.f32 0.0, %v5159
        %v5161 = vpop.f32.mrb[0].mxu0
        %v5162 = vpop.f32.mrb[0].mxu0
        %v5163 = vadd.f32 0.0, %v5162
        %v5164 = vpop.f32.mrb[0].mxu0
        %5165 = vmatprep.mubr.bf16.mxu0 0
        %5166 = vmatmul.mubr.bf16.gmra.mrb[0].mxu0 %v5117
        %v5167 = vpop.f32.mrb[0].mxu0
        %v5168 = vadd.f32 0.0, %v5167
        %v5169 = vpop.f32.mrb[0].mxu0
        %v5170 = vpop.f32.mrb[0].mxu0
        %v5171 = vadd.f32 0.0, %v5170
        %v5172 = vpop.f32.mrb[0].mxu0
        %5173 = vdwg.mxu0
        %v5175 = vsel %vm2598, %v4980, 0
        %v5178 = vsel %vm2598, %v5020, 0
        %v5181 = vsel %vm2598, %v4992, 0
        %v5184 = vsel %vm2598, %v5032, 0
        %5186 = vmatprep.subr.bf16.mxu0 0
        %5187 = vmatpush1.bf16.xpose.msra.mxu0 %v5181
        %5188 = vmatprep.subr.bf16.mxu0 0
        %5189 = vmatpush1.bf16.xpose.msra.mxu0 %v5184
        %5190 = vmatprep.subr.bf16.mxu0 0
        %5191 = vmatpush1.bf16.xpose.msra.mxu0 0
        %5192 = vmatprep.subr.bf16.mxu0 0
        %5193 = vmatpush1.bf16.xpose.msra.mxu0 0
        %5194 = vmatprep.subr.bf16.mxu0 0
        %5195 = vmatpush1.bf16.xpose.msra.mxu0 0
        %5196 = vmatprep.subr.bf16.mxu0 0
        %5197 = vmatpush1.bf16.xpose.msra.mxu0 0
        %5198 = vmatprep.subr.bf16.mxu0 0
        %5199 = vmatpush1.bf16.xpose.msra.mxu0 0
        %5200 = vmatprep.subr.bf16.mxu0 0
        %5201 = vmatpush1.bf16.xpose.msra.mxu0 0
        %5202 = vmatprep.subr.bf16.mxu0 0
        %5203 = vmatpush1.bf16.xpose.msra.mxu0 0
        %5204 = vmatprep.subr.bf16.mxu0 0
        %5205 = vmatpush1.bf16.xpose.msra.mxu0 0
        %5206 = vmatprep.subr.bf16.mxu0 0
        %5207 = vmatpush1.bf16.xpose.msra.mxu0 0
        %5208 = vmatprep.subr.bf16.mxu0 0
        %5209 = vmatpush1.bf16.xpose.msra.mxu0 0
        %5210 = vmatprep.subr.bf16.mxu0 0
        %5211 = vmatpush1.bf16.xpose.msra.mxu0 0
        %5212 = vmatprep.subr.bf16.mxu0 0
        %5213 = vmatpush1.bf16.xpose.msra.mxu0 0
        %5214 = vmatprep.subr.bf16.mxu0 0
        %5215 = vmatpush1.bf16.xpose.msra.mxu0 0
        %5216 = vmatprep.subr.bf16.mxu0 0
        %5217 = vmatpush1.bf16.xpose.msra.mxu0 0
        %5218 = vmatprep.mubr.bf16.mxu0 0
        %5219 = vmatmul.mubr.bf16.gmra.mrb[0].mxu0 %v5175
        %v5220 = vpop.f32.mrb[0].mxu0
        %v5221 = vadd.f32 0.0, %v5220
        %v5222 = vpop.f32.mrb[0].mxu0
        %v5223 = vpop.f32.mrb[0].mxu0
        %v5224 = vadd.f32 0.0, %v5223
        %v5225 = vpop.f32.mrb[0].mxu0
        %5226 = vmatprep.mubr.bf16.mxu0 0
        %5227 = vmatmul.mubr.bf16.gmra.mrb[0].mxu0 %v5178
        %v5228 = vpop.f32.mrb[0].mxu0
        %v5229 = vadd.f32 0.0, %v5228
        %v5230 = vpop.f32.mrb[0].mxu0
        %v5231 = vpop.f32.mrb[0].mxu0
        %v5232 = vadd.f32 0.0, %v5231
        %v5233 = vpop.f32.mrb[0].mxu0
        %5234 = vdwg.mxu0
        %v5236 = vsel %vm2598, %v4983, 0
        %v5239 = vsel %vm2598, %v5023, 0
        %v5242 = vsel %vm2598, %v4995, 0
        %v5245 = vsel %vm2598, %v5035, 0
        %5247 = vmatprep.subr.bf16.mxu0 0
        %5248 = vmatpush1.bf16.xpose.msra.mxu0 %v5242
        %5249 = vmatprep.subr.bf16.mxu0 0
        %5250 = vmatpush1.bf16.xpose.msra.mxu0 %v5245
        %5251 = vmatprep.subr.bf16.mxu0 0
        %5252 = vmatpush1.bf16.xpose.msra.mxu0 0
        %5253 = vmatprep.subr.bf16.mxu0 0
        %5254 = vmatpush1.bf16.xpose.msra.mxu0 0
        %5255 = vmatprep.subr.bf16.mxu0 0
        %5256 = vmatpush1.bf16.xpose.msra.mxu0 0
        %5257 = vmatprep.subr.bf16.mxu0 0
        %5258 = vmatpush1.bf16.xpose.msra.mxu0 0
        %5259 = vmatprep.subr.bf16.mxu0 0
        %5260 = vmatpush1.bf16.xpose.msra.mxu0 0
        %5261 = vmatprep.subr.bf16.mxu0 0
        %5262 = vmatpush1.bf16.xpose.msra.mxu0 0
        %5263 = vmatprep.subr.bf16.mxu0 0
        %5264 = vmatpush1.bf16.xpose.msra.mxu0 0
        %5265 = vmatprep.subr.bf16.mxu0 0
        %5266 = vmatpush1.bf16.xpose.msra.mxu0 0
        %5267 = vmatprep.subr.bf16.mxu0 0
        %5268 = vmatpush1.bf16.xpose.msra.mxu0 0
        %5269 = vmatprep.subr.bf16.mxu0 0
        %5270 = vmatpush1.bf16.xpose.msra.mxu0 0
        %5271 = vmatprep.subr.bf16.mxu0 0
        %5272 = vmatpush1.bf16.xpose.msra.mxu0 0
        %5273 = vmatprep.subr.bf16.mxu0 0
        %5274 = vmatpush1.bf16.xpose.msra.mxu0 0
        %5275 = vmatprep.subr.bf16.mxu0 0
        %5276 = vmatpush1.bf16.xpose.msra.mxu0 0
        %5277 = vmatprep.subr.bf16.mxu0 0
        %5278 = vmatpush1.bf16.xpose.msra.mxu0 0
        %5279 = vmatprep.mubr.bf16.mxu0 0
        %5280 = vmatmul.mubr.bf16.gmra.mrb[0].mxu0 %v5236
        %v5281 = vpop.f32.mrb[0].mxu0
        %v5282 = vadd.f32 0.0, %v5281
        %v5283 = vpop.f32.mrb[0].mxu0
        %v5284 = vpop.f32.mrb[0].mxu0
        %v5285 = vadd.f32 0.0, %v5284
        %v5286 = vpop.f32.mrb[0].mxu0
        %5287 = vmatprep.mubr.bf16.mxu0 0
        %5288 = vmatmul.mubr.bf16.gmra.mrb[0].mxu0 %v5239
        %v5289 = vpop.f32.mrb[0].mxu0
        %v5290 = vadd.f32 0.0, %v5289
        %v5291 = vpop.f32.mrb[0].mxu0
        %v5292 = vpop.f32.mrb[0].mxu0
        %v5293 = vadd.f32 0.0, %v5292
        %v5294 = vpop.f32.mrb[0].mxu0
        %5295 = vdwg.mxu0
        %v5296 = vsel %vm2847, %v5099, -1e+30
        %v5297 = vsel %vm2847, %v5102, -1e+30
        %v5298 = vsel %vm2847, %v5107, -1e+30
        %v5299 = vsel %vm2847, %v5110, -1e+30
        %v5300 = vsel %vm2847, %v5160, -1e+30
        %v5301 = vsel %vm2847, %v5163, -1e+30
        %v5302 = vsel %vm2847, %v5168, -1e+30
        %v5303 = vsel %vm2847, %v5171, -1e+30
        %v5304 = vsel %vm2847, %v5221, -1e+30
        %v5305 = vsel %vm2847, %v5224, -1e+30
        %v5306 = vsel %vm2847, %v5229, -1e+30
        %v5307 = vsel %vm2847, %v5232, -1e+30
        %v5308 = vsel %vm2847, %v5282, -1e+30
        %v5309 = vsel %vm2847, %v5285, -1e+30
        %v5310 = vsel %vm2847, %v5290, -1e+30
        %v5311 = vsel %vm2847, %v5293, -1e+30
        %v5312 = vsel %vm2598, %v5296, -inf
        %5313 = vmax.xlane.f32.xlu0 %v5312
        %v5314 = vpop.xlane.xlu0 %5313
        %v5315 = vsel %vm2598, %v5297, -inf
        %5316 = vmax.xlane.f32.xlu0 %v5315
        %v5317 = vpop.xlane.xlu0 %5316
        %v5318 = vsel %vm2598, %v5298, -inf
        %5319 = vmax.xlane.f32.xlu0 %v5318
        %v5320 = vpop.xlane.xlu0 %5319
        %v5321 = vsel %vm2598, %v5299, -inf
        %5322 = vmax.xlane.f32.xlu0 %v5321
        %v5323 = vpop.xlane.xlu0 %5322
        %v5324 = vsel %vm2598, %v5300, -inf
        %5325 = vmax.xlane.f32.xlu0 %v5324
        %v5326 = vpop.xlane.xlu0 %5325
        %v5327 = vsel %vm2598, %v5301, -inf
        %5328 = vmax.xlane.f32.xlu0 %v5327
        %v5329 = vpop.xlane.xlu0 %5328
        %v5330 = vsel %vm2598, %v5302, -inf
        %5331 = vmax.xlane.f32.xlu0 %v5330
        %v5332 = vpop.xlane.xlu0 %5331
        %v5333 = vsel %vm2598, %v5303, -inf
        %5334 = vmax.xlane.f32.xlu0 %v5333
        %v5335 = vpop.xlane.xlu0 %5334
        %v5336 = vsel %vm2598, %v5304, -inf
        %5337 = vmax.xlane.f32.xlu0 %v5336
        %v5338 = vpop.xlane.xlu0 %5337
        %v5339 = vsel %vm2598, %v5305, -inf
        %5340 = vmax.xlane.f32.xlu0 %v5339
        %v5341 = vpop.xlane.xlu0 %5340
        %v5342 = vsel %vm2598, %v5306, -inf
        %5343 = vmax.xlane.f32.xlu0 %v5342
        %v5344 = vpop.xlane.xlu0 %5343
        %v5345 = vsel %vm2598, %v5307, -inf
        %5346 = vmax.xlane.f32.xlu0 %v5345
        %v5347 = vpop.xlane.xlu0 %5346
        %v5348 = vsel %vm2598, %v5308, -inf
        %5349 = vmax.xlane.f32.xlu0 %v5348
        %v5350 = vpop.xlane.xlu0 %5349
        %v5351 = vsel %vm2598, %v5309, -inf
        %5352 = vmax.xlane.f32.xlu0 %v5351
        %v5353 = vpop.xlane.xlu0 %5352
        %v5354 = vsel %vm2598, %v5310, -inf
        %5355 = vmax.xlane.f32.xlu0 %v5354
        %v5356 = vpop.xlane.xlu0 %5355
        %v5357 = vsel %vm2598, %v5311, -inf
        %5358 = vmax.xlane.f32.xlu0 %v5357
        %v5359 = vpop.xlane.xlu0 %5358
        %v5360 = vsub.f32 %v5296, %v5314
        %v5361 = vsub.f32 %v5297, %v5317
        %v5362 = vsub.f32 %v5298, %v5320
        %v5363 = vsub.f32 %v5299, %v5323
        %v5364 = vsub.f32 %v5300, %v5326
        %v5365 = vsub.f32 %v5301, %v5329
        %v5366 = vsub.f32 %v5302, %v5332
        %v5367 = vsub.f32 %v5303, %v5335
        %v5368 = vsub.f32 %v5304, %v5338
        %v5369 = vsub.f32 %v5305, %v5341
        %v5370 = vsub.f32 %v5306, %v5344
        %v5371 = vsub.f32 %v5307, %v5347
        %v5372 = vsub.f32 %v5308, %v5350
        %v5373 = vsub.f32 %v5309, %v5353
        %v5374 = vsub.f32 %v5310, %v5356
        %v5375 = vsub.f32 %v5311, %v5359
        %v5376 = vmul.f32 %v5360, 1.442695
        %v5377 = vpow.pop %v5376
        %v5378 = vmul.f32 %v5361, 1.442695
        %v5379 = vpow.pop %v5378
        %v5380 = vmul.f32 %v5362, 1.442695
        %v5381 = vpow.pop %v5380
        %v5382 = vmul.f32 %v5363, 1.442695
        %v5383 = vpow.pop %v5382
        %v5384 = vmul.f32 %v5364, 1.442695
        %v5385 = vpow.pop %v5384
        %v5386 = vmul.f32 %v5365, 1.442695
        %v5387 = vpow.pop %v5386
        %v5388 = vmul.f32 %v5366, 1.442695
        %v5389 = vpow.pop %v5388
        %v5390 = vmul.f32 %v5367, 1.442695
        %v5391 = vpow.pop %v5390
        %v5392 = vmul.f32 %v5368, 1.442695
        %v5393 = vpow.pop %v5392
        %v5394 = vmul.f32 %v5369, 1.442695
        %v5395 = vpow.pop %v5394
        %v5396 = vmul.f32 %v5370, 1.442695
        %v5397 = vpow.pop %v5396
        %v5398 = vmul.f32 %v5371, 1.442695
        %v5399 = vpow.pop %v5398
        %v5400 = vmul.f32 %v5372, 1.442695
        %v5401 = vpow.pop %v5400
        %v5402 = vmul.f32 %v5373, 1.442695
        %v5403 = vpow.pop %v5402
        %v5404 = vmul.f32 %v5374, 1.442695
        %v5405 = vpow.pop %v5404
        %v5406 = vmul.f32 %v5375, 1.442695
        %v5407 = vpow.pop %v5406
        %v5408 = vsel %vm2598, %v5377, 0.0
        %5409 = vadd.xlane.f32.xlu0 %v5408
        %v5410 = vpop.xlane.xlu0 %5409
        %v5411 = vsel %vm2598, %v5379, 0.0
        %5412 = vadd.xlane.f32.xlu0 %v5411
        %v5413 = vpop.xlane.xlu0 %5412
        %v5414 = vsel %vm2598, %v5381, 0.0
        %5415 = vadd.xlane.f32.xlu0 %v5414
        %v5416 = vpop.xlane.xlu0 %5415
        %v5417 = vsel %vm2598, %v5383, 0.0
        %5418 = vadd.xlane.f32.xlu0 %v5417
        %v5419 = vpop.xlane.xlu0 %5418
        %v5420 = vsel %vm2598, %v5385, 0.0
        %5421 = vadd.xlane.f32.xlu0 %v5420
        %v5422 = vpop.xlane.xlu0 %5421
        %v5423 = vsel %vm2598, %v5387, 0.0
        %5424 = vadd.xlane.f32.xlu0 %v5423
        %v5425 = vpop.xlane.xlu0 %5424
        %v5426 = vsel %vm2598, %v5389, 0.0
        %5427 = vadd.xlane.f32.xlu0 %v5426
        %v5428 = vpop.xlane.xlu0 %5427
        %v5429 = vsel %vm2598, %v5391, 0.0
        %5430 = vadd.xlane.f32.xlu0 %v5429
        %v5431 = vpop.xlane.xlu0 %5430
        %v5432 = vsel %vm2598, %v5393, 0.0
        %5433 = vadd.xlane.f32.xlu0 %v5432
        %v5434 = vpop.xlane.xlu0 %5433
        %v5435 = vsel %vm2598, %v5395, 0.0
        %5436 = vadd.xlane.f32.xlu0 %v5435
        %v5437 = vpop.xlane.xlu0 %5436
        %v5438 = vsel %vm2598, %v5397, 0.0
        %5439 = vadd.xlane.f32.xlu0 %v5438
        %v5440 = vpop.xlane.xlu0 %5439
        %v5441 = vsel %vm2598, %v5399, 0.0
        %5442 = vadd.xlane.f32.xlu0 %v5441
        %v5443 = vpop.xlane.xlu0 %5442
        %v5444 = vsel %vm2598, %v5401, 0.0
        %5445 = vadd.xlane.f32.xlu0 %v5444
        %v5446 = vpop.xlane.xlu0 %5445
        %v5447 = vsel %vm2598, %v5403, 0.0
        %5448 = vadd.xlane.f32.xlu0 %v5447
        %v5449 = vpop.xlane.xlu0 %5448
        %v5450 = vsel %vm2598, %v5405, 0.0
        %5451 = vadd.xlane.f32.xlu0 %v5450
        %v5452 = vpop.xlane.xlu0 %5451
        %v5453 = vsel %vm2598, %v5407, 0.0
        %5454 = vadd.xlane.f32.xlu0 %v5453
        %v5455 = vpop.xlane.xlu0 %5454
        %v5456 = vrcp.pop %v5410
        %v5457 = vrcp.pop %v5413
        %v5458 = vrcp.pop %v5416
        %v5459 = vrcp.pop %v5419
        %v5460 = vrcp.pop %v5422
        %v5461 = vrcp.pop %v5425
        %v5462 = vrcp.pop %v5428
        %v5463 = vrcp.pop %v5431
        %v5464 = vrcp.pop %v5434
        %v5465 = vrcp.pop %v5437
        %v5466 = vrcp.pop %v5440
        %v5467 = vrcp.pop %v5443
        %v5468 = vrcp.pop %v5446
        %v5469 = vrcp.pop %v5449
        %v5470 = vrcp.pop %v5452
        %v5471 = vrcp.pop %v5455
        %v5472 = vmul.f32 %v5377, %v5456
        %v5473 = vmul.f32 %v5379, %v5457
        %v5474 = vmul.f32 %v5381, %v5458
        %v5475 = vmul.f32 %v5383, %v5459
        %v5476 = vmul.f32 %v5385, %v5460
        %v5477 = vmul.f32 %v5387, %v5461
        %v5478 = vmul.f32 %v5389, %v5462
        %v5479 = vmul.f32 %v5391, %v5463
        %v5480 = vmul.f32 %v5393, %v5464
        %v5481 = vmul.f32 %v5395, %v5465
        %v5482 = vmul.f32 %v5397, %v5466
        %v5483 = vmul.f32 %v5399, %v5467
        %v5484 = vmul.f32 %v5401, %v5468
        %v5485 = vmul.f32 %v5403, %v5469
        %v5486 = vmul.f32 %v5405, %v5470
        %v5487 = vmul.f32 %v5407, %v5471
        %v5488 = vpack.c.bf16 %v5473, %v5472
        %v5489 = vpack.c.bf16 %v5475, %v5474
        %v5490 = vpack.c.bf16 %v5477, %v5476
        %v5491 = vpack.c.bf16 %v5479, %v5478
        %v5492 = vpack.c.bf16 %v5481, %v5480
        %v5493 = vpack.c.bf16 %v5483, %v5482
        %v5494 = vpack.c.bf16 %v5485, %v5484
        %v5495 = vpack.c.bf16 %v5487, %v5486
        %v5497 = vsel %vm2598, %v5488, 0
        %v5500 = vsel %vm2598, %v5489, 0
        %5502 = vmatprep.subr.bf16.mxu0 0
        %5503 = vmatpush1.bf16.msra.mxu0 %v4998
        %5504 = vmatprep.subr.bf16.mxu0 0
        %5505 = vmatpush1.bf16.msra.mxu0 %v5038
        %5506 = vmatprep.subr.bf16.mxu0 0
        %5507 = vmatpush1.bf16.msra.mxu0 0
        %5508 = vmatprep.subr.bf16.mxu0 0
        %5509 = vmatpush1.bf16.msra.mxu0 0
        %5510 = vmatprep.subr.bf16.mxu0 0
        %5511 = vmatpush1.bf16.msra.mxu0 0
        %5512 = vmatprep.subr.bf16.mxu0 0
        %5513 = vmatpush1.bf16.msra.mxu0 0
        %5514 = vmatprep.subr.bf16.mxu0 0
        %5515 = vmatpush1.bf16.msra.mxu0 0
        %5516 = vmatprep.subr.bf16.mxu0 0
        %5517 = vmatpush1.bf16.msra.mxu0 0
        %5518 = vmatprep.subr.bf16.mxu0 0
        %5519 = vmatpush1.bf16.msra.mxu0 0
        %5520 = vmatprep.subr.bf16.mxu0 0
        %5521 = vmatpush1.bf16.msra.mxu0 0
        %5522 = vmatprep.subr.bf16.mxu0 0
        %5523 = vmatpush1.bf16.msra.mxu0 0
        %5524 = vmatprep.subr.bf16.mxu0 0
        %5525 = vmatpush1.bf16.msra.mxu0 0
        %5526 = vmatprep.subr.bf16.mxu0 0
        %5527 = vmatpush1.bf16.msra.mxu0 0
        %5528 = vmatprep.subr.bf16.mxu0 0
        %5529 = vmatpush1.bf16.msra.mxu0 0
        %5530 = vmatprep.subr.bf16.mxu0 0
        %5531 = vmatpush1.bf16.msra.mxu0 0
        %5532 = vmatprep.subr.bf16.mxu0 0
        %5533 = vmatpush1.bf16.msra.mxu0 0
        %5534 = vmatprep.mubr.bf16.mxu0 0
        %5535 = vmatmul.mubr.bf16.gmra.mrb[0].mxu0 %v5497
        %v5536 = vpop.f32.mrb[0].mxu0
        %v5537 = vadd.f32 0.0, %v5536
        %v5538 = vpop.f32.mrb[0].mxu0
        %v5539 = vpop.f32.mrb[0].mxu0
        %v5540 = vadd.f32 0.0, %v5539
        %v5541 = vpop.f32.mrb[0].mxu0
        %5542 = vmatprep.mubr.bf16.mxu0 0
        %5543 = vmatmul.mubr.bf16.gmra.mrb[0].mxu0 %v5500
        %v5544 = vpop.f32.mrb[0].mxu0
        %v5545 = vadd.f32 0.0, %v5544
        %v5546 = vpop.f32.mrb[0].mxu0
        %v5547 = vpop.f32.mrb[0].mxu0
        %v5548 = vadd.f32 0.0, %v5547
        %v5549 = vpop.f32.mrb[0].mxu0
        %5550 = vdwg.mxu0
        %v5552 = vsel %vm2598, %v5490, 0
        %v5555 = vsel %vm2598, %v5491, 0
        %5557 = vmatprep.subr.bf16.mxu0 0
        %5558 = vmatpush1.bf16.msra.mxu0 %v5002
        %5559 = vmatprep.subr.bf16.mxu0 0
        %5560 = vmatpush1.bf16.msra.mxu0 %v5042
        %5561 = vmatprep.subr.bf16.mxu0 0
        %5562 = vmatpush1.bf16.msra.mxu0 0
        %5563 = vmatprep.subr.bf16.mxu0 0
        %5564 = vmatpush1.bf16.msra.mxu0 0
        %5565 = vmatprep.subr.bf16.mxu0 0
        %5566 = vmatpush1.bf16.msra.mxu0 0
        %5567 = vmatprep.subr.bf16.mxu0 0
        %5568 = vmatpush1.bf16.msra.mxu0 0
        %5569 = vmatprep.subr.bf16.mxu0 0
        %5570 = vmatpush1.bf16.msra.mxu0 0
        %5571 = vmatprep.subr.bf16.mxu0 0
        %5572 = vmatpush1.bf16.msra.mxu0 0
        %5573 = vmatprep.subr.bf16.mxu0 0
        %5574 = vmatpush1.bf16.msra.mxu0 0
        %5575 = vmatprep.subr.bf16.mxu0 0
        %5576 = vmatpush1.bf16.msra.mxu0 0
        %5577 = vmatprep.subr.bf16.mxu0 0
        %5578 = vmatpush1.bf16.msra.mxu0 0
        %5579 = vmatprep.subr.bf16.mxu0 0
        %5580 = vmatpush1.bf16.msra.mxu0 0
        %5581 = vmatprep.subr.bf16.mxu0 0
        %5582 = vmatpush1.bf16.msra.mxu0 0
        %5583 = vmatprep.subr.bf16.mxu0 0
        %5584 = vmatpush1.bf16.msra.mxu0 0
        %5585 = vmatprep.subr.bf16.mxu0 0
        %5586 = vmatpush1.bf16.msra.mxu0 0
        %5587 = vmatprep.subr.bf16.mxu0 0
        %5588 = vmatpush1.bf16.msra.mxu0 0
        %5589 = vmatprep.mubr.bf16.mxu0 0
        %5590 = vmatmul.mubr.bf16.gmra.mrb[0].mxu0 %v5552
        %v5591 = vpop.f32.mrb[0].mxu0
        %v5592 = vadd.f32 0.0, %v5591
        %v5593 = vpop.f32.mrb[0].mxu0
        %v5594 = vpop.f32.mrb[0].mxu0
        %v5595 = vadd.f32 0.0, %v5594
        %v5596 = vpop.f32.mrb[0].mxu0
        %5597 = vmatprep.mubr.bf16.mxu0 0
        %5598 = vmatmul.mubr.bf16.gmra.mrb[0].mxu0 %v5555
        %v5599 = vpop.f32.mrb[0].mxu0
        %v5600 = vadd.f32 0.0, %v5599
        %v5601 = vpop.f32.mrb[0].mxu0
        %v5602 = vpop.f32.mrb[0].mxu0
        %v5603 = vadd.f32 0.0, %v5602
        %v5604 = vpop.f32.mrb[0].mxu0
        %5605 = vdwg.mxu0
        %v5607 = vsel %vm2598, %v5492, 0
        %v5610 = vsel %vm2598, %v5493, 0
        %5612 = vmatprep.subr.bf16.mxu0 0
        %5613 = vmatpush1.bf16.msra.mxu0 %v5006
        %5614 = vmatprep.subr.bf16.mxu0 0
        %5615 = vmatpush1.bf16.msra.mxu0 %v5046
        %5616 = vmatprep.subr.bf16.mxu0 0
        %5617 = vmatpush1.bf16.msra.mxu0 0
        %5618 = vmatprep.subr.bf16.mxu0 0
        %5619 = vmatpush1.bf16.msra.mxu0 0
        %5620 = vmatprep.subr.bf16.mxu0 0
        %5621 = vmatpush1.bf16.msra.mxu0 0
        %5622 = vmatprep.subr.bf16.mxu0 0
        %5623 = vmatpush1.bf16.msra.mxu0 0
        %5624 = vmatprep.subr.bf16.mxu0 0
        %5625 = vmatpush1.bf16.msra.mxu0 0
        %5626 = vmatprep.subr.bf16.mxu0 0
        %5627 = vmatpush1.bf16.msra.mxu0 0
        %5628 = vmatprep.subr.bf16.mxu0 0
        %5629 = vmatpush1.bf16.msra.mxu0 0
        %5630 = vmatprep.subr.bf16.mxu0 0
        %5631 = vmatpush1.bf16.msra.mxu0 0
        %5632 = vmatprep.subr.bf16.mxu0 0
        %5633 = vmatpush1.bf16.msra.mxu0 0
        %5634 = vmatprep.subr.bf16.mxu0 0
        %5635 = vmatpush1.bf16.msra.mxu0 0
        %5636 = vmatprep.subr.bf16.mxu0 0
        %5637 = vmatpush1.bf16.msra.mxu0 0
        %5638 = vmatprep.subr.bf16.mxu0 0
        %5639 = vmatpush1.bf16.msra.mxu0 0
        %5640 = vmatprep.subr.bf16.mxu0 0
        %5641 = vmatpush1.bf16.msra.mxu0 0
        %5642 = vmatprep.subr.bf16.mxu0 0
        %5643 = vmatpush1.bf16.msra.mxu0 0
        %5644 = vmatprep.mubr.bf16.mxu0 0
        %5645 = vmatmul.mubr.bf16.gmra.mrb[0].mxu0 %v5607
        %v5646 = vpop.f32.mrb[0].mxu0
        %v5647 = vadd.f32 0.0, %v5646
        %v5648 = vpop.f32.mrb[0].mxu0
        %v5649 = vpop.f32.mrb[0].mxu0
        %v5650 = vadd.f32 0.0, %v5649
        %v5651 = vpop.f32.mrb[0].mxu0
        %5652 = vmatprep.mubr.bf16.mxu0 0
        %5653 = vmatmul.mubr.bf16.gmra.mrb[0].mxu0 %v5610
        %v5654 = vpop.f32.mrb[0].mxu0
        %v5655 = vadd.f32 0.0, %v5654
        %v5656 = vpop.f32.mrb[0].mxu0
        %v5657 = vpop.f32.mrb[0].mxu0
        %v5658 = vadd.f32 0.0, %v5657
        %v5659 = vpop.f32.mrb[0].mxu0
        %5660 = vdwg.mxu0
        %v5662 = vsel %vm2598, %v5494, 0
        %v5665 = vsel %vm2598, %v5495, 0
        %5667 = vmatprep.subr.bf16.mxu0 0
        %5668 = vmatpush1.bf16.msra.mxu0 %v5010
        %5669 = vmatprep.subr.bf16.mxu0 0
        %5670 = vmatpush1.bf16.msra.mxu0 %v5050
        %5671 = vmatprep.subr.bf16.mxu0 0
        %5672 = vmatpush1.bf16.msra.mxu0 0
        %5673 = vmatprep.subr.bf16.mxu0 0
        %5674 = vmatpush1.bf16.msra.mxu0 0
        %5675 = vmatprep.subr.bf16.mxu0 0
        %5676 = vmatpush1.bf16.msra.mxu0 0
        %5677 = vmatprep.subr.bf16.mxu0 0
        %5678 = vmatpush1.bf16.msra.mxu0 0
        %5679 = vmatprep.subr.bf16.mxu0 0
        %5680 = vmatpush1.bf16.msra.mxu0 0
        %5681 = vmatprep.subr.bf16.mxu0 0
        %5682 = vmatpush1.bf16.msra.mxu0 0
        %5683 = vmatprep.subr.bf16.mxu0 0
        %5684 = vmatpush1.bf16.msra.mxu0 0
        %5685 = vmatprep.subr.bf16.mxu0 0
        %5686 = vmatpush1.bf16.msra.mxu0 0
        %5687 = vmatprep.subr.bf16.mxu0 0
        %5688 = vmatpush1.bf16.msra.mxu0 0
        %5689 = vmatprep.subr.bf16.mxu0 0
        %5690 = vmatpush1.bf16.msra.mxu0 0
        %5691 = vmatprep.subr.bf16.mxu0 0
        %5692 = vmatpush1.bf16.msra.mxu0 0
        %5693 = vmatprep.subr.bf16.mxu0 0
        %5694 = vmatpush1.bf16.msra.mxu0 0
        %5695 = vmatprep.subr.bf16.mxu0 0
        %5696 = vmatpush1.bf16.msra.mxu0 0
        %5697 = vmatprep.subr.bf16.mxu0 0
        %5698 = vmatpush1.bf16.msra.mxu0 0
        %5699 = vmatprep.mubr.bf16.mxu0 0
        %5700 = vmatmul.mubr.bf16.gmra.mrb[0].mxu0 %v5662
        %v5701 = vpop.f32.mrb[0].mxu0
        %v5702 = vadd.f32 0.0, %v5701
        %v5703 = vpop.f32.mrb[0].mxu0
        %v5704 = vpop.f32.mrb[0].mxu0
        %v5705 = vadd.f32 0.0, %v5704
        %v5706 = vpop.f32.mrb[0].mxu0
        %5707 = vmatprep.mubr.bf16.mxu0 0
        %5708 = vmatmul.mubr.bf16.gmra.mrb[0].mxu0 %v5665
        %v5709 = vpop.f32.mrb[0].mxu0
        %v5710 = vadd.f32 0.0, %v5709
        %v5711 = vpop.f32.mrb[0].mxu0
        %v5712 = vpop.f32.mrb[0].mxu0
        %v5713 = vadd.f32 0.0, %v5712
        %v5714 = vpop.f32.mrb[0].mxu0
        %5715 = vdwg.mxu0
        %v5716 = vpack.c.bf16 %v5540, %v5537
        %v5717 = vpack.c.bf16 %v5548, %v5545
        %v5718 = vpack.c.bf16 %v5595, %v5592
        %v5719 = vpack.c.bf16 %v5603, %v5600
        %v5720 = vpack.c.bf16 %v5650, %v5647
        %v5721 = vpack.c.bf16 %v5658, %v5655
        %v5722 = vpack.c.bf16 %v5705, %v5702
        %v5723 = vpack.c.bf16 %v5713, %v5710
        %v5726 = vpack.i.b16 %v5718, %v5716
        %v5728 = vshrl.u32 %v5716, 16
        %v5729 = vshrl.u32 %v5718, 16
        %v5730 = vpack.i.b16 %v5729, %v5728
        %v5734 = vpack.i.b16 %v5722, %v5720
        %v5736 = vshrl.u32 %v5720, 16
        %v5737 = vshrl.u32 %v5722, 16
        %v5738 = vpack.i.b16 %v5737, %v5736
        %v5742 = vpack.i.b16 %v5719, %v5717
        %v5744 = vshrl.u32 %v5717, 16
        %v5745 = vshrl.u32 %v5719, 16
        %v5746 = vpack.i.b16 %v5745, %v5744
        %v5750 = vpack.i.b16 %v5723, %v5721
        %v5752 = vshrl.u32 %v5721, 16
        %v5753 = vshrl.u32 %v5723, 16
        %v5754 = vpack.i.b16 %v5753, %v5752
        %v5756 = vcombine.high %v5726, %v1457
        %v5758 = vunpack.c.l.s4 1983009808
        %v5759 = vunpack.c.0.s8 %v5758
        %v5760 = vlaneseq
        %v5761 = vshrl.u32 %v5760, 7
        %v5762 = vsub.s32 %v5759, %v5761
        %v5763 = vrot.slane %v5726, %v5762
        %v5765 = vunpack.c.l.s4 1983009808
        %v5766 = vunpack.c.0.s8 %v5765
        %v5767 = vlaneseq
        %v5768 = vshrl.u32 %v5767, 7
        %v5769 = vsub.s32 %v5766, %v5768
        %v5770 = vrot.slane %v5756, %v5769
        %v5771 = vcombine.high %v5734, %v1457
        %v5773 = vunpack.c.l.s4 1983009808
        %v5774 = vunpack.c.0.s8 %v5773
        %v5775 = vlaneseq
        %v5776 = vshrl.u32 %v5775, 7
        %v5777 = vsub.s32 %v5774, %v5776
        %v5778 = vrot.slane %v5734, %v5777
        %v5780 = vunpack.c.l.s4 1983009808
        %v5781 = vunpack.c.0.s8 %v5780
        %v5782 = vlaneseq
        %v5783 = vshrl.u32 %v5782, 7
        %v5784 = vsub.s32 %v5781, %v5783
        %v5785 = vrot.slane %v5771, %v5784
        %v5786 = vcombine.low %v5763, %v5778
        %v5787 = vcombine.high %v5763, %v5778
        %v5789 = vunpack.c.l.s4 1934713408
        %v5790 = vunpack.c.0.s8 %v5789
        %v5791 = vlaneseq
        %v5792 = vshrl.u32 %v5791, 7
        %v5793 = vsub.s32 %v5790, %v5792
        %v5794 = vrot.slane %v5786, %v5793
        %v5796 = vunpack.c.l.s4 1934713408
        %v5797 = vunpack.c.0.s8 %v5796
        %v5798 = vlaneseq
        %v5799 = vshrl.u32 %v5798, 7
        %v5800 = vsub.s32 %v5797, %v5799
        %v5801 = vrot.slane %v5787, %v5800
        %v5802 = vcombine.low %v5770, %v5785
        %v5803 = vcombine.high %v5770, %v5785
        %v5805 = vunpack.c.l.s4 1934713408
        %v5806 = vunpack.c.0.s8 %v5805
        %v5807 = vlaneseq
        %v5808 = vshrl.u32 %v5807, 7
        %v5809 = vsub.s32 %v5806, %v5808
        %v5810 = vrot.slane %v5802, %v5809
        %v5812 = vunpack.c.l.s4 1934713408
        %v5813 = vunpack.c.0.s8 %v5812
        %v5814 = vlaneseq
        %v5815 = vshrl.u32 %v5814, 7
        %v5816 = vsub.s32 %v5813, %v5815
        %v5817 = vrot.slane %v5803, %v5816
        %v5818 = vcombine.high %v5794, 0
        %v5819 = vcombine.high %v5801, 0
        %v5820 = vcombine.high %v5810, 0
        %v5821 = vcombine.high %v5817, 0
        %v5822 = vcombine.high %v5730, %v1460
        %v5824 = vunpack.c.l.s4 1983009808
        %v5825 = vunpack.c.0.s8 %v5824
        %v5826 = vlaneseq
        %v5827 = vshrl.u32 %v5826, 7
        %v5828 = vsub.s32 %v5825, %v5827
        %v5829 = vrot.slane %v5730, %v5828
        %v5831 = vunpack.c.l.s4 1983009808
        %v5832 = vunpack.c.0.s8 %v5831
        %v5833 = vlaneseq
        %v5834 = vshrl.u32 %v5833, 7
        %v5835 = vsub.s32 %v5832, %v5834
        %v5836 = vrot.slane %v5822, %v5835
        %v5837 = vcombine.high %v5738, %v1460
        %v5839 = vunpack.c.l.s4 1983009808
        %v5840 = vunpack.c.0.s8 %v5839
        %v5841 = vlaneseq
        %v5842 = vshrl.u32 %v5841, 7
        %v5843 = vsub.s32 %v5840, %v5842
        %v5844 = vrot.slane %v5738, %v5843
        %v5846 = vunpack.c.l.s4 1983009808
        %v5847 = vunpack.c.0.s8 %v5846
        %v5848 = vlaneseq
        %v5849 = vshrl.u32 %v5848, 7
        %v5850 = vsub.s32 %v5847, %v5849
        %v5851 = vrot.slane %v5837, %v5850
        %v5852 = vcombine.low %v5829, %v5844
        %v5853 = vcombine.high %v5829, %v5844
        %v5855 = vunpack.c.l.s4 1934713408
        %v5856 = vunpack.c.0.s8 %v5855
        %v5857 = vlaneseq
        %v5858 = vshrl.u32 %v5857, 7
        %v5859 = vsub.s32 %v5856, %v5858
        %v5860 = vrot.slane %v5852, %v5859
        %v5862 = vunpack.c.l.s4 1934713408
        %v5863 = vunpack.c.0.s8 %v5862
        %v5864 = vlaneseq
        %v5865 = vshrl.u32 %v5864, 7
        %v5866 = vsub.s32 %v5863, %v5865
        %v5867 = vrot.slane %v5853, %v5866
        %v5868 = vcombine.low %v5836, %v5851
        %v5869 = vcombine.high %v5836, %v5851
        %v5871 = vunpack.c.l.s4 1934713408
        %v5872 = vunpack.c.0.s8 %v5871
        %v5873 = vlaneseq
        %v5874 = vshrl.u32 %v5873, 7
        %v5875 = vsub.s32 %v5872, %v5874
        %v5876 = vrot.slane %v5868, %v5875
        %v5878 = vunpack.c.l.s4 1934713408
        %v5879 = vunpack.c.0.s8 %v5878
        %v5880 = vlaneseq
        %v5881 = vshrl.u32 %v5880, 7
        %v5882 = vsub.s32 %v5879, %v5881
        %v5883 = vrot.slane %v5869, %v5882
        %v5884 = vcombine.high %v5860, 0
        %v5885 = vcombine.high %v5867, 0
        %v5886 = vcombine.high %v5876, 0
        %v5887 = vcombine.high %v5883, 0
        %v5888 = vcombine.high %v5742, %v1457
        %v5890 = vunpack.c.l.s4 1983009808
        %v5891 = vunpack.c.0.s8 %v5890
        %v5892 = vlaneseq
        %v5893 = vshrl.u32 %v5892, 7
        %v5894 = vsub.s32 %v5891, %v5893
        %v5895 = vrot.slane %v5742, %v5894
        %v5897 = vunpack.c.l.s4 1983009808
        %v5898 = vunpack.c.0.s8 %v5897
        %v5899 = vlaneseq
        %v5900 = vshrl.u32 %v5899, 7
        %v5901 = vsub.s32 %v5898, %v5900
        %v5902 = vrot.slane %v5888, %v5901
        %v5903 = vcombine.high %v5750, %v1457
        %v5905 = vunpack.c.l.s4 1983009808
        %v5906 = vunpack.c.0.s8 %v5905
        %v5907 = vlaneseq
        %v5908 = vshrl.u32 %v5907, 7
        %v5909 = vsub.s32 %v5906, %v5908
        %v5910 = vrot.slane %v5750, %v5909
        %v5912 = vunpack.c.l.s4 1983009808
        %v5913 = vunpack.c.0.s8 %v5912
        %v5914 = vlaneseq
        %v5915 = vshrl.u32 %v5914, 7
        %v5916 = vsub.s32 %v5913, %v5915
        %v5917 = vrot.slane %v5903, %v5916
        %v5918 = vcombine.low %v5895, %v5910
        %v5919 = vcombine.high %v5895, %v5910
        %v5921 = vunpack.c.l.s4 1934713408
        %v5922 = vunpack.c.0.s8 %v5921
        %v5923 = vlaneseq
        %v5924 = vshrl.u32 %v5923, 7
        %v5925 = vsub.s32 %v5922, %v5924
        %v5926 = vrot.slane %v5918, %v5925
        %v5928 = vunpack.c.l.s4 1934713408
        %v5929 = vunpack.c.0.s8 %v5928
        %v5930 = vlaneseq
        %v5931 = vshrl.u32 %v5930, 7
        %v5932 = vsub.s32 %v5929, %v5931
        %v5933 = vrot.slane %v5919, %v5932
        %v5934 = vcombine.low %v5902, %v5917
        %v5935 = vcombine.high %v5902, %v5917
        %v5937 = vunpack.c.l.s4 1934713408
        %v5938 = vunpack.c.0.s8 %v5937
        %v5939 = vlaneseq
        %v5940 = vshrl.u32 %v5939, 7
        %v5941 = vsub.s32 %v5938, %v5940
        %v5942 = vrot.slane %v5934, %v5941
        %v5944 = vunpack.c.l.s4 1934713408
        %v5945 = vunpack.c.0.s8 %v5944
        %v5946 = vlaneseq
        %v5947 = vshrl.u32 %v5946, 7
        %v5948 = vsub.s32 %v5945, %v5947
        %v5949 = vrot.slane %v5935, %v5948
        %v5950 = vcombine.high %v5926, 0
        %v5951 = vcombine.high %v5933, 0
        %v5952 = vcombine.high %v5942, 0
        %v5953 = vcombine.high %v5949, 0
        %v5954 = vcombine.high %v5746, %v1460
        %v5956 = vunpack.c.l.s4 1983009808
        %v5957 = vunpack.c.0.s8 %v5956
        %v5958 = vlaneseq
        %v5959 = vshrl.u32 %v5958, 7
        %v5960 = vsub.s32 %v5957, %v5959
        %v5961 = vrot.slane %v5746, %v5960
        %v5963 = vunpack.c.l.s4 1983009808
        %v5964 = vunpack.c.0.s8 %v5963
        %v5965 = vlaneseq
        %v5966 = vshrl.u32 %v5965, 7
        %v5967 = vsub.s32 %v5964, %v5966
        %v5968 = vrot.slane %v5954, %v5967
        %v5969 = vcombine.high %v5754, %v1460
        %v5971 = vunpack.c.l.s4 1983009808
        %v5972 = vunpack.c.0.s8 %v5971
        %v5973 = vlaneseq
        %v5974 = vshrl.u32 %v5973, 7
        %v5975 = vsub.s32 %v5972, %v5974
        %v5976 = vrot.slane %v5754, %v5975
        %v5978 = vunpack.c.l.s4 1983009808
        %v5979 = vunpack.c.0.s8 %v5978
        %v5980 = vlaneseq
        %v5981 = vshrl.u32 %v5980, 7
        %v5982 = vsub.s32 %v5979, %v5981
        %v5983 = vrot.slane %v5969, %v5982
        %v5984 = vcombine.low %v5961, %v5976
        %v5985 = vcombine.high %v5961, %v5976
        %v5987 = vunpack.c.l.s4 1934713408
        %v5988 = vunpack.c.0.s8 %v5987
        %v5989 = vlaneseq
        %v5990 = vshrl.u32 %v5989, 7
        %v5991 = vsub.s32 %v5988, %v5990
        %v5992 = vrot.slane %v5984, %v5991
        %v5994 = vunpack.c.l.s4 1934713408
        %v5995 = vunpack.c.0.s8 %v5994
        %v5996 = vlaneseq
        %v5997 = vshrl.u32 %v5996, 7
        %v5998 = vsub.s32 %v5995, %v5997
        %v5999 = vrot.slane %v5985, %v5998
        %v6000 = vcombine.low %v5968, %v5983
        %v6001 = vcombine.high %v5968, %v5983
        %v6003 = vunpack.c.l.s4 1934713408
        %v6004 = vunpack.c.0.s8 %v6003
        %v6005 = vlaneseq
        %v6006 = vshrl.u32 %v6005, 7
        %v6007 = vsub.s32 %v6004, %v6006
        %v6008 = vrot.slane %v6000, %v6007
        %v6010 = vunpack.c.l.s4 1934713408
        %v6011 = vunpack.c.0.s8 %v6010
        %v6012 = vlaneseq
        %v6013 = vshrl.u32 %v6012, 7
        %v6014 = vsub.s32 %v6011, %v6013
        %v6015 = vrot.slane %v6001, %v6014
        %v6016 = vcombine.high %v5992, 0
        %v6017 = vcombine.high %v5999, 0
        %v6018 = vcombine.high %v6008, 0
        %v6019 = vcombine.high %v6015, 0
        %v6020 = vcombine.low %v5794, %v5801
        %v6022 = vunpack.c.l.s4 1983009808
        %v6023 = vunpack.c.0.s8 %v6022
        %v6024 = vlaneseq
        %v6025 = vshrl.u32 %v6024, 7
        %v6026 = vsub.s32 %v6023, %v6025
        %v6027 = vrot.slane %v6020, %v6026
        %v6028 = vcombine.low %v5818, %v5819
        %v6030 = vunpack.c.l.s4 1983009808
        %v6031 = vunpack.c.0.s8 %v6030
        %v6032 = vlaneseq
        %v6033 = vshrl.u32 %v6032, 7
        %v6034 = vsub.s32 %v6031, %v6033
        %v6035 = vrot.slane %v6028, %v6034
        %v6036 = vcombine.low %v5810, %v5817
        %v6038 = vunpack.c.l.s4 1983009808
        %v6039 = vunpack.c.0.s8 %v6038
        %v6040 = vlaneseq
        %v6041 = vshrl.u32 %v6040, 7
        %v6042 = vsub.s32 %v6039, %v6041
        %v6043 = vrot.slane %v6036, %v6042
        %v6044 = vcombine.low %v5820, %v5821
        %v6046 = vunpack.c.l.s4 1983009808
        %v6047 = vunpack.c.0.s8 %v6046
        %v6048 = vlaneseq
        %v6049 = vshrl.u32 %v6048, 7
        %v6050 = vsub.s32 %v6047, %v6049
        %v6051 = vrot.slane %v6044, %v6050
        %v6052 = vcombine.low %v6027, %v6035
        %v6054 = vunpack.c.l.s4 1934713408
        %v6055 = vunpack.c.0.s8 %v6054
        %v6056 = vlaneseq
        %v6057 = vshrl.u32 %v6056, 7
        %v6058 = vsub.s32 %v6055, %v6057
        %v6059 = vrot.slane %v6052, %v6058
        %v6060 = vcombine.low %v6043, %v6051
        %v6062 = vunpack.c.l.s4 1934713408
        %v6063 = vunpack.c.0.s8 %v6062
        %v6064 = vlaneseq
        %v6065 = vshrl.u32 %v6064, 7
        %v6066 = vsub.s32 %v6063, %v6065
        %v6067 = vrot.slane %v6060, %v6066
        %v6068 = vcombine.low %v6059, %v6067
        %v6069 = vcombine.high %v6059, %v6067
        %v6070 = vcombine.low %v5860, %v5867
        %v6072 = vunpack.c.l.s4 1983009808
        %v6073 = vunpack.c.0.s8 %v6072
        %v6074 = vlaneseq
        %v6075 = vshrl.u32 %v6074, 7
        %v6076 = vsub.s32 %v6073, %v6075
        %v6077 = vrot.slane %v6070, %v6076
        %v6078 = vcombine.low %v5884, %v5885
        %v6080 = vunpack.c.l.s4 1983009808
        %v6081 = vunpack.c.0.s8 %v6080
        %v6082 = vlaneseq
        %v6083 = vshrl.u32 %v6082, 7
        %v6084 = vsub.s32 %v6081, %v6083
        %v6085 = vrot.slane %v6078, %v6084
        %v6086 = vcombine.low %v5876, %v5883
        %v6088 = vunpack.c.l.s4 1983009808
        %v6089 = vunpack.c.0.s8 %v6088
        %v6090 = vlaneseq
        %v6091 = vshrl.u32 %v6090, 7
        %v6092 = vsub.s32 %v6089, %v6091
        %v6093 = vrot.slane %v6086, %v6092
        %v6094 = vcombine.low %v5886, %v5887
        %v6096 = vunpack.c.l.s4 1983009808
        %v6097 = vunpack.c.0.s8 %v6096
        %v6098 = vlaneseq
        %v6099 = vshrl.u32 %v6098, 7
        %v6100 = vsub.s32 %v6097, %v6099
        %v6101 = vrot.slane %v6094, %v6100
        %v6102 = vcombine.low %v6077, %v6085
        %v6104 = vunpack.c.l.s4 1934713408
        %v6105 = vunpack.c.0.s8 %v6104
        %v6106 = vlaneseq
        %v6107 = vshrl.u32 %v6106, 7
        %v6108 = vsub.s32 %v6105, %v6107
        %v6109 = vrot.slane %v6102, %v6108
        %v6110 = vcombine.low %v6093, %v6101
        %v6112 = vunpack.c.l.s4 1934713408
        %v6113 = vunpack.c.0.s8 %v6112
        %v6114 = vlaneseq
        %v6115 = vshrl.u32 %v6114, 7
        %v6116 = vsub.s32 %v6113, %v6115
        %v6117 = vrot.slane %v6110, %v6116
        %v6118 = vcombine.low %v6109, %v6117
        %v6119 = vcombine.high %v6109, %v6117
        %v6120 = vcombine.low %v5926, %v5933
        %v6122 = vunpack.c.l.s4 1983009808
        %v6123 = vunpack.c.0.s8 %v6122
        %v6124 = vlaneseq
        %v6125 = vshrl.u32 %v6124, 7
        %v6126 = vsub.s32 %v6123, %v6125
        %v6127 = vrot.slane %v6120, %v6126
        %v6128 = vcombine.low %v5950, %v5951
        %v6130 = vunpack.c.l.s4 1983009808
        %v6131 = vunpack.c.0.s8 %v6130
        %v6132 = vlaneseq
        %v6133 = vshrl.u32 %v6132, 7
        %v6134 = vsub.s32 %v6131, %v6133
        %v6135 = vrot.slane %v6128, %v6134
        %v6136 = vcombine.low %v5942, %v5949
        %v6138 = vunpack.c.l.s4 1983009808
        %v6139 = vunpack.c.0.s8 %v6138
        %v6140 = vlaneseq
        %v6141 = vshrl.u32 %v6140, 7
        %v6142 = vsub.s32 %v6139, %v6141
        %v6143 = vrot.slane %v6136, %v6142
        %v6144 = vcombine.low %v5952, %v5953
        %v6146 = vunpack.c.l.s4 1983009808
        %v6147 = vunpack.c.0.s8 %v6146
        %v6148 = vlaneseq
        %v6149 = vshrl.u32 %v6148, 7
        %v6150 = vsub.s32 %v6147, %v6149
        %v6151 = vrot.slane %v6144, %v6150
        %v6152 = vcombine.low %v6127, %v6135
        %v6154 = vunpack.c.l.s4 1934713408
        %v6155 = vunpack.c.0.s8 %v6154
        %v6156 = vlaneseq
        %v6157 = vshrl.u32 %v6156, 7
        %v6158 = vsub.s32 %v6155, %v6157
        %v6159 = vrot.slane %v6152, %v6158
        %v6160 = vcombine.low %v6143, %v6151
        %v6162 = vunpack.c.l.s4 1934713408
        %v6163 = vunpack.c.0.s8 %v6162
        %v6164 = vlaneseq
        %v6165 = vshrl.u32 %v6164, 7
        %v6166 = vsub.s32 %v6163, %v6165
        %v6167 = vrot.slane %v6160, %v6166
        %v6168 = vcombine.low %v6159, %v6167
        %v6169 = vcombine.high %v6159, %v6167
        %v6170 = vcombine.low %v5992, %v5999
        %v6172 = vunpack.c.l.s4 1983009808
        %v6173 = vunpack.c.0.s8 %v6172
        %v6174 = vlaneseq
        %v6175 = vshrl.u32 %v6174, 7
        %v6176 = vsub.s32 %v6173, %v6175
        %v6177 = vrot.slane %v6170, %v6176
        %v6178 = vcombine.low %v6016, %v6017
        %v6180 = vunpack.c.l.s4 1983009808
        %v6181 = vunpack.c.0.s8 %v6180
        %v6182 = vlaneseq
        %v6183 = vshrl.u32 %v6182, 7
        %v6184 = vsub.s32 %v6181, %v6183
        %v6185 = vrot.slane %v6178, %v6184
        %v6186 = vcombine.low %v6008, %v6015
        %v6188 = vunpack.c.l.s4 1983009808
        %v6189 = vunpack.c.0.s8 %v6188
        %v6190 = vlaneseq
        %v6191 = vshrl.u32 %v6190, 7
        %v6192 = vsub.s32 %v6189, %v6191
        %v6193 = vrot.slane %v6186, %v6192
        %v6194 = vcombine.low %v6018, %v6019
        %v6196 = vunpack.c.l.s4 1983009808
        %v6197 = vunpack.c.0.s8 %v6196
        %v6198 = vlaneseq
        %v6199 = vshrl.u32 %v6198, 7
        %v6200 = vsub.s32 %v6197, %v6199
        %v6201 = vrot.slane %v6194, %v6200
        %v6202 = vcombine.low %v6177, %v6185
        %v6204 = vunpack.c.l.s4 1934713408
        %v6205 = vunpack.c.0.s8 %v6204
        %v6206 = vlaneseq
        %v6207 = vshrl.u32 %v6206, 7
        %v6208 = vsub.s32 %v6205, %v6207
        %v6209 = vrot.slane %v6202, %v6208
        %v6210 = vcombine.low %v6193, %v6201
        %v6212 = vunpack.c.l.s4 1934713408
        %v6213 = vunpack.c.0.s8 %v6212
        %v6214 = vlaneseq
        %v6215 = vshrl.u32 %v6214, 7
        %v6216 = vsub.s32 %v6213, %v6215
        %v6217 = vrot.slane %v6210, %v6216
        %v6218 = vcombine.low %v6209, %v6217
        %v6219 = vcombine.high %v6209, %v6217
        %v6222 = vpack.i.b16 %v6118, %v6068
        %v6223 = vshrl.u32 %v6068, 16
        %v6224 = vshrl.u32 %v6118, 16
        %v6225 = vpack.i.b16 %v6224, %v6223
        %v6228 = vpack.i.b16 %v6119, %v6069
        %v6229 = vshrl.u32 %v6069, 16
        %v6230 = vshrl.u32 %v6119, 16
        %v6231 = vpack.i.b16 %v6230, %v6229
        %v6234 = vpack.i.b16 %v6218, %v6168
        %v6235 = vshrl.u32 %v6168, 16
        %v6236 = vshrl.u32 %v6218, 16
        %v6237 = vpack.i.b16 %v6236, %v6235
        %v6240 = vpack.i.b16 %v6219, %v6169
        %v6241 = vshrl.u32 %v6169, 16
        %v6242 = vshrl.u32 %v6219, 16
        %v6243 = vpack.i.b16 %v6242, %v6241
        %6244 = vrot.lane.b32.xlu0 %v6225, 32
        %v6245 = vpop.permute.xlu0 %6244
        %6246 = vrot.lane.b32.xlu0 %v6237, 32
        %v6247 = vpop.permute.xlu0 %6246
        %6248 = vrot.lane.b32.xlu0 %v6228, 64
        %v6249 = vpop.permute.xlu0 %6248
        %6250 = vrot.lane.b32.xlu0 %v6240, 64
        %v6251 = vpop.permute.xlu0 %6250
        %6252 = vrot.lane.b32.xlu0 %v6231, 96
        %v6253 = vpop.permute.xlu0 %6252
        %6254 = vrot.lane.b32.xlu0 %v6243, 96
        %v6255 = vpop.permute.xlu0 %6254
        %v6258 = vsel %vm2598, %v6222, %v6245
        %v6261 = vsel %vm2598, %v6234, %v6247
        %v6263 = vsel %vm3814, %v6258, %v6249
        %v6265 = vsel %vm3814, %v6261, %v6251
        %v6267 = vsel %vm3819, %v6263, %v6253
        %v6270 = vsel %vm3819, %v6265, %v6255
        %v6272 = vld [vmem:[%s731] sm:$0xf]
        %v6273 = vld [vmem:[%s731 + $0x4] sm:$0xf]
        %v6274 = vld [vmem:[%s731 + $0x8] sm:$0xf]
        %v6275 = vld [vmem:[%s731 + $0xc] sm:$0xf]
        %v6276 = vld [vmem:[%s731 + $0x10] sm:$0xf]
        %v6277 = vld [vmem:[%s731 + $0x14] sm:$0xf]
        %v6278 = vld [vmem:[%s731 + $0x18] sm:$0xf]
        %v6279 = vld [vmem:[%s731 + $0x1c] sm:$0xf]
        %v6280 = vld [vmem:[%s731 + $0x20] sm:$0xf]
        %v6281 = vld [vmem:[%s731 + $0x24] sm:$0xf]
        %v6282 = vld [vmem:[%s731 + $0x28] sm:$0xf]
        %v6283 = vld [vmem:[%s731 + $0x2c] sm:$0xf]
        %v6284 = vld [vmem:[%s731 + $0x30] sm:$0xf]
        %v6285 = vld [vmem:[%s731 + $0x34] sm:$0xf]
        %v6286 = vld [vmem:[%s731 + $0x38] sm:$0xf]
        %v6287 = vld [vmem:[%s731 + $0x3c] sm:$0xf]
        %v6288 = vld [vmem:[%s878] sm:$0x1]
        %v6290 = vlaneseq
        %v6291 = vshrl.u32 %v6290, 7
        %v6292 = vsub.s32 0, %v6291
        %v6293 = vrot.slane %v6288, %v6292
        %v6311 = vunpack.c.l.b16 %v6272
        %v6312 = vunpack.c.l.b16 %v6273
        %v6313 = vunpack.c.l.b16 %v6274
        %v6314 = vunpack.c.l.b16 %v6275
        %v6315 = vunpack.c.l.b16 %v6276
        %v6316 = vunpack.c.l.b16 %v6277
        %v6317 = vunpack.c.l.b16 %v6278
        %v6318 = vunpack.c.l.b16 %v6279
        %v6319 = vunpack.c.l.b16 %v6280
        %v6320 = vunpack.c.l.b16 %v6281
        %v6321 = vunpack.c.l.b16 %v6282
        %v6322 = vunpack.c.l.b16 %v6283
        %v6323 = vunpack.c.l.b16 %v6284
        %v6324 = vunpack.c.l.b16 %v6285
        %v6325 = vunpack.c.l.b16 %v6286
        %v6326 = vunpack.c.l.b16 %v6287
        %v6327 = vpack.c.b16 %v6312, %v6311
        %v6328 = vpack.c.b16 %v6314, %v6313
        %v6329 = vpack.c.b16 %v6316, %v6315
        %v6330 = vpack.c.b16 %v6318, %v6317
        %v6331 = vpack.c.b16 %v6320, %v6319
        %v6332 = vpack.c.b16 %v6322, %v6321
        %v6333 = vpack.c.b16 %v6324, %v6323
        %v6334 = vpack.c.b16 %v6326, %v6325
        %6343 = vmatprep.subr.bf16.mxu0 0
        %6344 = vmatpush1.bf16.msra.mxu0 %v6327
        %6345 = vmatprep.subr.bf16.mxu0 0
        %6346 = vmatpush1.bf16.msra.mxu0 %v6328
        %6347 = vmatprep.subr.bf16.mxu0 0
        %6348 = vmatpush1.bf16.msra.mxu0 %v6329
        %6349 = vmatprep.subr.bf16.mxu0 0
        %6350 = vmatpush1.bf16.msra.mxu0 %v6330
        %6351 = vmatprep.subr.bf16.mxu0 0
        %6352 = vmatpush1.bf16.msra.mxu0 %v6331
        %6353 = vmatprep.subr.bf16.mxu0 0
        %6354 = vmatpush1.bf16.msra.mxu0 %v6332
        %6355 = vmatprep.subr.bf16.mxu0 0
        %6356 = vmatpush1.bf16.msra.mxu0 %v6333
        %6357 = vmatprep.subr.bf16.mxu0 0
        %6358 = vmatpush1.bf16.msra.mxu0 %v6334
        %6359 = vmatprep.subr.bf16.mxu0 0
        %6360 = vmatpush1.bf16.msra.mxu0 0
        %6361 = vmatprep.subr.bf16.mxu0 0
        %6362 = vmatpush1.bf16.msra.mxu0 0
        %6363 = vmatprep.subr.bf16.mxu0 0
        %6364 = vmatpush1.bf16.msra.mxu0 0
        %6365 = vmatprep.subr.bf16.mxu0 0
        %6366 = vmatpush1.bf16.msra.mxu0 0
        %6367 = vmatprep.subr.bf16.mxu0 0
        %6368 = vmatpush1.bf16.msra.mxu0 0
        %6369 = vmatprep.subr.bf16.mxu0 0
        %6370 = vmatpush1.bf16.msra.mxu0 0
        %6371 = vmatprep.subr.bf16.mxu0 0
        %6372 = vmatpush1.bf16.msra.mxu0 0
        %6373 = vmatprep.subr.bf16.mxu0 0
        %6374 = vmatpush1.bf16.msra.mxu0 0
        %6375 = vmatprep.mubr.bf16.mxu0 0
        %6376 = vmatmul.mubr.bf16.gmra.mrb[0].mxu0 %v3821
        %v6377 = vpop.f32.mrb[0].mxu0
        %v6378 = vadd.f32 %v6293, %v6377
        %v6379 = vpop.f32.mrb[0].mxu0
        %v6380 = vpop.f32.mrb[0].mxu0
        %v6381 = vadd.f32 %v6293, %v6380
        %v6382 = vpop.f32.mrb[0].mxu0
        %6383 = vmatprep.mubr.bf16.mxu0 0
        %6384 = vmatmul.mubr.bf16.gmra.mrb[0].mxu0 %v3824
        %v6385 = vpop.f32.mrb[0].mxu0
        %v6386 = vadd.f32 %v6293, %v6385
        %v6387 = vpop.f32.mrb[0].mxu0
        %v6388 = vpop.f32.mrb[0].mxu0
        %v6389 = vadd.f32 %v6293, %v6388
        %v6390 = vpop.f32.mrb[0].mxu0
        %6391 = vmatprep.mubr.bf16.mxu0 0
        %6392 = vmatmul.mubr.bf16.gmra.mrb[0].mxu0 %v6267
        %v6393 = vpop.f32.mrb[0].mxu0
        %v6394 = vadd.f32 %v6293, %v6393
        %v6395 = vpop.f32.mrb[0].mxu0
        %v6396 = vpop.f32.mrb[0].mxu0
        %v6397 = vadd.f32 %v6293, %v6396
        %v6398 = vpop.f32.mrb[0].mxu0
        %6399 = vmatprep.mubr.bf16.mxu0 0
        %6400 = vmatmul.mubr.bf16.gmra.mrb[0].mxu0 %v6270
        %v6401 = vpop.f32.mrb[0].mxu0
        %v6402 = vadd.f32 %v6293, %v6401
        %v6403 = vpop.f32.mrb[0].mxu0
        %v6404 = vpop.f32.mrb[0].mxu0
        %v6405 = vadd.f32 %v6293, %v6404
        %v6406 = vpop.f32.mrb[0].mxu0
        %6407 = vdwg.mxu0
        %v6408 = vadd.f32 %v908, %v6378
        %v6409 = vadd.f32 %v909, %v6381
        %v6410 = vadd.f32 %v910, %v6386
        %v6411 = vadd.f32 %v911, %v6389
        %v6412 = vadd.f32 %v912, %v6394
        %v6413 = vadd.f32 %v913, %v6397
        %v6414 = vadd.f32 %v914, %v6402
        %v6415 = vadd.f32 %v915, %v6405
        %v6416 = vld [vmem:[%s881] sm:$0x1]
        %v6417 = vld [vmem:[%s739] sm:$0x1]
        %6418 = vadd.xlane.f32.xlu0 %v6408
        %v6419 = vpop.xlane.xlu0 %6418
        %6420 = vadd.xlane.f32.xlu0 %v6409
        %v6421 = vpop.xlane.xlu0 %6420
        %6422 = vadd.xlane.f32.xlu0 %v6410
        %v6423 = vpop.xlane.xlu0 %6422
        %6424 = vadd.xlane.f32.xlu0 %v6411
        %v6425 = vpop.xlane.xlu0 %6424
        %6426 = vadd.xlane.f32.xlu0 %v6412
        %v6427 = vpop.xlane.xlu0 %6426
        %6428 = vadd.xlane.f32.xlu0 %v6413
        %v6429 = vpop.xlane.xlu0 %6428
        %6430 = vadd.xlane.f32.xlu0 %v6414
        %v6431 = vpop.xlane.xlu0 %6430
        %6432 = vadd.xlane.f32.xlu0 %v6415
        %v6433 = vpop.xlane.xlu0 %6432
        %v6434 = vmul.f32 %v6419, %v934
        %v6435 = vmul.f32 %v6421, %v934
        %v6436 = vmul.f32 %v6423, %v934
        %v6437 = vmul.f32 %v6425, %v934
        %v6438 = vmul.f32 %v6427, %v934
        %v6439 = vmul.f32 %v6429, %v934
        %v6440 = vmul.f32 %v6431, %v934
        %v6441 = vmul.f32 %v6433, %v934
        %v6442 = vsub.f32 %v6408, %v6434
        %v6443 = vsub.f32 %v6409, %v6435
        %v6444 = vsub.f32 %v6410, %v6436
        %v6445 = vsub.f32 %v6411, %v6437
        %v6446 = vsub.f32 %v6412, %v6438
        %v6447 = vsub.f32 %v6413, %v6439
        %v6448 = vsub.f32 %v6414, %v6440
        %v6449 = vsub.f32 %v6415, %v6441
        %v6450 = vmul.f32 %v6442, %v6442
        %v6451 = vmul.f32 %v6443, %v6443
        %v6452 = vmul.f32 %v6444, %v6444
        %v6453 = vmul.f32 %v6445, %v6445
        %v6454 = vmul.f32 %v6446, %v6446
        %v6455 = vmul.f32 %v6447, %v6447
        %v6456 = vmul.f32 %v6448, %v6448
        %v6457 = vmul.f32 %v6449, %v6449
        %6458 = vadd.xlane.f32.xlu0 %v6450
        %v6459 = vpop.xlane.xlu0 %6458
        %6460 = vadd.xlane.f32.xlu0 %v6451
        %v6461 = vpop.xlane.xlu0 %6460
        %6462 = vadd.xlane.f32.xlu0 %v6452
        %v6463 = vpop.xlane.xlu0 %6462
        %6464 = vadd.xlane.f32.xlu0 %v6453
        %v6465 = vpop.xlane.xlu0 %6464
        %6466 = vadd.xlane.f32.xlu0 %v6454
        %v6467 = vpop.xlane.xlu0 %6466
        %6468 = vadd.xlane.f32.xlu0 %v6455
        %v6469 = vpop.xlane.xlu0 %6468
        %6470 = vadd.xlane.f32.xlu0 %v6456
        %v6471 = vpop.xlane.xlu0 %6470
        %6472 = vadd.xlane.f32.xlu0 %v6457
        %v6473 = vpop.xlane.xlu0 %6472
        %v6474 = vmul.f32 %v6459, %v934
        %v6475 = vmul.f32 %v6461, %v934
        %v6476 = vmul.f32 %v6463, %v934
        %v6477 = vmul.f32 %v6465, %v934
        %v6478 = vmul.f32 %v6467, %v934
        %v6479 = vmul.f32 %v6469, %v934
        %v6480 = vmul.f32 %v6471, %v934
        %v6481 = vmul.f32 %v6473, %v934
        %v6482 = vadd.f32 %v6474, 1e-06
        %v6483 = vadd.f32 %v6475, 1e-06
        %v6484 = vadd.f32 %v6476, 1e-06
        %v6485 = vadd.f32 %v6477, 1e-06
        %v6486 = vadd.f32 %v6478, 1e-06
        %v6487 = vadd.f32 %v6479, 1e-06
        %v6488 = vadd.f32 %v6480, 1e-06
        %v6489 = vadd.f32 %v6481, 1e-06
        %v6490 = vrsqrt.pop %v6482
        %v6491 = vrsqrt.pop %v6483
        %v6492 = vrsqrt.pop %v6484
        %v6493 = vrsqrt.pop %v6485
        %v6494 = vrsqrt.pop %v6486
        %v6495 = vrsqrt.pop %v6487
        %v6496 = vrsqrt.pop %v6488
        %v6497 = vrsqrt.pop %v6489
        %v6498 = vmul.f32 %v6442, %v6490
        %v6499 = vmul.f32 %v6443, %v6491
        %v6500 = vmul.f32 %v6444, %v6492
        %v6501 = vmul.f32 %v6445, %v6493
        %v6502 = vmul.f32 %v6446, %v6494
        %v6503 = vmul.f32 %v6447, %v6495
        %v6504 = vmul.f32 %v6448, %v6496
        %v6505 = vmul.f32 %v6449, %v6497
        %v6507 = vlaneseq
        %v6508 = vshrl.u32 %v6507, 7
        %v6509 = vsub.s32 0, %v6508
        %v6510 = vrot.slane %v6416, %v6509
        %v6512 = vmul.f32 %v6498, %v6510
        %v6513 = vmul.f32 %v6499, %v6510
        %v6514 = vmul.f32 %v6500, %v6510
        %v6515 = vmul.f32 %v6501, %v6510
        %v6516 = vmul.f32 %v6502, %v6510
        %v6517 = vmul.f32 %v6503, %v6510
        %v6518 = vmul.f32 %v6504, %v6510
        %v6519 = vmul.f32 %v6505, %v6510
        %v6521 = vlaneseq
        %v6522 = vshrl.u32 %v6521, 7
        %v6523 = vsub.s32 0, %v6522
        %v6524 = vrot.slane %v6417, %v6523
        %v6526 = vadd.f32 %v6512, %v6524
        %v6527 = vadd.f32 %v6513, %v6524
        %v6528 = vadd.f32 %v6514, %v6524
        %v6529 = vadd.f32 %v6515, %v6524
        %v6530 = vadd.f32 %v6516, %v6524
        %v6531 = vadd.f32 %v6517, %v6524
        %v6532 = vadd.f32 %v6518, %v6524
        %v6533 = vadd.f32 %v6519, %v6524
        %v6534 = vpack.c.bf16 %v6527, %v6526
        %v6535 = vpack.c.bf16 %v6529, %v6528
        %v6536 = vpack.c.bf16 %v6531, %v6530
        %v6537 = vpack.c.bf16 %v6533, %v6532
        %v6538 = vld [vmem:[%s886] sm:$0xff]
        %v6539 = vld [vmem:[%s886 + $0x8] sm:$0xff]
        %v6540 = vld [vmem:[%s886 + $0x10] sm:$0xff]
        %v6541 = vld [vmem:[%s886 + $0x18] sm:$0xff]
        %v6542 = vld [vmem:[%s886 + $0x20] sm:$0xff]
        %v6543 = vld [vmem:[%s886 + $0x28] sm:$0xff]
        %v6544 = vld [vmem:[%s886 + $0x30] sm:$0xff]
        %v6545 = vld [vmem:[%s886 + $0x38] sm:$0xff]
        %v6546 = vld [vmem:[%s886 + $0x40] sm:$0xff]
        %v6547 = vld [vmem:[%s886 + $0x48] sm:$0xff]
        %v6548 = vld [vmem:[%s886 + $0x50] sm:$0xff]
        %v6549 = vld [vmem:[%s886 + $0x58] sm:$0xff]
        %v6550 = vld [vmem:[%s886 + $0x60] sm:$0xff]
        %v6551 = vld [vmem:[%s886 + $0x68] sm:$0xff]
        %v6552 = vld [vmem:[%s886 + $0x70] sm:$0xff]
        %v6553 = vld [vmem:[%s886 + $0x78] sm:$0xff]
        %v6554 = vld [vmem:[%s886 + $0x80] sm:$0xff]
        %v6555 = vld [vmem:[%s886 + $0x88] sm:$0xff]
        %v6556 = vld [vmem:[%s886 + $0x90] sm:$0xff]
        %v6557 = vld [vmem:[%s886 + $0x98] sm:$0xff]
        %v6558 = vld [vmem:[%s886 + $0xa0] sm:$0xff]
        %v6559 = vld [vmem:[%s886 + $0xa8] sm:$0xff]
        %v6560 = vld [vmem:[%s886 + $0xb0] sm:$0xff]
        %v6561 = vld [vmem:[%s886 + $0xb8] sm:$0xff]
        %v6562 = vld [vmem:[%s886 + $0xc0] sm:$0xff]
        %v6563 = vld [vmem:[%s886 + $0xc8] sm:$0xff]
        %v6564 = vld [vmem:[%s886 + $0xd0] sm:$0xff]
        %v6565 = vld [vmem:[%s886 + $0xd8] sm:$0xff]
        %v6566 = vld [vmem:[%s886 + $0xe0] sm:$0xff]
        %v6567 = vld [vmem:[%s886 + $0xe8] sm:$0xff]
        %v6568 = vld [vmem:[%s886 + $0xf0] sm:$0xff]
        %v6569 = vld [vmem:[%s886 + $0xf8] sm:$0xff]
        %v6570 = vld [vmem:[%s748] sm:$0xf]
        %v6572 = vlaneseq
        %v6573 = vshrl.u32 %v6572, 7
        %v6574 = vsub.s32 0, %v6573
        %v6575 = vrot.slane %v6570, %v6574
        %v6576 = vlaneseq
        %v6577 = vshrl.u32 %v6576, 7
        %v6578 = vsub.s32 1, %v6577
        %v6579 = vrot.slane %v6570, %v6578
        %v6580 = vlaneseq
        %v6581 = vshrl.u32 %v6580, 7
        %v6582 = vsub.s32 2, %v6581
        %v6583 = vrot.slane %v6570, %v6582
        %v6584 = vlaneseq
        %v6585 = vshrl.u32 %v6584, 7
        %v6586 = vsub.s32 3, %v6585
        %v6587 = vrot.slane %v6570, %v6586
        %v6624 = vunpack.c.l.b16 %v6538
        %v6625 = vunpack.c.h.b16 %v6538
        %v6626 = vunpack.c.l.b16 %v6539
        %v6627 = vunpack.c.h.b16 %v6539
        %v6628 = vunpack.c.l.b16 %v6540
        %v6629 = vunpack.c.h.b16 %v6540
        %v6630 = vunpack.c.l.b16 %v6541
        %v6631 = vunpack.c.h.b16 %v6541
        %v6632 = vunpack.c.l.b16 %v6542
        %v6633 = vunpack.c.h.b16 %v6542
        %v6634 = vunpack.c.l.b16 %v6543
        %v6635 = vunpack.c.h.b16 %v6543
        %v6636 = vunpack.c.l.b16 %v6544
        %v6637 = vunpack.c.h.b16 %v6544
        %v6638 = vunpack.c.l.b16 %v6545
        %v6639 = vunpack.c.h.b16 %v6545
        %v6640 = vunpack.c.l.b16 %v6546
        %v6641 = vunpack.c.h.b16 %v6546
        %v6642 = vunpack.c.l.b16 %v6547
        %v6643 = vunpack.c.h.b16 %v6547
        %v6644 = vunpack.c.l.b16 %v6548
        %v6645 = vunpack.c.h.b16 %v6548
        %v6646 = vunpack.c.l.b16 %v6549
        %v6647 = vunpack.c.h.b16 %v6549
        %v6648 = vunpack.c.l.b16 %v6550
        %v6649 = vunpack.c.h.b16 %v6550
        %v6650 = vunpack.c.l.b16 %v6551
        %v6651 = vunpack.c.h.b16 %v6551
        %v6652 = vunpack.c.l.b16 %v6552
        %v6653 = vunpack.c.h.b16 %v6552
        %v6654 = vunpack.c.l.b16 %v6553
        %v6655 = vunpack.c.h.b16 %v6553
        %v6656 = vunpack.c.l.b16 %v6554
        %v6657 = vunpack.c.h.b16 %v6554
        %v6658 = vunpack.c.l.b16 %v6555
        %v6659 = vunpack.c.h.b16 %v6555
        %v6660 = vunpack.c.l.b16 %v6556
        %v6661 = vunpack.c.h.b16 %v6556
        %v6662 = vunpack.c.l.b16 %v6557
        %v6663 = vunpack.c.h.b16 %v6557
        %v6664 = vunpack.c.l.b16 %v6558
        %v6665 = vunpack.c.h.b16 %v6558
        %v6666 = vunpack.c.l.b16 %v6559
        %v6667 = vunpack.c.h.b16 %v6559
        %v6668 = vunpack.c.l.b16 %v6560
        %v6669 = vunpack.c.h.b16 %v6560
        %v6670 = vunpack.c.l.b16 %v6561
        %v6671 = vunpack.c.h.b16 %v6561
        %v6672 = vunpack.c.l.b16 %v6562
        %v6673 = vunpack.c.h.b16 %v6562
        %v6674 = vunpack.c.l.b16 %v6563
        %v6675 = vunpack.c.h.b16 %v6563
        %v6676 = vunpack.c.l.b16 %v6564
        %v6677 = vunpack.c.h.b16 %v6564
        %v6678 = vunpack.c.l.b16 %v6565
        %v6679 = vunpack.c.h.b16 %v6565
        %v6680 = vunpack.c.l.b16 %v6566
        %v6681 = vunpack.c.h.b16 %v6566
        %v6682 = vunpack.c.l.b16 %v6567
        %v6683 = vunpack.c.h.b16 %v6567
        %v6684 = vunpack.c.l.b16 %v6568
        %v6685 = vunpack.c.h.b16 %v6568
        %v6686 = vunpack.c.l.b16 %v6569
        %v6687 = vunpack.c.h.b16 %v6569
        %v6688 = vpack.c.b16 %v6628, %v6624
        %v6689 = vpack.c.b16 %v6629, %v6625
        %v6690 = vpack.c.b16 %v6630, %v6626
        %v6691 = vpack.c.b16 %v6631, %v6627
        %v6692 = vpack.c.b16 %v6636, %v6632
        %v6693 = vpack.c.b16 %v6637, %v6633
        %v6694 = vpack.c.b16 %v6638, %v6634
        %v6695 = vpack.c.b16 %v6639, %v6635
        %v6696 = vpack.c.b16 %v6644, %v6640
        %v6697 = vpack.c.b16 %v6645, %v6641
        %v6698 = vpack.c.b16 %v6646, %v6642
        %v6699 = vpack.c.b16 %v6647, %v6643
        %v6700 = vpack.c.b16 %v6652, %v6648
        %v6701 = vpack.c.b16 %v6653, %v6649
        %v6702 = vpack.c.b16 %v6654, %v6650
        %v6703 = vpack.c.b16 %v6655, %v6651
        %v6704 = vpack.c.b16 %v6660, %v6656
        %v6705 = vpack.c.b16 %v6661, %v6657
        %v6706 = vpack.c.b16 %v6662, %v6658
        %v6707 = vpack.c.b16 %v6663, %v6659
        %v6708 = vpack.c.b16 %v6668, %v6664
        %v6709 = vpack.c.b16 %v6669, %v6665
        %v6710 = vpack.c.b16 %v6670, %v6666
        %v6711 = vpack.c.b16 %v6671, %v6667
        %v6712 = vpack.c.b16 %v6676, %v6672
        %v6713 = vpack.c.b16 %v6677, %v6673
        %v6714 = vpack.c.b16 %v6678, %v6674
        %v6715 = vpack.c.b16 %v6679, %v6675
        %v6716 = vpack.c.b16 %v6684, %v6680
        %v6717 = vpack.c.b16 %v6685, %v6681
        %v6718 = vpack.c.b16 %v6686, %v6682
        %v6719 = vpack.c.b16 %v6687, %v6683
        %6752 = vmatprep.subr.bf16.mxu0 %v6689
        %6753 = vmatpush1.bf16.msra.mxu0 %v6688
        %6754 = vmatprep.subr.bf16.mxu0 %v6693
        %6755 = vmatpush1.bf16.msra.mxu0 %v6692
        %6756 = vmatprep.subr.bf16.mxu0 %v6697
        %6757 = vmatpush1.bf16.msra.mxu0 %v6696
        %6758 = vmatprep.subr.bf16.mxu0 %v6701
        %6759 = vmatpush1.bf16.msra.mxu0 %v6700
        %6760 = vmatprep.subr.bf16.mxu0 %v6705
        %6761 = vmatpush1.bf16.msra.mxu0 %v6704
        %6762 = vmatprep.subr.bf16.mxu0 %v6709
        %6763 = vmatpush1.bf16.msra.mxu0 %v6708
        %6764 = vmatprep.subr.bf16.mxu0 %v6713
        %6765 = vmatpush1.bf16.msra.mxu0 %v6712
        %6766 = vmatprep.subr.bf16.mxu0 %v6717
        %6767 = vmatpush1.bf16.msra.mxu0 %v6716
        %6768 = vmatprep.subr.bf16.mxu0 0
        %6769 = vmatpush1.bf16.msra.mxu0 0
        %6770 = vmatprep.subr.bf16.mxu0 0
        %6771 = vmatpush1.bf16.msra.mxu0 0
        %6772 = vmatprep.subr.bf16.mxu0 0
        %6773 = vmatpush1.bf16.msra.mxu0 0
        %6774 = vmatprep.subr.bf16.mxu0 0
        %6775 = vmatpush1.bf16.msra.mxu0 0
        %6776 = vmatprep.subr.bf16.mxu0 0
        %6777 = vmatpush1.bf16.msra.mxu0 0
        %6778 = vmatprep.subr.bf16.mxu0 0
        %6779 = vmatpush1.bf16.msra.mxu0 0
        %6780 = vmatprep.subr.bf16.mxu0 0
        %6781 = vmatpush1.bf16.msra.mxu0 0
        %6782 = vmatprep.subr.bf16.mxu0 0
        %6783 = vmatpush1.bf16.msra.mxu0 0
        %6784 = vmatprep.mubr.bf16.mxu0 0
        %6785 = vmatmul.mubr.bf16.gmra.mrb[0].mxu0 %v6534
        %v6786 = vpop.f32.mrb[0].mxu0
        %v6787 = vadd.f32 %v6575, %v6786
        %v6788 = vpop.f32.mrb[0].mxu0
        %v6789 = vadd.f32 %v6579, %v6788
        %v6790 = vpop.f32.mrb[0].mxu0
        %v6791 = vadd.f32 %v6575, %v6790
        %v6792 = vpop.f32.mrb[0].mxu0
        %v6793 = vadd.f32 %v6579, %v6792
        %6794 = vmatprep.mubr.bf16.mxu0 0
        %6795 = vmatmul.mubr.bf16.gmra.mrb[0].mxu0 %v6535
        %v6796 = vpop.f32.mrb[0].mxu0
        %v6797 = vadd.f32 %v6575, %v6796
        %v6798 = vpop.f32.mrb[0].mxu0
        %v6799 = vadd.f32 %v6579, %v6798
        %v6800 = vpop.f32.mrb[0].mxu0
        %v6801 = vadd.f32 %v6575, %v6800
        %v6802 = vpop.f32.mrb[0].mxu0
        %v6803 = vadd.f32 %v6579, %v6802
        %6804 = vmatprep.mubr.bf16.mxu0 0
        %6805 = vmatmul.mubr.bf16.gmra.mrb[0].mxu0 %v6536
        %v6806 = vpop.f32.mrb[0].mxu0
        %v6807 = vadd.f32 %v6575, %v6806
        %v6808 = vpop.f32.mrb[0].mxu0
        %v6809 = vadd.f32 %v6579, %v6808
        %v6810 = vpop.f32.mrb[0].mxu0
        %v6811 = vadd.f32 %v6575, %v6810
        %v6812 = vpop.f32.mrb[0].mxu0
        %v6813 = vadd.f32 %v6579, %v6812
        %6814 = vmatprep.mubr.bf16.mxu0 0
        %6815 = vmatmul.mubr.bf16.gmra.mrb[0].mxu0 %v6537
        %v6816 = vpop.f32.mrb[0].mxu0
        %v6817 = vadd.f32 %v6575, %v6816
        %v6818 = vpop.f32.mrb[0].mxu0
        %v6819 = vadd.f32 %v6579, %v6818
        %v6820 = vpop.f32.mrb[0].mxu0
        %v6821 = vadd.f32 %v6575, %v6820
        %v6822 = vpop.f32.mrb[0].mxu0
        %v6823 = vadd.f32 %v6579, %v6822
        %6824 = vdwg.mxu0
        %6825 = vmatprep.subr.bf16.mxu0 %v6691
        %6826 = vmatpush1.bf16.msra.mxu0 %v6690
        %6827 = vmatprep.subr.bf16.mxu0 %v6695
        %6828 = vmatpush1.bf16.msra.mxu0 %v6694
        %6829 = vmatprep.subr.bf16.mxu0 %v6699
        %6830 = vmatpush1.bf16.msra.mxu0 %v6698
        %6831 = vmatprep.subr.bf16.mxu0 %v6703
        %6832 = vmatpush1.bf16.msra.mxu0 %v6702
        %6833 = vmatprep.subr.bf16.mxu0 %v6707
        %6834 = vmatpush1.bf16.msra.mxu0 %v6706
        %6835 = vmatprep.subr.bf16.mxu0 %v6711
        %6836 = vmatpush1.bf16.msra.mxu0 %v6710
        %6837 = vmatprep.subr.bf16.mxu0 %v6715
        %6838 = vmatpush1.bf16.msra.mxu0 %v6714
        %6839 = vmatprep.subr.bf16.mxu0 %v6719
        %6840 = vmatpush1.bf16.msra.mxu0 %v6718
        %6841 = vmatprep.subr.bf16.mxu0 0
        %6842 = vmatpush1.bf16.msra.mxu0 0
        %6843 = vmatprep.subr.bf16.mxu0 0
        %6844 = vmatpush1.bf16.msra.mxu0 0
        %6845 = vmatprep.subr.bf16.mxu0 0
        %6846 = vmatpush1.bf16.msra.mxu0 0
        %6847 = vmatprep.subr.bf16.mxu0 0
        %6848 = vmatpush1.bf16.msra.mxu0 0
        %6849 = vmatprep.subr.bf16.mxu0 0
        %6850 = vmatpush1.bf16.msra.mxu0 0
        %6851 = vmatprep.subr.bf16.mxu0 0
        %6852 = vmatpush1.bf16.msra.mxu0 0
        %6853 = vmatprep.subr.bf16.mxu0 0
        %6854 = vmatpush1.bf16.msra.mxu0 0
        %6855 = vmatprep.subr.bf16.mxu0 0
        %6856 = vmatpush1.bf16.msra.mxu0 0
        %6857 = vmatprep.mubr.bf16.mxu0 0
        %6858 = vmatmul.mubr.bf16.gmra.mrb[0].mxu0 %v6534
        %v6859 = vpop.f32.mrb[0].mxu0
        %v6860 = vadd.f32 %v6583, %v6859
        %v6861 = vpop.f32.mrb[0].mxu0
        %v6862 = vadd.f32 %v6587, %v6861
        %v6863 = vpop.f32.mrb[0].mxu0
        %v6864 = vadd.f32 %v6583, %v6863
        %v6865 = vpop.f32.mrb[0].mxu0
        %v6866 = vadd.f32 %v6587, %v6865
        %6867 = vmatprep.mubr.bf16.mxu0 0
        %6868 = vmatmul.mubr.bf16.gmra.mrb[0].mxu0 %v6535
        %v6869 = vpop.f32.mrb[0].mxu0
        %v6870 = vadd.f32 %v6583, %v6869
        %v6871 = vpop.f32.mrb[0].mxu0
        %v6872 = vadd.f32 %v6587, %v6871
        %v6873 = vpop.f32.mrb[0].mxu0
        %v6874 = vadd.f32 %v6583, %v6873
        %v6875 = vpop.f32.mrb[0].mxu0
        %v6876 = vadd.f32 %v6587, %v6875
        %6877 = vmatprep.mubr.bf16.mxu0 0
        %6878 = vmatmul.mubr.bf16.gmra.mrb[0].mxu0 %v6536
        %v6879 = vpop.f32.mrb[0].mxu0
        %v6880 = vadd.f32 %v6583, %v6879
        %v6881 = vpop.f32.mrb[0].mxu0
        %v6882 = vadd.f32 %v6587, %v6881
        %v6883 = vpop.f32.mrb[0].mxu0
        %v6884 = vadd.f32 %v6583, %v6883
        %v6885 = vpop.f32.mrb[0].mxu0
        %v6886 = vadd.f32 %v6587, %v6885
        %6887 = vmatprep.mubr.bf16.mxu0 0
        %6888 = vmatmul.mubr.bf16.gmra.mrb[0].mxu0 %v6537
        %v6889 = vpop.f32.mrb[0].mxu0
        %v6890 = vadd.f32 %v6583, %v6889
        %v6891 = vpop.f32.mrb[0].mxu0
        %v6892 = vadd.f32 %v6587, %v6891
        %v6893 = vpop.f32.mrb[0].mxu0
        %v6894 = vadd.f32 %v6583, %v6893
        %v6895 = vpop.f32.mrb[0].mxu0
        %v6896 = vadd.f32 %v6587, %v6895
        %6897 = vdwg.mxu0
        %v6898 = vmul.f32 %v6787, 0.5
        %v6899 = vmul.f32 %v6789, 0.5
        %v6900 = vmul.f32 %v6860, 0.5
        %v6901 = vmul.f32 %v6862, 0.5
        %v6902 = vmul.f32 %v6791, 0.5
        %v6903 = vmul.f32 %v6793, 0.5
        %v6904 = vmul.f32 %v6864, 0.5
        %v6905 = vmul.f32 %v6866, 0.5
        %v6906 = vmul.f32 %v6797, 0.5
        %v6907 = vmul.f32 %v6799, 0.5
        %v6908 = vmul.f32 %v6870, 0.5
        %v6909 = vmul.f32 %v6872, 0.5
        %v6910 = vmul.f32 %v6801, 0.5
        %v6911 = vmul.f32 %v6803, 0.5
        %v6912 = vmul.f32 %v6874, 0.5
        %v6913 = vmul.f32 %v6876, 0.5
        %v6914 = vmul.f32 %v6807, 0.5
        %v6915 = vmul.f32 %v6809, 0.5
        %v6916 = vmul.f32 %v6880, 0.5
        %v6917 = vmul.f32 %v6882, 0.5
        %v6918 = vmul.f32 %v6811, 0.5
        %v6919 = vmul.f32 %v6813, 0.5
        %v6920 = vmul.f32 %v6884, 0.5
        %v6921 = vmul.f32 %v6886, 0.5
        %v6922 = vmul.f32 %v6817, 0.5
        %v6923 = vmul.f32 %v6819, 0.5
        %v6924 = vmul.f32 %v6890, 0.5
        %v6925 = vmul.f32 %v6892, 0.5
        %v6926 = vmul.f32 %v6821, 0.5
        %v6927 = vmul.f32 %v6823, 0.5
        %v6928 = vmul.f32 %v6894, 0.5
        %v6929 = vmul.f32 %v6896, 0.5
        %v6930 = vmul.f32 %v6787, 0.70710677
        %v6931 = vmul.f32 %v6789, 0.70710677
        %v6932 = vmul.f32 %v6860, 0.70710677
        %v6933 = vmul.f32 %v6862, 0.70710677
        %v6934 = vmul.f32 %v6791, 0.70710677
        %v6935 = vmul.f32 %v6793, 0.70710677
        %v6936 = vmul.f32 %v6864, 0.70710677
        %v6937 = vmul.f32 %v6866, 0.70710677
        %v6938 = vmul.f32 %v6797, 0.70710677
        %v6939 = vmul.f32 %v6799, 0.70710677
        %v6940 = vmul.f32 %v6870, 0.70710677
        %v6941 = vmul.f32 %v6872, 0.70710677
        %v6942 = vmul.f32 %v6801, 0.70710677
        %v6943 = vmul.f32 %v6803, 0.70710677
        %v6944 = vmul.f32 %v6874, 0.70710677
        %v6945 = vmul.f32 %v6876, 0.70710677
        %v6946 = vmul.f32 %v6807, 0.70710677
        %v6947 = vmul.f32 %v6809, 0.70710677
        %v6948 = vmul.f32 %v6880, 0.70710677
        %v6949 = vmul.f32 %v6882, 0.70710677
        %v6950 = vmul.f32 %v6811, 0.70710677
        %v6951 = vmul.f32 %v6813, 0.70710677
        %v6952 = vmul.f32 %v6884, 0.70710677
        %v6953 = vmul.f32 %v6886, 0.70710677
        %v6954 = vmul.f32 %v6817, 0.70710677
        %v6955 = vmul.f32 %v6819, 0.70710677
        %v6956 = vmul.f32 %v6890, 0.70710677
        %v6957 = vmul.f32 %v6892, 0.70710677
        %v6958 = vmul.f32 %v6821, 0.70710677
        %v6959 = vmul.f32 %v6823, 0.70710677
        %v6960 = vmul.f32 %v6894, 0.70710677
        %v6961 = vmul.f32 %v6896, 0.70710677
        %v6962 = verf.f32.pop %v6930
        %v6963 = verf.f32.pop %v6931
        %v6964 = verf.f32.pop %v6932
        %v6965 = verf.f32.pop %v6933
        %v6966 = verf.f32.pop %v6934
        %v6967 = verf.f32.pop %v6935
        %v6968 = verf.f32.pop %v6936
        %v6969 = verf.f32.pop %v6937
        %v6970 = verf.f32.pop %v6938
        %v6971 = verf.f32.pop %v6939
        %v6972 = verf.f32.pop %v6940
        %v6973 = verf.f32.pop %v6941
        %v6974 = verf.f32.pop %v6942
        %v6975 = verf.f32.pop %v6943
        %v6976 = verf.f32.pop %v6944
        %v6977 = verf.f32.pop %v6945
        %v6978 = verf.f32.pop %v6946
        %v6979 = verf.f32.pop %v6947
        %v6980 = verf.f32.pop %v6948
        %v6981 = verf.f32.pop %v6949
        %v6982 = verf.f32.pop %v6950
        %v6983 = verf.f32.pop %v6951
        %v6984 = verf.f32.pop %v6952
        %v6985 = verf.f32.pop %v6953
        %v6986 = verf.f32.pop %v6954
        %v6987 = verf.f32.pop %v6955
        %v6988 = verf.f32.pop %v6956
        %v6989 = verf.f32.pop %v6957
        %v6990 = verf.f32.pop %v6958
        %v6991 = verf.f32.pop %v6959
        %v6992 = verf.f32.pop %v6960
        %v6993 = verf.f32.pop %v6961
        %v6994 = vadd.f32 %v6962, 1.0
        %v6995 = vadd.f32 %v6963, 1.0
        %v6996 = vadd.f32 %v6964, 1.0
        %v6997 = vadd.f32 %v6965, 1.0
        %v6998 = vadd.f32 %v6966, 1.0
        %v6999 = vadd.f32 %v6967, 1.0
        %v7000 = vadd.f32 %v6968, 1.0
        %v7001 = vadd.f32 %v6969, 1.0
        %v7002 = vadd.f32 %v6970, 1.0
        %v7003 = vadd.f32 %v6971, 1.0
        %v7004 = vadd.f32 %v6972, 1.0
        %v7005 = vadd.f32 %v6973, 1.0
        %v7006 = vadd.f32 %v6974, 1.0
        %v7007 = vadd.f32 %v6975, 1.0
        %v7008 = vadd.f32 %v6976, 1.0
        %v7009 = vadd.f32 %v6977, 1.0
        %v7010 = vadd.f32 %v6978, 1.0
        %v7011 = vadd.f32 %v6979, 1.0
        %v7012 = vadd.f32 %v6980, 1.0
        %v7013 = vadd.f32 %v6981, 1.0
        %v7014 = vadd.f32 %v6982, 1.0
        %v7015 = vadd.f32 %v6983, 1.0
        %v7016 = vadd.f32 %v6984, 1.0
        %v7017 = vadd.f32 %v6985, 1.0
        %v7018 = vadd.f32 %v6986, 1.0
        %v7019 = vadd.f32 %v6987, 1.0
        %v7020 = vadd.f32 %v6988, 1.0
        %v7021 = vadd.f32 %v6989, 1.0
        %v7022 = vadd.f32 %v6990, 1.0
        %v7023 = vadd.f32 %v6991, 1.0
        %v7024 = vadd.f32 %v6992, 1.0
        %v7025 = vadd.f32 %v6993, 1.0
        %v7026 = vmul.f32 %v6898, %v6994
        %v7027 = vmul.f32 %v6899, %v6995
        %v7028 = vmul.f32 %v6900, %v6996
        %v7029 = vmul.f32 %v6901, %v6997
        %v7030 = vmul.f32 %v6902, %v6998
        %v7031 = vmul.f32 %v6903, %v6999
        %v7032 = vmul.f32 %v6904, %v7000
        %v7033 = vmul.f32 %v6905, %v7001
        %v7034 = vmul.f32 %v6906, %v7002
        %v7035 = vmul.f32 %v6907, %v7003
        %v7036 = vmul.f32 %v6908, %v7004
        %v7037 = vmul.f32 %v6909, %v7005
        %v7038 = vmul.f32 %v6910, %v7006
        %v7039 = vmul.f32 %v6911, %v7007
        %v7040 = vmul.f32 %v6912, %v7008
        %v7041 = vmul.f32 %v6913, %v7009
        %v7042 = vmul.f32 %v6914, %v7010
        %v7043 = vmul.f32 %v6915, %v7011
        %v7044 = vmul.f32 %v6916, %v7012
        %v7045 = vmul.f32 %v6917, %v7013
        %v7046 = vmul.f32 %v6918, %v7014
        %v7047 = vmul.f32 %v6919, %v7015
        %v7048 = vmul.f32 %v6920, %v7016
        %v7049 = vmul.f32 %v6921, %v7017
        %v7050 = vmul.f32 %v6922, %v7018
        %v7051 = vmul.f32 %v6923, %v7019
        %v7052 = vmul.f32 %v6924, %v7020
        %v7053 = vmul.f32 %v6925, %v7021
        %v7054 = vmul.f32 %v6926, %v7022
        %v7055 = vmul.f32 %v6927, %v7023
        %v7056 = vmul.f32 %v6928, %v7024
        %v7057 = vmul.f32 %v6929, %v7025
        %v7058 = vpack.c.bf16 %v7030, %v7026
        %v7059 = vpack.c.bf16 %v7031, %v7027
        %v7060 = vpack.c.bf16 %v7032, %v7028
        %v7061 = vpack.c.bf16 %v7033, %v7029
        %v7062 = vpack.c.bf16 %v7038, %v7034
        %v7063 = vpack.c.bf16 %v7039, %v7035
        %v7064 = vpack.c.bf16 %v7040, %v7036
        %v7065 = vpack.c.bf16 %v7041, %v7037
        %v7066 = vpack.c.bf16 %v7046, %v7042
        %v7067 = vpack.c.bf16 %v7047, %v7043
        %v7068 = vpack.c.bf16 %v7048, %v7044
        %v7069 = vpack.c.bf16 %v7049, %v7045
        %v7070 = vpack.c.bf16 %v7054, %v7050
        %v7071 = vpack.c.bf16 %v7055, %v7051
        %v7072 = vpack.c.bf16 %v7056, %v7052
        %v7073 = vpack.c.bf16 %v7057, %v7053
        %v7074 = vld [vmem:[%s757] sm:$0xf]
        %v7075 = vld [vmem:[%s757 + $0x4] sm:$0xf]
        %v7076 = vld [vmem:[%s757 + $0x8] sm:$0xf]
        %v7077 = vld [vmem:[%s757 + $0xc] sm:$0xf]
        %v7078 = vld [vmem:[%s757 + $0x10] sm:$0xf]
        %v7079 = vld [vmem:[%s757 + $0x14] sm:$0xf]
        %v7080 = vld [vmem:[%s757 + $0x18] sm:$0xf]
        %v7081 = vld [vmem:[%s757 + $0x1c] sm:$0xf]
        %v7082 = vld [vmem:[%s757 + $0x20] sm:$0xf]
        %v7083 = vld [vmem:[%s757 + $0x24] sm:$0xf]
        %v7084 = vld [vmem:[%s757 + $0x28] sm:$0xf]
        %v7085 = vld [vmem:[%s757 + $0x2c] sm:$0xf]
        %v7086 = vld [vmem:[%s757 + $0x30] sm:$0xf]
        %v7087 = vld [vmem:[%s757 + $0x34] sm:$0xf]
        %v7088 = vld [vmem:[%s757 + $0x38] sm:$0xf]
        %v7089 = vld [vmem:[%s757 + $0x3c] sm:$0xf]
        %v7090 = vld [vmem:[%s757 + $0x40] sm:$0xf]
        %v7091 = vld [vmem:[%s757 + $0x44] sm:$0xf]
        %v7092 = vld [vmem:[%s757 + $0x48] sm:$0xf]
        %v7093 = vld [vmem:[%s757 + $0x4c] sm:$0xf]
        %v7094 = vld [vmem:[%s757 + $0x50] sm:$0xf]
        %v7095 = vld [vmem:[%s757 + $0x54] sm:$0xf]
        %v7096 = vld [vmem:[%s757 + $0x58] sm:$0xf]
        %v7097 = vld [vmem:[%s757 + $0x5c] sm:$0xf]
        %v7098 = vld [vmem:[%s757 + $0x60] sm:$0xf]
        %v7099 = vld [vmem:[%s757 + $0x64] sm:$0xf]
        %v7100 = vld [vmem:[%s757 + $0x68] sm:$0xf]
        %v7101 = vld [vmem:[%s757 + $0x6c] sm:$0xf]
        %v7102 = vld [vmem:[%s757 + $0x70] sm:$0xf]
        %v7103 = vld [vmem:[%s757 + $0x74] sm:$0xf]
        %v7104 = vld [vmem:[%s757 + $0x78] sm:$0xf]
        %v7105 = vld [vmem:[%s757 + $0x7c] sm:$0xf]
        %v7106 = vld [vmem:[%s757 + $0x80] sm:$0xf]
        %v7107 = vld [vmem:[%s757 + $0x84] sm:$0xf]
        %v7108 = vld [vmem:[%s757 + $0x88] sm:$0xf]
        %v7109 = vld [vmem:[%s757 + $0x8c] sm:$0xf]
        %v7110 = vld [vmem:[%s757 + $0x90] sm:$0xf]
        %v7111 = vld [vmem:[%s757 + $0x94] sm:$0xf]
        %v7112 = vld [vmem:[%s757 + $0x98] sm:$0xf]
        %v7113 = vld [vmem:[%s757 + $0x9c] sm:$0xf]
        %v7114 = vld [vmem:[%s757 + $0xa0] sm:$0xf]
        %v7115 = vld [vmem:[%s757 + $0xa4] sm:$0xf]
        %v7116 = vld [vmem:[%s757 + $0xa8] sm:$0xf]
        %v7117 = vld [vmem:[%s757 + $0xac] sm:$0xf]
        %v7118 = vld [vmem:[%s757 + $0xb0] sm:$0xf]
        %v7119 = vld [vmem:[%s757 + $0xb4] sm:$0xf]
        %v7120 = vld [vmem:[%s757 + $0xb8] sm:$0xf]
        %v7121 = vld [vmem:[%s757 + $0xbc] sm:$0xf]
        %v7122 = vld [vmem:[%s757 + $0xc0] sm:$0xf]
        %v7123 = vld [vmem:[%s757 + $0xc4] sm:$0xf]
        %v7124 = vld [vmem:[%s757 + $0xc8] sm:$0xf]
        %v7125 = vld [vmem:[%s757 + $0xcc] sm:$0xf]
        %v7126 = vld [vmem:[%s757 + $0xd0] sm:$0xf]
        %v7127 = vld [vmem:[%s757 + $0xd4] sm:$0xf]
        %v7128 = vld [vmem:[%s757 + $0xd8] sm:$0xf]
        %v7129 = vld [vmem:[%s757 + $0xdc] sm:$0xf]
        %v7130 = vld [vmem:[%s757 + $0xe0] sm:$0xf]
        %v7131 = vld [vmem:[%s757 + $0xe4] sm:$0xf]
        %v7132 = vld [vmem:[%s757 + $0xe8] sm:$0xf]
        %v7133 = vld [vmem:[%s757 + $0xec] sm:$0xf]
        %v7134 = vld [vmem:[%s757 + $0xf0] sm:$0xf]
        %v7135 = vld [vmem:[%s757 + $0xf4] sm:$0xf]
        %v7136 = vld [vmem:[%s757 + $0xf8] sm:$0xf]
        %v7137 = vld [vmem:[%s757 + $0xfc] sm:$0xf]
        %v7138 = vld [vmem:[%s765] sm:$0x1]
        %v7140 = vlaneseq
        %v7141 = vshrl.u32 %v7140, 7
        %v7142 = vsub.s32 0, %v7141
        %v7143 = vrot.slane %v7138, %v7142
        %v7209 = vunpack.c.l.b16 %v7074
        %v7210 = vunpack.c.l.b16 %v7075
        %v7211 = vunpack.c.l.b16 %v7076
        %v7212 = vunpack.c.l.b16 %v7077
        %v7213 = vunpack.c.l.b16 %v7078
        %v7214 = vunpack.c.l.b16 %v7079
        %v7215 = vunpack.c.l.b16 %v7080
        %v7216 = vunpack.c.l.b16 %v7081
        %v7217 = vunpack.c.l.b16 %v7082
        %v7218 = vunpack.c.l.b16 %v7083
        %v7219 = vunpack.c.l.b16 %v7084
        %v7220 = vunpack.c.l.b16 %v7085
        %v7221 = vunpack.c.l.b16 %v7086
        %v7222 = vunpack.c.l.b16 %v7087
        %v7223 = vunpack.c.l.b16 %v7088
        %v7224 = vunpack.c.l.b16 %v7089
        %v7225 = vunpack.c.l.b16 %v7090
        %v7226 = vunpack.c.l.b16 %v7091
        %v7227 = vunpack.c.l.b16 %v7092
        %v7228 = vunpack.c.l.b16 %v7093
        %v7229 = vunpack.c.l.b16 %v7094
        %v7230 = vunpack.c.l.b16 %v7095
        %v7231 = vunpack.c.l.b16 %v7096
        %v7232 = vunpack.c.l.b16 %v7097
        %v7233 = vunpack.c.l.b16 %v7098
        %v7234 = vunpack.c.l.b16 %v7099
        %v7235 = vunpack.c.l.b16 %v7100
        %v7236 = vunpack.c.l.b16 %v7101
        %v7237 = vunpack.c.l.b16 %v7102
        %v7238 = vunpack.c.l.b16 %v7103
        %v7239 = vunpack.c.l.b16 %v7104
        %v7240 = vunpack.c.l.b16 %v7105
        %v7241 = vunpack.c.l.b16 %v7106
        %v7242 = vunpack.c.l.b16 %v7107
        %v7243 = vunpack.c.l.b16 %v7108
        %v7244 = vunpack.c.l.b16 %v7109
        %v7245 = vunpack.c.l.b16 %v7110
        %v7246 = vunpack.c.l.b16 %v7111
        %v7247 = vunpack.c.l.b16 %v7112
        %v7248 = vunpack.c.l.b16 %v7113
        %v7249 = vunpack.c.l.b16 %v7114
        %v7250 = vunpack.c.l.b16 %v7115
        %v7251 = vunpack.c.l.b16 %v7116
        %v7252 = vunpack.c.l.b16 %v7117
        %v7253 = vunpack.c.l.b16 %v7118
        %v7254 = vunpack.c.l.b16 %v7119
        %v7255 = vunpack.c.l.b16 %v7120
        %v7256 = vunpack.c.l.b16 %v7121
        %v7257 = vunpack.c.l.b16 %v7122
        %v7258 = vunpack.c.l.b16 %v7123
        %v7259 = vunpack.c.l.b16 %v7124
        %v7260 = vunpack.c.l.b16 %v7125
        %v7261 = vunpack.c.l.b16 %v7126
        %v7262 = vunpack.c.l.b16 %v7127
        %v7263 = vunpack.c.l.b16 %v7128
        %v7264 = vunpack.c.l.b16 %v7129
        %v7265 = vunpack.c.l.b16 %v7130
        %v7266 = vunpack.c.l.b16 %v7131
        %v7267 = vunpack.c.l.b16 %v7132
        %v7268 = vunpack.c.l.b16 %v7133
        %v7269 = vunpack.c.l.b16 %v7134
        %v7270 = vunpack.c.l.b16 %v7135
        %v7271 = vunpack.c.l.b16 %v7136
        %v7272 = vunpack.c.l.b16 %v7137
        %v7273 = vpack.c.b16 %v7210, %v7209
        %v7274 = vpack.c.b16 %v7212, %v7211
        %v7275 = vpack.c.b16 %v7214, %v7213
        %v7276 = vpack.c.b16 %v7216, %v7215
        %v7277 = vpack.c.b16 %v7218, %v7217
        %v7278 = vpack.c.b16 %v7220, %v7219
        %v7279 = vpack.c.b16 %v7222, %v7221
        %v7280 = vpack.c.b16 %v7224, %v7223
        %v7281 = vpack.c.b16 %v7226, %v7225
        %v7282 = vpack.c.b16 %v7228, %v7227
        %v7283 = vpack.c.b16 %v7230, %v7229
        %v7284 = vpack.c.b16 %v7232, %v7231
        %v7285 = vpack.c.b16 %v7234, %v7233
        %v7286 = vpack.c.b16 %v7236, %v7235
        %v7287 = vpack.c.b16 %v7238, %v7237
        %v7288 = vpack.c.b16 %v7240, %v7239
        %v7289 = vpack.c.b16 %v7242, %v7241
        %v7290 = vpack.c.b16 %v7244, %v7243
        %v7291 = vpack.c.b16 %v7246, %v7245
        %v7292 = vpack.c.b16 %v7248, %v7247
        %v7293 = vpack.c.b16 %v7250, %v7249
        %v7294 = vpack.c.b16 %v7252, %v7251
        %v7295 = vpack.c.b16 %v7254, %v7253
        %v7296 = vpack.c.b16 %v7256, %v7255
        %v7297 = vpack.c.b16 %v7258, %v7257
        %v7298 = vpack.c.b16 %v7260, %v7259
        %v7299 = vpack.c.b16 %v7262, %v7261
        %v7300 = vpack.c.b16 %v7264, %v7263
        %v7301 = vpack.c.b16 %v7266, %v7265
        %v7302 = vpack.c.b16 %v7268, %v7267
        %v7303 = vpack.c.b16 %v7270, %v7269
        %v7304 = vpack.c.b16 %v7272, %v7271
        %7337 = vmatprep.subr.bf16.mxu0 0
        %7338 = vmatpush1.bf16.msra.mxu0 %v7273
        %7339 = vmatprep.subr.bf16.mxu0 0
        %7340 = vmatpush1.bf16.msra.mxu0 %v7274
        %7341 = vmatprep.subr.bf16.mxu0 0
        %7342 = vmatpush1.bf16.msra.mxu0 %v7275
        %7343 = vmatprep.subr.bf16.mxu0 0
        %7344 = vmatpush1.bf16.msra.mxu0 %v7276
        %7345 = vmatprep.subr.bf16.mxu0 0
        %7346 = vmatpush1.bf16.msra.mxu0 %v7277
        %7347 = vmatprep.subr.bf16.mxu0 0
        %7348 = vmatpush1.bf16.msra.mxu0 %v7278
        %7349 = vmatprep.subr.bf16.mxu0 0
        %7350 = vmatpush1.bf16.msra.mxu0 %v7279
        %7351 = vmatprep.subr.bf16.mxu0 0
        %7352 = vmatpush1.bf16.msra.mxu0 %v7280
        %7353 = vmatprep.subr.bf16.mxu0 0
        %7354 = vmatpush1.bf16.msra.mxu0 %v7281
        %7355 = vmatprep.subr.bf16.mxu0 0
        %7356 = vmatpush1.bf16.msra.mxu0 %v7282
        %7357 = vmatprep.subr.bf16.mxu0 0
        %7358 = vmatpush1.bf16.msra.mxu0 %v7283
        %7359 = vmatprep.subr.bf16.mxu0 0
        %7360 = vmatpush1.bf16.msra.mxu0 %v7284
        %7361 = vmatprep.subr.bf16.mxu0 0
        %7362 = vmatpush1.bf16.msra.mxu0 %v7285
        %7363 = vmatprep.subr.bf16.mxu0 0
        %7364 = vmatpush1.bf16.msra.mxu0 %v7286
        %7365 = vmatprep.subr.bf16.mxu0 0
        %7366 = vmatpush1.bf16.msra.mxu0 %v7287
        %7367 = vmatprep.subr.bf16.mxu0 0
        %7368 = vmatpush1.bf16.msra.mxu0 %v7288
        %7369 = vmatprep.mubr.bf16.mxu0 %v7059
        %7370 = vmatmul.mubr.bf16.gmra.mrb[0].mxu0 %v7058
        %v7371 = vpop.f32.mrb[0].mxu0
        %v7372 = vadd.f32 %v7143, %v7371
        %v7373 = vpop.f32.mrb[0].mxu0
        %v7374 = vpop.f32.mrb[0].mxu0
        %v7375 = vadd.f32 %v7143, %v7374
        %v7376 = vpop.f32.mrb[0].mxu0
        %7377 = vmatprep.mubr.bf16.mxu0 %v7063
        %7378 = vmatmul.mubr.bf16.gmra.mrb[0].mxu0 %v7062
        %v7379 = vpop.f32.mrb[0].mxu0
        %v7380 = vadd.f32 %v7143, %v7379
        %v7381 = vpop.f32.mrb[0].mxu0
        %v7382 = vpop.f32.mrb[0].mxu0
        %v7383 = vadd.f32 %v7143, %v7382
        %v7384 = vpop.f32.mrb[0].mxu0
        %7385 = vmatprep.mubr.bf16.mxu0 %v7067
        %7386 = vmatmul.mubr.bf16.gmra.mrb[0].mxu0 %v7066
        %v7387 = vpop.f32.mrb[0].mxu0
        %v7388 = vadd.f32 %v7143, %v7387
        %v7389 = vpop.f32.mrb[0].mxu0
        %v7390 = vpop.f32.mrb[0].mxu0
        %v7391 = vadd.f32 %v7143, %v7390
        %v7392 = vpop.f32.mrb[0].mxu0
        %7393 = vmatprep.mubr.bf16.mxu0 %v7071
        %7394 = vmatmul.mubr.bf16.gmra.mrb[0].mxu0 %v7070
        %v7395 = vpop.f32.mrb[0].mxu0
        %v7396 = vadd.f32 %v7143, %v7395
        %v7397 = vpop.f32.mrb[0].mxu0
        %v7398 = vpop.f32.mrb[0].mxu0
        %v7399 = vadd.f32 %v7143, %v7398
        %v7400 = vpop.f32.mrb[0].mxu0
        %7401 = vdwg.mxu0
        %7402 = vmatprep.subr.bf16.mxu0 0
        %7403 = vmatpush1.bf16.msra.mxu0 %v7289
        %7404 = vmatprep.subr.bf16.mxu0 0
        %7405 = vmatpush1.bf16.msra.mxu0 %v7290
        %7406 = vmatprep.subr.bf16.mxu0 0
        %7407 = vmatpush1.bf16.msra.mxu0 %v7291
        %7408 = vmatprep.subr.bf16.mxu0 0
        %7409 = vmatpush1.bf16.msra.mxu0 %v7292
        %7410 = vmatprep.subr.bf16.mxu0 0
        %7411 = vmatpush1.bf16.msra.mxu0 %v7293
        %7412 = vmatprep.subr.bf16.mxu0 0
        %7413 = vmatpush1.bf16.msra.mxu0 %v7294
        %7414 = vmatprep.subr.bf16.mxu0 0
        %7415 = vmatpush1.bf16.msra.mxu0 %v7295
        %7416 = vmatprep.subr.bf16.mxu0 0
        %7417 = vmatpush1.bf16.msra.mxu0 %v7296
        %7418 = vmatprep.subr.bf16.mxu0 0
        %7419 = vmatpush1.bf16.msra.mxu0 %v7297
        %7420 = vmatprep.subr.bf16.mxu0 0
        %7421 = vmatpush1.bf16.msra.mxu0 %v7298
        %7422 = vmatprep.subr.bf16.mxu0 0
        %7423 = vmatpush1.bf16.msra.mxu0 %v7299
        %7424 = vmatprep.subr.bf16.mxu0 0
        %7425 = vmatpush1.bf16.msra.mxu0 %v7300
        %7426 = vmatprep.subr.bf16.mxu0 0
        %7427 = vmatpush1.bf16.msra.mxu0 %v7301
        %7428 = vmatprep.subr.bf16.mxu0 0
        %7429 = vmatpush1.bf16.msra.mxu0 %v7302
        %7430 = vmatprep.subr.bf16.mxu0 0
        %7431 = vmatpush1.bf16.msra.mxu0 %v7303
        %7432 = vmatprep.subr.bf16.mxu0 0
        %7433 = vmatpush1.bf16.msra.mxu0 %v7304
        %7434 = vmatprep.mubr.bf16.mxu0 %v7061
        %7435 = vmatmul.mubr.bf16.gmra.mrb[0].mxu0 %v7060
        %v7436 = vpop.f32.mrb[0].mxu0
        %v7437 = vadd.f32 %v7372, %v7436
        %v7438 = vpop.f32.mrb[0].mxu0
        %v7439 = vpop.f32.mrb[0].mxu0
        %v7440 = vadd.f32 %v7375, %v7439
        %v7441 = vpop.f32.mrb[0].mxu0
        %7442 = vmatprep.mubr.bf16.mxu0 %v7065
        %7443 = vmatmul.mubr.bf16.gmra.mrb[0].mxu0 %v7064
        %v7444 = vpop.f32.mrb[0].mxu0
        %v7445 = vadd.f32 %v7380, %v7444
        %v7446 = vpop.f32.mrb[0].mxu0
        %v7447 = vpop.f32.mrb[0].mxu0
        %v7448 = vadd.f32 %v7383, %v7447
        %v7449 = vpop.f32.mrb[0].mxu0
        %7450 = vmatprep.mubr.bf16.mxu0 %v7069
        %7451 = vmatmul.mubr.bf16.gmra.mrb[0].mxu0 %v7068
        %v7452 = vpop.f32.mrb[0].mxu0
        %v7453 = vadd.f32 %v7388, %v7452
        %v7454 = vpop.f32.mrb[0].mxu0
        %v7455 = vpop.f32.mrb[0].mxu0
        %v7456 = vadd.f32 %v7391, %v7455
        %v7457 = vpop.f32.mrb[0].mxu0
        %7458 = vmatprep.mubr.bf16.mxu0 %v7073
        %7459 = vmatmul.mubr.bf16.gmra.mrb[0].mxu0 %v7072
        %v7460 = vpop.f32.mrb[0].mxu0
        %v7461 = vadd.f32 %v7396, %v7460
        %v7462 = vpop.f32.mrb[0].mxu0
        %v7463 = vpop.f32.mrb[0].mxu0
        %v7464 = vadd.f32 %v7399, %v7463
        %v7465 = vpop.f32.mrb[0].mxu0
        %7466 = vdwg.mxu0
        %v7467 = vadd.f32 %v6408, %v7437
        %v7468 = vadd.f32 %v6409, %v7440
        %v7469 = vadd.f32 %v6410, %v7445
        %v7470 = vadd.f32 %v6411, %v7448
        %v7471 = vadd.f32 %v6412, %v7453
        %v7472 = vadd.f32 %v6413, %v7456
        %v7473 = vadd.f32 %v6414, %v7461
        %v7474 = vadd.f32 %v6415, %v7464
        %7475 = vst [vmem:[#allocation2] sm:$0xff] %v7467
        %7476 = vst [vmem:[#allocation2 + $0x8] sm:$0xff] %v7468
        %7477 = vst [vmem:[#allocation2 + $0x10] sm:$0xff] %v7469
        %7478 = vst [vmem:[#allocation2 + $0x18] sm:$0xff] %v7470
        %7479 = vst [vmem:[#allocation2 + $0x20] sm:$0xff] %v7471
        %7480 = vst [vmem:[#allocation2 + $0x28] sm:$0xff] %v7472
        %7481 = vst [vmem:[#allocation2 + $0x30] sm:$0xff] %v7473
        %7482 = vst [vmem:[#allocation2 + $0x38] sm:$0xff] %v7474
        %p7483 = scmp.eq.s32.totalorder %s46, 1
        // Predicated region
        $region121: #{xvit_rgb_branch_forward.3} parent=87 // pred_check
          %p7484 = pneg %p7483
        $region122: #{xvit_rgb_branch_forward.3} parent=87 // pred_check_branch
          %7486 = sbr.rel (%p7484) target = $region124
        $region123: #{xvit_rgb_branch_forward.3} parent=87 // pred_region
          %v7487 = vld [vmem:[%s13] sm:$0x1]
          %v7488 = vld [vmem:[%s14] sm:$0x1]
          %v7491 = vrot.slane %v7471, 7
          %vm7492 = vcmask 1041409
          %v7493 = vsel %vm7492, %v7491, %v7467
          %vm7495 = vcmask 1041408
          %v7496 = vsel %vm7495, %v7493, 0.0
          %7497 = vadd.xlane.f32.xlu0 %v7496
          %v7498 = vpop.xlane.xlu0 %7497
          %v7499 = vmul.f32 %v7498, %v934
          %v7501 = vrot.slane %v7499, 1
          %v7504 = vsub.f32 %v7467, %v7499
          %v7505 = vsub.f32 %v7471, %v7501
          %v7506 = vmul.f32 %v7504, %v7504
          %v7507 = vmul.f32 %v7505, %v7505
          %v7510 = vrot.slane %v7507, 7
          %v7511 = vsel %vm7492, %v7510, %v7506
          %v7513 = vsel %vm7495, %v7511, 0.0
          %7514 = vadd.xlane.f32.xlu0 %v7513
          %v7515 = vpop.xlane.xlu0 %7514
          %v7516 = vmul.f32 %v7515, %v934
          %v7517 = vadd.f32 %v7516, 1e-06
          %v7518 = vrsqrt.pop %v7517
          %v7520 = vrot.slane %v7518, 1
          %v7523 = vmul.f32 %v7504, %v7518
          %v7524 = vmul.f32 %v7505, %v7520
          %v7526 = vlaneseq
          %v7527 = vshrl.u32 %v7526, 7
          %v7528 = vsub.s32 0, %v7527
          %v7529 = vrot.slane %v7487, %v7528
          %v7531 = vmul.f32 %v7523, %v7529
          %v7532 = vmul.f32 %v7524, %v7529
          %v7534 = vlaneseq
          %v7535 = vshrl.u32 %v7534, 7
          %v7536 = vsub.s32 0, %v7535
          %v7537 = vrot.slane %v7488, %v7536
          %v7539 = vadd.f32 %v7531, %v7537
          %v7540 = vadd.f32 %v7532, %v7537
          %v7541 = vld [vmem:[%s15] sm:$0xff]
          %v7542 = vld [vmem:[%s15 + $0x8] sm:$0xff]
          %v7543 = vld [vmem:[%s15 + $0x10] sm:$0xff]
          %v7544 = vld [vmem:[%s15 + $0x18] sm:$0xff]
          %v7545 = vld [vmem:[%s15 + $0x20] sm:$0xff]
          %v7546 = vld [vmem:[%s15 + $0x28] sm:$0xff]
          %v7547 = vld [vmem:[%s15 + $0x30] sm:$0xff]
          %v7548 = vld [vmem:[%s15 + $0x38] sm:$0xff]
          %v7549 = vld [vmem:[%s15 + $0x40] sm:$0xff]
          %v7550 = vld [vmem:[%s15 + $0x48] sm:$0xff]
          %v7551 = vld [vmem:[%s15 + $0x50] sm:$0xff]
          %v7552 = vld [vmem:[%s15 + $0x58] sm:$0xff]
          %v7553 = vld [vmem:[%s15 + $0x60] sm:$0xff]
          %v7554 = vld [vmem:[%s15 + $0x68] sm:$0xff]
          %v7555 = vld [vmem:[%s15 + $0x70] sm:$0xff]
          %v7556 = vld [vmem:[%s15 + $0x78] sm:$0xff]
          %v7557 = vld [vmem:[%s16] sm:$0x1]
          %v7559 = vlaneseq
          %v7560 = vshrl.u32 %v7559, 7
          %v7561 = vsub.s32 0, %v7560
          %v7562 = vrot.slane %v7557, %v7561
          %v7566 = vrot.slane %v7540, 7
          %v7567 = vsel %vm7492, %v7566, %v7539
          %7569 = vmatprep.subr.mxu0 0.0
          %7570 = vmatpush1.msra.mxu0 %v7541
          %7571 = vmatprep.subr.mxu0 0.0
          %7572 = vmatpush1.msra.mxu0 %v7542
          %7573 = vmatprep.subr.mxu0 0.0
          %7574 = vmatpush1.msra.mxu0 %v7543
          %7575 = vmatprep.subr.mxu0 0.0
          %7576 = vmatpush1.msra.mxu0 %v7544
          %7577 = vmatprep.subr.mxu0 0.0
          %7578 = vmatpush1.msra.mxu0 %v7545
          %7579 = vmatprep.subr.mxu0 0.0
          %7580 = vmatpush1.msra.mxu0 %v7546
          %7581 = vmatprep.subr.mxu0 0.0
          %7582 = vmatpush1.msra.mxu0 %v7547
          %7583 = vmatprep.subr.mxu0 0.0
          %7584 = vmatpush1.msra.mxu0 %v7548
          %7585 = vmatprep.subr.mxu0 0.0
          %7586 = vmatpush1.msra.mxu0 %v7549
          %7587 = vmatprep.subr.mxu0 0.0
          %7588 = vmatpush1.msra.mxu0 %v7550
          %7589 = vmatprep.subr.mxu0 0.0
          %7590 = vmatpush1.msra.mxu0 %v7551
          %7591 = vmatprep.subr.mxu0 0.0
          %7592 = vmatpush1.msra.mxu0 %v7552
          %7593 = vmatprep.subr.mxu0 0.0
          %7594 = vmatpush1.msra.mxu0 %v7553
          %7595 = vmatprep.subr.mxu0 0.0
          %7596 = vmatpush1.msra.mxu0 %v7554
          %7597 = vmatprep.subr.mxu0 0.0
          %7598 = vmatpush1.msra.mxu0 %v7555
          %7599 = vmatprep.subr.mxu0 0.0
          %7600 = vmatpush1.msra.mxu0 %v7556
          %7601 = vmatprep.subr.mxu0 0.0
          %7602 = vmatpush1.msra.mxu0 0.0
          %7603 = vmatprep.subr.mxu0 0.0
          %7604 = vmatpush1.msra.mxu0 0.0
          %7605 = vmatprep.subr.mxu0 0.0
          %7606 = vmatpush1.msra.mxu0 0.0
          %7607 = vmatprep.subr.mxu0 0.0
          %7608 = vmatpush1.msra.mxu0 0.0
          %7609 = vmatprep.subr.mxu0 0.0
          %7610 = vmatpush1.msra.mxu0 0.0
          %7611 = vmatprep.subr.mxu0 0.0
          %7612 = vmatpush1.msra.mxu0 0.0
          %7613 = vmatprep.subr.mxu0 0.0
          %7614 = vmatpush1.msra.mxu0 0.0
          %7615 = vmatprep.subr.mxu0 0.0
          %7616 = vmatpush1.msra.mxu0 0.0
          %7617 = vmatprep.subr.mxu0 0.0
          %7618 = vmatpush1.msra.mxu0 0.0
          %7619 = vmatprep.subr.mxu0 0.0
          %7620 = vmatpush1.msra.mxu0 0.0
          %7621 = vmatprep.subr.mxu0 0.0
          %7622 = vmatpush1.msra.mxu0 0.0
          %7623 = vmatprep.subr.mxu0 0.0
          %7624 = vmatpush1.msra.mxu0 0.0
          %7625 = vmatprep.subr.mxu0 0.0
          %7626 = vmatpush1.msra.mxu0 0.0
          %7627 = vmatprep.subr.mxu0 0.0
          %7628 = vmatpush1.msra.mxu0 0.0
          %7629 = vmatprep.subr.mxu0 0.0
          %7630 = vmatpush1.msra.mxu0 0.0
          %7631 = vmatprep.subr.mxu0 0.0
          %7632 = vmatpush1.msra.mxu0 0.0
          %7633 = vmatprep.mubr.f32.mxu0 0.0
          %7634 = vmatmul.mubr.f32.gmra.mrb[0].mxu0 %v7567
          %v7635 = vpop.f32.mrb[0].mxu0
          %v7636 = vadd.f32 %v7562, %v7635
          %v7637 = vpop.f32.mrb[0].mxu0
          %7638 = vdwg.mxu0
          %vm7639 = vcmask 9216
          %7640 = vst.msk [vmem:[#allocation15] sm:$0x3] %vm7639, %v7636
        $region124: #{xvit_rgb_branch_forward.3} parent=87 // pred_fallthru
          _
        // Predicated region
        $region125: #{xvit_rgb_branch_forward.3} parent=87 // pred_check
          %p7641 = pneg %p493
        $region126: #{xvit_rgb_branch_forward.3} parent=87 // pred_check_branch
          %7643 = sbr.rel (%p7641) target = $region128
        $region127: #{xvit_rgb_branch_forward.3} parent=87 // pred_region
          %s7645 = ssub.s32 32, 32
          %7646 = vsyncadd [#allocation5], %s7645
          %s7647 = smul.addr %s45, 32
          %s7648 = scalar_lea.hbm %s17, %s7647
          %s7650 = sshll.u32 [#allocation15], 4
          %s7651 = int_to_ptr.vmem [resolvable:$true] %s7650
          %7653 = dma.vmem_to_hbm [thread:$0]  %s7651, 32, %s7648, [#allocation5]
        $region128: #{xvit_rgb_branch_forward.3} parent=87 // pred_fallthru
          _
        // Predicated region
        $region129: #{xvit_rgb_branch_forward.3} parent=87 // pred_check
          %p7654 = pneg %p493
        $region130: #{xvit_rgb_branch_forward.3} parent=87 // pred_check_branch
          %7656 = sbr.rel (%p7654) target = $region132
        $region131: #{xvit_rgb_branch_forward.3} parent=87 // pred_region
          %7657 = dma.done [#allocation5], 32
        $region132: #{xvit_rgb_branch_forward.3} parent=87 // pred_fallthru
          _
      $region88: #{xvit_rgb_branch_forward.3} parent=5 // pred_fallthru
        _
      %p7658 = scmp.le.s32.totalorder 2, %s36
      // Predicated region
      $region133: #{xvit_rgb_branch_forward.3} parent=5 // pred_check
        %p7659 = pneg %p7658
      $region134: #{xvit_rgb_branch_forward.3} parent=5 // pred_check_branch
        %7661 = sbr.rel (%p7659) target = $region136
      $region135: #{xvit_rgb_branch_forward.3} parent=5 // pred_region
        %s7662 = ssub.s32 %s36, 2
      $region136: #{xvit_rgb_branch_forward.3} parent=5 // pred_fallthru
        _
    $region6: #{xvit_rgb_branch_forward.3} parent=1 // loop_footer
      %s40 = sadd.s32 1, %s36
    $region7: #{xvit_rgb_branch_forward.3} parent=1 // loop_footer_branch
      %35 = sbr.rel target = $region3
    $region8: #{xvit_rgb_branch_forward.3} parent=1 // loop_exit
      _
    %7663 = vsyncpa [#allocation4], 1
    %s7664 = scalar_lea.sflag [#allocation4], 1
    %7665 = vsyncpa %s7664, 1
    %7666 = vsyncpa [#allocation7], 1
    %s7667 = scalar_lea.sflag [#allocation7], 1
    %7668 = vsyncpa %s7667, 1
    %7669 = vsyncpa [#allocation10], 1
    %s7670 = scalar_lea.sflag [#allocation10], 1
    %7671 = vsyncpa %s7670, 1
    %7672 = vsyncpa [#allocation13], 1
    %s7673 = scalar_lea.sflag [#allocation13], 1
    %7674 = vsyncpa %s7673, 1
    %7675 = vsyncpa [#allocation5], 1
    %s7676 = scalar_lea.sflag [#allocation5], 1
    %7677 = vsyncpa %s7676, 1

</llo_original>
